<compile_context>
chip_gen: v6e
topology: v6e:2x2x1
jax: 0.10.0
libtpu: 0.0.40
codegen_flags: <defaults>
</compile_context>

<pallas_src>
import functools

import numpy as np
import jax
import jax.numpy as jnp
from jax.experimental import pallas as pl
from jax.experimental.pallas import tpu as pltpu


# ----------------------------------------------------------------------------------------------
# Kernel
# ----------------------------------------------------------------------------------------------
def mamba_block_kernel(x_ref, lnw_ref, lnb_ref, win_ref, convw_ref, convb_ref,
                       wxf_ref, dtb_ref, at_ref, dprm_ref, wout_ref,
                       out_ref,
                       da_ref, dbu_ref, c_ref, y_ref,
                       *, seq_len, unroll_limit):
    f32 = jnp.float32
    M, _ = x_ref.shape                        # M = n_seq * seq_len rows, TIME-major order
    d_conv, d_inner = convw_ref.shape
    d_state = at_ref.shape[0]
    L = seq_len
    n_seq = M // L                            # sequences folded into this block

    x = x_ref[...].astype(f32)

    # ---- LayerNorm(d_model), eps=1e-5, biased variance ----
    mean = jnp.mean(x, axis=-1, keepdims=True)
    var = jnp.mean((x - mean) ** 2, axis=-1, keepdims=True)
    xn = (x - mean) * jax.lax.rsqrt(var + 1e-5)
    xn = xn * lnw_ref[...] + lnb_ref[...]

    # ---- in_proj: (M, D) @ (D, 2*d_inner) ----
    w_in = win_ref[...]
    xz = jnp.dot(xn.astype(w_in.dtype), w_in, preferred_element_type=f32)
    u = xz[:, :d_inner]                       # (M, d_inner)
    z = xz[:, d_inner:]                       # (M, d_inner)

    # ---- causal depthwise conv1d + bias + SiLU ----
    # Rows are time-major, so "one step back in time" is n_seq rows up; the zero left-pad alone
    # keeps the conv causal for EVERY sequence in the block (no cross-sequence bleed, no mask).
    # TODO(synk): the shifted taps could use a sublane pltpu.roll instead of pad + slices.
    pad = (d_conv - 1) * n_seq
    xpad = jnp.concatenate([jnp.zeros((pad, d_inner), f32), u], axis=0)
    xc = jnp.zeros((M, d_inner), f32) + convb_ref[...]
    for k in range(d_conv):                   # static unroll over the 4 taps
        xc = xc + convw_ref[k:k + 1, :] * xpad[k * n_seq:k * n_seq + M, :]
    xc = xc * jax.nn.sigmoid(xc)              # SiLU

    # ---- fused x_proj (+ dt_proj folded on the host): one fuller MXU pass ----
    w_xf = wxf_ref[...]
    proj = jnp.dot(xc.astype(w_xf.dtype), w_xf, preferred_element_type=f32)
    delta = jax.nn.softplus(proj[:, :d_inner] + dtb_ref[...])     # (M, d_inner)
    Bm = proj[:, d_inner:d_inner + d_state]                        # (M, d_state)
    c_ref[...] = proj[:, d_inner + d_state:]                       # (M, d_state) -> scratch

    # ---- hoist the EUP / outer-product work out of the serial scan ----
    #   dA[s, r, :]  = exp(delta[r, :] * A[s, :])
    #   dBu[s, r, :] = delta[r, :] * u_conv[r, :] * B[r, s]
    At = at_ref[...].astype(f32)              # (d_state, d_inner), A = -exp(A_log) transposed
    du = delta * xc
    for s in range(d_state):                  # static; only wide (M, d_inner) elementwise ops
        da_ref[s] = jnp.exp(delta * At[s:s + 1, :])
        dbu_ref[s] = du * Bm[:, s:s + 1]

    # ---- selective scan, vectorized across the n_seq sequences of the block ----
    #   h[s, b, :] = dA_t[s, b, :] * h[s, b, :] + dBu_t[s, b, :]
    #   y_t[b, :]  = sum_s C_t[b, s] * h[s, b, :]
    def scan_step(t, h):
        sl = pl.ds(t * n_seq, n_seq)                       # contiguous time slab
        h = da_ref[:, sl, :] * h + dbu_ref[:, sl, :]       # (d_state, n_seq, d_inner)
        c_t = c_ref[sl, :]                                 # (n_seq, d_state)
        y_t = c_t[:, 0:1] * h[0]
        for s in range(1, d_state):                        # small static reduction tree (VALU)
            y_t = y_t + c_t[:, s:s + 1] * h[s]
        y_ref[sl, :] = y_t                                 # contiguous, lane-dense store
        return h

    h = jnp.zeros((d_state, n_seq, d_inner), f32)
    if L <= unroll_limit:
        for t in range(L):                                 # static unroll: all slices static
            h = scan_step(t, h)
    else:
        h = jax.lax.fori_loop(0, L, scan_step, h)

    # ---- skip connection (D), gate with SiLU(z), out_proj; one lane-dense (M, D) store ----
    y = y_ref[...] + xc * dprm_ref[...]
    y = y * (z * jax.nn.sigmoid(z))
    w_out = wout_ref[...]
    out = jnp.dot(y.astype(w_out.dtype), w_out, preferred_element_type=f32)
    out_ref[...] = out.astype(out_ref.dtype)


# ----------------------------------------------------------------------------------------------
# Wrapper
# ----------------------------------------------------------------------------------------------
def _device_kind():
    try:
        return jax.devices()[0].device_kind.lower()
    except Exception:
        return ""


def _vmem_estimate(M, D, d_inner, d_state, w_bytes, x_itemsize):
    b = 2 * 2 * M * D * x_itemsize            # x / out blocks, double-buffered
    b += 2 * w_bytes                          # weights (double-buffered by the pipeline)
    b += 2 * d_state * M * d_inner * 4        # dA + dBu scratch
    b += M * 128 * 4                          # C scratch (d_state lanes padded to 128)
    b += M * d_inner * 4                      # y scratch
    b += 6 * M * d_inner * 4                  # live f32 intermediates (u, z, xc, delta, ...)
    return b


def _choose_batch_block(Bsz, L, D, d_inner, d_state, w_bytes, cap_bytes, min_steps,
                        max_block_rows=1024):
    """Largest per-block batch count Bblk whose VMEM estimate fits, whose (Bblk*L, D) block is
    sublane-legal, and (on v7x) that keeps the grid >= 2 steps for the two TensorCores."""
    best = None
    for c in range(1, Bsz + 1):
        if Bsz % c:
            continue
        M = c * L
        if M > max_block_rows:
            continue
        if (M % 8) and c != Bsz:              # (8,128) rule unless the block == full array
            continue
        if (Bsz // c) < min(min_steps, Bsz):
            continue
        if _vmem_estimate(M, D, d_inner, d_state, w_bytes, 4) > cap_bytes:
            continue
        best = c
    if best is None:
        # Guarded fallback (review note): one sequence per block when legal, else the whole
        # batch in a single block (a block equal to the full array is always shape-legal).
        best = 1 if (L % 8 == 0) else Bsz
    return best


def mamba_layer_forward(x, params, *, matmul_dtype=jnp.bfloat16, unroll_limit=32):
    Bsz, L, D = x.shape
    d_conv, d_inner = params["conv_w"].shape
    d_state = params["A_T"].shape[0]
    dt_rank = params["w_dt"].shape[0]
    f32 = jnp.float32

    # Host-side weight prep: fuse dt_proj into x_proj, cast only MXU operands to matmul_dtype.
    w_xf = jnp.concatenate(
        [jnp.dot(params["w_xproj"][:, :dt_rank], params["w_dt"],
                 precision=jax.lax.Precision.HIGHEST),
         params["w_xproj"][:, dt_rank:]], axis=1)            # (d_inner, d_inner + 2*d_state)
    weight_list = [
        params["ln_w"].astype(f32), params["ln_b"].astype(f32),
        params["w_in"].astype(matmul_dtype),
        params["conv_w"].astype(f32), params["conv_b"].astype(f32),
        w_xf.astype(matmul_dtype),
        params["dt_bias"].astype(f32), params["A_T"].astype(f32),
        params["D"].astype(f32),
        params["w_out"].astype(matmul_dtype),
    ]
    w_bytes = sum(int(w.size) * w.dtype.itemsize for w in weight_list)

    kind = _device_kind()
    is_v7x = ("v7" in kind) or ("7x" in kind)
    vmem_cap = (48 << 20) if is_v7x else (100 << 20)          # headroom vs 64 / 128 MiB physical
    min_steps = 2 if is_v7x else 1                            # keep both v7x TensorCores busy

    Bblk = _choose_batch_block(Bsz, L, D, d_inner, d_state, w_bytes, vmem_cap, min_steps)
    M = Bblk * L
    nblk = Bsz // Bblk
    grid = (nblk,)

    # Time-major row order inside each block (row = t*Bblk + b); plain XLA transposes outside
    # the kernel.  Residual of the Block is the input itself and is returned directly.
    x_tm = x.reshape(nblk, Bblk, L, D).transpose(0, 2, 1, 3).reshape(Bsz * L, D)

    def full_spec(arr):
        nd = arr.ndim
        return pl.BlockSpec(arr.shape, lambda g, _nd=nd: (0,) * _nd)

    in_specs = [pl.BlockSpec((M, D), lambda g: (g, 0))] + [full_spec(w) for w in weight_list]
    out_specs = pl.BlockSpec((M, D), lambda g: (g, 0))
    out_shape = jax.ShapeDtypeStruct((Bsz * L, D), x.dtype)

    scratch_shapes = [
        pltpu.VMEM((d_state, M, d_inner), jnp.float32),   # dA  = exp(delta*A)  (hoisted)
        pltpu.VMEM((d_state, M, d_inner), jnp.float32),   # dBu = delta*B*u     (hoisted)
        pltpu.VMEM((M, d_state), jnp.float32),            # C
        pltpu.VMEM((M, d_inner), jnp.float32),            # y (scan output)
    ]

    vmem_limit = int(min(vmem_cap,
                         _vmem_estimate(M, D, d_inner, d_state, w_bytes, x.dtype.itemsize)
                         + (8 << 20)))
    vmem_limit = max(vmem_limit, 16 << 20)

    fn = pl.pallas_call(
        functools.partial(mamba_block_kernel, seq_len=L, unroll_limit=unroll_limit),
        grid=grid,
        in_specs=in_specs,
        out_specs=out_specs,
        out_shape=out_shape,
        scratch_shapes=scratch_shapes,
        compiler_params=pltpu.CompilerParams(
            dimension_semantics=("parallel",),
            vmem_limit_bytes=vmem_limit,
        ),
    )
    out_tm = fn(x_tm, *weight_list)
    out = out_tm.reshape(nblk, L, Bblk, D).transpose(0, 2, 1, 3).reshape(Bsz, L, D)
    return out, x


# ----------------------------------------------------------------------------------------------
# Parameters + pure-JAX reference (same math as mamba_ssm Block + selective_scan_ref)
# ----------------------------------------------------------------------------------------------
def init_params(key, d_model, d_state=16, d_conv=4, expand=2):
    d_inner = expand * d_model
    dt_rank = (d_model + 15) // 16
    ks = jax.random.split(key, 8)
    f32 = jnp.float32
    p = {}
    p["ln_w"] = jnp.ones((1, d_model), f32)
    p["ln_b"] = jnp.zeros((1, d_model), f32)
    p["w_in"] = 0.05 * jax.random.normal(ks[0], (d_model, 2 * d_inner), f32)      # in_proj.weight.T
    p["conv_w"] = 0.3 * jax.random.normal(ks[1], (d_conv, d_inner), f32)          # conv1d weight (k, c)
    p["conv_b"] = 0.1 * jax.random.normal(ks[2], (1, d_inner), f32)
    p["w_xproj"] = 0.05 * jax.random.normal(ks[3], (d_inner, dt_rank + 2 * d_state), f32)
    p["w_dt"] = 0.1 * jax.random.normal(ks[4], (dt_rank, d_inner), f32)           # dt_proj.weight.T
    p["dt_bias"] = 0.1 * jax.random.normal(ks[5], (1, d_inner), f32) - 2.0
    A = -jnp.tile(jnp.arange(1, d_state + 1, dtype=f32)[None, :], (d_inner, 1))   # A = -exp(A_log)
    p["A_T"] = jnp.transpose(A)                                                   # (d_state, d_inner)
    p["D"] = jnp.ones((1, d_inner), f32)
    p["w_out"] = 0.05 * jax.random.normal(ks[6], (d_inner, d_model), f32)         # out_proj.weight.T
    return p


def ref_forward(x, p, d_state=16, d_conv=4):
    Bsz, L, D = x.shape
    d_inner = p["D"].shape[1]
    dt_rank = p["w_dt"].shape[0]
    hp = jax.lax.Precision.HIGHEST
    mean = jnp.mean(x, -1, keepdims=True)
    var = jnp.mean((x - mean) ** 2, -1, keepdims=True)
    xn = (x - mean) / jnp.sqrt(var + 1e-5) * p["ln_w"][0] + p["ln_b"][0]
    xz = jnp.dot(xn, p["w_in"], precision=hp)
    xp_, z = xz[..., :d_inner], xz[..., d_inner:]
    xpad = jnp.pad(xp_, ((0, 0), (d_conv - 1, 0), (0, 0)))
    xc = jnp.zeros((Bsz, L, d_inner), jnp.float32) + p["conv_b"][0]
    for k in range(d_conv):
        xc = xc + p["conv_w"][k] * xpad[:, k:k + L, :]
    xc = xc * jax.nn.sigmoid(xc)
    xdbl = jnp.dot(xc, p["w_xproj"], precision=hp)
    dt = jnp.dot(xdbl[..., :dt_rank], p["w_dt"], precision=hp) + p["dt_bias"][0]
    delta = jax.nn.softplus(dt)
    Bm = xdbl[..., dt_rank:dt_rank + d_state]
    Cm = xdbl[..., dt_rank + d_state:]
    A = jnp.transpose(p["A_T"])
    h = jnp.zeros((Bsz, d_inner, d_state), jnp.float32)
    ys = []
    for t in range(L):
        dA = jnp.exp(delta[:, t, :, None] * A[None])
        dBu = delta[:, t, :, None] * Bm[:, t, None, :] * xc[:, t, :, None]
        h = dA * h + dBu
        ys.append(jnp.einsum("bds,bs->bd", h, Cm[:, t, :], precision=hp))
    y = jnp.stack(ys, axis=1)
    y = y + xc * p["D"][0]
    y = y * (z * jax.nn.sigmoid(z))
    out = jnp.dot(y, p["w_out"], precision=hp)
    return out, x


if __name__ == "__main__":
    d_model = 128
    Bsz, L = 2, 8
    key = jax.random.PRNGKey(0)
    kx, kp = jax.random.split(key)
    x = jax.random.normal(kx, (Bsz, L, d_model), jnp.float32)
    params = init_params(kp, d_model)

    # Default path: bf16 MXU operands, f32 element-wise math.
    out, residual = mamba_layer_forward(x, params)
    jax.block_until_ready((out, residual))

    ref_out, ref_res = ref_forward(x, params)
    assert out.shape == (Bsz, L, d_model) and residual.shape == (Bsz, L, d_model)
    np.testing.assert_allclose(np.asarray(residual), np.asarray(ref_res), rtol=1e-5, atol=1e-5)
    np.testing.assert_allclose(np.asarray(out), np.asarray(ref_out), rtol=1e-1, atol=3e-2)

    # Full-f32 matmul path (tighter tolerance).
    out_f32, _ = mamba_layer_forward(x, params, matmul_dtype=jnp.float32)
    jax.block_until_ready(out_f32)
    np.testing.assert_allclose(np.asarray(out_f32), np.asarray(ref_out), rtol=2e-2, atol=1e-2)

    print("KERNEL_OK")
</pallas_src>

<mosaic_0001>
module attributes {stable_mosaic.version = 11 : i64} {
  func.func @mamba_block_kernel(%arg0: i32, %arg1: memref<16x128xf32, #tpu.memory_space<vmem>>, %arg2: memref<1x128xf32, #tpu.memory_space<vmem>>, %arg3: memref<1x128xf32, #tpu.memory_space<vmem>>, %arg4: memref<128x512xbf16, #tpu.memory_space<vmem>>, %arg5: memref<4x256xf32, #tpu.memory_space<vmem>>, %arg6: memref<1x256xf32, #tpu.memory_space<vmem>>, %arg7: memref<256x288xbf16, #tpu.memory_space<vmem>>, %arg8: memref<1x256xf32, #tpu.memory_space<vmem>>, %arg9: memref<16x256xf32, #tpu.memory_space<vmem>>, %arg10: memref<1x256xf32, #tpu.memory_space<vmem>>, %arg11: memref<256x128xbf16, #tpu.memory_space<vmem>>, %arg12: memref<16x128xf32, #tpu.memory_space<vmem>>, %arg13: memref<16x16x256xf32, #tpu.memory_space<vmem>>, %arg14: memref<16x16x256xf32, #tpu.memory_space<vmem>>, %arg15: memref<16x16xf32, #tpu.memory_space<vmem>>, %arg16: memref<16x256xf32, #tpu.memory_space<vmem>>) attributes {dimension_semantics = [#tpu.dimension_semantics<parallel>], iteration_bounds = array<i64: 1>, scalar_prefetch = 0 : i64, scratch_operands = 4 : i64, tpu.core_type = #tpu.core_type<tc>, window_params = [{transform_indices = @transform_0, window_bounds = array<i64: 16, 128>}, {pipeline_mode = #tpu.pipeline_mode<synchronous>, transform_indices = @transform_1, window_bounds = array<i64: 1, 128>}, {pipeline_mode = #tpu.pipeline_mode<synchronous>, transform_indices = @transform_2, window_bounds = array<i64: 1, 128>}, {pipeline_mode = #tpu.pipeline_mode<synchronous>, transform_indices = @transform_3, window_bounds = array<i64: 128, 512>}, {pipeline_mode = #tpu.pipeline_mode<synchronous>, transform_indices = @transform_4, window_bounds = array<i64: 4, 256>}, {pipeline_mode = #tpu.pipeline_mode<synchronous>, transform_indices = @transform_5, window_bounds = array<i64: 1, 256>}, {pipeline_mode = #tpu.pipeline_mode<synchronous>, transform_indices = @transform_6, window_bounds = array<i64: 256, 288>}, {pipeline_mode = #tpu.pipeline_mode<synchronous>, transform_indices = @transform_7, window_bounds = array<i64: 1, 256>}, {pipeline_mode = #tpu.pipeline_mode<synchronous>, transform_indices = @transform_8, window_bounds = array<i64: 16, 256>}, {pipeline_mode = #tpu.pipeline_mode<synchronous>, transform_indices = @transform_9, window_bounds = array<i64: 1, 256>}, {pipeline_mode = #tpu.pipeline_mode<synchronous>, transform_indices = @transform_10, window_bounds = array<i64: 256, 128>}, {transform_indices = @transform_11, window_bounds = array<i64: 16, 128>}]} {
    %c0 = arith.constant 0 : index
    %c0_0 = arith.constant 0 : index
    %0 = vector.load %arg1[%c0, %c0_0] : memref<16x128xf32, #tpu.memory_space<vmem>>, vector<16x128xf32>
    %cst = arith.constant dense<0.000000e+00> : vector<16xf32>
    %1 = vector.multi_reduction <add>, %0, %cst [1] : vector<16x128xf32> to vector<16xf32>
    %2 = vector.shape_cast %1 : vector<16xf32> to vector<16x1xf32>
    %cst_1 = arith.constant 1.280000e+02 : f32
    %3 = vector.broadcast %cst_1 : f32 to vector<16x1xf32>
    %4 = arith.divf %2, %3 : vector<16x1xf32>
    %5 = vector.broadcast %4 : vector<16x1xf32> to vector<16x128xf32>
    %6 = arith.subf %0, %5 : vector<16x128xf32>
    %7 = arith.mulf %6, %6 : vector<16x128xf32>
    %cst_2 = arith.constant dense<0.000000e+00> : vector<16xf32>
    %8 = vector.multi_reduction <add>, %7, %cst_2 [1] : vector<16x128xf32> to vector<16xf32>
    %9 = vector.shape_cast %8 : vector<16xf32> to vector<16x1xf32>
    %cst_3 = arith.constant 1.280000e+02 : f32
    %10 = vector.broadcast %cst_3 : f32 to vector<16x1xf32>
    %11 = arith.divf %9, %10 : vector<16x1xf32>
    %12 = vector.broadcast %4 : vector<16x1xf32> to vector<16x128xf32>
    %13 = arith.subf %0, %12 : vector<16x128xf32>
    %cst_4 = arith.constant 9.99999974E-6 : f32
    %14 = vector.broadcast %cst_4 : f32 to vector<16x1xf32>
    %15 = arith.addf %11, %14 : vector<16x1xf32>
    %16 = math.rsqrt %15 : vector<16x1xf32>
    %17 = vector.broadcast %16 : vector<16x1xf32> to vector<16x128xf32>
    %18 = arith.mulf %13, %17 : vector<16x128xf32>
    %c0_5 = arith.constant 0 : index
    %c0_6 = arith.constant 0 : index
    %19 = vector.load %arg2[%c0_5, %c0_6] : memref<1x128xf32, #tpu.memory_space<vmem>>, vector<1x128xf32>
    %20 = vector.broadcast %19 : vector<1x128xf32> to vector<16x128xf32>
    %21 = arith.mulf %18, %20 : vector<16x128xf32>
    %c0_7 = arith.constant 0 : index
    %c0_8 = arith.constant 0 : index
    %22 = vector.load %arg3[%c0_7, %c0_8] : memref<1x128xf32, #tpu.memory_space<vmem>>, vector<1x128xf32>
    %23 = vector.broadcast %22 : vector<1x128xf32> to vector<16x128xf32>
    %24 = arith.addf %21, %23 : vector<16x128xf32>
    %c0_9 = arith.constant 0 : index
    %c0_10 = arith.constant 0 : index
    %25 = vector.load %arg4[%c0_9, %c0_10] : memref<128x512xbf16, #tpu.memory_space<vmem>>, vector<128x512xbf16>
    %26 = arith.truncf %24 : vector<16x128xf32> to vector<16x128xbf16>
    %cst_11 = arith.constant dense<0.000000e+00> : vector<16x512xf32>
    %27 = tpu.matmul %26, %25, %cst_11 {dimension_numbers = #tpu.dot_dimension_numbers<[1], [0], [0], [1], [0, 0, 1, 1], [], []>} : vector<16x128xbf16>, vector<128x512xbf16>, vector<16x512xf32> -> vector<16x512xf32>
    %28 = vector.extract_strided_slice %27 {offsets = [0, 0], sizes = [16, 256], strides = [1, 1]} : vector<16x512xf32> to vector<16x256xf32>
    %29 = vector.extract_strided_slice %27 {offsets = [0, 256], sizes = [16, 256], strides = [1, 1]} : vector<16x512xf32> to vector<16x256xf32>
    %cst_12 = arith.constant 0.000000e+00 : f32
    %30 = vector.broadcast %cst_12 : f32 to vector<6x256xf32>
    %31 = tpu.concatenate %30, %28 in 0 : vector<6x256xf32>, vector<16x256xf32> -> vector<22x256xf32>
    %cst_13 = arith.constant 0.000000e+00 : f32
    %32 = vector.broadcast %cst_13 : f32 to vector<16x256xf32>
    %c0_14 = arith.constant 0 : index
    %c0_15 = arith.constant 0 : index
    %33 = vector.load %arg6[%c0_14, %c0_15] : memref<1x256xf32, #tpu.memory_space<vmem>>, vector<1x256xf32>
    %34 = vector.broadcast %33 : vector<1x256xf32> to vector<16x256xf32>
    %35 = arith.addf %32, %34 : vector<16x256xf32>
    %c0_16 = arith.constant 0 : index
    %c0_17 = arith.constant 0 : index
    %36 = vector.load %arg5[%c0_16, %c0_17] : memref<4x256xf32, #tpu.memory_space<vmem>>, vector<1x256xf32>
    %37 = vector.extract_strided_slice %31 {offsets = [0, 0], sizes = [16, 256], strides = [1, 1]} : vector<22x256xf32> to vector<16x256xf32>
    %38 = vector.broadcast %36 : vector<1x256xf32> to vector<16x256xf32>
    %39 = arith.mulf %38, %37 : vector<16x256xf32>
    %40 = arith.addf %35, %39 : vector<16x256xf32>
    %c1 = arith.constant 1 : index
    %c0_18 = arith.constant 0 : index
    %41 = vector.load %arg5[%c1, %c0_18] : memref<4x256xf32, #tpu.memory_space<vmem>>, vector<1x256xf32>
    %42 = vector.extract_strided_slice %31 {offsets = [2, 0], sizes = [16, 256], strides = [1, 1]} : vector<22x256xf32> to vector<16x256xf32>
    %43 = vector.broadcast %41 : vector<1x256xf32> to vector<16x256xf32>
    %44 = arith.mulf %43, %42 : vector<16x256xf32>
    %45 = arith.addf %40, %44 : vector<16x256xf32>
    %c2 = arith.constant 2 : index
    %c0_19 = arith.constant 0 : index
    %46 = vector.load %arg5[%c2, %c0_19] : memref<4x256xf32, #tpu.memory_space<vmem>>, vector<1x256xf32>
    %47 = vector.extract_strided_slice %31 {offsets = [4, 0], sizes = [16, 256], strides = [1, 1]} : vector<22x256xf32> to vector<16x256xf32>
    %48 = vector.broadcast %46 : vector<1x256xf32> to vector<16x256xf32>
    %49 = arith.mulf %48, %47 : vector<16x256xf32>
    %50 = arith.addf %45, %49 : vector<16x256xf32>
    %c3 = arith.constant 3 : index
    %c0_20 = arith.constant 0 : index
    %51 = vector.load %arg5[%c3, %c0_20] : memref<4x256xf32, #tpu.memory_space<vmem>>, vector<1x256xf32>
    %52 = vector.extract_strided_slice %31 {offsets = [6, 0], sizes = [16, 256], strides = [1, 1]} : vector<22x256xf32> to vector<16x256xf32>
    %53 = vector.broadcast %51 : vector<1x256xf32> to vector<16x256xf32>
    %54 = arith.mulf %53, %52 : vector<16x256xf32>
    %55 = arith.addf %50, %54 : vector<16x256xf32>
    %56 = arith.negf %55 : vector<16x256xf32>
    %57 = math.exp %56 : vector<16x256xf32>
    %cst_21 = arith.constant 1.000000e+00 : f32
    %58 = vector.broadcast %cst_21 : f32 to vector<16x256xf32>
    %59 = arith.addf %58, %57 : vector<16x256xf32>
    %60 = arith.divf %58, %59 : vector<16x256xf32>
    %61 = arith.mulf %55, %60 : vector<16x256xf32>
    %c0_22 = arith.constant 0 : index
    %c0_23 = arith.constant 0 : index
    %62 = vector.load %arg7[%c0_22, %c0_23] : memref<256x288xbf16, #tpu.memory_space<vmem>>, vector<256x288xbf16>
    %63 = arith.truncf %61 : vector<16x256xf32> to vector<16x256xbf16>
    %cst_24 = arith.constant dense<0.000000e+00> : vector<16x288xf32>
    %64 = tpu.matmul %63, %62, %cst_24 {dimension_numbers = #tpu.dot_dimension_numbers<[1], [0], [0], [1], [0, 0, 1, 1], [], []>} : vector<16x256xbf16>, vector<256x288xbf16>, vector<16x288xf32> -> vector<16x288xf32>
    %65 = vector.extract_strided_slice %64 {offsets = [0, 0], sizes = [16, 256], strides = [1, 1]} : vector<16x288xf32> to vector<16x256xf32>
    %c0_25 = arith.constant 0 : index
    %c0_26 = arith.constant 0 : index
    %66 = vector.load %arg8[%c0_25, %c0_26] : memref<1x256xf32, #tpu.memory_space<vmem>>, vector<1x256xf32>
    %67 = vector.broadcast %66 : vector<1x256xf32> to vector<16x256xf32>
    %68 = arith.addf %65, %67 : vector<16x256xf32>
    %cst_27 = arith.constant 0.000000e+00 : f32
    %69 = vector.broadcast %cst_27 : f32 to vector<16x256xf32>
    %70 = arith.maximumf %68, %69 : vector<16x256xf32>
    %71 = vector.broadcast %cst_27 : f32 to vector<16x256xf32>
    %72 = arith.subf %68, %71 : vector<16x256xf32>
    %73 = arith.cmpf one, %72, %72 : vector<16x256xf32>
    %74 = vector.broadcast %cst_27 : f32 to vector<16x256xf32>
    %75 = arith.addf %68, %74 : vector<16x256xf32>
    %76 = math.absf %72 : vector<16x256xf32>
    %cst_28 = arith.constant 0.000000e+00 : f32
    %77 = vector.broadcast %cst_28 : f32 to vector<16x256xf32>
    %78 = arith.subf %77, %76 : vector<16x256xf32>
    %79 = math.exp %78 : vector<16x256xf32>
    %80 = math.log1p %79 : vector<16x256xf32>
    %81 = arith.addf %70, %80 : vector<16x256xf32>
    %82 = arith.select %73, %75, %81 : vector<16x256xi1>, vector<16x256xf32>
    %83 = vector.extract_strided_slice %64 {offsets = [0, 256], sizes = [16, 16], strides = [1, 1]} : vector<16x288xf32> to vector<16x16xf32>
    %84 = vector.extract_strided_slice %64 {offsets = [0, 272], sizes = [16, 16], strides = [1, 1]} : vector<16x288xf32> to vector<16x16xf32>
    %c0_29 = arith.constant 0 : index
    %c0_30 = arith.constant 0 : index
    %85 = vector.load %arg15[%c0_29, %c0_30] : memref<16x16xf32, #tpu.memory_space<vmem>>, vector<16x16xf32>
    tpu.vector_store %arg15[%c0_29, %c0_30], %84 {strides = array<i32>} : memref<16x16xf32, #tpu.memory_space<vmem>>, vector<16x16xf32>,
    %c0_31 = arith.constant 0 : index
    %c0_32 = arith.constant 0 : index
    %86 = vector.load %arg9[%c0_31, %c0_32] : memref<16x256xf32, #tpu.memory_space<vmem>>, vector<16x256xf32>
    %87 = arith.mulf %82, %61 : vector<16x256xf32>
    %88 = vector.extract_strided_slice %86 {offsets = [0, 0], sizes = [1, 256], strides = [1, 1]} : vector<16x256xf32> to vector<1x256xf32>
    %89 = vector.broadcast %88 : vector<1x256xf32> to vector<16x256xf32>
    %90 = arith.mulf %82, %89 : vector<16x256xf32>
    %91 = math.exp %90 : vector<16x256xf32>
    %c0_33 = arith.constant 0 : index
    %c0_34 = arith.constant 0 : index
    %c0_35 = arith.constant 0 : index
    %92 = vector.load %arg13[%c0_33, %c0_34, %c0_35] : memref<16x16x256xf32, #tpu.memory_space<vmem>>, vector<1x16x256xf32>
    %93 = vector.shape_cast %92 : vector<1x16x256xf32> to vector<16x256xf32>
    %94 = vector.shape_cast %91 : vector<16x256xf32> to vector<1x16x256xf32>
    tpu.vector_store %arg13[%c0_33, %c0_34, %c0_35], %94 {strides = array<i32>} : memref<16x16x256xf32, #tpu.memory_space<vmem>>, vector<1x16x256xf32>,
    %95 = vector.extract_strided_slice %83 {offsets = [0, 0], sizes = [16, 1], strides = [1, 1]} : vector<16x16xf32> to vector<16x1xf32>
    %96 = vector.broadcast %95 : vector<16x1xf32> to vector<16x256xf32>
    %97 = arith.mulf %87, %96 : vector<16x256xf32>
    %c0_36 = arith.constant 0 : index
    %c0_37 = arith.constant 0 : index
    %c0_38 = arith.constant 0 : index
    %98 = vector.load %arg14[%c0_36, %c0_37, %c0_38] : memref<16x16x256xf32, #tpu.memory_space<vmem>>, vector<1x16x256xf32>
    %99 = vector.shape_cast %98 : vector<1x16x256xf32> to vector<16x256xf32>
    %100 = vector.shape_cast %97 : vector<16x256xf32> to vector<1x16x256xf32>
    tpu.vector_store %arg14[%c0_36, %c0_37, %c0_38], %100 {strides = array<i32>} : memref<16x16x256xf32, #tpu.memory_space<vmem>>, vector<1x16x256xf32>,
    %101 = vector.extract_strided_slice %86 {offsets = [1, 0], sizes = [1, 256], strides = [1, 1]} : vector<16x256xf32> to vector<1x256xf32>
    %102 = vector.broadcast %101 : vector<1x256xf32> to vector<16x256xf32>
    %103 = arith.mulf %82, %102 : vector<16x256xf32>
    %104 = math.exp %103 : vector<16x256xf32>
    %c1_39 = arith.constant 1 : index
    %c0_40 = arith.constant 0 : index
    %c0_41 = arith.constant 0 : index
    %105 = vector.load %arg13[%c1_39, %c0_40, %c0_41] : memref<16x16x256xf32, #tpu.memory_space<vmem>>, vector<1x16x256xf32>
    %106 = vector.shape_cast %105 : vector<1x16x256xf32> to vector<16x256xf32>
    %107 = vector.shape_cast %104 : vector<16x256xf32> to vector<1x16x256xf32>
    tpu.vector_store %arg13[%c1_39, %c0_40, %c0_41], %107 {strides = array<i32>} : memref<16x16x256xf32, #tpu.memory_space<vmem>>, vector<1x16x256xf32>,
    %108 = vector.extract_strided_slice %83 {offsets = [0, 1], sizes = [16, 1], strides = [1, 1]} : vector<16x16xf32> to vector<16x1xf32>
    %109 = vector.broadcast %108 : vector<16x1xf32> to vector<16x256xf32>
    %110 = arith.mulf %87, %109 : vector<16x256xf32>
    %c1_42 = arith.constant 1 : index
    %c0_43 = arith.constant 0 : index
    %c0_44 = arith.constant 0 : index
    %111 = vector.load %arg14[%c1_42, %c0_43, %c0_44] : memref<16x16x256xf32, #tpu.memory_space<vmem>>, vector<1x16x256xf32>
    %112 = vector.shape_cast %111 : vector<1x16x256xf32> to vector<16x256xf32>
    %113 = vector.shape_cast %110 : vector<16x256xf32> to vector<1x16x256xf32>
    tpu.vector_store %arg14[%c1_42, %c0_43, %c0_44], %113 {strides = array<i32>} : memref<16x16x256xf32, #tpu.memory_space<vmem>>, vector<1x16x256xf32>,
    %114 = vector.extract_strided_slice %86 {offsets = [2, 0], sizes = [1, 256], strides = [1, 1]} : vector<16x256xf32> to vector<1x256xf32>
    %115 = vector.broadcast %114 : vector<1x256xf32> to vector<16x256xf32>
    %116 = arith.mulf %82, %115 : vector<16x256xf32>
    %117 = math.exp %116 : vector<16x256xf32>
    %c2_45 = arith.constant 2 : index
    %c0_46 = arith.constant 0 : index
    %c0_47 = arith.constant 0 : index
    %118 = vector.load %arg13[%c2_45, %c0_46, %c0_47] : memref<16x16x256xf32, #tpu.memory_space<vmem>>, vector<1x16x256xf32>
    %119 = vector.shape_cast %118 : vector<1x16x256xf32> to vector<16x256xf32>
    %120 = vector.shape_cast %117 : vector<16x256xf32> to vector<1x16x256xf32>
    tpu.vector_store %arg13[%c2_45, %c0_46, %c0_47], %120 {strides = array<i32>} : memref<16x16x256xf32, #tpu.memory_space<vmem>>, vector<1x16x256xf32>,
    %121 = vector.extract_strided_slice %83 {offsets = [0, 2], sizes = [16, 1], strides = [1, 1]} : vector<16x16xf32> to vector<16x1xf32>
    %122 = vector.broadcast %121 : vector<16x1xf32> to vector<16x256xf32>
    %123 = arith.mulf %87, %122 : vector<16x256xf32>
    %c2_48 = arith.constant 2 : index
    %c0_49 = arith.constant 0 : index
    %c0_50 = arith.constant 0 : index
    %124 = vector.load %arg14[%c2_48, %c0_49, %c0_50] : memref<16x16x256xf32, #tpu.memory_space<vmem>>, vector<1x16x256xf32>
    %125 = vector.shape_cast %124 : vector<1x16x256xf32> to vector<16x256xf32>
    %126 = vector.shape_cast %123 : vector<16x256xf32> to vector<1x16x256xf32>
    tpu.vector_store %arg14[%c2_48, %c0_49, %c0_50], %126 {strides = array<i32>} : memref<16x16x256xf32, #tpu.memory_space<vmem>>, vector<1x16x256xf32>,
    %127 = vector.extract_strided_slice %86 {offsets = [3, 0], sizes = [1, 256], strides = [1, 1]} : vector<16x256xf32> to vector<1x256xf32>
    %128 = vector.broadcast %127 : vector<1x256xf32> to vector<16x256xf32>
    %129 = arith.mulf %82, %128 : vector<16x256xf32>
    %130 = math.exp %129 : vector<16x256xf32>
    %c3_51 = arith.constant 3 : index
    %c0_52 = arith.constant 0 : index
    %c0_53 = arith.constant 0 : index
    %131 = vector.load %arg13[%c3_51, %c0_52, %c0_53] : memref<16x16x256xf32, #tpu.memory_space<vmem>>, vector<1x16x256xf32>
    %132 = vector.shape_cast %131 : vector<1x16x256xf32> to vector<16x256xf32>
    %133 = vector.shape_cast %130 : vector<16x256xf32> to vector<1x16x256xf32>
    tpu.vector_store %arg13[%c3_51, %c0_52, %c0_53], %133 {strides = array<i32>} : memref<16x16x256xf32, #tpu.memory_space<vmem>>, vector<1x16x256xf32>,
    %134 = vector.extract_strided_slice %83 {offsets = [0, 3], sizes = [16, 1], strides = [1, 1]} : vector<16x16xf32> to vector<16x1xf32>
    %135 = vector.broadcast %134 : vector<16x1xf32> to vector<16x256xf32>
    %136 = arith.mulf %87, %135 : vector<16x256xf32>
    %c3_54 = arith.constant 3 : index
    %c0_55 = arith.constant 0 : index
    %c0_56 = arith.constant 0 : index
    %137 = vector.load %arg14[%c3_54, %c0_55, %c0_56] : memref<16x16x256xf32, #tpu.memory_space<vmem>>, vector<1x16x256xf32>
    %138 = vector.shape_cast %137 : vector<1x16x256xf32> to vector<16x256xf32>
    %139 = vector.shape_cast %136 : vector<16x256xf32> to vector<1x16x256xf32>
    tpu.vector_store %arg14[%c3_54, %c0_55, %c0_56], %139 {strides = array<i32>} : memref<16x16x256xf32, #tpu.memory_space<vmem>>, vector<1x16x256xf32>,
    %140 = vector.extract_strided_slice %86 {offsets = [4, 0], sizes = [1, 256], strides = [1, 1]} : vector<16x256xf32> to vector<1x256xf32>
    %141 = vector.broadcast %140 : vector<1x256xf32> to vector<16x256xf32>
    %142 = arith.mulf %82, %141 : vector<16x256xf32>
    %143 = math.exp %142 : vector<16x256xf32>
    %c4 = arith.constant 4 : index
    %c0_57 = arith.constant 0 : index
    %c0_58 = arith.constant 0 : index
    %144 = vector.load %arg13[%c4, %c0_57, %c0_58] : memref<16x16x256xf32, #tpu.memory_space<vmem>>, vector<1x16x256xf32>
    %145 = vector.shape_cast %144 : vector<1x16x256xf32> to vector<16x256xf32>
    %146 = vector.shape_cast %143 : vector<16x256xf32> to vector<1x16x256xf32>
    tpu.vector_store %arg13[%c4, %c0_57, %c0_58], %146 {strides = array<i32>} : memref<16x16x256xf32, #tpu.memory_space<vmem>>, vector<1x16x256xf32>,
    %147 = vector.extract_strided_slice %83 {offsets = [0, 4], sizes = [16, 1], strides = [1, 1]} : vector<16x16xf32> to vector<16x1xf32>
    %148 = vector.broadcast %147 : vector<16x1xf32> to vector<16x256xf32>
    %149 = arith.mulf %87, %148 : vector<16x256xf32>
    %c4_59 = arith.constant 4 : index
    %c0_60 = arith.constant 0 : index
    %c0_61 = arith.constant 0 : index
    %150 = vector.load %arg14[%c4_59, %c0_60, %c0_61] : memref<16x16x256xf32, #tpu.memory_space<vmem>>, vector<1x16x256xf32>
    %151 = vector.shape_cast %150 : vector<1x16x256xf32> to vector<16x256xf32>
    %152 = vector.shape_cast %149 : vector<16x256xf32> to vector<1x16x256xf32>
    tpu.vector_store %arg14[%c4_59, %c0_60, %c0_61], %152 {strides = array<i32>} : memref<16x16x256xf32, #tpu.memory_space<vmem>>, vector<1x16x256xf32>,
    %153 = vector.extract_strided_slice %86 {offsets = [5, 0], sizes = [1, 256], strides = [1, 1]} : vector<16x256xf32> to vector<1x256xf32>
    %154 = vector.broadcast %153 : vector<1x256xf32> to vector<16x256xf32>
    %155 = arith.mulf %82, %154 : vector<16x256xf32>
    %156 = math.exp %155 : vector<16x256xf32>
    %c5 = arith.constant 5 : index
    %c0_62 = arith.constant 0 : index
    %c0_63 = arith.constant 0 : index
    %157 = vector.load %arg13[%c5, %c0_62, %c0_63] : memref<16x16x256xf32, #tpu.memory_space<vmem>>, vector<1x16x256xf32>
    %158 = vector.shape_cast %157 : vector<1x16x256xf32> to vector<16x256xf32>
    %159 = vector.shape_cast %156 : vector<16x256xf32> to vector<1x16x256xf32>
    tpu.vector_store %arg13[%c5, %c0_62, %c0_63], %159 {strides = array<i32>} : memref<16x16x256xf32, #tpu.memory_space<vmem>>, vector<1x16x256xf32>,
    %160 = vector.extract_strided_slice %83 {offsets = [0, 5], sizes = [16, 1], strides = [1, 1]} : vector<16x16xf32> to vector<16x1xf32>
    %161 = vector.broadcast %160 : vector<16x1xf32> to vector<16x256xf32>
    %162 = arith.mulf %87, %161 : vector<16x256xf32>
    %c5_64 = arith.constant 5 : index
    %c0_65 = arith.constant 0 : index
    %c0_66 = arith.constant 0 : index
    %163 = vector.load %arg14[%c5_64, %c0_65, %c0_66] : memref<16x16x256xf32, #tpu.memory_space<vmem>>, vector<1x16x256xf32>
    %164 = vector.shape_cast %163 : vector<1x16x256xf32> to vector<16x256xf32>
    %165 = vector.shape_cast %162 : vector<16x256xf32> to vector<1x16x256xf32>
    tpu.vector_store %arg14[%c5_64, %c0_65, %c0_66], %165 {strides = array<i32>} : memref<16x16x256xf32, #tpu.memory_space<vmem>>, vector<1x16x256xf32>,
    %166 = vector.extract_strided_slice %86 {offsets = [6, 0], sizes = [1, 256], strides = [1, 1]} : vector<16x256xf32> to vector<1x256xf32>
    %167 = vector.broadcast %166 : vector<1x256xf32> to vector<16x256xf32>
    %168 = arith.mulf %82, %167 : vector<16x256xf32>
    %169 = math.exp %168 : vector<16x256xf32>
    %c6 = arith.constant 6 : index
    %c0_67 = arith.constant 0 : index
    %c0_68 = arith.constant 0 : index
    %170 = vector.load %arg13[%c6, %c0_67, %c0_68] : memref<16x16x256xf32, #tpu.memory_space<vmem>>, vector<1x16x256xf32>
    %171 = vector.shape_cast %170 : vector<1x16x256xf32> to vector<16x256xf32>
    %172 = vector.shape_cast %169 : vector<16x256xf32> to vector<1x16x256xf32>
    tpu.vector_store %arg13[%c6, %c0_67, %c0_68], %172 {strides = array<i32>} : memref<16x16x256xf32, #tpu.memory_space<vmem>>, vector<1x16x256xf32>,
    %173 = vector.extract_strided_slice %83 {offsets = [0, 6], sizes = [16, 1], strides = [1, 1]} : vector<16x16xf32> to vector<16x1xf32>
    %174 = vector.broadcast %173 : vector<16x1xf32> to vector<16x256xf32>
    %175 = arith.mulf %87, %174 : vector<16x256xf32>
    %c6_69 = arith.constant 6 : index
    %c0_70 = arith.constant 0 : index
    %c0_71 = arith.constant 0 : index
    %176 = vector.load %arg14[%c6_69, %c0_70, %c0_71] : memref<16x16x256xf32, #tpu.memory_space<vmem>>, vector<1x16x256xf32>
    %177 = vector.shape_cast %176 : vector<1x16x256xf32> to vector<16x256xf32>
    %178 = vector.shape_cast %175 : vector<16x256xf32> to vector<1x16x256xf32>
    tpu.vector_store %arg14[%c6_69, %c0_70, %c0_71], %178 {strides = array<i32>} : memref<16x16x256xf32, #tpu.memory_space<vmem>>, vector<1x16x256xf32>,
    %179 = vector.extract_strided_slice %86 {offsets = [7, 0], sizes = [1, 256], strides = [1, 1]} : vector<16x256xf32> to vector<1x256xf32>
    %180 = vector.broadcast %179 : vector<1x256xf32> to vector<16x256xf32>
    %181 = arith.mulf %82, %180 : vector<16x256xf32>
    %182 = math.exp %181 : vector<16x256xf32>
    %c7 = arith.constant 7 : index
    %c0_72 = arith.constant 0 : index
    %c0_73 = arith.constant 0 : index
    %183 = vector.load %arg13[%c7, %c0_72, %c0_73] : memref<16x16x256xf32, #tpu.memory_space<vmem>>, vector<1x16x256xf32>
    %184 = vector.shape_cast %183 : vector<1x16x256xf32> to vector<16x256xf32>
    %185 = vector.shape_cast %182 : vector<16x256xf32> to vector<1x16x256xf32>
    tpu.vector_store %arg13[%c7, %c0_72, %c0_73], %185 {strides = array<i32>} : memref<16x16x256xf32, #tpu.memory_space<vmem>>, vector<1x16x256xf32>,
    %186 = vector.extract_strided_slice %83 {offsets = [0, 7], sizes = [16, 1], strides = [1, 1]} : vector<16x16xf32> to vector<16x1xf32>
    %187 = vector.broadcast %186 : vector<16x1xf32> to vector<16x256xf32>
    %188 = arith.mulf %87, %187 : vector<16x256xf32>
    %c7_74 = arith.constant 7 : index
    %c0_75 = arith.constant 0 : index
    %c0_76 = arith.constant 0 : index
    %189 = vector.load %arg14[%c7_74, %c0_75, %c0_76] : memref<16x16x256xf32, #tpu.memory_space<vmem>>, vector<1x16x256xf32>
    %190 = vector.shape_cast %189 : vector<1x16x256xf32> to vector<16x256xf32>
    %191 = vector.shape_cast %188 : vector<16x256xf32> to vector<1x16x256xf32>
    tpu.vector_store %arg14[%c7_74, %c0_75, %c0_76], %191 {strides = array<i32>} : memref<16x16x256xf32, #tpu.memory_space<vmem>>, vector<1x16x256xf32>,
    %192 = vector.extract_strided_slice %86 {offsets = [8, 0], sizes = [1, 256], strides = [1, 1]} : vector<16x256xf32> to vector<1x256xf32>
    %193 = vector.broadcast %192 : vector<1x256xf32> to vector<16x256xf32>
    %194 = arith.mulf %82, %193 : vector<16x256xf32>
    %195 = math.exp %194 : vector<16x256xf32>
    %c8 = arith.constant 8 : index
    %c0_77 = arith.constant 0 : index
    %c0_78 = arith.constant 0 : index
    %196 = vector.load %arg13[%c8, %c0_77, %c0_78] : memref<16x16x256xf32, #tpu.memory_space<vmem>>, vector<1x16x256xf32>
    %197 = vector.shape_cast %196 : vector<1x16x256xf32> to vector<16x256xf32>
    %198 = vector.shape_cast %195 : vector<16x256xf32> to vector<1x16x256xf32>
    tpu.vector_store %arg13[%c8, %c0_77, %c0_78], %198 {strides = array<i32>} : memref<16x16x256xf32, #tpu.memory_space<vmem>>, vector<1x16x256xf32>,
    %199 = vector.extract_strided_slice %83 {offsets = [0, 8], sizes = [16, 1], strides = [1, 1]} : vector<16x16xf32> to vector<16x1xf32>
    %200 = vector.broadcast %199 : vector<16x1xf32> to vector<16x256xf32>
    %201 = arith.mulf %87, %200 : vector<16x256xf32>
    %c8_79 = arith.constant 8 : index
    %c0_80 = arith.constant 0 : index
    %c0_81 = arith.constant 0 : index
    %202 = vector.load %arg14[%c8_79, %c0_80, %c0_81] : memref<16x16x256xf32, #tpu.memory_space<vmem>>, vector<1x16x256xf32>
    %203 = vector.shape_cast %202 : vector<1x16x256xf32> to vector<16x256xf32>
    %204 = vector.shape_cast %201 : vector<16x256xf32> to vector<1x16x256xf32>
    tpu.vector_store %arg14[%c8_79, %c0_80, %c0_81], %204 {strides = array<i32>} : memref<16x16x256xf32, #tpu.memory_space<vmem>>, vector<1x16x256xf32>,
    %205 = vector.extract_strided_slice %86 {offsets = [9, 0], sizes = [1, 256], strides = [1, 1]} : vector<16x256xf32> to vector<1x256xf32>
    %206 = vector.broadcast %205 : vector<1x256xf32> to vector<16x256xf32>
    %207 = arith.mulf %82, %206 : vector<16x256xf32>
    %208 = math.exp %207 : vector<16x256xf32>
    %c9 = arith.constant 9 : index
    %c0_82 = arith.constant 0 : index
    %c0_83 = arith.constant 0 : index
    %209 = vector.load %arg13[%c9, %c0_82, %c0_83] : memref<16x16x256xf32, #tpu.memory_space<vmem>>, vector<1x16x256xf32>
    %210 = vector.shape_cast %209 : vector<1x16x256xf32> to vector<16x256xf32>
    %211 = vector.shape_cast %208 : vector<16x256xf32> to vector<1x16x256xf32>
    tpu.vector_store %arg13[%c9, %c0_82, %c0_83], %211 {strides = array<i32>} : memref<16x16x256xf32, #tpu.memory_space<vmem>>, vector<1x16x256xf32>,
    %212 = vector.extract_strided_slice %83 {offsets = [0, 9], sizes = [16, 1], strides = [1, 1]} : vector<16x16xf32> to vector<16x1xf32>
    %213 = vector.broadcast %212 : vector<16x1xf32> to vector<16x256xf32>
    %214 = arith.mulf %87, %213 : vector<16x256xf32>
    %c9_84 = arith.constant 9 : index
    %c0_85 = arith.constant 0 : index
    %c0_86 = arith.constant 0 : index
    %215 = vector.load %arg14[%c9_84, %c0_85, %c0_86] : memref<16x16x256xf32, #tpu.memory_space<vmem>>, vector<1x16x256xf32>
    %216 = vector.shape_cast %215 : vector<1x16x256xf32> to vector<16x256xf32>
    %217 = vector.shape_cast %214 : vector<16x256xf32> to vector<1x16x256xf32>
    tpu.vector_store %arg14[%c9_84, %c0_85, %c0_86], %217 {strides = array<i32>} : memref<16x16x256xf32, #tpu.memory_space<vmem>>, vector<1x16x256xf32>,
    %218 = vector.extract_strided_slice %86 {offsets = [10, 0], sizes = [1, 256], strides = [1, 1]} : vector<16x256xf32> to vector<1x256xf32>
    %219 = vector.broadcast %218 : vector<1x256xf32> to vector<16x256xf32>
    %220 = arith.mulf %82, %219 : vector<16x256xf32>
    %221 = math.exp %220 : vector<16x256xf32>
    %c10 = arith.constant 10 : index
    %c0_87 = arith.constant 0 : index
    %c0_88 = arith.constant 0 : index
    %222 = vector.load %arg13[%c10, %c0_87, %c0_88] : memref<16x16x256xf32, #tpu.memory_space<vmem>>, vector<1x16x256xf32>
    %223 = vector.shape_cast %222 : vector<1x16x256xf32> to vector<16x256xf32>
    %224 = vector.shape_cast %221 : vector<16x256xf32> to vector<1x16x256xf32>
    tpu.vector_store %arg13[%c10, %c0_87, %c0_88], %224 {strides = array<i32>} : memref<16x16x256xf32, #tpu.memory_space<vmem>>, vector<1x16x256xf32>,
    %225 = vector.extract_strided_slice %83 {offsets = [0, 10], sizes = [16, 1], strides = [1, 1]} : vector<16x16xf32> to vector<16x1xf32>
    %226 = vector.broadcast %225 : vector<16x1xf32> to vector<16x256xf32>
    %227 = arith.mulf %87, %226 : vector<16x256xf32>
    %c10_89 = arith.constant 10 : index
    %c0_90 = arith.constant 0 : index
    %c0_91 = arith.constant 0 : index
    %228 = vector.load %arg14[%c10_89, %c0_90, %c0_91] : memref<16x16x256xf32, #tpu.memory_space<vmem>>, vector<1x16x256xf32>
    %229 = vector.shape_cast %228 : vector<1x16x256xf32> to vector<16x256xf32>
    %230 = vector.shape_cast %227 : vector<16x256xf32> to vector<1x16x256xf32>
    tpu.vector_store %arg14[%c10_89, %c0_90, %c0_91], %230 {strides = array<i32>} : memref<16x16x256xf32, #tpu.memory_space<vmem>>, vector<1x16x256xf32>,
    %231 = vector.extract_strided_slice %86 {offsets = [11, 0], sizes = [1, 256], strides = [1, 1]} : vector<16x256xf32> to vector<1x256xf32>
    %232 = vector.broadcast %231 : vector<1x256xf32> to vector<16x256xf32>
    %233 = arith.mulf %82, %232 : vector<16x256xf32>
    %234 = math.exp %233 : vector<16x256xf32>
    %c11 = arith.constant 11 : index
    %c0_92 = arith.constant 0 : index
    %c0_93 = arith.constant 0 : index
    %235 = vector.load %arg13[%c11, %c0_92, %c0_93] : memref<16x16x256xf32, #tpu.memory_space<vmem>>, vector<1x16x256xf32>
    %236 = vector.shape_cast %235 : vector<1x16x256xf32> to vector<16x256xf32>
    %237 = vector.shape_cast %234 : vector<16x256xf32> to vector<1x16x256xf32>
    tpu.vector_store %arg13[%c11, %c0_92, %c0_93], %237 {strides = array<i32>} : memref<16x16x256xf32, #tpu.memory_space<vmem>>, vector<1x16x256xf32>,
    %238 = vector.extract_strided_slice %83 {offsets = [0, 11], sizes = [16, 1], strides = [1, 1]} : vector<16x16xf32> to vector<16x1xf32>
    %239 = vector.broadcast %238 : vector<16x1xf32> to vector<16x256xf32>
    %240 = arith.mulf %87, %239 : vector<16x256xf32>
    %c11_94 = arith.constant 11 : index
    %c0_95 = arith.constant 0 : index
    %c0_96 = arith.constant 0 : index
    %241 = vector.load %arg14[%c11_94, %c0_95, %c0_96] : memref<16x16x256xf32, #tpu.memory_space<vmem>>, vector<1x16x256xf32>
    %242 = vector.shape_cast %241 : vector<1x16x256xf32> to vector<16x256xf32>
    %243 = vector.shape_cast %240 : vector<16x256xf32> to vector<1x16x256xf32>
    tpu.vector_store %arg14[%c11_94, %c0_95, %c0_96], %243 {strides = array<i32>} : memref<16x16x256xf32, #tpu.memory_space<vmem>>, vector<1x16x256xf32>,
    %244 = vector.extract_strided_slice %86 {offsets = [12, 0], sizes = [1, 256], strides = [1, 1]} : vector<16x256xf32> to vector<1x256xf32>
    %245 = vector.broadcast %244 : vector<1x256xf32> to vector<16x256xf32>
    %246 = arith.mulf %82, %245 : vector<16x256xf32>
    %247 = math.exp %246 : vector<16x256xf32>
    %c12 = arith.constant 12 : index
    %c0_97 = arith.constant 0 : index
    %c0_98 = arith.constant 0 : index
    %248 = vector.load %arg13[%c12, %c0_97, %c0_98] : memref<16x16x256xf32, #tpu.memory_space<vmem>>, vector<1x16x256xf32>
    %249 = vector.shape_cast %248 : vector<1x16x256xf32> to vector<16x256xf32>
    %250 = vector.shape_cast %247 : vector<16x256xf32> to vector<1x16x256xf32>
    tpu.vector_store %arg13[%c12, %c0_97, %c0_98], %250 {strides = array<i32>} : memref<16x16x256xf32, #tpu.memory_space<vmem>>, vector<1x16x256xf32>,
    %251 = vector.extract_strided_slice %83 {offsets = [0, 12], sizes = [16, 1], strides = [1, 1]} : vector<16x16xf32> to vector<16x1xf32>
    %252 = vector.broadcast %251 : vector<16x1xf32> to vector<16x256xf32>
    %253 = arith.mulf %87, %252 : vector<16x256xf32>
    %c12_99 = arith.constant 12 : index
    %c0_100 = arith.constant 0 : index
    %c0_101 = arith.constant 0 : index
    %254 = vector.load %arg14[%c12_99, %c0_100, %c0_101] : memref<16x16x256xf32, #tpu.memory_space<vmem>>, vector<1x16x256xf32>
    %255 = vector.shape_cast %254 : vector<1x16x256xf32> to vector<16x256xf32>
    %256 = vector.shape_cast %253 : vector<16x256xf32> to vector<1x16x256xf32>
    tpu.vector_store %arg14[%c12_99, %c0_100, %c0_101], %256 {strides = array<i32>} : memref<16x16x256xf32, #tpu.memory_space<vmem>>, vector<1x16x256xf32>,
    %257 = vector.extract_strided_slice %86 {offsets = [13, 0], sizes = [1, 256], strides = [1, 1]} : vector<16x256xf32> to vector<1x256xf32>
    %258 = vector.broadcast %257 : vector<1x256xf32> to vector<16x256xf32>
    %259 = arith.mulf %82, %258 : vector<16x256xf32>
    %260 = math.exp %259 : vector<16x256xf32>
    %c13 = arith.constant 13 : index
    %c0_102 = arith.constant 0 : index
    %c0_103 = arith.constant 0 : index
    %261 = vector.load %arg13[%c13, %c0_102, %c0_103] : memref<16x16x256xf32, #tpu.memory_space<vmem>>, vector<1x16x256xf32>
    %262 = vector.shape_cast %261 : vector<1x16x256xf32> to vector<16x256xf32>
    %263 = vector.shape_cast %260 : vector<16x256xf32> to vector<1x16x256xf32>
    tpu.vector_store %arg13[%c13, %c0_102, %c0_103], %263 {strides = array<i32>} : memref<16x16x256xf32, #tpu.memory_space<vmem>>, vector<1x16x256xf32>,
    %264 = vector.extract_strided_slice %83 {offsets = [0, 13], sizes = [16, 1], strides = [1, 1]} : vector<16x16xf32> to vector<16x1xf32>
    %265 = vector.broadcast %264 : vector<16x1xf32> to vector<16x256xf32>
    %266 = arith.mulf %87, %265 : vector<16x256xf32>
    %c13_104 = arith.constant 13 : index
    %c0_105 = arith.constant 0 : index
    %c0_106 = arith.constant 0 : index
    %267 = vector.load %arg14[%c13_104, %c0_105, %c0_106] : memref<16x16x256xf32, #tpu.memory_space<vmem>>, vector<1x16x256xf32>
    %268 = vector.shape_cast %267 : vector<1x16x256xf32> to vector<16x256xf32>
    %269 = vector.shape_cast %266 : vector<16x256xf32> to vector<1x16x256xf32>
    tpu.vector_store %arg14[%c13_104, %c0_105, %c0_106], %269 {strides = array<i32>} : memref<16x16x256xf32, #tpu.memory_space<vmem>>, vector<1x16x256xf32>,
    %270 = vector.extract_strided_slice %86 {offsets = [14, 0], sizes = [1, 256], strides = [1, 1]} : vector<16x256xf32> to vector<1x256xf32>
    %271 = vector.broadcast %270 : vector<1x256xf32> to vector<16x256xf32>
    %272 = arith.mulf %82, %271 : vector<16x256xf32>
    %273 = math.exp %272 : vector<16x256xf32>
    %c14 = arith.constant 14 : index
    %c0_107 = arith.constant 0 : index
    %c0_108 = arith.constant 0 : index
    %274 = vector.load %arg13[%c14, %c0_107, %c0_108] : memref<16x16x256xf32, #tpu.memory_space<vmem>>, vector<1x16x256xf32>
    %275 = vector.shape_cast %274 : vector<1x16x256xf32> to vector<16x256xf32>
    %276 = vector.shape_cast %273 : vector<16x256xf32> to vector<1x16x256xf32>
    tpu.vector_store %arg13[%c14, %c0_107, %c0_108], %276 {strides = array<i32>} : memref<16x16x256xf32, #tpu.memory_space<vmem>>, vector<1x16x256xf32>,
    %277 = vector.extract_strided_slice %83 {offsets = [0, 14], sizes = [16, 1], strides = [1, 1]} : vector<16x16xf32> to vector<16x1xf32>
    %278 = vector.broadcast %277 : vector<16x1xf32> to vector<16x256xf32>
    %279 = arith.mulf %87, %278 : vector<16x256xf32>
    %c14_109 = arith.constant 14 : index
    %c0_110 = arith.constant 0 : index
    %c0_111 = arith.constant 0 : index
    %280 = vector.load %arg14[%c14_109, %c0_110, %c0_111] : memref<16x16x256xf32, #tpu.memory_space<vmem>>, vector<1x16x256xf32>
    %281 = vector.shape_cast %280 : vector<1x16x256xf32> to vector<16x256xf32>
    %282 = vector.shape_cast %279 : vector<16x256xf32> to vector<1x16x256xf32>
    tpu.vector_store %arg14[%c14_109, %c0_110, %c0_111], %282 {strides = array<i32>} : memref<16x16x256xf32, #tpu.memory_space<vmem>>, vector<1x16x256xf32>,
    %283 = vector.extract_strided_slice %86 {offsets = [15, 0], sizes = [1, 256], strides = [1, 1]} : vector<16x256xf32> to vector<1x256xf32>
    %284 = vector.broadcast %283 : vector<1x256xf32> to vector<16x256xf32>
    %285 = arith.mulf %82, %284 : vector<16x256xf32>
    %286 = math.exp %285 : vector<16x256xf32>
    %c15 = arith.constant 15 : index
    %c0_112 = arith.constant 0 : index
    %c0_113 = arith.constant 0 : index
    %287 = vector.load %arg13[%c15, %c0_112, %c0_113] : memref<16x16x256xf32, #tpu.memory_space<vmem>>, vector<1x16x256xf32>
    %288 = vector.shape_cast %287 : vector<1x16x256xf32> to vector<16x256xf32>
    %289 = vector.shape_cast %286 : vector<16x256xf32> to vector<1x16x256xf32>
    tpu.vector_store %arg13[%c15, %c0_112, %c0_113], %289 {strides = array<i32>} : memref<16x16x256xf32, #tpu.memory_space<vmem>>, vector<1x16x256xf32>,
    %290 = vector.extract_strided_slice %83 {offsets = [0, 15], sizes = [16, 1], strides = [1, 1]} : vector<16x16xf32> to vector<16x1xf32>
    %291 = vector.broadcast %290 : vector<16x1xf32> to vector<16x256xf32>
    %292 = arith.mulf %87, %291 : vector<16x256xf32>
    %c15_114 = arith.constant 15 : index
    %c0_115 = arith.constant 0 : index
    %c0_116 = arith.constant 0 : index
    %293 = vector.load %arg14[%c15_114, %c0_115, %c0_116] : memref<16x16x256xf32, #tpu.memory_space<vmem>>, vector<1x16x256xf32>
    %294 = vector.shape_cast %293 : vector<1x16x256xf32> to vector<16x256xf32>
    %295 = vector.shape_cast %292 : vector<16x256xf32> to vector<1x16x256xf32>
    tpu.vector_store %arg14[%c15_114, %c0_115, %c0_116], %295 {strides = array<i32>} : memref<16x16x256xf32, #tpu.memory_space<vmem>>, vector<1x16x256xf32>,
    %cst_117 = arith.constant 0.000000e+00 : f32
    %296 = vector.broadcast %cst_117 : f32 to vector<16x2x256xf32>
    %c0_118 = arith.constant 0 : index
    %c0_119 = arith.constant 0 : index
    %c0_120 = arith.constant 0 : index
    %297 = vector.load %arg13[%c0_118, %c0_119, %c0_120] : memref<16x16x256xf32, #tpu.memory_space<vmem>>, vector<16x2x256xf32>
    %298 = arith.mulf %297, %296 : vector<16x2x256xf32>
    %c0_121 = arith.constant 0 : index
    %c0_122 = arith.constant 0 : index
    %c0_123 = arith.constant 0 : index
    %299 = vector.load %arg14[%c0_121, %c0_122, %c0_123] : memref<16x16x256xf32, #tpu.memory_space<vmem>>, vector<16x2x256xf32>
    %300 = arith.addf %298, %299 : vector<16x2x256xf32>
    %c0_124 = arith.constant 0 : index
    %c0_125 = arith.constant 0 : index
    %301 = vector.load %arg15[%c0_124, %c0_125] : memref<16x16xf32, #tpu.memory_space<vmem>>, vector<2x16xf32>
    %302 = vector.extract_strided_slice %301 {offsets = [0, 0], sizes = [2, 1], strides = [1, 1]} : vector<2x16xf32> to vector<2x1xf32>
    %303 = vector.extract_strided_slice %300 {offsets = [0, 0, 0], sizes = [1, 2, 256], strides = [1, 1, 1]} : vector<16x2x256xf32> to vector<1x2x256xf32>
    %304 = vector.shape_cast %303 : vector<1x2x256xf32> to vector<2x256xf32>
    %305 = vector.broadcast %302 : vector<2x1xf32> to vector<2x256xf32>
    %306 = arith.mulf %305, %304 : vector<2x256xf32>
    %307 = vector.extract_strided_slice %301 {offsets = [0, 1], sizes = [2, 1], strides = [1, 1]} : vector<2x16xf32> to vector<2x1xf32>
    %308 = vector.extract_strided_slice %300 {offsets = [1, 0, 0], sizes = [1, 2, 256], strides = [1, 1, 1]} : vector<16x2x256xf32> to vector<1x2x256xf32>
    %309 = vector.shape_cast %308 : vector<1x2x256xf32> to vector<2x256xf32>
    %310 = vector.broadcast %307 : vector<2x1xf32> to vector<2x256xf32>
    %311 = arith.mulf %310, %309 : vector<2x256xf32>
    %312 = arith.addf %306, %311 : vector<2x256xf32>
    %313 = vector.extract_strided_slice %301 {offsets = [0, 2], sizes = [2, 1], strides = [1, 1]} : vector<2x16xf32> to vector<2x1xf32>
    %314 = vector.extract_strided_slice %300 {offsets = [2, 0, 0], sizes = [1, 2, 256], strides = [1, 1, 1]} : vector<16x2x256xf32> to vector<1x2x256xf32>
    %315 = vector.shape_cast %314 : vector<1x2x256xf32> to vector<2x256xf32>
    %316 = vector.broadcast %313 : vector<2x1xf32> to vector<2x256xf32>
    %317 = arith.mulf %316, %315 : vector<2x256xf32>
    %318 = arith.addf %312, %317 : vector<2x256xf32>
    %319 = vector.extract_strided_slice %301 {offsets = [0, 3], sizes = [2, 1], strides = [1, 1]} : vector<2x16xf32> to vector<2x1xf32>
    %320 = vector.extract_strided_slice %300 {offsets = [3, 0, 0], sizes = [1, 2, 256], strides = [1, 1, 1]} : vector<16x2x256xf32> to vector<1x2x256xf32>
    %321 = vector.shape_cast %320 : vector<1x2x256xf32> to vector<2x256xf32>
    %322 = vector.broadcast %319 : vector<2x1xf32> to vector<2x256xf32>
    %323 = arith.mulf %322, %321 : vector<2x256xf32>
    %324 = arith.addf %318, %323 : vector<2x256xf32>
    %325 = vector.extract_strided_slice %301 {offsets = [0, 4], sizes = [2, 1], strides = [1, 1]} : vector<2x16xf32> to vector<2x1xf32>
    %326 = vector.extract_strided_slice %300 {offsets = [4, 0, 0], sizes = [1, 2, 256], strides = [1, 1, 1]} : vector<16x2x256xf32> to vector<1x2x256xf32>
    %327 = vector.shape_cast %326 : vector<1x2x256xf32> to vector<2x256xf32>
    %328 = vector.broadcast %325 : vector<2x1xf32> to vector<2x256xf32>
    %329 = arith.mulf %328, %327 : vector<2x256xf32>
    %330 = arith.addf %324, %329 : vector<2x256xf32>
    %331 = vector.extract_strided_slice %301 {offsets = [0, 5], sizes = [2, 1], strides = [1, 1]} : vector<2x16xf32> to vector<2x1xf32>
    %332 = vector.extract_strided_slice %300 {offsets = [5, 0, 0], sizes = [1, 2, 256], strides = [1, 1, 1]} : vector<16x2x256xf32> to vector<1x2x256xf32>
    %333 = vector.shape_cast %332 : vector<1x2x256xf32> to vector<2x256xf32>
    %334 = vector.broadcast %331 : vector<2x1xf32> to vector<2x256xf32>
    %335 = arith.mulf %334, %333 : vector<2x256xf32>
    %336 = arith.addf %330, %335 : vector<2x256xf32>
    %337 = vector.extract_strided_slice %301 {offsets = [0, 6], sizes = [2, 1], strides = [1, 1]} : vector<2x16xf32> to vector<2x1xf32>
    %338 = vector.extract_strided_slice %300 {offsets = [6, 0, 0], sizes = [1, 2, 256], strides = [1, 1, 1]} : vector<16x2x256xf32> to vector<1x2x256xf32>
    %339 = vector.shape_cast %338 : vector<1x2x256xf32> to vector<2x256xf32>
    %340 = vector.broadcast %337 : vector<2x1xf32> to vector<2x256xf32>
    %341 = arith.mulf %340, %339 : vector<2x256xf32>
    %342 = arith.addf %336, %341 : vector<2x256xf32>
    %343 = vector.extract_strided_slice %301 {offsets = [0, 7], sizes = [2, 1], strides = [1, 1]} : vector<2x16xf32> to vector<2x1xf32>
    %344 = vector.extract_strided_slice %300 {offsets = [7, 0, 0], sizes = [1, 2, 256], strides = [1, 1, 1]} : vector<16x2x256xf32> to vector<1x2x256xf32>
    %345 = vector.shape_cast %344 : vector<1x2x256xf32> to vector<2x256xf32>
    %346 = vector.broadcast %343 : vector<2x1xf32> to vector<2x256xf32>
    %347 = arith.mulf %346, %345 : vector<2x256xf32>
    %348 = arith.addf %342, %347 : vector<2x256xf32>
    %349 = vector.extract_strided_slice %301 {offsets = [0, 8], sizes = [2, 1], strides = [1, 1]} : vector<2x16xf32> to vector<2x1xf32>
    %350 = vector.extract_strided_slice %300 {offsets = [8, 0, 0], sizes = [1, 2, 256], strides = [1, 1, 1]} : vector<16x2x256xf32> to vector<1x2x256xf32>
    %351 = vector.shape_cast %350 : vector<1x2x256xf32> to vector<2x256xf32>
    %352 = vector.broadcast %349 : vector<2x1xf32> to vector<2x256xf32>
    %353 = arith.mulf %352, %351 : vector<2x256xf32>
    %354 = arith.addf %348, %353 : vector<2x256xf32>
    %355 = vector.extract_strided_slice %301 {offsets = [0, 9], sizes = [2, 1], strides = [1, 1]} : vector<2x16xf32> to vector<2x1xf32>
    %356 = vector.extract_strided_slice %300 {offsets = [9, 0, 0], sizes = [1, 2, 256], strides = [1, 1, 1]} : vector<16x2x256xf32> to vector<1x2x256xf32>
    %357 = vector.shape_cast %356 : vector<1x2x256xf32> to vector<2x256xf32>
    %358 = vector.broadcast %355 : vector<2x1xf32> to vector<2x256xf32>
    %359 = arith.mulf %358, %357 : vector<2x256xf32>
    %360 = arith.addf %354, %359 : vector<2x256xf32>
    %361 = vector.extract_strided_slice %301 {offsets = [0, 10], sizes = [2, 1], strides = [1, 1]} : vector<2x16xf32> to vector<2x1xf32>
    %362 = vector.extract_strided_slice %300 {offsets = [10, 0, 0], sizes = [1, 2, 256], strides = [1, 1, 1]} : vector<16x2x256xf32> to vector<1x2x256xf32>
    %363 = vector.shape_cast %362 : vector<1x2x256xf32> to vector<2x256xf32>
    %364 = vector.broadcast %361 : vector<2x1xf32> to vector<2x256xf32>
    %365 = arith.mulf %364, %363 : vector<2x256xf32>
    %366 = arith.addf %360, %365 : vector<2x256xf32>
    %367 = vector.extract_strided_slice %301 {offsets = [0, 11], sizes = [2, 1], strides = [1, 1]} : vector<2x16xf32> to vector<2x1xf32>
    %368 = vector.extract_strided_slice %300 {offsets = [11, 0, 0], sizes = [1, 2, 256], strides = [1, 1, 1]} : vector<16x2x256xf32> to vector<1x2x256xf32>
    %369 = vector.shape_cast %368 : vector<1x2x256xf32> to vector<2x256xf32>
    %370 = vector.broadcast %367 : vector<2x1xf32> to vector<2x256xf32>
    %371 = arith.mulf %370, %369 : vector<2x256xf32>
    %372 = arith.addf %366, %371 : vector<2x256xf32>
    %373 = vector.extract_strided_slice %301 {offsets = [0, 12], sizes = [2, 1], strides = [1, 1]} : vector<2x16xf32> to vector<2x1xf32>
    %374 = vector.extract_strided_slice %300 {offsets = [12, 0, 0], sizes = [1, 2, 256], strides = [1, 1, 1]} : vector<16x2x256xf32> to vector<1x2x256xf32>
    %375 = vector.shape_cast %374 : vector<1x2x256xf32> to vector<2x256xf32>
    %376 = vector.broadcast %373 : vector<2x1xf32> to vector<2x256xf32>
    %377 = arith.mulf %376, %375 : vector<2x256xf32>
    %378 = arith.addf %372, %377 : vector<2x256xf32>
    %379 = vector.extract_strided_slice %301 {offsets = [0, 13], sizes = [2, 1], strides = [1, 1]} : vector<2x16xf32> to vector<2x1xf32>
    %380 = vector.extract_strided_slice %300 {offsets = [13, 0, 0], sizes = [1, 2, 256], strides = [1, 1, 1]} : vector<16x2x256xf32> to vector<1x2x256xf32>
    %381 = vector.shape_cast %380 : vector<1x2x256xf32> to vector<2x256xf32>
    %382 = vector.broadcast %379 : vector<2x1xf32> to vector<2x256xf32>
    %383 = arith.mulf %382, %381 : vector<2x256xf32>
    %384 = arith.addf %378, %383 : vector<2x256xf32>
    %385 = vector.extract_strided_slice %301 {offsets = [0, 14], sizes = [2, 1], strides = [1, 1]} : vector<2x16xf32> to vector<2x1xf32>
    %386 = vector.extract_strided_slice %300 {offsets = [14, 0, 0], sizes = [1, 2, 256], strides = [1, 1, 1]} : vector<16x2x256xf32> to vector<1x2x256xf32>
    %387 = vector.shape_cast %386 : vector<1x2x256xf32> to vector<2x256xf32>
    %388 = vector.broadcast %385 : vector<2x1xf32> to vector<2x256xf32>
    %389 = arith.mulf %388, %387 : vector<2x256xf32>
    %390 = arith.addf %384, %389 : vector<2x256xf32>
    %391 = vector.extract_strided_slice %301 {offsets = [0, 15], sizes = [2, 1], strides = [1, 1]} : vector<2x16xf32> to vector<2x1xf32>
    %392 = vector.extract_strided_slice %300 {offsets = [15, 0, 0], sizes = [1, 2, 256], strides = [1, 1, 1]} : vector<16x2x256xf32> to vector<1x2x256xf32>
    %393 = vector.shape_cast %392 : vector<1x2x256xf32> to vector<2x256xf32>
    %394 = vector.broadcast %391 : vector<2x1xf32> to vector<2x256xf32>
    %395 = arith.mulf %394, %393 : vector<2x256xf32>
    %396 = arith.addf %390, %395 : vector<2x256xf32>
    %c0_126 = arith.constant 0 : index
    %c0_127 = arith.constant 0 : index
    %397 = vector.load %arg16[%c0_126, %c0_127] : memref<16x256xf32, #tpu.memory_space<vmem>>, vector<2x256xf32>
    tpu.vector_store %arg16[%c0_126, %c0_127], %396 {strides = array<i32>} : memref<16x256xf32, #tpu.memory_space<vmem>>, vector<2x256xf32>,
    %c0_128 = arith.constant 0 : index
    %c2_129 = arith.constant 2 : index
    %c0_130 = arith.constant 0 : index
    %398 = vector.load %arg13[%c0_128, %c2_129, %c0_130] : memref<16x16x256xf32, #tpu.memory_space<vmem>>, vector<16x2x256xf32>
    %399 = arith.mulf %398, %300 : vector<16x2x256xf32>
    %c0_131 = arith.constant 0 : index
    %c2_132 = arith.constant 2 : index
    %c0_133 = arith.constant 0 : index
    %400 = vector.load %arg14[%c0_131, %c2_132, %c0_133] : memref<16x16x256xf32, #tpu.memory_space<vmem>>, vector<16x2x256xf32>
    %401 = arith.addf %399, %400 : vector<16x2x256xf32>
    %c2_134 = arith.constant 2 : index
    %c0_135 = arith.constant 0 : index
    %402 = vector.load %arg15[%c2_134, %c0_135] : memref<16x16xf32, #tpu.memory_space<vmem>>, vector<2x16xf32>
    %403 = vector.extract_strided_slice %402 {offsets = [0, 0], sizes = [2, 1], strides = [1, 1]} : vector<2x16xf32> to vector<2x1xf32>
    %404 = vector.extract_strided_slice %401 {offsets = [0, 0, 0], sizes = [1, 2, 256], strides = [1, 1, 1]} : vector<16x2x256xf32> to vector<1x2x256xf32>
    %405 = vector.shape_cast %404 : vector<1x2x256xf32> to vector<2x256xf32>
    %406 = vector.broadcast %403 : vector<2x1xf32> to vector<2x256xf32>
    %407 = arith.mulf %406, %405 : vector<2x256xf32>
    %408 = vector.extract_strided_slice %402 {offsets = [0, 1], sizes = [2, 1], strides = [1, 1]} : vector<2x16xf32> to vector<2x1xf32>
    %409 = vector.extract_strided_slice %401 {offsets = [1, 0, 0], sizes = [1, 2, 256], strides = [1, 1, 1]} : vector<16x2x256xf32> to vector<1x2x256xf32>
    %410 = vector.shape_cast %409 : vector<1x2x256xf32> to vector<2x256xf32>
    %411 = vector.broadcast %408 : vector<2x1xf32> to vector<2x256xf32>
    %412 = arith.mulf %411, %410 : vector<2x256xf32>
    %413 = arith.addf %407, %412 : vector<2x256xf32>
    %414 = vector.extract_strided_slice %402 {offsets = [0, 2], sizes = [2, 1], strides = [1, 1]} : vector<2x16xf32> to vector<2x1xf32>
    %415 = vector.extract_strided_slice %401 {offsets = [2, 0, 0], sizes = [1, 2, 256], strides = [1, 1, 1]} : vector<16x2x256xf32> to vector<1x2x256xf32>
    %416 = vector.shape_cast %415 : vector<1x2x256xf32> to vector<2x256xf32>
    %417 = vector.broadcast %414 : vector<2x1xf32> to vector<2x256xf32>
    %418 = arith.mulf %417, %416 : vector<2x256xf32>
    %419 = arith.addf %413, %418 : vector<2x256xf32>
    %420 = vector.extract_strided_slice %402 {offsets = [0, 3], sizes = [2, 1], strides = [1, 1]} : vector<2x16xf32> to vector<2x1xf32>
    %421 = vector.extract_strided_slice %401 {offsets = [3, 0, 0], sizes = [1, 2, 256], strides = [1, 1, 1]} : vector<16x2x256xf32> to vector<1x2x256xf32>
    %422 = vector.shape_cast %421 : vector<1x2x256xf32> to vector<2x256xf32>
    %423 = vector.broadcast %420 : vector<2x1xf32> to vector<2x256xf32>
    %424 = arith.mulf %423, %422 : vector<2x256xf32>
    %425 = arith.addf %419, %424 : vector<2x256xf32>
    %426 = vector.extract_strided_slice %402 {offsets = [0, 4], sizes = [2, 1], strides = [1, 1]} : vector<2x16xf32> to vector<2x1xf32>
    %427 = vector.extract_strided_slice %401 {offsets = [4, 0, 0], sizes = [1, 2, 256], strides = [1, 1, 1]} : vector<16x2x256xf32> to vector<1x2x256xf32>
    %428 = vector.shape_cast %427 : vector<1x2x256xf32> to vector<2x256xf32>
    %429 = vector.broadcast %426 : vector<2x1xf32> to vector<2x256xf32>
    %430 = arith.mulf %429, %428 : vector<2x256xf32>
    %431 = arith.addf %425, %430 : vector<2x256xf32>
    %432 = vector.extract_strided_slice %402 {offsets = [0, 5], sizes = [2, 1], strides = [1, 1]} : vector<2x16xf32> to vector<2x1xf32>
    %433 = vector.extract_strided_slice %401 {offsets = [5, 0, 0], sizes = [1, 2, 256], strides = [1, 1, 1]} : vector<16x2x256xf32> to vector<1x2x256xf32>
    %434 = vector.shape_cast %433 : vector<1x2x256xf32> to vector<2x256xf32>
    %435 = vector.broadcast %432 : vector<2x1xf32> to vector<2x256xf32>
    %436 = arith.mulf %435, %434 : vector<2x256xf32>
    %437 = arith.addf %431, %436 : vector<2x256xf32>
    %438 = vector.extract_strided_slice %402 {offsets = [0, 6], sizes = [2, 1], strides = [1, 1]} : vector<2x16xf32> to vector<2x1xf32>
    %439 = vector.extract_strided_slice %401 {offsets = [6, 0, 0], sizes = [1, 2, 256], strides = [1, 1, 1]} : vector<16x2x256xf32> to vector<1x2x256xf32>
    %440 = vector.shape_cast %439 : vector<1x2x256xf32> to vector<2x256xf32>
    %441 = vector.broadcast %438 : vector<2x1xf32> to vector<2x256xf32>
    %442 = arith.mulf %441, %440 : vector<2x256xf32>
    %443 = arith.addf %437, %442 : vector<2x256xf32>
    %444 = vector.extract_strided_slice %402 {offsets = [0, 7], sizes = [2, 1], strides = [1, 1]} : vector<2x16xf32> to vector<2x1xf32>
    %445 = vector.extract_strided_slice %401 {offsets = [7, 0, 0], sizes = [1, 2, 256], strides = [1, 1, 1]} : vector<16x2x256xf32> to vector<1x2x256xf32>
    %446 = vector.shape_cast %445 : vector<1x2x256xf32> to vector<2x256xf32>
    %447 = vector.broadcast %444 : vector<2x1xf32> to vector<2x256xf32>
    %448 = arith.mulf %447, %446 : vector<2x256xf32>
    %449 = arith.addf %443, %448 : vector<2x256xf32>
    %450 = vector.extract_strided_slice %402 {offsets = [0, 8], sizes = [2, 1], strides = [1, 1]} : vector<2x16xf32> to vector<2x1xf32>
    %451 = vector.extract_strided_slice %401 {offsets = [8, 0, 0], sizes = [1, 2, 256], strides = [1, 1, 1]} : vector<16x2x256xf32> to vector<1x2x256xf32>
    %452 = vector.shape_cast %451 : vector<1x2x256xf32> to vector<2x256xf32>
    %453 = vector.broadcast %450 : vector<2x1xf32> to vector<2x256xf32>
    %454 = arith.mulf %453, %452 : vector<2x256xf32>
    %455 = arith.addf %449, %454 : vector<2x256xf32>
    %456 = vector.extract_strided_slice %402 {offsets = [0, 9], sizes = [2, 1], strides = [1, 1]} : vector<2x16xf32> to vector<2x1xf32>
    %457 = vector.extract_strided_slice %401 {offsets = [9, 0, 0], sizes = [1, 2, 256], strides = [1, 1, 1]} : vector<16x2x256xf32> to vector<1x2x256xf32>
    %458 = vector.shape_cast %457 : vector<1x2x256xf32> to vector<2x256xf32>
    %459 = vector.broadcast %456 : vector<2x1xf32> to vector<2x256xf32>
    %460 = arith.mulf %459, %458 : vector<2x256xf32>
    %461 = arith.addf %455, %460 : vector<2x256xf32>
    %462 = vector.extract_strided_slice %402 {offsets = [0, 10], sizes = [2, 1], strides = [1, 1]} : vector<2x16xf32> to vector<2x1xf32>
    %463 = vector.extract_strided_slice %401 {offsets = [10, 0, 0], sizes = [1, 2, 256], strides = [1, 1, 1]} : vector<16x2x256xf32> to vector<1x2x256xf32>
    %464 = vector.shape_cast %463 : vector<1x2x256xf32> to vector<2x256xf32>
    %465 = vector.broadcast %462 : vector<2x1xf32> to vector<2x256xf32>
    %466 = arith.mulf %465, %464 : vector<2x256xf32>
    %467 = arith.addf %461, %466 : vector<2x256xf32>
    %468 = vector.extract_strided_slice %402 {offsets = [0, 11], sizes = [2, 1], strides = [1, 1]} : vector<2x16xf32> to vector<2x1xf32>
    %469 = vector.extract_strided_slice %401 {offsets = [11, 0, 0], sizes = [1, 2, 256], strides = [1, 1, 1]} : vector<16x2x256xf32> to vector<1x2x256xf32>
    %470 = vector.shape_cast %469 : vector<1x2x256xf32> to vector<2x256xf32>
    %471 = vector.broadcast %468 : vector<2x1xf32> to vector<2x256xf32>
    %472 = arith.mulf %471, %470 : vector<2x256xf32>
    %473 = arith.addf %467, %472 : vector<2x256xf32>
    %474 = vector.extract_strided_slice %402 {offsets = [0, 12], sizes = [2, 1], strides = [1, 1]} : vector<2x16xf32> to vector<2x1xf32>
    %475 = vector.extract_strided_slice %401 {offsets = [12, 0, 0], sizes = [1, 2, 256], strides = [1, 1, 1]} : vector<16x2x256xf32> to vector<1x2x256xf32>
    %476 = vector.shape_cast %475 : vector<1x2x256xf32> to vector<2x256xf32>
    %477 = vector.broadcast %474 : vector<2x1xf32> to vector<2x256xf32>
    %478 = arith.mulf %477, %476 : vector<2x256xf32>
    %479 = arith.addf %473, %478 : vector<2x256xf32>
    %480 = vector.extract_strided_slice %402 {offsets = [0, 13], sizes = [2, 1], strides = [1, 1]} : vector<2x16xf32> to vector<2x1xf32>
    %481 = vector.extract_strided_slice %401 {offsets = [13, 0, 0], sizes = [1, 2, 256], strides = [1, 1, 1]} : vector<16x2x256xf32> to vector<1x2x256xf32>
    %482 = vector.shape_cast %481 : vector<1x2x256xf32> to vector<2x256xf32>
    %483 = vector.broadcast %480 : vector<2x1xf32> to vector<2x256xf32>
    %484 = arith.mulf %483, %482 : vector<2x256xf32>
    %485 = arith.addf %479, %484 : vector<2x256xf32>
    %486 = vector.extract_strided_slice %402 {offsets = [0, 14], sizes = [2, 1], strides = [1, 1]} : vector<2x16xf32> to vector<2x1xf32>
    %487 = vector.extract_strided_slice %401 {offsets = [14, 0, 0], sizes = [1, 2, 256], strides = [1, 1, 1]} : vector<16x2x256xf32> to vector<1x2x256xf32>
    %488 = vector.shape_cast %487 : vector<1x2x256xf32> to vector<2x256xf32>
    %489 = vector.broadcast %486 : vector<2x1xf32> to vector<2x256xf32>
    %490 = arith.mulf %489, %488 : vector<2x256xf32>
    %491 = arith.addf %485, %490 : vector<2x256xf32>
    %492 = vector.extract_strided_slice %402 {offsets = [0, 15], sizes = [2, 1], strides = [1, 1]} : vector<2x16xf32> to vector<2x1xf32>
    %493 = vector.extract_strided_slice %401 {offsets = [15, 0, 0], sizes = [1, 2, 256], strides = [1, 1, 1]} : vector<16x2x256xf32> to vector<1x2x256xf32>
    %494 = vector.shape_cast %493 : vector<1x2x256xf32> to vector<2x256xf32>
    %495 = vector.broadcast %492 : vector<2x1xf32> to vector<2x256xf32>
    %496 = arith.mulf %495, %494 : vector<2x256xf32>
    %497 = arith.addf %491, %496 : vector<2x256xf32>
    %c2_136 = arith.constant 2 : index
    %c0_137 = arith.constant 0 : index
    %498 = vector.load %arg16[%c2_136, %c0_137] : memref<16x256xf32, #tpu.memory_space<vmem>>, vector<2x256xf32>
    tpu.vector_store %arg16[%c2_136, %c0_137], %497 {strides = array<i32>} : memref<16x256xf32, #tpu.memory_space<vmem>>, vector<2x256xf32>,
    %c0_138 = arith.constant 0 : index
    %c4_139 = arith.constant 4 : index
    %c0_140 = arith.constant 0 : index
    %499 = vector.load %arg13[%c0_138, %c4_139, %c0_140] : memref<16x16x256xf32, #tpu.memory_space<vmem>>, vector<16x2x256xf32>
    %500 = arith.mulf %499, %401 : vector<16x2x256xf32>
    %c0_141 = arith.constant 0 : index
    %c4_142 = arith.constant 4 : index
    %c0_143 = arith.constant 0 : index
    %501 = vector.load %arg14[%c0_141, %c4_142, %c0_143] : memref<16x16x256xf32, #tpu.memory_space<vmem>>, vector<16x2x256xf32>
    %502 = arith.addf %500, %501 : vector<16x2x256xf32>
    %c4_144 = arith.constant 4 : index
    %c0_145 = arith.constant 0 : index
    %503 = vector.load %arg15[%c4_144, %c0_145] : memref<16x16xf32, #tpu.memory_space<vmem>>, vector<2x16xf32>
    %504 = vector.extract_strided_slice %503 {offsets = [0, 0], sizes = [2, 1], strides = [1, 1]} : vector<2x16xf32> to vector<2x1xf32>
    %505 = vector.extract_strided_slice %502 {offsets = [0, 0, 0], sizes = [1, 2, 256], strides = [1, 1, 1]} : vector<16x2x256xf32> to vector<1x2x256xf32>
    %506 = vector.shape_cast %505 : vector<1x2x256xf32> to vector<2x256xf32>
    %507 = vector.broadcast %504 : vector<2x1xf32> to vector<2x256xf32>
    %508 = arith.mulf %507, %506 : vector<2x256xf32>
    %509 = vector.extract_strided_slice %503 {offsets = [0, 1], sizes = [2, 1], strides = [1, 1]} : vector<2x16xf32> to vector<2x1xf32>
    %510 = vector.extract_strided_slice %502 {offsets = [1, 0, 0], sizes = [1, 2, 256], strides = [1, 1, 1]} : vector<16x2x256xf32> to vector<1x2x256xf32>
    %511 = vector.shape_cast %510 : vector<1x2x256xf32> to vector<2x256xf32>
    %512 = vector.broadcast %509 : vector<2x1xf32> to vector<2x256xf32>
    %513 = arith.mulf %512, %511 : vector<2x256xf32>
    %514 = arith.addf %508, %513 : vector<2x256xf32>
    %515 = vector.extract_strided_slice %503 {offsets = [0, 2], sizes = [2, 1], strides = [1, 1]} : vector<2x16xf32> to vector<2x1xf32>
    %516 = vector.extract_strided_slice %502 {offsets = [2, 0, 0], sizes = [1, 2, 256], strides = [1, 1, 1]} : vector<16x2x256xf32> to vector<1x2x256xf32>
    %517 = vector.shape_cast %516 : vector<1x2x256xf32> to vector<2x256xf32>
    %518 = vector.broadcast %515 : vector<2x1xf32> to vector<2x256xf32>
    %519 = arith.mulf %518, %517 : vector<2x256xf32>
    %520 = arith.addf %514, %519 : vector<2x256xf32>
    %521 = vector.extract_strided_slice %503 {offsets = [0, 3], sizes = [2, 1], strides = [1, 1]} : vector<2x16xf32> to vector<2x1xf32>
    %522 = vector.extract_strided_slice %502 {offsets = [3, 0, 0], sizes = [1, 2, 256], strides = [1, 1, 1]} : vector<16x2x256xf32> to vector<1x2x256xf32>
    %523 = vector.shape_cast %522 : vector<1x2x256xf32> to vector<2x256xf32>
    %524 = vector.broadcast %521 : vector<2x1xf32> to vector<2x256xf32>
    %525 = arith.mulf %524, %523 : vector<2x256xf32>
    %526 = arith.addf %520, %525 : vector<2x256xf32>
    %527 = vector.extract_strided_slice %503 {offsets = [0, 4], sizes = [2, 1], strides = [1, 1]} : vector<2x16xf32> to vector<2x1xf32>
    %528 = vector.extract_strided_slice %502 {offsets = [4, 0, 0], sizes = [1, 2, 256], strides = [1, 1, 1]} : vector<16x2x256xf32> to vector<1x2x256xf32>
    %529 = vector.shape_cast %528 : vector<1x2x256xf32> to vector<2x256xf32>
    %530 = vector.broadcast %527 : vector<2x1xf32> to vector<2x256xf32>
    %531 = arith.mulf %530, %529 : vector<2x256xf32>
    %532 = arith.addf %526, %531 : vector<2x256xf32>
    %533 = vector.extract_strided_slice %503 {offsets = [0, 5], sizes = [2, 1], strides = [1, 1]} : vector<2x16xf32> to vector<2x1xf32>
    %534 = vector.extract_strided_slice %502 {offsets = [5, 0, 0], sizes = [1, 2, 256], strides = [1, 1, 1]} : vector<16x2x256xf32> to vector<1x2x256xf32>
    %535 = vector.shape_cast %534 : vector<1x2x256xf32> to vector<2x256xf32>
    %536 = vector.broadcast %533 : vector<2x1xf32> to vector<2x256xf32>
    %537 = arith.mulf %536, %535 : vector<2x256xf32>
    %538 = arith.addf %532, %537 : vector<2x256xf32>
    %539 = vector.extract_strided_slice %503 {offsets = [0, 6], sizes = [2, 1], strides = [1, 1]} : vector<2x16xf32> to vector<2x1xf32>
    %540 = vector.extract_strided_slice %502 {offsets = [6, 0, 0], sizes = [1, 2, 256], strides = [1, 1, 1]} : vector<16x2x256xf32> to vector<1x2x256xf32>
    %541 = vector.shape_cast %540 : vector<1x2x256xf32> to vector<2x256xf32>
    %542 = vector.broadcast %539 : vector<2x1xf32> to vector<2x256xf32>
    %543 = arith.mulf %542, %541 : vector<2x256xf32>
    %544 = arith.addf %538, %543 : vector<2x256xf32>
    %545 = vector.extract_strided_slice %503 {offsets = [0, 7], sizes = [2, 1], strides = [1, 1]} : vector<2x16xf32> to vector<2x1xf32>
    %546 = vector.extract_strided_slice %502 {offsets = [7, 0, 0], sizes = [1, 2, 256], strides = [1, 1, 1]} : vector<16x2x256xf32> to vector<1x2x256xf32>
    %547 = vector.shape_cast %546 : vector<1x2x256xf32> to vector<2x256xf32>
    %548 = vector.broadcast %545 : vector<2x1xf32> to vector<2x256xf32>
    %549 = arith.mulf %548, %547 : vector<2x256xf32>
    %550 = arith.addf %544, %549 : vector<2x256xf32>
    %551 = vector.extract_strided_slice %503 {offsets = [0, 8], sizes = [2, 1], strides = [1, 1]} : vector<2x16xf32> to vector<2x1xf32>
    %552 = vector.extract_strided_slice %502 {offsets = [8, 0, 0], sizes = [1, 2, 256], strides = [1, 1, 1]} : vector<16x2x256xf32> to vector<1x2x256xf32>
    %553 = vector.shape_cast %552 : vector<1x2x256xf32> to vector<2x256xf32>
    %554 = vector.broadcast %551 : vector<2x1xf32> to vector<2x256xf32>
    %555 = arith.mulf %554, %553 : vector<2x256xf32>
    %556 = arith.addf %550, %555 : vector<2x256xf32>
    %557 = vector.extract_strided_slice %503 {offsets = [0, 9], sizes = [2, 1], strides = [1, 1]} : vector<2x16xf32> to vector<2x1xf32>
    %558 = vector.extract_strided_slice %502 {offsets = [9, 0, 0], sizes = [1, 2, 256], strides = [1, 1, 1]} : vector<16x2x256xf32> to vector<1x2x256xf32>
    %559 = vector.shape_cast %558 : vector<1x2x256xf32> to vector<2x256xf32>
    %560 = vector.broadcast %557 : vector<2x1xf32> to vector<2x256xf32>
    %561 = arith.mulf %560, %559 : vector<2x256xf32>
    %562 = arith.addf %556, %561 : vector<2x256xf32>
    %563 = vector.extract_strided_slice %503 {offsets = [0, 10], sizes = [2, 1], strides = [1, 1]} : vector<2x16xf32> to vector<2x1xf32>
    %564 = vector.extract_strided_slice %502 {offsets = [10, 0, 0], sizes = [1, 2, 256], strides = [1, 1, 1]} : vector<16x2x256xf32> to vector<1x2x256xf32>
    %565 = vector.shape_cast %564 : vector<1x2x256xf32> to vector<2x256xf32>
    %566 = vector.broadcast %563 : vector<2x1xf32> to vector<2x256xf32>
    %567 = arith.mulf %566, %565 : vector<2x256xf32>
    %568 = arith.addf %562, %567 : vector<2x256xf32>
    %569 = vector.extract_strided_slice %503 {offsets = [0, 11], sizes = [2, 1], strides = [1, 1]} : vector<2x16xf32> to vector<2x1xf32>
    %570 = vector.extract_strided_slice %502 {offsets = [11, 0, 0], sizes = [1, 2, 256], strides = [1, 1, 1]} : vector<16x2x256xf32> to vector<1x2x256xf32>
    %571 = vector.shape_cast %570 : vector<1x2x256xf32> to vector<2x256xf32>
    %572 = vector.broadcast %569 : vector<2x1xf32> to vector<2x256xf32>
    %573 = arith.mulf %572, %571 : vector<2x256xf32>
    %574 = arith.addf %568, %573 : vector<2x256xf32>
    %575 = vector.extract_strided_slice %503 {offsets = [0, 12], sizes = [2, 1], strides = [1, 1]} : vector<2x16xf32> to vector<2x1xf32>
    %576 = vector.extract_strided_slice %502 {offsets = [12, 0, 0], sizes = [1, 2, 256], strides = [1, 1, 1]} : vector<16x2x256xf32> to vector<1x2x256xf32>
    %577 = vector.shape_cast %576 : vector<1x2x256xf32> to vector<2x256xf32>
    %578 = vector.broadcast %575 : vector<2x1xf32> to vector<2x256xf32>
    %579 = arith.mulf %578, %577 : vector<2x256xf32>
    %580 = arith.addf %574, %579 : vector<2x256xf32>
    %581 = vector.extract_strided_slice %503 {offsets = [0, 13], sizes = [2, 1], strides = [1, 1]} : vector<2x16xf32> to vector<2x1xf32>
    %582 = vector.extract_strided_slice %502 {offsets = [13, 0, 0], sizes = [1, 2, 256], strides = [1, 1, 1]} : vector<16x2x256xf32> to vector<1x2x256xf32>
    %583 = vector.shape_cast %582 : vector<1x2x256xf32> to vector<2x256xf32>
    %584 = vector.broadcast %581 : vector<2x1xf32> to vector<2x256xf32>
    %585 = arith.mulf %584, %583 : vector<2x256xf32>
    %586 = arith.addf %580, %585 : vector<2x256xf32>
    %587 = vector.extract_strided_slice %503 {offsets = [0, 14], sizes = [2, 1], strides = [1, 1]} : vector<2x16xf32> to vector<2x1xf32>
    %588 = vector.extract_strided_slice %502 {offsets = [14, 0, 0], sizes = [1, 2, 256], strides = [1, 1, 1]} : vector<16x2x256xf32> to vector<1x2x256xf32>
    %589 = vector.shape_cast %588 : vector<1x2x256xf32> to vector<2x256xf32>
    %590 = vector.broadcast %587 : vector<2x1xf32> to vector<2x256xf32>
    %591 = arith.mulf %590, %589 : vector<2x256xf32>
    %592 = arith.addf %586, %591 : vector<2x256xf32>
    %593 = vector.extract_strided_slice %503 {offsets = [0, 15], sizes = [2, 1], strides = [1, 1]} : vector<2x16xf32> to vector<2x1xf32>
    %594 = vector.extract_strided_slice %502 {offsets = [15, 0, 0], sizes = [1, 2, 256], strides = [1, 1, 1]} : vector<16x2x256xf32> to vector<1x2x256xf32>
    %595 = vector.shape_cast %594 : vector<1x2x256xf32> to vector<2x256xf32>
    %596 = vector.broadcast %593 : vector<2x1xf32> to vector<2x256xf32>
    %597 = arith.mulf %596, %595 : vector<2x256xf32>
    %598 = arith.addf %592, %597 : vector<2x256xf32>
    %c4_146 = arith.constant 4 : index
    %c0_147 = arith.constant 0 : index
    %599 = vector.load %arg16[%c4_146, %c0_147] : memref<16x256xf32, #tpu.memory_space<vmem>>, vector<2x256xf32>
    tpu.vector_store %arg16[%c4_146, %c0_147], %598 {strides = array<i32>} : memref<16x256xf32, #tpu.memory_space<vmem>>, vector<2x256xf32>,
    %c0_148 = arith.constant 0 : index
    %c6_149 = arith.constant 6 : index
    %c0_150 = arith.constant 0 : index
    %600 = vector.load %arg13[%c0_148, %c6_149, %c0_150] : memref<16x16x256xf32, #tpu.memory_space<vmem>>, vector<16x2x256xf32>
    %601 = arith.mulf %600, %502 : vector<16x2x256xf32>
    %c0_151 = arith.constant 0 : index
    %c6_152 = arith.constant 6 : index
    %c0_153 = arith.constant 0 : index
    %602 = vector.load %arg14[%c0_151, %c6_152, %c0_153] : memref<16x16x256xf32, #tpu.memory_space<vmem>>, vector<16x2x256xf32>
    %603 = arith.addf %601, %602 : vector<16x2x256xf32>
    %c6_154 = arith.constant 6 : index
    %c0_155 = arith.constant 0 : index
    %604 = vector.load %arg15[%c6_154, %c0_155] : memref<16x16xf32, #tpu.memory_space<vmem>>, vector<2x16xf32>
    %605 = vector.extract_strided_slice %604 {offsets = [0, 0], sizes = [2, 1], strides = [1, 1]} : vector<2x16xf32> to vector<2x1xf32>
    %606 = vector.extract_strided_slice %603 {offsets = [0, 0, 0], sizes = [1, 2, 256], strides = [1, 1, 1]} : vector<16x2x256xf32> to vector<1x2x256xf32>
    %607 = vector.shape_cast %606 : vector<1x2x256xf32> to vector<2x256xf32>
    %608 = vector.broadcast %605 : vector<2x1xf32> to vector<2x256xf32>
    %609 = arith.mulf %608, %607 : vector<2x256xf32>
    %610 = vector.extract_strided_slice %604 {offsets = [0, 1], sizes = [2, 1], strides = [1, 1]} : vector<2x16xf32> to vector<2x1xf32>
    %611 = vector.extract_strided_slice %603 {offsets = [1, 0, 0], sizes = [1, 2, 256], strides = [1, 1, 1]} : vector<16x2x256xf32> to vector<1x2x256xf32>
    %612 = vector.shape_cast %611 : vector<1x2x256xf32> to vector<2x256xf32>
    %613 = vector.broadcast %610 : vector<2x1xf32> to vector<2x256xf32>
    %614 = arith.mulf %613, %612 : vector<2x256xf32>
    %615 = arith.addf %609, %614 : vector<2x256xf32>
    %616 = vector.extract_strided_slice %604 {offsets = [0, 2], sizes = [2, 1], strides = [1, 1]} : vector<2x16xf32> to vector<2x1xf32>
    %617 = vector.extract_strided_slice %603 {offsets = [2, 0, 0], sizes = [1, 2, 256], strides = [1, 1, 1]} : vector<16x2x256xf32> to vector<1x2x256xf32>
    %618 = vector.shape_cast %617 : vector<1x2x256xf32> to vector<2x256xf32>
    %619 = vector.broadcast %616 : vector<2x1xf32> to vector<2x256xf32>
    %620 = arith.mulf %619, %618 : vector<2x256xf32>
    %621 = arith.addf %615, %620 : vector<2x256xf32>
    %622 = vector.extract_strided_slice %604 {offsets = [0, 3], sizes = [2, 1], strides = [1, 1]} : vector<2x16xf32> to vector<2x1xf32>
    %623 = vector.extract_strided_slice %603 {offsets = [3, 0, 0], sizes = [1, 2, 256], strides = [1, 1, 1]} : vector<16x2x256xf32> to vector<1x2x256xf32>
    %624 = vector.shape_cast %623 : vector<1x2x256xf32> to vector<2x256xf32>
    %625 = vector.broadcast %622 : vector<2x1xf32> to vector<2x256xf32>
    %626 = arith.mulf %625, %624 : vector<2x256xf32>
    %627 = arith.addf %621, %626 : vector<2x256xf32>
    %628 = vector.extract_strided_slice %604 {offsets = [0, 4], sizes = [2, 1], strides = [1, 1]} : vector<2x16xf32> to vector<2x1xf32>
    %629 = vector.extract_strided_slice %603 {offsets = [4, 0, 0], sizes = [1, 2, 256], strides = [1, 1, 1]} : vector<16x2x256xf32> to vector<1x2x256xf32>
    %630 = vector.shape_cast %629 : vector<1x2x256xf32> to vector<2x256xf32>
    %631 = vector.broadcast %628 : vector<2x1xf32> to vector<2x256xf32>
    %632 = arith.mulf %631, %630 : vector<2x256xf32>
    %633 = arith.addf %627, %632 : vector<2x256xf32>
    %634 = vector.extract_strided_slice %604 {offsets = [0, 5], sizes = [2, 1], strides = [1, 1]} : vector<2x16xf32> to vector<2x1xf32>
    %635 = vector.extract_strided_slice %603 {offsets = [5, 0, 0], sizes = [1, 2, 256], strides = [1, 1, 1]} : vector<16x2x256xf32> to vector<1x2x256xf32>
    %636 = vector.shape_cast %635 : vector<1x2x256xf32> to vector<2x256xf32>
    %637 = vector.broadcast %634 : vector<2x1xf32> to vector<2x256xf32>
    %638 = arith.mulf %637, %636 : vector<2x256xf32>
    %639 = arith.addf %633, %638 : vector<2x256xf32>
    %640 = vector.extract_strided_slice %604 {offsets = [0, 6], sizes = [2, 1], strides = [1, 1]} : vector<2x16xf32> to vector<2x1xf32>
    %641 = vector.extract_strided_slice %603 {offsets = [6, 0, 0], sizes = [1, 2, 256], strides = [1, 1, 1]} : vector<16x2x256xf32> to vector<1x2x256xf32>
    %642 = vector.shape_cast %641 : vector<1x2x256xf32> to vector<2x256xf32>
    %643 = vector.broadcast %640 : vector<2x1xf32> to vector<2x256xf32>
    %644 = arith.mulf %643, %642 : vector<2x256xf32>
    %645 = arith.addf %639, %644 : vector<2x256xf32>
    %646 = vector.extract_strided_slice %604 {offsets = [0, 7], sizes = [2, 1], strides = [1, 1]} : vector<2x16xf32> to vector<2x1xf32>
    %647 = vector.extract_strided_slice %603 {offsets = [7, 0, 0], sizes = [1, 2, 256], strides = [1, 1, 1]} : vector<16x2x256xf32> to vector<1x2x256xf32>
    %648 = vector.shape_cast %647 : vector<1x2x256xf32> to vector<2x256xf32>
    %649 = vector.broadcast %646 : vector<2x1xf32> to vector<2x256xf32>
    %650 = arith.mulf %649, %648 : vector<2x256xf32>
    %651 = arith.addf %645, %650 : vector<2x256xf32>
    %652 = vector.extract_strided_slice %604 {offsets = [0, 8], sizes = [2, 1], strides = [1, 1]} : vector<2x16xf32> to vector<2x1xf32>
    %653 = vector.extract_strided_slice %603 {offsets = [8, 0, 0], sizes = [1, 2, 256], strides = [1, 1, 1]} : vector<16x2x256xf32> to vector<1x2x256xf32>
    %654 = vector.shape_cast %653 : vector<1x2x256xf32> to vector<2x256xf32>
    %655 = vector.broadcast %652 : vector<2x1xf32> to vector<2x256xf32>
    %656 = arith.mulf %655, %654 : vector<2x256xf32>
    %657 = arith.addf %651, %656 : vector<2x256xf32>
    %658 = vector.extract_strided_slice %604 {offsets = [0, 9], sizes = [2, 1], strides = [1, 1]} : vector<2x16xf32> to vector<2x1xf32>
    %659 = vector.extract_strided_slice %603 {offsets = [9, 0, 0], sizes = [1, 2, 256], strides = [1, 1, 1]} : vector<16x2x256xf32> to vector<1x2x256xf32>
    %660 = vector.shape_cast %659 : vector<1x2x256xf32> to vector<2x256xf32>
    %661 = vector.broadcast %658 : vector<2x1xf32> to vector<2x256xf32>
    %662 = arith.mulf %661, %660 : vector<2x256xf32>
    %663 = arith.addf %657, %662 : vector<2x256xf32>
    %664 = vector.extract_strided_slice %604 {offsets = [0, 10], sizes = [2, 1], strides = [1, 1]} : vector<2x16xf32> to vector<2x1xf32>
    %665 = vector.extract_strided_slice %603 {offsets = [10, 0, 0], sizes = [1, 2, 256], strides = [1, 1, 1]} : vector<16x2x256xf32> to vector<1x2x256xf32>
    %666 = vector.shape_cast %665 : vector<1x2x256xf32> to vector<2x256xf32>
    %667 = vector.broadcast %664 : vector<2x1xf32> to vector<2x256xf32>
    %668 = arith.mulf %667, %666 : vector<2x256xf32>
    %669 = arith.addf %663, %668 : vector<2x256xf32>
    %670 = vector.extract_strided_slice %604 {offsets = [0, 11], sizes = [2, 1], strides = [1, 1]} : vector<2x16xf32> to vector<2x1xf32>
    %671 = vector.extract_strided_slice %603 {offsets = [11, 0, 0], sizes = [1, 2, 256], strides = [1, 1, 1]} : vector<16x2x256xf32> to vector<1x2x256xf32>
    %672 = vector.shape_cast %671 : vector<1x2x256xf32> to vector<2x256xf32>
    %673 = vector.broadcast %670 : vector<2x1xf32> to vector<2x256xf32>
    %674 = arith.mulf %673, %672 : vector<2x256xf32>
    %675 = arith.addf %669, %674 : vector<2x256xf32>
    %676 = vector.extract_strided_slice %604 {offsets = [0, 12], sizes = [2, 1], strides = [1, 1]} : vector<2x16xf32> to vector<2x1xf32>
    %677 = vector.extract_strided_slice %603 {offsets = [12, 0, 0], sizes = [1, 2, 256], strides = [1, 1, 1]} : vector<16x2x256xf32> to vector<1x2x256xf32>
    %678 = vector.shape_cast %677 : vector<1x2x256xf32> to vector<2x256xf32>
    %679 = vector.broadcast %676 : vector<2x1xf32> to vector<2x256xf32>
    %680 = arith.mulf %679, %678 : vector<2x256xf32>
    %681 = arith.addf %675, %680 : vector<2x256xf32>
    %682 = vector.extract_strided_slice %604 {offsets = [0, 13], sizes = [2, 1], strides = [1, 1]} : vector<2x16xf32> to vector<2x1xf32>
    %683 = vector.extract_strided_slice %603 {offsets = [13, 0, 0], sizes = [1, 2, 256], strides = [1, 1, 1]} : vector<16x2x256xf32> to vector<1x2x256xf32>
    %684 = vector.shape_cast %683 : vector<1x2x256xf32> to vector<2x256xf32>
    %685 = vector.broadcast %682 : vector<2x1xf32> to vector<2x256xf32>
    %686 = arith.mulf %685, %684 : vector<2x256xf32>
    %687 = arith.addf %681, %686 : vector<2x256xf32>
    %688 = vector.extract_strided_slice %604 {offsets = [0, 14], sizes = [2, 1], strides = [1, 1]} : vector<2x16xf32> to vector<2x1xf32>
    %689 = vector.extract_strided_slice %603 {offsets = [14, 0, 0], sizes = [1, 2, 256], strides = [1, 1, 1]} : vector<16x2x256xf32> to vector<1x2x256xf32>
    %690 = vector.shape_cast %689 : vector<1x2x256xf32> to vector<2x256xf32>
    %691 = vector.broadcast %688 : vector<2x1xf32> to vector<2x256xf32>
    %692 = arith.mulf %691, %690 : vector<2x256xf32>
    %693 = arith.addf %687, %692 : vector<2x256xf32>
    %694 = vector.extract_strided_slice %604 {offsets = [0, 15], sizes = [2, 1], strides = [1, 1]} : vector<2x16xf32> to vector<2x1xf32>
    %695 = vector.extract_strided_slice %603 {offsets = [15, 0, 0], sizes = [1, 2, 256], strides = [1, 1, 1]} : vector<16x2x256xf32> to vector<1x2x256xf32>
    %696 = vector.shape_cast %695 : vector<1x2x256xf32> to vector<2x256xf32>
    %697 = vector.broadcast %694 : vector<2x1xf32> to vector<2x256xf32>
    %698 = arith.mulf %697, %696 : vector<2x256xf32>
    %699 = arith.addf %693, %698 : vector<2x256xf32>
    %c6_156 = arith.constant 6 : index
    %c0_157 = arith.constant 0 : index
    %700 = vector.load %arg16[%c6_156, %c0_157] : memref<16x256xf32, #tpu.memory_space<vmem>>, vector<2x256xf32>
    tpu.vector_store %arg16[%c6_156, %c0_157], %699 {strides = array<i32>} : memref<16x256xf32, #tpu.memory_space<vmem>>, vector<2x256xf32>,
    %c0_158 = arith.constant 0 : index
    %c8_159 = arith.constant 8 : index
    %c0_160 = arith.constant 0 : index
    %701 = vector.load %arg13[%c0_158, %c8_159, %c0_160] : memref<16x16x256xf32, #tpu.memory_space<vmem>>, vector<16x2x256xf32>
    %702 = arith.mulf %701, %603 : vector<16x2x256xf32>
    %c0_161 = arith.constant 0 : index
    %c8_162 = arith.constant 8 : index
    %c0_163 = arith.constant 0 : index
    %703 = vector.load %arg14[%c0_161, %c8_162, %c0_163] : memref<16x16x256xf32, #tpu.memory_space<vmem>>, vector<16x2x256xf32>
    %704 = arith.addf %702, %703 : vector<16x2x256xf32>
    %c8_164 = arith.constant 8 : index
    %c0_165 = arith.constant 0 : index
    %705 = vector.load %arg15[%c8_164, %c0_165] : memref<16x16xf32, #tpu.memory_space<vmem>>, vector<2x16xf32>
    %706 = vector.extract_strided_slice %705 {offsets = [0, 0], sizes = [2, 1], strides = [1, 1]} : vector<2x16xf32> to vector<2x1xf32>
    %707 = vector.extract_strided_slice %704 {offsets = [0, 0, 0], sizes = [1, 2, 256], strides = [1, 1, 1]} : vector<16x2x256xf32> to vector<1x2x256xf32>
    %708 = vector.shape_cast %707 : vector<1x2x256xf32> to vector<2x256xf32>
    %709 = vector.broadcast %706 : vector<2x1xf32> to vector<2x256xf32>
    %710 = arith.mulf %709, %708 : vector<2x256xf32>
    %711 = vector.extract_strided_slice %705 {offsets = [0, 1], sizes = [2, 1], strides = [1, 1]} : vector<2x16xf32> to vector<2x1xf32>
    %712 = vector.extract_strided_slice %704 {offsets = [1, 0, 0], sizes = [1, 2, 256], strides = [1, 1, 1]} : vector<16x2x256xf32> to vector<1x2x256xf32>
    %713 = vector.shape_cast %712 : vector<1x2x256xf32> to vector<2x256xf32>
    %714 = vector.broadcast %711 : vector<2x1xf32> to vector<2x256xf32>
    %715 = arith.mulf %714, %713 : vector<2x256xf32>
    %716 = arith.addf %710, %715 : vector<2x256xf32>
    %717 = vector.extract_strided_slice %705 {offsets = [0, 2], sizes = [2, 1], strides = [1, 1]} : vector<2x16xf32> to vector<2x1xf32>
    %718 = vector.extract_strided_slice %704 {offsets = [2, 0, 0], sizes = [1, 2, 256], strides = [1, 1, 1]} : vector<16x2x256xf32> to vector<1x2x256xf32>
    %719 = vector.shape_cast %718 : vector<1x2x256xf32> to vector<2x256xf32>
    %720 = vector.broadcast %717 : vector<2x1xf32> to vector<2x256xf32>
    %721 = arith.mulf %720, %719 : vector<2x256xf32>
    %722 = arith.addf %716, %721 : vector<2x256xf32>
    %723 = vector.extract_strided_slice %705 {offsets = [0, 3], sizes = [2, 1], strides = [1, 1]} : vector<2x16xf32> to vector<2x1xf32>
    %724 = vector.extract_strided_slice %704 {offsets = [3, 0, 0], sizes = [1, 2, 256], strides = [1, 1, 1]} : vector<16x2x256xf32> to vector<1x2x256xf32>
    %725 = vector.shape_cast %724 : vector<1x2x256xf32> to vector<2x256xf32>
    %726 = vector.broadcast %723 : vector<2x1xf32> to vector<2x256xf32>
    %727 = arith.mulf %726, %725 : vector<2x256xf32>
    %728 = arith.addf %722, %727 : vector<2x256xf32>
    %729 = vector.extract_strided_slice %705 {offsets = [0, 4], sizes = [2, 1], strides = [1, 1]} : vector<2x16xf32> to vector<2x1xf32>
    %730 = vector.extract_strided_slice %704 {offsets = [4, 0, 0], sizes = [1, 2, 256], strides = [1, 1, 1]} : vector<16x2x256xf32> to vector<1x2x256xf32>
    %731 = vector.shape_cast %730 : vector<1x2x256xf32> to vector<2x256xf32>
    %732 = vector.broadcast %729 : vector<2x1xf32> to vector<2x256xf32>
    %733 = arith.mulf %732, %731 : vector<2x256xf32>
    %734 = arith.addf %728, %733 : vector<2x256xf32>
    %735 = vector.extract_strided_slice %705 {offsets = [0, 5], sizes = [2, 1], strides = [1, 1]} : vector<2x16xf32> to vector<2x1xf32>
    %736 = vector.extract_strided_slice %704 {offsets = [5, 0, 0], sizes = [1, 2, 256], strides = [1, 1, 1]} : vector<16x2x256xf32> to vector<1x2x256xf32>
    %737 = vector.shape_cast %736 : vector<1x2x256xf32> to vector<2x256xf32>
    %738 = vector.broadcast %735 : vector<2x1xf32> to vector<2x256xf32>
    %739 = arith.mulf %738, %737 : vector<2x256xf32>
    %740 = arith.addf %734, %739 : vector<2x256xf32>
    %741 = vector.extract_strided_slice %705 {offsets = [0, 6], sizes = [2, 1], strides = [1, 1]} : vector<2x16xf32> to vector<2x1xf32>
    %742 = vector.extract_strided_slice %704 {offsets = [6, 0, 0], sizes = [1, 2, 256], strides = [1, 1, 1]} : vector<16x2x256xf32> to vector<1x2x256xf32>
    %743 = vector.shape_cast %742 : vector<1x2x256xf32> to vector<2x256xf32>
    %744 = vector.broadcast %741 : vector<2x1xf32> to vector<2x256xf32>
    %745 = arith.mulf %744, %743 : vector<2x256xf32>
    %746 = arith.addf %740, %745 : vector<2x256xf32>
    %747 = vector.extract_strided_slice %705 {offsets = [0, 7], sizes = [2, 1], strides = [1, 1]} : vector<2x16xf32> to vector<2x1xf32>
    %748 = vector.extract_strided_slice %704 {offsets = [7, 0, 0], sizes = [1, 2, 256], strides = [1, 1, 1]} : vector<16x2x256xf32> to vector<1x2x256xf32>
    %749 = vector.shape_cast %748 : vector<1x2x256xf32> to vector<2x256xf32>
    %750 = vector.broadcast %747 : vector<2x1xf32> to vector<2x256xf32>
    %751 = arith.mulf %750, %749 : vector<2x256xf32>
    %752 = arith.addf %746, %751 : vector<2x256xf32>
    %753 = vector.extract_strided_slice %705 {offsets = [0, 8], sizes = [2, 1], strides = [1, 1]} : vector<2x16xf32> to vector<2x1xf32>
    %754 = vector.extract_strided_slice %704 {offsets = [8, 0, 0], sizes = [1, 2, 256], strides = [1, 1, 1]} : vector<16x2x256xf32> to vector<1x2x256xf32>
    %755 = vector.shape_cast %754 : vector<1x2x256xf32> to vector<2x256xf32>
    %756 = vector.broadcast %753 : vector<2x1xf32> to vector<2x256xf32>
    %757 = arith.mulf %756, %755 : vector<2x256xf32>
    %758 = arith.addf %752, %757 : vector<2x256xf32>
    %759 = vector.extract_strided_slice %705 {offsets = [0, 9], sizes = [2, 1], strides = [1, 1]} : vector<2x16xf32> to vector<2x1xf32>
    %760 = vector.extract_strided_slice %704 {offsets = [9, 0, 0], sizes = [1, 2, 256], strides = [1, 1, 1]} : vector<16x2x256xf32> to vector<1x2x256xf32>
    %761 = vector.shape_cast %760 : vector<1x2x256xf32> to vector<2x256xf32>
    %762 = vector.broadcast %759 : vector<2x1xf32> to vector<2x256xf32>
    %763 = arith.mulf %762, %761 : vector<2x256xf32>
    %764 = arith.addf %758, %763 : vector<2x256xf32>
    %765 = vector.extract_strided_slice %705 {offsets = [0, 10], sizes = [2, 1], strides = [1, 1]} : vector<2x16xf32> to vector<2x1xf32>
    %766 = vector.extract_strided_slice %704 {offsets = [10, 0, 0], sizes = [1, 2, 256], strides = [1, 1, 1]} : vector<16x2x256xf32> to vector<1x2x256xf32>
    %767 = vector.shape_cast %766 : vector<1x2x256xf32> to vector<2x256xf32>
    %768 = vector.broadcast %765 : vector<2x1xf32> to vector<2x256xf32>
    %769 = arith.mulf %768, %767 : vector<2x256xf32>
    %770 = arith.addf %764, %769 : vector<2x256xf32>
    %771 = vector.extract_strided_slice %705 {offsets = [0, 11], sizes = [2, 1], strides = [1, 1]} : vector<2x16xf32> to vector<2x1xf32>
    %772 = vector.extract_strided_slice %704 {offsets = [11, 0, 0], sizes = [1, 2, 256], strides = [1, 1, 1]} : vector<16x2x256xf32> to vector<1x2x256xf32>
    %773 = vector.shape_cast %772 : vector<1x2x256xf32> to vector<2x256xf32>
    %774 = vector.broadcast %771 : vector<2x1xf32> to vector<2x256xf32>
    %775 = arith.mulf %774, %773 : vector<2x256xf32>
    %776 = arith.addf %770, %775 : vector<2x256xf32>
    %777 = vector.extract_strided_slice %705 {offsets = [0, 12], sizes = [2, 1], strides = [1, 1]} : vector<2x16xf32> to vector<2x1xf32>
    %778 = vector.extract_strided_slice %704 {offsets = [12, 0, 0], sizes = [1, 2, 256], strides = [1, 1, 1]} : vector<16x2x256xf32> to vector<1x2x256xf32>
    %779 = vector.shape_cast %778 : vector<1x2x256xf32> to vector<2x256xf32>
    %780 = vector.broadcast %777 : vector<2x1xf32> to vector<2x256xf32>
    %781 = arith.mulf %780, %779 : vector<2x256xf32>
    %782 = arith.addf %776, %781 : vector<2x256xf32>
    %783 = vector.extract_strided_slice %705 {offsets = [0, 13], sizes = [2, 1], strides = [1, 1]} : vector<2x16xf32> to vector<2x1xf32>
    %784 = vector.extract_strided_slice %704 {offsets = [13, 0, 0], sizes = [1, 2, 256], strides = [1, 1, 1]} : vector<16x2x256xf32> to vector<1x2x256xf32>
    %785 = vector.shape_cast %784 : vector<1x2x256xf32> to vector<2x256xf32>
    %786 = vector.broadcast %783 : vector<2x1xf32> to vector<2x256xf32>
    %787 = arith.mulf %786, %785 : vector<2x256xf32>
    %788 = arith.addf %782, %787 : vector<2x256xf32>
    %789 = vector.extract_strided_slice %705 {offsets = [0, 14], sizes = [2, 1], strides = [1, 1]} : vector<2x16xf32> to vector<2x1xf32>
    %790 = vector.extract_strided_slice %704 {offsets = [14, 0, 0], sizes = [1, 2, 256], strides = [1, 1, 1]} : vector<16x2x256xf32> to vector<1x2x256xf32>
    %791 = vector.shape_cast %790 : vector<1x2x256xf32> to vector<2x256xf32>
    %792 = vector.broadcast %789 : vector<2x1xf32> to vector<2x256xf32>
    %793 = arith.mulf %792, %791 : vector<2x256xf32>
    %794 = arith.addf %788, %793 : vector<2x256xf32>
    %795 = vector.extract_strided_slice %705 {offsets = [0, 15], sizes = [2, 1], strides = [1, 1]} : vector<2x16xf32> to vector<2x1xf32>
    %796 = vector.extract_strided_slice %704 {offsets = [15, 0, 0], sizes = [1, 2, 256], strides = [1, 1, 1]} : vector<16x2x256xf32> to vector<1x2x256xf32>
    %797 = vector.shape_cast %796 : vector<1x2x256xf32> to vector<2x256xf32>
    %798 = vector.broadcast %795 : vector<2x1xf32> to vector<2x256xf32>
    %799 = arith.mulf %798, %797 : vector<2x256xf32>
    %800 = arith.addf %794, %799 : vector<2x256xf32>
    %c8_166 = arith.constant 8 : index
    %c0_167 = arith.constant 0 : index
    %801 = vector.load %arg16[%c8_166, %c0_167] : memref<16x256xf32, #tpu.memory_space<vmem>>, vector<2x256xf32>
    tpu.vector_store %arg16[%c8_166, %c0_167], %800 {strides = array<i32>} : memref<16x256xf32, #tpu.memory_space<vmem>>, vector<2x256xf32>,
    %c0_168 = arith.constant 0 : index
    %c10_169 = arith.constant 10 : index
    %c0_170 = arith.constant 0 : index
    %802 = vector.load %arg13[%c0_168, %c10_169, %c0_170] : memref<16x16x256xf32, #tpu.memory_space<vmem>>, vector<16x2x256xf32>
    %803 = arith.mulf %802, %704 : vector<16x2x256xf32>
    %c0_171 = arith.constant 0 : index
    %c10_172 = arith.constant 10 : index
    %c0_173 = arith.constant 0 : index
    %804 = vector.load %arg14[%c0_171, %c10_172, %c0_173] : memref<16x16x256xf32, #tpu.memory_space<vmem>>, vector<16x2x256xf32>
    %805 = arith.addf %803, %804 : vector<16x2x256xf32>
    %c10_174 = arith.constant 10 : index
    %c0_175 = arith.constant 0 : index
    %806 = vector.load %arg15[%c10_174, %c0_175] : memref<16x16xf32, #tpu.memory_space<vmem>>, vector<2x16xf32>
    %807 = vector.extract_strided_slice %806 {offsets = [0, 0], sizes = [2, 1], strides = [1, 1]} : vector<2x16xf32> to vector<2x1xf32>
    %808 = vector.extract_strided_slice %805 {offsets = [0, 0, 0], sizes = [1, 2, 256], strides = [1, 1, 1]} : vector<16x2x256xf32> to vector<1x2x256xf32>
    %809 = vector.shape_cast %808 : vector<1x2x256xf32> to vector<2x256xf32>
    %810 = vector.broadcast %807 : vector<2x1xf32> to vector<2x256xf32>
    %811 = arith.mulf %810, %809 : vector<2x256xf32>
    %812 = vector.extract_strided_slice %806 {offsets = [0, 1], sizes = [2, 1], strides = [1, 1]} : vector<2x16xf32> to vector<2x1xf32>
    %813 = vector.extract_strided_slice %805 {offsets = [1, 0, 0], sizes = [1, 2, 256], strides = [1, 1, 1]} : vector<16x2x256xf32> to vector<1x2x256xf32>
    %814 = vector.shape_cast %813 : vector<1x2x256xf32> to vector<2x256xf32>
    %815 = vector.broadcast %812 : vector<2x1xf32> to vector<2x256xf32>
    %816 = arith.mulf %815, %814 : vector<2x256xf32>
    %817 = arith.addf %811, %816 : vector<2x256xf32>
    %818 = vector.extract_strided_slice %806 {offsets = [0, 2], sizes = [2, 1], strides = [1, 1]} : vector<2x16xf32> to vector<2x1xf32>
    %819 = vector.extract_strided_slice %805 {offsets = [2, 0, 0], sizes = [1, 2, 256], strides = [1, 1, 1]} : vector<16x2x256xf32> to vector<1x2x256xf32>
    %820 = vector.shape_cast %819 : vector<1x2x256xf32> to vector<2x256xf32>
    %821 = vector.broadcast %818 : vector<2x1xf32> to vector<2x256xf32>
    %822 = arith.mulf %821, %820 : vector<2x256xf32>
    %823 = arith.addf %817, %822 : vector<2x256xf32>
    %824 = vector.extract_strided_slice %806 {offsets = [0, 3], sizes = [2, 1], strides = [1, 1]} : vector<2x16xf32> to vector<2x1xf32>
    %825 = vector.extract_strided_slice %805 {offsets = [3, 0, 0], sizes = [1, 2, 256], strides = [1, 1, 1]} : vector<16x2x256xf32> to vector<1x2x256xf32>
    %826 = vector.shape_cast %825 : vector<1x2x256xf32> to vector<2x256xf32>
    %827 = vector.broadcast %824 : vector<2x1xf32> to vector<2x256xf32>
    %828 = arith.mulf %827, %826 : vector<2x256xf32>
    %829 = arith.addf %823, %828 : vector<2x256xf32>
    %830 = vector.extract_strided_slice %806 {offsets = [0, 4], sizes = [2, 1], strides = [1, 1]} : vector<2x16xf32> to vector<2x1xf32>
    %831 = vector.extract_strided_slice %805 {offsets = [4, 0, 0], sizes = [1, 2, 256], strides = [1, 1, 1]} : vector<16x2x256xf32> to vector<1x2x256xf32>
    %832 = vector.shape_cast %831 : vector<1x2x256xf32> to vector<2x256xf32>
    %833 = vector.broadcast %830 : vector<2x1xf32> to vector<2x256xf32>
    %834 = arith.mulf %833, %832 : vector<2x256xf32>
    %835 = arith.addf %829, %834 : vector<2x256xf32>
    %836 = vector.extract_strided_slice %806 {offsets = [0, 5], sizes = [2, 1], strides = [1, 1]} : vector<2x16xf32> to vector<2x1xf32>
    %837 = vector.extract_strided_slice %805 {offsets = [5, 0, 0], sizes = [1, 2, 256], strides = [1, 1, 1]} : vector<16x2x256xf32> to vector<1x2x256xf32>
    %838 = vector.shape_cast %837 : vector<1x2x256xf32> to vector<2x256xf32>
    %839 = vector.broadcast %836 : vector<2x1xf32> to vector<2x256xf32>
    %840 = arith.mulf %839, %838 : vector<2x256xf32>
    %841 = arith.addf %835, %840 : vector<2x256xf32>
    %842 = vector.extract_strided_slice %806 {offsets = [0, 6], sizes = [2, 1], strides = [1, 1]} : vector<2x16xf32> to vector<2x1xf32>
    %843 = vector.extract_strided_slice %805 {offsets = [6, 0, 0], sizes = [1, 2, 256], strides = [1, 1, 1]} : vector<16x2x256xf32> to vector<1x2x256xf32>
    %844 = vector.shape_cast %843 : vector<1x2x256xf32> to vector<2x256xf32>
    %845 = vector.broadcast %842 : vector<2x1xf32> to vector<2x256xf32>
    %846 = arith.mulf %845, %844 : vector<2x256xf32>
    %847 = arith.addf %841, %846 : vector<2x256xf32>
    %848 = vector.extract_strided_slice %806 {offsets = [0, 7], sizes = [2, 1], strides = [1, 1]} : vector<2x16xf32> to vector<2x1xf32>
    %849 = vector.extract_strided_slice %805 {offsets = [7, 0, 0], sizes = [1, 2, 256], strides = [1, 1, 1]} : vector<16x2x256xf32> to vector<1x2x256xf32>
    %850 = vector.shape_cast %849 : vector<1x2x256xf32> to vector<2x256xf32>
    %851 = vector.broadcast %848 : vector<2x1xf32> to vector<2x256xf32>
    %852 = arith.mulf %851, %850 : vector<2x256xf32>
    %853 = arith.addf %847, %852 : vector<2x256xf32>
    %854 = vector.extract_strided_slice %806 {offsets = [0, 8], sizes = [2, 1], strides = [1, 1]} : vector<2x16xf32> to vector<2x1xf32>
    %855 = vector.extract_strided_slice %805 {offsets = [8, 0, 0], sizes = [1, 2, 256], strides = [1, 1, 1]} : vector<16x2x256xf32> to vector<1x2x256xf32>
    %856 = vector.shape_cast %855 : vector<1x2x256xf32> to vector<2x256xf32>
    %857 = vector.broadcast %854 : vector<2x1xf32> to vector<2x256xf32>
    %858 = arith.mulf %857, %856 : vector<2x256xf32>
    %859 = arith.addf %853, %858 : vector<2x256xf32>
    %860 = vector.extract_strided_slice %806 {offsets = [0, 9], sizes = [2, 1], strides = [1, 1]} : vector<2x16xf32> to vector<2x1xf32>
    %861 = vector.extract_strided_slice %805 {offsets = [9, 0, 0], sizes = [1, 2, 256], strides = [1, 1, 1]} : vector<16x2x256xf32> to vector<1x2x256xf32>
    %862 = vector.shape_cast %861 : vector<1x2x256xf32> to vector<2x256xf32>
    %863 = vector.broadcast %860 : vector<2x1xf32> to vector<2x256xf32>
    %864 = arith.mulf %863, %862 : vector<2x256xf32>
    %865 = arith.addf %859, %864 : vector<2x256xf32>
    %866 = vector.extract_strided_slice %806 {offsets = [0, 10], sizes = [2, 1], strides = [1, 1]} : vector<2x16xf32> to vector<2x1xf32>
    %867 = vector.extract_strided_slice %805 {offsets = [10, 0, 0], sizes = [1, 2, 256], strides = [1, 1, 1]} : vector<16x2x256xf32> to vector<1x2x256xf32>
    %868 = vector.shape_cast %867 : vector<1x2x256xf32> to vector<2x256xf32>
    %869 = vector.broadcast %866 : vector<2x1xf32> to vector<2x256xf32>
    %870 = arith.mulf %869, %868 : vector<2x256xf32>
    %871 = arith.addf %865, %870 : vector<2x256xf32>
    %872 = vector.extract_strided_slice %806 {offsets = [0, 11], sizes = [2, 1], strides = [1, 1]} : vector<2x16xf32> to vector<2x1xf32>
    %873 = vector.extract_strided_slice %805 {offsets = [11, 0, 0], sizes = [1, 2, 256], strides = [1, 1, 1]} : vector<16x2x256xf32> to vector<1x2x256xf32>
    %874 = vector.shape_cast %873 : vector<1x2x256xf32> to vector<2x256xf32>
    %875 = vector.broadcast %872 : vector<2x1xf32> to vector<2x256xf32>
    %876 = arith.mulf %875, %874 : vector<2x256xf32>
    %877 = arith.addf %871, %876 : vector<2x256xf32>
    %878 = vector.extract_strided_slice %806 {offsets = [0, 12], sizes = [2, 1], strides = [1, 1]} : vector<2x16xf32> to vector<2x1xf32>
    %879 = vector.extract_strided_slice %805 {offsets = [12, 0, 0], sizes = [1, 2, 256], strides = [1, 1, 1]} : vector<16x2x256xf32> to vector<1x2x256xf32>
    %880 = vector.shape_cast %879 : vector<1x2x256xf32> to vector<2x256xf32>
    %881 = vector.broadcast %878 : vector<2x1xf32> to vector<2x256xf32>
    %882 = arith.mulf %881, %880 : vector<2x256xf32>
    %883 = arith.addf %877, %882 : vector<2x256xf32>
    %884 = vector.extract_strided_slice %806 {offsets = [0, 13], sizes = [2, 1], strides = [1, 1]} : vector<2x16xf32> to vector<2x1xf32>
    %885 = vector.extract_strided_slice %805 {offsets = [13, 0, 0], sizes = [1, 2, 256], strides = [1, 1, 1]} : vector<16x2x256xf32> to vector<1x2x256xf32>
    %886 = vector.shape_cast %885 : vector<1x2x256xf32> to vector<2x256xf32>
    %887 = vector.broadcast %884 : vector<2x1xf32> to vector<2x256xf32>
    %888 = arith.mulf %887, %886 : vector<2x256xf32>
    %889 = arith.addf %883, %888 : vector<2x256xf32>
    %890 = vector.extract_strided_slice %806 {offsets = [0, 14], sizes = [2, 1], strides = [1, 1]} : vector<2x16xf32> to vector<2x1xf32>
    %891 = vector.extract_strided_slice %805 {offsets = [14, 0, 0], sizes = [1, 2, 256], strides = [1, 1, 1]} : vector<16x2x256xf32> to vector<1x2x256xf32>
    %892 = vector.shape_cast %891 : vector<1x2x256xf32> to vector<2x256xf32>
    %893 = vector.broadcast %890 : vector<2x1xf32> to vector<2x256xf32>
    %894 = arith.mulf %893, %892 : vector<2x256xf32>
    %895 = arith.addf %889, %894 : vector<2x256xf32>
    %896 = vector.extract_strided_slice %806 {offsets = [0, 15], sizes = [2, 1], strides = [1, 1]} : vector<2x16xf32> to vector<2x1xf32>
    %897 = vector.extract_strided_slice %805 {offsets = [15, 0, 0], sizes = [1, 2, 256], strides = [1, 1, 1]} : vector<16x2x256xf32> to vector<1x2x256xf32>
    %898 = vector.shape_cast %897 : vector<1x2x256xf32> to vector<2x256xf32>
    %899 = vector.broadcast %896 : vector<2x1xf32> to vector<2x256xf32>
    %900 = arith.mulf %899, %898 : vector<2x256xf32>
    %901 = arith.addf %895, %900 : vector<2x256xf32>
    %c10_176 = arith.constant 10 : index
    %c0_177 = arith.constant 0 : index
    %902 = vector.load %arg16[%c10_176, %c0_177] : memref<16x256xf32, #tpu.memory_space<vmem>>, vector<2x256xf32>
    tpu.vector_store %arg16[%c10_176, %c0_177], %901 {strides = array<i32>} : memref<16x256xf32, #tpu.memory_space<vmem>>, vector<2x256xf32>,
    %c0_178 = arith.constant 0 : index
    %c12_179 = arith.constant 12 : index
    %c0_180 = arith.constant 0 : index
    %903 = vector.load %arg13[%c0_178, %c12_179, %c0_180] : memref<16x16x256xf32, #tpu.memory_space<vmem>>, vector<16x2x256xf32>
    %904 = arith.mulf %903, %805 : vector<16x2x256xf32>
    %c0_181 = arith.constant 0 : index
    %c12_182 = arith.constant 12 : index
    %c0_183 = arith.constant 0 : index
    %905 = vector.load %arg14[%c0_181, %c12_182, %c0_183] : memref<16x16x256xf32, #tpu.memory_space<vmem>>, vector<16x2x256xf32>
    %906 = arith.addf %904, %905 : vector<16x2x256xf32>
    %c12_184 = arith.constant 12 : index
    %c0_185 = arith.constant 0 : index
    %907 = vector.load %arg15[%c12_184, %c0_185] : memref<16x16xf32, #tpu.memory_space<vmem>>, vector<2x16xf32>
    %908 = vector.extract_strided_slice %907 {offsets = [0, 0], sizes = [2, 1], strides = [1, 1]} : vector<2x16xf32> to vector<2x1xf32>
    %909 = vector.extract_strided_slice %906 {offsets = [0, 0, 0], sizes = [1, 2, 256], strides = [1, 1, 1]} : vector<16x2x256xf32> to vector<1x2x256xf32>
    %910 = vector.shape_cast %909 : vector<1x2x256xf32> to vector<2x256xf32>
    %911 = vector.broadcast %908 : vector<2x1xf32> to vector<2x256xf32>
    %912 = arith.mulf %911, %910 : vector<2x256xf32>
    %913 = vector.extract_strided_slice %907 {offsets = [0, 1], sizes = [2, 1], strides = [1, 1]} : vector<2x16xf32> to vector<2x1xf32>
    %914 = vector.extract_strided_slice %906 {offsets = [1, 0, 0], sizes = [1, 2, 256], strides = [1, 1, 1]} : vector<16x2x256xf32> to vector<1x2x256xf32>
    %915 = vector.shape_cast %914 : vector<1x2x256xf32> to vector<2x256xf32>
    %916 = vector.broadcast %913 : vector<2x1xf32> to vector<2x256xf32>
    %917 = arith.mulf %916, %915 : vector<2x256xf32>
    %918 = arith.addf %912, %917 : vector<2x256xf32>
    %919 = vector.extract_strided_slice %907 {offsets = [0, 2], sizes = [2, 1], strides = [1, 1]} : vector<2x16xf32> to vector<2x1xf32>
    %920 = vector.extract_strided_slice %906 {offsets = [2, 0, 0], sizes = [1, 2, 256], strides = [1, 1, 1]} : vector<16x2x256xf32> to vector<1x2x256xf32>
    %921 = vector.shape_cast %920 : vector<1x2x256xf32> to vector<2x256xf32>
    %922 = vector.broadcast %919 : vector<2x1xf32> to vector<2x256xf32>
    %923 = arith.mulf %922, %921 : vector<2x256xf32>
    %924 = arith.addf %918, %923 : vector<2x256xf32>
    %925 = vector.extract_strided_slice %907 {offsets = [0, 3], sizes = [2, 1], strides = [1, 1]} : vector<2x16xf32> to vector<2x1xf32>
    %926 = vector.extract_strided_slice %906 {offsets = [3, 0, 0], sizes = [1, 2, 256], strides = [1, 1, 1]} : vector<16x2x256xf32> to vector<1x2x256xf32>
    %927 = vector.shape_cast %926 : vector<1x2x256xf32> to vector<2x256xf32>
    %928 = vector.broadcast %925 : vector<2x1xf32> to vector<2x256xf32>
    %929 = arith.mulf %928, %927 : vector<2x256xf32>
    %930 = arith.addf %924, %929 : vector<2x256xf32>
    %931 = vector.extract_strided_slice %907 {offsets = [0, 4], sizes = [2, 1], strides = [1, 1]} : vector<2x16xf32> to vector<2x1xf32>
    %932 = vector.extract_strided_slice %906 {offsets = [4, 0, 0], sizes = [1, 2, 256], strides = [1, 1, 1]} : vector<16x2x256xf32> to vector<1x2x256xf32>
    %933 = vector.shape_cast %932 : vector<1x2x256xf32> to vector<2x256xf32>
    %934 = vector.broadcast %931 : vector<2x1xf32> to vector<2x256xf32>
    %935 = arith.mulf %934, %933 : vector<2x256xf32>
    %936 = arith.addf %930, %935 : vector<2x256xf32>
    %937 = vector.extract_strided_slice %907 {offsets = [0, 5], sizes = [2, 1], strides = [1, 1]} : vector<2x16xf32> to vector<2x1xf32>
    %938 = vector.extract_strided_slice %906 {offsets = [5, 0, 0], sizes = [1, 2, 256], strides = [1, 1, 1]} : vector<16x2x256xf32> to vector<1x2x256xf32>
    %939 = vector.shape_cast %938 : vector<1x2x256xf32> to vector<2x256xf32>
    %940 = vector.broadcast %937 : vector<2x1xf32> to vector<2x256xf32>
    %941 = arith.mulf %940, %939 : vector<2x256xf32>
    %942 = arith.addf %936, %941 : vector<2x256xf32>
    %943 = vector.extract_strided_slice %907 {offsets = [0, 6], sizes = [2, 1], strides = [1, 1]} : vector<2x16xf32> to vector<2x1xf32>
    %944 = vector.extract_strided_slice %906 {offsets = [6, 0, 0], sizes = [1, 2, 256], strides = [1, 1, 1]} : vector<16x2x256xf32> to vector<1x2x256xf32>
    %945 = vector.shape_cast %944 : vector<1x2x256xf32> to vector<2x256xf32>
    %946 = vector.broadcast %943 : vector<2x1xf32> to vector<2x256xf32>
    %947 = arith.mulf %946, %945 : vector<2x256xf32>
    %948 = arith.addf %942, %947 : vector<2x256xf32>
    %949 = vector.extract_strided_slice %907 {offsets = [0, 7], sizes = [2, 1], strides = [1, 1]} : vector<2x16xf32> to vector<2x1xf32>
    %950 = vector.extract_strided_slice %906 {offsets = [7, 0, 0], sizes = [1, 2, 256], strides = [1, 1, 1]} : vector<16x2x256xf32> to vector<1x2x256xf32>
    %951 = vector.shape_cast %950 : vector<1x2x256xf32> to vector<2x256xf32>
    %952 = vector.broadcast %949 : vector<2x1xf32> to vector<2x256xf32>
    %953 = arith.mulf %952, %951 : vector<2x256xf32>
    %954 = arith.addf %948, %953 : vector<2x256xf32>
    %955 = vector.extract_strided_slice %907 {offsets = [0, 8], sizes = [2, 1], strides = [1, 1]} : vector<2x16xf32> to vector<2x1xf32>
    %956 = vector.extract_strided_slice %906 {offsets = [8, 0, 0], sizes = [1, 2, 256], strides = [1, 1, 1]} : vector<16x2x256xf32> to vector<1x2x256xf32>
    %957 = vector.shape_cast %956 : vector<1x2x256xf32> to vector<2x256xf32>
    %958 = vector.broadcast %955 : vector<2x1xf32> to vector<2x256xf32>
    %959 = arith.mulf %958, %957 : vector<2x256xf32>
    %960 = arith.addf %954, %959 : vector<2x256xf32>
    %961 = vector.extract_strided_slice %907 {offsets = [0, 9], sizes = [2, 1], strides = [1, 1]} : vector<2x16xf32> to vector<2x1xf32>
    %962 = vector.extract_strided_slice %906 {offsets = [9, 0, 0], sizes = [1, 2, 256], strides = [1, 1, 1]} : vector<16x2x256xf32> to vector<1x2x256xf32>
    %963 = vector.shape_cast %962 : vector<1x2x256xf32> to vector<2x256xf32>
    %964 = vector.broadcast %961 : vector<2x1xf32> to vector<2x256xf32>
    %965 = arith.mulf %964, %963 : vector<2x256xf32>
    %966 = arith.addf %960, %965 : vector<2x256xf32>
    %967 = vector.extract_strided_slice %907 {offsets = [0, 10], sizes = [2, 1], strides = [1, 1]} : vector<2x16xf32> to vector<2x1xf32>
    %968 = vector.extract_strided_slice %906 {offsets = [10, 0, 0], sizes = [1, 2, 256], strides = [1, 1, 1]} : vector<16x2x256xf32> to vector<1x2x256xf32>
    %969 = vector.shape_cast %968 : vector<1x2x256xf32> to vector<2x256xf32>
    %970 = vector.broadcast %967 : vector<2x1xf32> to vector<2x256xf32>
    %971 = arith.mulf %970, %969 : vector<2x256xf32>
    %972 = arith.addf %966, %971 : vector<2x256xf32>
    %973 = vector.extract_strided_slice %907 {offsets = [0, 11], sizes = [2, 1], strides = [1, 1]} : vector<2x16xf32> to vector<2x1xf32>
    %974 = vector.extract_strided_slice %906 {offsets = [11, 0, 0], sizes = [1, 2, 256], strides = [1, 1, 1]} : vector<16x2x256xf32> to vector<1x2x256xf32>
    %975 = vector.shape_cast %974 : vector<1x2x256xf32> to vector<2x256xf32>
    %976 = vector.broadcast %973 : vector<2x1xf32> to vector<2x256xf32>
    %977 = arith.mulf %976, %975 : vector<2x256xf32>
    %978 = arith.addf %972, %977 : vector<2x256xf32>
    %979 = vector.extract_strided_slice %907 {offsets = [0, 12], sizes = [2, 1], strides = [1, 1]} : vector<2x16xf32> to vector<2x1xf32>
    %980 = vector.extract_strided_slice %906 {offsets = [12, 0, 0], sizes = [1, 2, 256], strides = [1, 1, 1]} : vector<16x2x256xf32> to vector<1x2x256xf32>
    %981 = vector.shape_cast %980 : vector<1x2x256xf32> to vector<2x256xf32>
    %982 = vector.broadcast %979 : vector<2x1xf32> to vector<2x256xf32>
    %983 = arith.mulf %982, %981 : vector<2x256xf32>
    %984 = arith.addf %978, %983 : vector<2x256xf32>
    %985 = vector.extract_strided_slice %907 {offsets = [0, 13], sizes = [2, 1], strides = [1, 1]} : vector<2x16xf32> to vector<2x1xf32>
    %986 = vector.extract_strided_slice %906 {offsets = [13, 0, 0], sizes = [1, 2, 256], strides = [1, 1, 1]} : vector<16x2x256xf32> to vector<1x2x256xf32>
    %987 = vector.shape_cast %986 : vector<1x2x256xf32> to vector<2x256xf32>
    %988 = vector.broadcast %985 : vector<2x1xf32> to vector<2x256xf32>
    %989 = arith.mulf %988, %987 : vector<2x256xf32>
    %990 = arith.addf %984, %989 : vector<2x256xf32>
    %991 = vector.extract_strided_slice %907 {offsets = [0, 14], sizes = [2, 1], strides = [1, 1]} : vector<2x16xf32> to vector<2x1xf32>
    %992 = vector.extract_strided_slice %906 {offsets = [14, 0, 0], sizes = [1, 2, 256], strides = [1, 1, 1]} : vector<16x2x256xf32> to vector<1x2x256xf32>
    %993 = vector.shape_cast %992 : vector<1x2x256xf32> to vector<2x256xf32>
    %994 = vector.broadcast %991 : vector<2x1xf32> to vector<2x256xf32>
    %995 = arith.mulf %994, %993 : vector<2x256xf32>
    %996 = arith.addf %990, %995 : vector<2x256xf32>
    %997 = vector.extract_strided_slice %907 {offsets = [0, 15], sizes = [2, 1], strides = [1, 1]} : vector<2x16xf32> to vector<2x1xf32>
    %998 = vector.extract_strided_slice %906 {offsets = [15, 0, 0], sizes = [1, 2, 256], strides = [1, 1, 1]} : vector<16x2x256xf32> to vector<1x2x256xf32>
    %999 = vector.shape_cast %998 : vector<1x2x256xf32> to vector<2x256xf32>
    %1000 = vector.broadcast %997 : vector<2x1xf32> to vector<2x256xf32>
    %1001 = arith.mulf %1000, %999 : vector<2x256xf32>
    %1002 = arith.addf %996, %1001 : vector<2x256xf32>
    %c12_186 = arith.constant 12 : index
    %c0_187 = arith.constant 0 : index
    %1003 = vector.load %arg16[%c12_186, %c0_187] : memref<16x256xf32, #tpu.memory_space<vmem>>, vector<2x256xf32>
    tpu.vector_store %arg16[%c12_186, %c0_187], %1002 {strides = array<i32>} : memref<16x256xf32, #tpu.memory_space<vmem>>, vector<2x256xf32>,
    %c0_188 = arith.constant 0 : index
    %c14_189 = arith.constant 14 : index
    %c0_190 = arith.constant 0 : index
    %1004 = vector.load %arg13[%c0_188, %c14_189, %c0_190] : memref<16x16x256xf32, #tpu.memory_space<vmem>>, vector<16x2x256xf32>
    %1005 = arith.mulf %1004, %906 : vector<16x2x256xf32>
    %c0_191 = arith.constant 0 : index
    %c14_192 = arith.constant 14 : index
    %c0_193 = arith.constant 0 : index
    %1006 = vector.load %arg14[%c0_191, %c14_192, %c0_193] : memref<16x16x256xf32, #tpu.memory_space<vmem>>, vector<16x2x256xf32>
    %1007 = arith.addf %1005, %1006 : vector<16x2x256xf32>
    %c14_194 = arith.constant 14 : index
    %c0_195 = arith.constant 0 : index
    %1008 = vector.load %arg15[%c14_194, %c0_195] : memref<16x16xf32, #tpu.memory_space<vmem>>, vector<2x16xf32>
    %1009 = vector.extract_strided_slice %1008 {offsets = [0, 0], sizes = [2, 1], strides = [1, 1]} : vector<2x16xf32> to vector<2x1xf32>
    %1010 = vector.extract_strided_slice %1007 {offsets = [0, 0, 0], sizes = [1, 2, 256], strides = [1, 1, 1]} : vector<16x2x256xf32> to vector<1x2x256xf32>
    %1011 = vector.shape_cast %1010 : vector<1x2x256xf32> to vector<2x256xf32>
    %1012 = vector.broadcast %1009 : vector<2x1xf32> to vector<2x256xf32>
    %1013 = arith.mulf %1012, %1011 : vector<2x256xf32>
    %1014 = vector.extract_strided_slice %1008 {offsets = [0, 1], sizes = [2, 1], strides = [1, 1]} : vector<2x16xf32> to vector<2x1xf32>
    %1015 = vector.extract_strided_slice %1007 {offsets = [1, 0, 0], sizes = [1, 2, 256], strides = [1, 1, 1]} : vector<16x2x256xf32> to vector<1x2x256xf32>
    %1016 = vector.shape_cast %1015 : vector<1x2x256xf32> to vector<2x256xf32>
    %1017 = vector.broadcast %1014 : vector<2x1xf32> to vector<2x256xf32>
    %1018 = arith.mulf %1017, %1016 : vector<2x256xf32>
    %1019 = arith.addf %1013, %1018 : vector<2x256xf32>
    %1020 = vector.extract_strided_slice %1008 {offsets = [0, 2], sizes = [2, 1], strides = [1, 1]} : vector<2x16xf32> to vector<2x1xf32>
    %1021 = vector.extract_strided_slice %1007 {offsets = [2, 0, 0], sizes = [1, 2, 256], strides = [1, 1, 1]} : vector<16x2x256xf32> to vector<1x2x256xf32>
    %1022 = vector.shape_cast %1021 : vector<1x2x256xf32> to vector<2x256xf32>
    %1023 = vector.broadcast %1020 : vector<2x1xf32> to vector<2x256xf32>
    %1024 = arith.mulf %1023, %1022 : vector<2x256xf32>
    %1025 = arith.addf %1019, %1024 : vector<2x256xf32>
    %1026 = vector.extract_strided_slice %1008 {offsets = [0, 3], sizes = [2, 1], strides = [1, 1]} : vector<2x16xf32> to vector<2x1xf32>
    %1027 = vector.extract_strided_slice %1007 {offsets = [3, 0, 0], sizes = [1, 2, 256], strides = [1, 1, 1]} : vector<16x2x256xf32> to vector<1x2x256xf32>
    %1028 = vector.shape_cast %1027 : vector<1x2x256xf32> to vector<2x256xf32>
    %1029 = vector.broadcast %1026 : vector<2x1xf32> to vector<2x256xf32>
    %1030 = arith.mulf %1029, %1028 : vector<2x256xf32>
    %1031 = arith.addf %1025, %1030 : vector<2x256xf32>
    %1032 = vector.extract_strided_slice %1008 {offsets = [0, 4], sizes = [2, 1], strides = [1, 1]} : vector<2x16xf32> to vector<2x1xf32>
    %1033 = vector.extract_strided_slice %1007 {offsets = [4, 0, 0], sizes = [1, 2, 256], strides = [1, 1, 1]} : vector<16x2x256xf32> to vector<1x2x256xf32>
    %1034 = vector.shape_cast %1033 : vector<1x2x256xf32> to vector<2x256xf32>
    %1035 = vector.broadcast %1032 : vector<2x1xf32> to vector<2x256xf32>
    %1036 = arith.mulf %1035, %1034 : vector<2x256xf32>
    %1037 = arith.addf %1031, %1036 : vector<2x256xf32>
    %1038 = vector.extract_strided_slice %1008 {offsets = [0, 5], sizes = [2, 1], strides = [1, 1]} : vector<2x16xf32> to vector<2x1xf32>
    %1039 = vector.extract_strided_slice %1007 {offsets = [5, 0, 0], sizes = [1, 2, 256], strides = [1, 1, 1]} : vector<16x2x256xf32> to vector<1x2x256xf32>
    %1040 = vector.shape_cast %1039 : vector<1x2x256xf32> to vector<2x256xf32>
    %1041 = vector.broadcast %1038 : vector<2x1xf32> to vector<2x256xf32>
    %1042 = arith.mulf %1041, %1040 : vector<2x256xf32>
    %1043 = arith.addf %1037, %1042 : vector<2x256xf32>
    %1044 = vector.extract_strided_slice %1008 {offsets = [0, 6], sizes = [2, 1], strides = [1, 1]} : vector<2x16xf32> to vector<2x1xf32>
    %1045 = vector.extract_strided_slice %1007 {offsets = [6, 0, 0], sizes = [1, 2, 256], strides = [1, 1, 1]} : vector<16x2x256xf32> to vector<1x2x256xf32>
    %1046 = vector.shape_cast %1045 : vector<1x2x256xf32> to vector<2x256xf32>
    %1047 = vector.broadcast %1044 : vector<2x1xf32> to vector<2x256xf32>
    %1048 = arith.mulf %1047, %1046 : vector<2x256xf32>
    %1049 = arith.addf %1043, %1048 : vector<2x256xf32>
    %1050 = vector.extract_strided_slice %1008 {offsets = [0, 7], sizes = [2, 1], strides = [1, 1]} : vector<2x16xf32> to vector<2x1xf32>
    %1051 = vector.extract_strided_slice %1007 {offsets = [7, 0, 0], sizes = [1, 2, 256], strides = [1, 1, 1]} : vector<16x2x256xf32> to vector<1x2x256xf32>
    %1052 = vector.shape_cast %1051 : vector<1x2x256xf32> to vector<2x256xf32>
    %1053 = vector.broadcast %1050 : vector<2x1xf32> to vector<2x256xf32>
    %1054 = arith.mulf %1053, %1052 : vector<2x256xf32>
    %1055 = arith.addf %1049, %1054 : vector<2x256xf32>
    %1056 = vector.extract_strided_slice %1008 {offsets = [0, 8], sizes = [2, 1], strides = [1, 1]} : vector<2x16xf32> to vector<2x1xf32>
    %1057 = vector.extract_strided_slice %1007 {offsets = [8, 0, 0], sizes = [1, 2, 256], strides = [1, 1, 1]} : vector<16x2x256xf32> to vector<1x2x256xf32>
    %1058 = vector.shape_cast %1057 : vector<1x2x256xf32> to vector<2x256xf32>
    %1059 = vector.broadcast %1056 : vector<2x1xf32> to vector<2x256xf32>
    %1060 = arith.mulf %1059, %1058 : vector<2x256xf32>
    %1061 = arith.addf %1055, %1060 : vector<2x256xf32>
    %1062 = vector.extract_strided_slice %1008 {offsets = [0, 9], sizes = [2, 1], strides = [1, 1]} : vector<2x16xf32> to vector<2x1xf32>
    %1063 = vector.extract_strided_slice %1007 {offsets = [9, 0, 0], sizes = [1, 2, 256], strides = [1, 1, 1]} : vector<16x2x256xf32> to vector<1x2x256xf32>
    %1064 = vector.shape_cast %1063 : vector<1x2x256xf32> to vector<2x256xf32>
    %1065 = vector.broadcast %1062 : vector<2x1xf32> to vector<2x256xf32>
    %1066 = arith.mulf %1065, %1064 : vector<2x256xf32>
    %1067 = arith.addf %1061, %1066 : vector<2x256xf32>
    %1068 = vector.extract_strided_slice %1008 {offsets = [0, 10], sizes = [2, 1], strides = [1, 1]} : vector<2x16xf32> to vector<2x1xf32>
    %1069 = vector.extract_strided_slice %1007 {offsets = [10, 0, 0], sizes = [1, 2, 256], strides = [1, 1, 1]} : vector<16x2x256xf32> to vector<1x2x256xf32>
    %1070 = vector.shape_cast %1069 : vector<1x2x256xf32> to vector<2x256xf32>
    %1071 = vector.broadcast %1068 : vector<2x1xf32> to vector<2x256xf32>
    %1072 = arith.mulf %1071, %1070 : vector<2x256xf32>
    %1073 = arith.addf %1067, %1072 : vector<2x256xf32>
    %1074 = vector.extract_strided_slice %1008 {offsets = [0, 11], sizes = [2, 1], strides = [1, 1]} : vector<2x16xf32> to vector<2x1xf32>
    %1075 = vector.extract_strided_slice %1007 {offsets = [11, 0, 0], sizes = [1, 2, 256], strides = [1, 1, 1]} : vector<16x2x256xf32> to vector<1x2x256xf32>
    %1076 = vector.shape_cast %1075 : vector<1x2x256xf32> to vector<2x256xf32>
    %1077 = vector.broadcast %1074 : vector<2x1xf32> to vector<2x256xf32>
    %1078 = arith.mulf %1077, %1076 : vector<2x256xf32>
    %1079 = arith.addf %1073, %1078 : vector<2x256xf32>
    %1080 = vector.extract_strided_slice %1008 {offsets = [0, 12], sizes = [2, 1], strides = [1, 1]} : vector<2x16xf32> to vector<2x1xf32>
    %1081 = vector.extract_strided_slice %1007 {offsets = [12, 0, 0], sizes = [1, 2, 256], strides = [1, 1, 1]} : vector<16x2x256xf32> to vector<1x2x256xf32>
    %1082 = vector.shape_cast %1081 : vector<1x2x256xf32> to vector<2x256xf32>
    %1083 = vector.broadcast %1080 : vector<2x1xf32> to vector<2x256xf32>
    %1084 = arith.mulf %1083, %1082 : vector<2x256xf32>
    %1085 = arith.addf %1079, %1084 : vector<2x256xf32>
    %1086 = vector.extract_strided_slice %1008 {offsets = [0, 13], sizes = [2, 1], strides = [1, 1]} : vector<2x16xf32> to vector<2x1xf32>
    %1087 = vector.extract_strided_slice %1007 {offsets = [13, 0, 0], sizes = [1, 2, 256], strides = [1, 1, 1]} : vector<16x2x256xf32> to vector<1x2x256xf32>
    %1088 = vector.shape_cast %1087 : vector<1x2x256xf32> to vector<2x256xf32>
    %1089 = vector.broadcast %1086 : vector<2x1xf32> to vector<2x256xf32>
    %1090 = arith.mulf %1089, %1088 : vector<2x256xf32>
    %1091 = arith.addf %1085, %1090 : vector<2x256xf32>
    %1092 = vector.extract_strided_slice %1008 {offsets = [0, 14], sizes = [2, 1], strides = [1, 1]} : vector<2x16xf32> to vector<2x1xf32>
    %1093 = vector.extract_strided_slice %1007 {offsets = [14, 0, 0], sizes = [1, 2, 256], strides = [1, 1, 1]} : vector<16x2x256xf32> to vector<1x2x256xf32>
    %1094 = vector.shape_cast %1093 : vector<1x2x256xf32> to vector<2x256xf32>
    %1095 = vector.broadcast %1092 : vector<2x1xf32> to vector<2x256xf32>
    %1096 = arith.mulf %1095, %1094 : vector<2x256xf32>
    %1097 = arith.addf %1091, %1096 : vector<2x256xf32>
    %1098 = vector.extract_strided_slice %1008 {offsets = [0, 15], sizes = [2, 1], strides = [1, 1]} : vector<2x16xf32> to vector<2x1xf32>
    %1099 = vector.extract_strided_slice %1007 {offsets = [15, 0, 0], sizes = [1, 2, 256], strides = [1, 1, 1]} : vector<16x2x256xf32> to vector<1x2x256xf32>
    %1100 = vector.shape_cast %1099 : vector<1x2x256xf32> to vector<2x256xf32>
    %1101 = vector.broadcast %1098 : vector<2x1xf32> to vector<2x256xf32>
    %1102 = arith.mulf %1101, %1100 : vector<2x256xf32>
    %1103 = arith.addf %1097, %1102 : vector<2x256xf32>
    %c14_196 = arith.constant 14 : index
    %c0_197 = arith.constant 0 : index
    %1104 = vector.load %arg16[%c14_196, %c0_197] : memref<16x256xf32, #tpu.memory_space<vmem>>, vector<2x256xf32>
    tpu.vector_store %arg16[%c14_196, %c0_197], %1103 {strides = array<i32>} : memref<16x256xf32, #tpu.memory_space<vmem>>, vector<2x256xf32>,
    %c0_198 = arith.constant 0 : index
    %c0_199 = arith.constant 0 : index
    %1105 = vector.load %arg16[%c0_198, %c0_199] : memref<16x256xf32, #tpu.memory_space<vmem>>, vector<16x256xf32>
    %c0_200 = arith.constant 0 : index
    %c0_201 = arith.constant 0 : index
    %1106 = vector.load %arg10[%c0_200, %c0_201] : memref<1x256xf32, #tpu.memory_space<vmem>>, vector<1x256xf32>
    %1107 = vector.broadcast %1106 : vector<1x256xf32> to vector<16x256xf32>
    %1108 = arith.mulf %61, %1107 : vector<16x256xf32>
    %1109 = arith.addf %1105, %1108 : vector<16x256xf32>
    %1110 = arith.negf %29 : vector<16x256xf32>
    %1111 = math.exp %1110 : vector<16x256xf32>
    %cst_202 = arith.constant 1.000000e+00 : f32
    %1112 = vector.broadcast %cst_202 : f32 to vector<16x256xf32>
    %1113 = arith.addf %1112, %1111 : vector<16x256xf32>
    %1114 = arith.divf %1112, %1113 : vector<16x256xf32>
    %1115 = arith.mulf %29, %1114 : vector<16x256xf32>
    %1116 = arith.mulf %1109, %1115 : vector<16x256xf32>
    %c0_203 = arith.constant 0 : index
    %c0_204 = arith.constant 0 : index
    %1117 = vector.load %arg11[%c0_203, %c0_204] : memref<256x128xbf16, #tpu.memory_space<vmem>>, vector<256x128xbf16>
    %1118 = arith.truncf %1116 : vector<16x256xf32> to vector<16x256xbf16>
    %cst_205 = arith.constant dense<0.000000e+00> : vector<16x128xf32>
    %1119 = tpu.matmul %1118, %1117, %cst_205 {dimension_numbers = #tpu.dot_dimension_numbers<[1], [0], [0], [1], [0, 0, 1, 1], [], []>} : vector<16x256xbf16>, vector<256x128xbf16>, vector<16x128xf32> -> vector<16x128xf32>
    %c0_206 = arith.constant 0 : index
    %c0_207 = arith.constant 0 : index
    %1120 = vector.load %arg12[%c0_206, %c0_207] : memref<16x128xf32, #tpu.memory_space<vmem>>, vector<16x128xf32>
    tpu.vector_store %arg12[%c0_206, %c0_207], %1119 {strides = array<i32>} : memref<16x128xf32, #tpu.memory_space<vmem>>, vector<16x128xf32>,
    return
  }
  func.func @transform_0(%arg0: i32) -> (i32, i32) {
    %c0_i32 = arith.constant 0 : i32
    %c0_i32_0 = arith.constant 0 : i32
    return %arg0, %c0_i32 : i32, i32
  }
  func.func @transform_1(%arg0: i32) -> (i32, i32) {
    %c0_i32 = arith.constant 0 : i32
    %c0_i32_0 = arith.constant 0 : i32
    %c0_i32_1 = arith.constant 0 : i32
    return %c0_i32, %c0_i32_0 : i32, i32
  }
  func.func @transform_2(%arg0: i32) -> (i32, i32) {
    %c0_i32 = arith.constant 0 : i32
    %c0_i32_0 = arith.constant 0 : i32
    %c0_i32_1 = arith.constant 0 : i32
    return %c0_i32, %c0_i32_0 : i32, i32
  }
  func.func @transform_3(%arg0: i32) -> (i32, i32) {
    %c0_i32 = arith.constant 0 : i32
    %c0_i32_0 = arith.constant 0 : i32
    %c0_i32_1 = arith.constant 0 : i32
    return %c0_i32, %c0_i32_0 : i32, i32
  }
  func.func @transform_4(%arg0: i32) -> (i32, i32) {
    %c0_i32 = arith.constant 0 : i32
    %c0_i32_0 = arith.constant 0 : i32
    %c0_i32_1 = arith.constant 0 : i32
    return %c0_i32, %c0_i32_0 : i32, i32
  }
  func.func @transform_5(%arg0: i32) -> (i32, i32) {
    %c0_i32 = arith.constant 0 : i32
    %c0_i32_0 = arith.constant 0 : i32
    %c0_i32_1 = arith.constant 0 : i32
    return %c0_i32, %c0_i32_0 : i32, i32
  }
  func.func @transform_6(%arg0: i32) -> (i32, i32) {
    %c0_i32 = arith.constant 0 : i32
    %c0_i32_0 = arith.constant 0 : i32
    %c0_i32_1 = arith.constant 0 : i32
    return %c0_i32, %c0_i32_0 : i32, i32
  }
  func.func @transform_7(%arg0: i32) -> (i32, i32) {
    %c0_i32 = arith.constant 0 : i32
    %c0_i32_0 = arith.constant 0 : i32
    %c0_i32_1 = arith.constant 0 : i32
    return %c0_i32, %c0_i32_0 : i32, i32
  }
  func.func @transform_8(%arg0: i32) -> (i32, i32) {
    %c0_i32 = arith.constant 0 : i32
    %c0_i32_0 = arith.constant 0 : i32
    %c0_i32_1 = arith.constant 0 : i32
    return %c0_i32, %c0_i32_0 : i32, i32
  }
  func.func @transform_9(%arg0: i32) -> (i32, i32) {
    %c0_i32 = arith.constant 0 : i32
    %c0_i32_0 = arith.constant 0 : i32
    %c0_i32_1 = arith.constant 0 : i32
    return %c0_i32, %c0_i32_0 : i32, i32
  }
  func.func @transform_10(%arg0: i32) -> (i32, i32) {
    %c0_i32 = arith.constant 0 : i32
    %c0_i32_0 = arith.constant 0 : i32
    %c0_i32_1 = arith.constant 0 : i32
    return %c0_i32, %c0_i32_0 : i32, i32
  }
  func.func @transform_11(%arg0: i32) -> (i32, i32) {
    %c0_i32 = arith.constant 0 : i32
    %c0_i32_0 = arith.constant 0 : i32
    return %arg0, %c0_i32 : i32, i32
  }
}

</mosaic_0001>

<llo_original>
// kernel: tpu_custom_call.1
$region0: #{tpu_custom_call.1}
  #allocation0 [shape = 'u32[]', space=smem, size = 0x4, offset = 0x4, fixed_abs, tag = 'smem constant byte address 0x4 - core index']
  #allocation1 [shape = 'u32[144,128]{1,0:T(1,128)}', space=vmem, size = 0x12000, scoped, tag = 'internal scratch']
  #allocation2 [shape = 'f32[16,16,256]{2,1,0:T(8,128)}', space=vmem, size = 0x40000, scoped, tag = 'scratch operand']
  #allocation3 [shape = 'f32[16,16,256]{2,1,0:T(8,128)}', space=vmem, size = 0x40000, scoped, tag = 'scratch operand']
  #allocation4 [shape = 'f32[16,16]{1,0:T(8,128)}', space=vmem, size = 0x2000, scoped, tag = 'scratch operand']
  #allocation5 [shape = 'f32[16,256]{1,0:T(8,128)}', space=vmem, size = 0x4000, scoped, tag = 'scratch operand']
  %s0 = inlined_call_operand.vmem [shape: f32[16,128], index: 0, kind: input, shape index: {}]
  %s1 = inlined_call_operand.vmem [shape: f32[1,128], index: 1, kind: input, shape index: {}]
  %s2 = inlined_call_operand.vmem [shape: f32[1,128], index: 2, kind: input, shape index: {}]
  %s3 = inlined_call_operand.vmem [shape: bf16[128,512], index: 3, kind: input, shape index: {}]
  %s4 = inlined_call_operand.vmem [shape: f32[4,256], index: 4, kind: input, shape index: {}]
  %s5 = inlined_call_operand.vmem [shape: f32[1,256], index: 5, kind: input, shape index: {}]
  %s6 = inlined_call_operand.vmem [shape: bf16[256,288], index: 6, kind: input, shape index: {}]
  %s7 = inlined_call_operand.vmem [shape: f32[1,256], index: 7, kind: input, shape index: {}]
  %s8 = inlined_call_operand.vmem [shape: f32[16,256], index: 8, kind: input, shape index: {}]
  %s9 = inlined_call_operand.vmem [shape: f32[1,256], index: 9, kind: input, shape index: {}]
  %s10 = inlined_call_operand.vmem [shape: bf16[256,128], index: 10, kind: input, shape index: {}]
  %s11 = inlined_call_operand.hbm [shape: f32[16,128], index: 11, kind: output, shape index: {}]
  %s12 = sld [smem:[#allocation0]]
  $region54: #{tpu_custom_call.1} parent=0
    _
  %s14 = ssub.s32 1, %s12
  %s15 = scalar_select 0, %s14, %s12
  $region1: #{tpu_custom_call.1} parent=0
    #allocation6 [shape = 'u8[8192]{0}', space=vmem, size = 0x2000, scoped, tag = 'output window, operand 0, single buffered']
    #allocation7 [shape = 's32[1]{0}', space=sflag, size = 0x4, scoped, tag = 'scoped memory for tpu_custom_call.1']
    %16 = vsyncpa [#allocation7], 0
    // Predicated region
    $region2: #{tpu_custom_call.1} parent=1 // pred_check
      _
    $region3: #{tpu_custom_call.1} parent=1 // pred_check_branch
      %18 = sbr.rel (0) target = $region5
    $region4: #{tpu_custom_call.1} parent=1 // pred_region
      _
    $region5: #{tpu_custom_call.1} parent=1 // pred_fallthru
      _
    // Predicated region
    $region6: #{tpu_custom_call.1} parent=1 // pred_check
      _
    $region7: #{tpu_custom_call.1} parent=1 // pred_check_branch
      %20 = sbr.rel (0) target = $region9
    $region8: #{tpu_custom_call.1} parent=1 // pred_region
      _
    $region9: #{tpu_custom_call.1} parent=1 // pred_fallthru
      _
    // Predicated region
    $region10: #{tpu_custom_call.1} parent=1 // pred_check
      _
    $region11: #{tpu_custom_call.1} parent=1 // pred_check_branch
      %22 = sbr.rel (0) target = $region13
    $region12: #{tpu_custom_call.1} parent=1 // pred_region
      _
    $region13: #{tpu_custom_call.1} parent=1 // pred_fallthru
      _
    // Predicated region
    $region14: #{tpu_custom_call.1} parent=1 // pred_check
      _
    $region15: #{tpu_custom_call.1} parent=1 // pred_check_branch
      %24 = sbr.rel (0) target = $region17
    $region16: #{tpu_custom_call.1} parent=1 // pred_region
      _
    $region17: #{tpu_custom_call.1} parent=1 // pred_fallthru
      _
    // Predicated region
    $region18: #{tpu_custom_call.1} parent=1 // pred_check
      _
    $region19: #{tpu_custom_call.1} parent=1 // pred_check_branch
      %26 = sbr.rel (0) target = $region21
    $region20: #{tpu_custom_call.1} parent=1 // pred_region
      _
    $region21: #{tpu_custom_call.1} parent=1 // pred_fallthru
      _
    // Predicated region
    $region22: #{tpu_custom_call.1} parent=1 // pred_check
      _
    $region23: #{tpu_custom_call.1} parent=1 // pred_check_branch
      %28 = sbr.rel (0) target = $region25
    $region24: #{tpu_custom_call.1} parent=1 // pred_region
      _
    $region25: #{tpu_custom_call.1} parent=1 // pred_fallthru
      _
    // Predicated region
    $region26: #{tpu_custom_call.1} parent=1 // pred_check
      _
    $region27: #{tpu_custom_call.1} parent=1 // pred_check_branch
      %30 = sbr.rel (0) target = $region29
    $region28: #{tpu_custom_call.1} parent=1 // pred_region
      _
    $region29: #{tpu_custom_call.1} parent=1 // pred_fallthru
      _
    // Predicated region
    $region30: #{tpu_custom_call.1} parent=1 // pred_check
      _
    $region31: #{tpu_custom_call.1} parent=1 // pred_check_branch
      %32 = sbr.rel (0) target = $region33
    $region32: #{tpu_custom_call.1} parent=1 // pred_region
      _
    $region33: #{tpu_custom_call.1} parent=1 // pred_fallthru
      _
    // Predicated region
    $region34: #{tpu_custom_call.1} parent=1 // pred_check
      _
    $region35: #{tpu_custom_call.1} parent=1 // pred_check_branch
      %34 = sbr.rel (0) target = $region37
    $region36: #{tpu_custom_call.1} parent=1 // pred_region
      _
    $region37: #{tpu_custom_call.1} parent=1 // pred_fallthru
      _
    // Predicated region
    $region38: #{tpu_custom_call.1} parent=1 // pred_check
      _
    $region39: #{tpu_custom_call.1} parent=1 // pred_check_branch
      %36 = sbr.rel (0) target = $region41
    $region40: #{tpu_custom_call.1} parent=1 // pred_region
      _
    $region41: #{tpu_custom_call.1} parent=1 // pred_fallthru
      _
    // Predicated region
    $region42: #{tpu_custom_call.1} parent=1 // pred_check
      _
    $region43: #{tpu_custom_call.1} parent=1 // pred_check_branch
      %38 = sbr.rel (0) target = $region45
    $region44: #{tpu_custom_call.1} parent=1 // pred_region
      _
    $region45: #{tpu_custom_call.1} parent=1 // pred_fallthru
      _
    %v40 = vld [vmem:[%s0] sm:$0xff]
    %v41 = vld [vmem:[%s0 + $0x8] sm:$0xff]
    %42 = vadd.xlane.f32.xlu0 %v40
    %v43 = vpop.xlane.xlu0 %42
    %44 = vadd.xlane.f32.xlu0 %v41
    %v45 = vpop.xlane.xlu0 %44
    %v46 = vrcp.pop 128.0
    %v47 = vmul.f32 %v43, %v46
    %v48 = vmul.f32 %v45, %v46
    %v49 = vsub.f32 %v40, %v47
    %v50 = vsub.f32 %v41, %v48
    %v51 = vmul.f32 %v49, %v49
    %v52 = vmul.f32 %v50, %v50
    %53 = vadd.xlane.f32.xlu0 %v51
    %v54 = vpop.xlane.xlu0 %53
    %55 = vadd.xlane.f32.xlu0 %v52
    %v56 = vpop.xlane.xlu0 %55
    %v57 = vmul.f32 %v54, %v46
    %v58 = vmul.f32 %v56, %v46
    %v59 = vadd.f32 %v57, 1e-05
    %v60 = vadd.f32 %v58, 1e-05
    %v61 = vrsqrt.pop %v59
    %v62 = vrsqrt.pop %v60
    %v63 = vmul.f32 %v49, %v61
    %v64 = vmul.f32 %v50, %v62
    %v65 = vld [vmem:[%s1] sm:$0x1]
    %v67 = vlaneseq
    %v68 = vshrl.u32 %v67, 7
    %v69 = vsub.s32 0, %v68
    %v70 = vrot.slane %v65, %v69
    %v72 = vmul.f32 %v63, %v70
    %v73 = vmul.f32 %v64, %v70
    %v74 = vld [vmem:[%s2] sm:$0x1]
    %v76 = vlaneseq
    %v77 = vshrl.u32 %v76, 7
    %v78 = vsub.s32 0, %v77
    %v79 = vrot.slane %v74, %v78
    %v81 = vadd.f32 %v72, %v79
    %v82 = vadd.f32 %v73, %v79
    %v83 = vld [vmem:[%s3] sm:$0xff]
    %v84 = vld [vmem:[%s3 + $0x8] sm:$0xff]
    %v85 = vld [vmem:[%s3 + $0x10] sm:$0xff]
    %v86 = vld [vmem:[%s3 + $0x18] sm:$0xff]
    %v87 = vld [vmem:[%s3 + $0x20] sm:$0xff]
    %v88 = vld [vmem:[%s3 + $0x28] sm:$0xff]
    %v89 = vld [vmem:[%s3 + $0x30] sm:$0xff]
    %v90 = vld [vmem:[%s3 + $0x38] sm:$0xff]
    %v91 = vld [vmem:[%s3 + $0x40] sm:$0xff]
    %v92 = vld [vmem:[%s3 + $0x48] sm:$0xff]
    %v93 = vld [vmem:[%s3 + $0x50] sm:$0xff]
    %v94 = vld [vmem:[%s3 + $0x58] sm:$0xff]
    %v95 = vld [vmem:[%s3 + $0x60] sm:$0xff]
    %v96 = vld [vmem:[%s3 + $0x68] sm:$0xff]
    %v97 = vld [vmem:[%s3 + $0x70] sm:$0xff]
    %v98 = vld [vmem:[%s3 + $0x78] sm:$0xff]
    %v99 = vld [vmem:[%s3 + $0x80] sm:$0xff]
    %v100 = vld [vmem:[%s3 + $0x88] sm:$0xff]
    %v101 = vld [vmem:[%s3 + $0x90] sm:$0xff]
    %v102 = vld [vmem:[%s3 + $0x98] sm:$0xff]
    %v103 = vld [vmem:[%s3 + $0xa0] sm:$0xff]
    %v104 = vld [vmem:[%s3 + $0xa8] sm:$0xff]
    %v105 = vld [vmem:[%s3 + $0xb0] sm:$0xff]
    %v106 = vld [vmem:[%s3 + $0xb8] sm:$0xff]
    %v107 = vld [vmem:[%s3 + $0xc0] sm:$0xff]
    %v108 = vld [vmem:[%s3 + $0xc8] sm:$0xff]
    %v109 = vld [vmem:[%s3 + $0xd0] sm:$0xff]
    %v110 = vld [vmem:[%s3 + $0xd8] sm:$0xff]
    %v111 = vld [vmem:[%s3 + $0xe0] sm:$0xff]
    %v112 = vld [vmem:[%s3 + $0xe8] sm:$0xff]
    %v113 = vld [vmem:[%s3 + $0xf0] sm:$0xff]
    %v114 = vld [vmem:[%s3 + $0xf8] sm:$0xff]
    %v115 = vpack.c.bf16 %v82, %v81
    %v148 = vunpack.c.l.b16 %v83
    %v149 = vunpack.c.h.b16 %v83
    %v150 = vunpack.c.l.b16 %v84
    %v151 = vunpack.c.h.b16 %v84
    %v152 = vunpack.c.l.b16 %v85
    %v153 = vunpack.c.h.b16 %v85
    %v154 = vunpack.c.l.b16 %v86
    %v155 = vunpack.c.h.b16 %v86
    %v156 = vunpack.c.l.b16 %v87
    %v157 = vunpack.c.h.b16 %v87
    %v158 = vunpack.c.l.b16 %v88
    %v159 = vunpack.c.h.b16 %v88
    %v160 = vunpack.c.l.b16 %v89
    %v161 = vunpack.c.h.b16 %v89
    %v162 = vunpack.c.l.b16 %v90
    %v163 = vunpack.c.h.b16 %v90
    %v164 = vunpack.c.l.b16 %v91
    %v165 = vunpack.c.h.b16 %v91
    %v166 = vunpack.c.l.b16 %v92
    %v167 = vunpack.c.h.b16 %v92
    %v168 = vunpack.c.l.b16 %v93
    %v169 = vunpack.c.h.b16 %v93
    %v170 = vunpack.c.l.b16 %v94
    %v171 = vunpack.c.h.b16 %v94
    %v172 = vunpack.c.l.b16 %v95
    %v173 = vunpack.c.h.b16 %v95
    %v174 = vunpack.c.l.b16 %v96
    %v175 = vunpack.c.h.b16 %v96
    %v176 = vunpack.c.l.b16 %v97
    %v177 = vunpack.c.h.b16 %v97
    %v178 = vunpack.c.l.b16 %v98
    %v179 = vunpack.c.h.b16 %v98
    %v180 = vunpack.c.l.b16 %v99
    %v181 = vunpack.c.h.b16 %v99
    %v182 = vunpack.c.l.b16 %v100
    %v183 = vunpack.c.h.b16 %v100
    %v184 = vunpack.c.l.b16 %v101
    %v185 = vunpack.c.h.b16 %v101
    %v186 = vunpack.c.l.b16 %v102
    %v187 = vunpack.c.h.b16 %v102
    %v188 = vunpack.c.l.b16 %v103
    %v189 = vunpack.c.h.b16 %v103
    %v190 = vunpack.c.l.b16 %v104
    %v191 = vunpack.c.h.b16 %v104
    %v192 = vunpack.c.l.b16 %v105
    %v193 = vunpack.c.h.b16 %v105
    %v194 = vunpack.c.l.b16 %v106
    %v195 = vunpack.c.h.b16 %v106
    %v196 = vunpack.c.l.b16 %v107
    %v197 = vunpack.c.h.b16 %v107
    %v198 = vunpack.c.l.b16 %v108
    %v199 = vunpack.c.h.b16 %v108
    %v200 = vunpack.c.l.b16 %v109
    %v201 = vunpack.c.h.b16 %v109
    %v202 = vunpack.c.l.b16 %v110
    %v203 = vunpack.c.h.b16 %v110
    %v204 = vunpack.c.l.b16 %v111
    %v205 = vunpack.c.h.b16 %v111
    %v206 = vunpack.c.l.b16 %v112
    %v207 = vunpack.c.h.b16 %v112
    %v208 = vunpack.c.l.b16 %v113
    %v209 = vunpack.c.h.b16 %v113
    %v210 = vunpack.c.l.b16 %v114
    %v211 = vunpack.c.h.b16 %v114
    %v212 = vpack.c.b16 %v152, %v148
    %v213 = vpack.c.b16 %v153, %v149
    %v214 = vpack.c.b16 %v154, %v150
    %v215 = vpack.c.b16 %v155, %v151
    %v216 = vpack.c.b16 %v160, %v156
    %v217 = vpack.c.b16 %v161, %v157
    %v218 = vpack.c.b16 %v162, %v158
    %v219 = vpack.c.b16 %v163, %v159
    %v220 = vpack.c.b16 %v168, %v164
    %v221 = vpack.c.b16 %v169, %v165
    %v222 = vpack.c.b16 %v170, %v166
    %v223 = vpack.c.b16 %v171, %v167
    %v224 = vpack.c.b16 %v176, %v172
    %v225 = vpack.c.b16 %v177, %v173
    %v226 = vpack.c.b16 %v178, %v174
    %v227 = vpack.c.b16 %v179, %v175
    %v228 = vpack.c.b16 %v184, %v180
    %v229 = vpack.c.b16 %v185, %v181
    %v230 = vpack.c.b16 %v186, %v182
    %v231 = vpack.c.b16 %v187, %v183
    %v232 = vpack.c.b16 %v192, %v188
    %v233 = vpack.c.b16 %v193, %v189
    %v234 = vpack.c.b16 %v194, %v190
    %v235 = vpack.c.b16 %v195, %v191
    %v236 = vpack.c.b16 %v200, %v196
    %v237 = vpack.c.b16 %v201, %v197
    %v238 = vpack.c.b16 %v202, %v198
    %v239 = vpack.c.b16 %v203, %v199
    %v240 = vpack.c.b16 %v208, %v204
    %v241 = vpack.c.b16 %v209, %v205
    %v242 = vpack.c.b16 %v210, %v206
    %v243 = vpack.c.b16 %v211, %v207
    %276 = vmatprep.subr.bf16.mxu0 %v241
    %277 = vmatpush1.bf16.msra.mxu0 %v240
    %278 = vmatprep.subr.bf16.mxu0 %v237
    %279 = vmatpush1.bf16.msra.mxu0 %v236
    %280 = vmatprep.subr.bf16.mxu0 %v233
    %281 = vmatpush1.bf16.msra.mxu0 %v232
    %282 = vmatprep.subr.bf16.mxu0 %v229
    %283 = vmatpush1.bf16.msra.mxu0 %v228
    %284 = vmatprep.subr.bf16.mxu0 %v225
    %285 = vmatpush1.bf16.msra.mxu0 %v224
    %286 = vmatprep.subr.bf16.mxu0 %v221
    %287 = vmatpush1.bf16.msra.mxu0 %v220
    %288 = vmatprep.subr.bf16.mxu0 %v217
    %289 = vmatpush1.bf16.msra.mxu0 %v216
    %290 = vmatprep.subr.bf16.mxu0 %v213
    %291 = vmatpush1.bf16.msra.mxu0 %v212
    %292 = vmatprep.subr.bf16.mxu0 0
    %293 = vmatpush2.bf16.msra.mxu0 0
    %294 = vmatprep.subr.bf16.mxu0 0
    %295 = vmatpush2.bf16.msra.mxu0 0
    %296 = vmatprep.subr.bf16.mxu0 0
    %297 = vmatpush2.bf16.msra.mxu0 0
    %298 = vmatprep.subr.bf16.mxu0 0
    %299 = vmatpush2.bf16.msra.mxu0 0
    %300 = vmatprep.subr.bf16.mxu0 0
    %301 = vmatpush2.bf16.msra.mxu0 0
    %302 = vmatprep.subr.bf16.mxu0 0
    %303 = vmatpush2.bf16.msra.mxu0 0
    %304 = vmatprep.subr.bf16.mxu0 0
    %305 = vmatpush2.bf16.msra.mxu0 0
    %306 = vmatprep.subr.bf16.mxu0 0
    %307 = vmatpush2.bf16.msra.mxu0 0
    %308 = vmatprep.mubr.bf16.mxu0 0
    %309 = vmatmul.mubr.bf16.gmra.mxu0 %v115
    %v310 = vpop.f32.mrf.mxu0
    %v311 = vadd.f32 0.0, %v310
    %v312 = vpop.f32.mrf.mxu0
    %v313 = vadd.f32 0.0, %v312
    %v314 = vpop.f32.mrf.mxu0
    %v315 = vadd.f32 0.0, %v314
    %v316 = vpop.f32.mrf.mxu0
    %v317 = vadd.f32 0.0, %v316
    %318 = vdwg.mxu0
    %319 = vmatprep.subr.bf16.mxu0 %v243
    %320 = vmatpush1.bf16.msra.mxu0 %v242
    %321 = vmatprep.subr.bf16.mxu0 %v239
    %322 = vmatpush1.bf16.msra.mxu0 %v238
    %323 = vmatprep.subr.bf16.mxu0 %v235
    %324 = vmatpush1.bf16.msra.mxu0 %v234
    %325 = vmatprep.subr.bf16.mxu0 %v231
    %326 = vmatpush1.bf16.msra.mxu0 %v230
    %327 = vmatprep.subr.bf16.mxu0 %v227
    %328 = vmatpush1.bf16.msra.mxu0 %v226
    %329 = vmatprep.subr.bf16.mxu0 %v223
    %330 = vmatpush1.bf16.msra.mxu0 %v222
    %331 = vmatprep.subr.bf16.mxu0 %v219
    %332 = vmatpush1.bf16.msra.mxu0 %v218
    %333 = vmatprep.subr.bf16.mxu0 %v215
    %334 = vmatpush1.bf16.msra.mxu0 %v214
    %335 = vmatprep.subr.bf16.mxu0 0
    %336 = vmatpush2.bf16.msra.mxu0 0
    %337 = vmatprep.subr.bf16.mxu0 0
    %338 = vmatpush2.bf16.msra.mxu0 0
    %339 = vmatprep.subr.bf16.mxu0 0
    %340 = vmatpush2.bf16.msra.mxu0 0
    %341 = vmatprep.subr.bf16.mxu0 0
    %342 = vmatpush2.bf16.msra.mxu0 0
    %343 = vmatprep.subr.bf16.mxu0 0
    %344 = vmatpush2.bf16.msra.mxu0 0
    %345 = vmatprep.subr.bf16.mxu0 0
    %346 = vmatpush2.bf16.msra.mxu0 0
    %347 = vmatprep.subr.bf16.mxu0 0
    %348 = vmatpush2.bf16.msra.mxu0 0
    %349 = vmatprep.subr.bf16.mxu0 0
    %350 = vmatpush2.bf16.msra.mxu0 0
    %351 = vmatprep.mubr.bf16.mxu0 0
    %352 = vmatmul.mubr.bf16.gmra.mxu0 %v115
    %v353 = vpop.f32.mrf.mxu0
    %v354 = vadd.f32 0.0, %v353
    %v355 = vpop.f32.mrf.mxu0
    %v356 = vadd.f32 0.0, %v355
    %v357 = vpop.f32.mrf.mxu0
    %v358 = vadd.f32 0.0, %v357
    %v359 = vpop.f32.mrf.mxu0
    %v360 = vadd.f32 0.0, %v359
    %361 = vdwg.mxu0
    %vm366 = vcmask 1045504
    %v367 = vrot.slane %v311, 2
    %v368 = vrot.slane %v313, 2
    %v369 = vrot.slane %v315, 2
    %v370 = vsel %vm366, %v367, %v369
    %v371 = vrot.slane %v317, 2
    %v372 = vsel %vm366, %v368, %v371
    %v379 = vsel %vm366, 0.0, %v367
    %v380 = vsel %vm366, 0.0, %v368
    %v381 = vld [vmem:[%s5] sm:$0x3]
    %v383 = vlaneseq
    %v384 = vshrl.u32 %v383, 7
    %v385 = vsub.s32 0, %v384
    %v386 = vrot.slane %v381, %v385
    %v387 = vlaneseq
    %v388 = vshrl.u32 %v387, 7
    %v389 = vsub.s32 1, %v388
    %v390 = vrot.slane %v381, %v389
    %v393 = vadd.f32 %v386, 0.0
    %v394 = vadd.f32 %v390, 0.0
    %v395 = vld [vmem:[%s4] ss:$4 sm:$0x3]
    %v397 = vlaneseq
    %v398 = vshrl.u32 %v397, 7
    %v399 = vsub.s32 0, %v398
    %v400 = vrot.slane %v395, %v399
    %v401 = vlaneseq
    %v402 = vshrl.u32 %v401, 7
    %v403 = vsub.s32 1, %v402
    %v404 = vrot.slane %v395, %v403
    %v407 = vmul.f32 %v400, %v379
    %v408 = vmul.f32 %v404, %v380
    %v409 = vmul.f32 %v400, %v370
    %v410 = vmul.f32 %v404, %v372
    %v411 = vadd.f32 %v393, %v407
    %v412 = vadd.f32 %v394, %v408
    %v413 = vadd.f32 %v393, %v409
    %v414 = vadd.f32 %v394, %v410
    %s415 = scalar_lea.vmem %s4, 1
    %v416 = vld [vmem:[%s415] ss:$4 sm:$0x3]
    %v418 = vlaneseq
    %v419 = vshrl.u32 %v418, 7
    %v420 = vsub.s32 0, %v419
    %v421 = vrot.slane %v416, %v420
    %v422 = vlaneseq
    %v423 = vshrl.u32 %v422, 7
    %v424 = vsub.s32 1, %v423
    %v425 = vrot.slane %v416, %v424
    %v428 = vmul.f32 %v421, %v379
    %v429 = vmul.f32 %v425, %v380
    %v430 = vmul.f32 %v421, %v370
    %v431 = vmul.f32 %v425, %v372
    %v432 = vmul.f32 %v421, %v369
    %v433 = vmul.f32 %v425, %v371
    %v440 = vrot.slane %v428, 2
    %v441 = vrot.slane %v430, 2
    %v442 = vsel %vm366, %v440, %v441
    %v443 = vrot.slane %v429, 2
    %v444 = vrot.slane %v431, 2
    %v445 = vsel %vm366, %v443, %v444
    %v446 = vrot.slane %v432, 2
    %v447 = vsel %vm366, %v441, %v446
    %v448 = vrot.slane %v433, 2
    %v449 = vsel %vm366, %v444, %v448
    %v454 = vadd.f32 %v411, %v442
    %v455 = vadd.f32 %v412, %v445
    %v456 = vadd.f32 %v413, %v447
    %v457 = vadd.f32 %v414, %v449
    %s458 = scalar_lea.vmem %s4, 2
    %v459 = vld [vmem:[%s458] ss:$4 sm:$0x3]
    %v461 = vlaneseq
    %v462 = vshrl.u32 %v461, 7
    %v463 = vsub.s32 0, %v462
    %v464 = vrot.slane %v459, %v463
    %v465 = vlaneseq
    %v466 = vshrl.u32 %v465, 7
    %v467 = vsub.s32 1, %v466
    %v468 = vrot.slane %v459, %v467
    %v471 = vmul.f32 %v464, %v379
    %v472 = vmul.f32 %v468, %v380
    %v473 = vmul.f32 %v464, %v370
    %v474 = vmul.f32 %v468, %v372
    %v475 = vmul.f32 %v464, %v369
    %v476 = vmul.f32 %v468, %v371
    %vm483 = vcmask 1043456
    %v484 = vrot.slane %v471, 4
    %v485 = vrot.slane %v473, 4
    %v486 = vsel %vm483, %v484, %v485
    %v487 = vrot.slane %v472, 4
    %v488 = vrot.slane %v474, 4
    %v489 = vsel %vm483, %v487, %v488
    %v490 = vrot.slane %v475, 4
    %v491 = vsel %vm483, %v485, %v490
    %v492 = vrot.slane %v476, 4
    %v493 = vsel %vm483, %v488, %v492
    %v498 = vadd.f32 %v454, %v486
    %v499 = vadd.f32 %v455, %v489
    %v500 = vadd.f32 %v456, %v491
    %v501 = vadd.f32 %v457, %v493
    %s502 = scalar_lea.vmem %s4, 3
    %v503 = vld [vmem:[%s502] ss:$4 sm:$0x3]
    %v505 = vlaneseq
    %v506 = vshrl.u32 %v505, 7
    %v507 = vsub.s32 0, %v506
    %v508 = vrot.slane %v503, %v507
    %v509 = vlaneseq
    %v510 = vshrl.u32 %v509, 7
    %v511 = vsub.s32 1, %v510
    %v512 = vrot.slane %v503, %v511
    %v515 = vmul.f32 %v508, %v379
    %v516 = vmul.f32 %v512, %v380
    %v517 = vmul.f32 %v508, %v370
    %v518 = vmul.f32 %v512, %v372
    %v519 = vmul.f32 %v508, %v369
    %v520 = vmul.f32 %v512, %v371
    %vm527 = vcmask 1041408
    %v528 = vrot.slane %v515, 6
    %v529 = vrot.slane %v517, 6
    %v530 = vsel %vm527, %v528, %v529
    %v531 = vrot.slane %v516, 6
    %v532 = vrot.slane %v518, 6
    %v533 = vsel %vm527, %v531, %v532
    %v534 = vrot.slane %v519, 6
    %v535 = vsel %vm527, %v529, %v534
    %v536 = vrot.slane %v520, 6
    %v537 = vsel %vm527, %v532, %v536
    %v542 = vadd.f32 %v498, %v530
    %v543 = vadd.f32 %v499, %v533
    %v544 = vadd.f32 %v500, %v535
    %v545 = vadd.f32 %v501, %v537
    %v546 = vxor.u32 %v542, 2147483648
    %v547 = vxor.u32 %v543, 2147483648
    %v548 = vxor.u32 %v544, 2147483648
    %v549 = vxor.u32 %v545, 2147483648
    %v550 = vmul.f32 %v546, 1.442695
    %v551 = vpow.pop %v550
    %v552 = vmul.f32 %v547, 1.442695
    %v553 = vpow.pop %v552
    %v554 = vmul.f32 %v548, 1.442695
    %v555 = vpow.pop %v554
    %v556 = vmul.f32 %v549, 1.442695
    %v557 = vpow.pop %v556
    %v558 = vadd.f32 %v551, 1.0
    %v559 = vadd.f32 %v553, 1.0
    %v560 = vadd.f32 %v555, 1.0
    %v561 = vadd.f32 %v557, 1.0
    %v562 = vrcp.pop %v558
    %v563 = vmul.f32 1.0, %v562
    %v564 = vrcp.pop %v559
    %v565 = vmul.f32 1.0, %v564
    %v566 = vrcp.pop %v560
    %v567 = vmul.f32 1.0, %v566
    %v568 = vrcp.pop %v561
    %v569 = vmul.f32 1.0, %v568
    %v570 = vmul.f32 %v542, %v563
    %v571 = vmul.f32 %v543, %v565
    %v572 = vmul.f32 %v544, %v567
    %v573 = vmul.f32 %v545, %v569
    %v574 = vld [vmem:[%s6] sm:$0xff]
    %v575 = vld [vmem:[%s6 + $0x8] sm:$0xf]
    %v576 = vld [vmem:[%s6 + $0xc] sm:$0xff]
    %v577 = vld [vmem:[%s6 + $0x14] sm:$0xf]
    %v578 = vld [vmem:[%s6 + $0x18] sm:$0xff]
    %v579 = vld [vmem:[%s6 + $0x20] sm:$0xf]
    %v580 = vld [vmem:[%s6 + $0x24] sm:$0xff]
    %v581 = vld [vmem:[%s6 + $0x2c] sm:$0xf]
    %v582 = vld [vmem:[%s6 + $0x30] sm:$0xff]
    %v583 = vld [vmem:[%s6 + $0x38] sm:$0xf]
    %v584 = vld [vmem:[%s6 + $0x3c] sm:$0xff]
    %v585 = vld [vmem:[%s6 + $0x44] sm:$0xf]
    %v586 = vld [vmem:[%s6 + $0x48] sm:$0xff]
    %v587 = vld [vmem:[%s6 + $0x50] sm:$0xf]
    %v588 = vld [vmem:[%s6 + $0x54] sm:$0xff]
    %v589 = vld [vmem:[%s6 + $0x5c] sm:$0xf]
    %v590 = vld [vmem:[%s6 + $0x60] sm:$0xff]
    %v591 = vld [vmem:[%s6 + $0x68] sm:$0xf]
    %v592 = vld [vmem:[%s6 + $0x6c] sm:$0xff]
    %v593 = vld [vmem:[%s6 + $0x74] sm:$0xf]
    %v594 = vld [vmem:[%s6 + $0x78] sm:$0xff]
    %v595 = vld [vmem:[%s6 + $0x80] sm:$0xf]
    %v596 = vld [vmem:[%s6 + $0x84] sm:$0xff]
    %v597 = vld [vmem:[%s6 + $0x8c] sm:$0xf]
    %v598 = vld [vmem:[%s6 + $0x90] sm:$0xff]
    %v599 = vld [vmem:[%s6 + $0x98] sm:$0xf]
    %v600 = vld [vmem:[%s6 + $0x9c] sm:$0xff]
    %v601 = vld [vmem:[%s6 + $0xa4] sm:$0xf]
    %v602 = vld [vmem:[%s6 + $0xa8] sm:$0xff]
    %v603 = vld [vmem:[%s6 + $0xb0] sm:$0xf]
    %v604 = vld [vmem:[%s6 + $0xb4] sm:$0xff]
    %v605 = vld [vmem:[%s6 + $0xbc] sm:$0xf]
    %v606 = vld [vmem:[%s6 + $0xc0] sm:$0xff]
    %v607 = vld [vmem:[%s6 + $0xc8] sm:$0xf]
    %v608 = vld [vmem:[%s6 + $0xcc] sm:$0xff]
    %v609 = vld [vmem:[%s6 + $0xd4] sm:$0xf]
    %v610 = vld [vmem:[%s6 + $0xd8] sm:$0xff]
    %v611 = vld [vmem:[%s6 + $0xe0] sm:$0xf]
    %v612 = vld [vmem:[%s6 + $0xe4] sm:$0xff]
    %v613 = vld [vmem:[%s6 + $0xec] sm:$0xf]
    %v614 = vld [vmem:[%s6 + $0xf0] sm:$0xff]
    %v615 = vld [vmem:[%s6 + $0xf8] sm:$0xf]
    %v616 = vld [vmem:[%s6 + $0xfc] sm:$0xff]
    %v617 = vld [vmem:[%s6 + $0x104] sm:$0xf]
    %v618 = vld [vmem:[%s6 + $0x108] sm:$0xff]
    %v619 = vld [vmem:[%s6 + $0x110] sm:$0xf]
    %v620 = vld [vmem:[%s6 + $0x114] sm:$0xff]
    %v621 = vld [vmem:[%s6 + $0x11c] sm:$0xf]
    %v622 = vld [vmem:[%s6 + $0x120] sm:$0xff]
    %v623 = vld [vmem:[%s6 + $0x128] sm:$0xf]
    %v624 = vld [vmem:[%s6 + $0x12c] sm:$0xff]
    %v625 = vld [vmem:[%s6 + $0x134] sm:$0xf]
    %v626 = vld [vmem:[%s6 + $0x138] sm:$0xff]
    %v627 = vld [vmem:[%s6 + $0x140] sm:$0xf]
    %v628 = vld [vmem:[%s6 + $0x144] sm:$0xff]
    %v629 = vld [vmem:[%s6 + $0x14c] sm:$0xf]
    %v630 = vld [vmem:[%s6 + $0x150] sm:$0xff]
    %v631 = vld [vmem:[%s6 + $0x158] sm:$0xf]
    %v632 = vld [vmem:[%s6 + $0x15c] sm:$0xff]
    %v633 = vld [vmem:[%s6 + $0x164] sm:$0xf]
    %v634 = vld [vmem:[%s6 + $0x168] sm:$0xff]
    %v635 = vld [vmem:[%s6 + $0x170] sm:$0xf]
    %v636 = vld [vmem:[%s6 + $0x174] sm:$0xff]
    %v637 = vld [vmem:[%s6 + $0x17c] sm:$0xf]
    %v638 = vpack.c.bf16 %v572, %v570
    %v639 = vpack.c.bf16 %v573, %v571
    %v704 = vunpack.c.l.b16 %v574
    %v705 = vunpack.c.h.b16 %v574
    %v706 = vunpack.c.l.b16 %v575
    %v707 = vunpack.c.l.b16 %v576
    %v708 = vunpack.c.h.b16 %v576
    %v709 = vunpack.c.l.b16 %v577
    %v710 = vunpack.c.l.b16 %v578
    %v711 = vunpack.c.h.b16 %v578
    %v712 = vunpack.c.l.b16 %v579
    %v713 = vunpack.c.l.b16 %v580
    %v714 = vunpack.c.h.b16 %v580
    %v715 = vunpack.c.l.b16 %v581
    %v716 = vunpack.c.l.b16 %v582
    %v717 = vunpack.c.h.b16 %v582
    %v718 = vunpack.c.l.b16 %v583
    %v719 = vunpack.c.l.b16 %v584
    %v720 = vunpack.c.h.b16 %v584
    %v721 = vunpack.c.l.b16 %v585
    %v722 = vunpack.c.l.b16 %v586
    %v723 = vunpack.c.h.b16 %v586
    %v724 = vunpack.c.l.b16 %v587
    %v725 = vunpack.c.l.b16 %v588
    %v726 = vunpack.c.h.b16 %v588
    %v727 = vunpack.c.l.b16 %v589
    %v728 = vunpack.c.l.b16 %v590
    %v729 = vunpack.c.h.b16 %v590
    %v730 = vunpack.c.l.b16 %v591
    %v731 = vunpack.c.l.b16 %v592
    %v732 = vunpack.c.h.b16 %v592
    %v733 = vunpack.c.l.b16 %v593
    %v734 = vunpack.c.l.b16 %v594
    %v735 = vunpack.c.h.b16 %v594
    %v736 = vunpack.c.l.b16 %v595
    %v737 = vunpack.c.l.b16 %v596
    %v738 = vunpack.c.h.b16 %v596
    %v739 = vunpack.c.l.b16 %v597
    %v740 = vunpack.c.l.b16 %v598
    %v741 = vunpack.c.h.b16 %v598
    %v742 = vunpack.c.l.b16 %v599
    %v743 = vunpack.c.l.b16 %v600
    %v744 = vunpack.c.h.b16 %v600
    %v745 = vunpack.c.l.b16 %v601
    %v746 = vunpack.c.l.b16 %v602
    %v747 = vunpack.c.h.b16 %v602
    %v748 = vunpack.c.l.b16 %v603
    %v749 = vunpack.c.l.b16 %v604
    %v750 = vunpack.c.h.b16 %v604
    %v751 = vunpack.c.l.b16 %v605
    %v752 = vunpack.c.l.b16 %v606
    %v753 = vunpack.c.h.b16 %v606
    %v754 = vunpack.c.l.b16 %v607
    %v755 = vunpack.c.l.b16 %v608
    %v756 = vunpack.c.h.b16 %v608
    %v757 = vunpack.c.l.b16 %v609
    %v758 = vunpack.c.l.b16 %v610
    %v759 = vunpack.c.h.b16 %v610
    %v760 = vunpack.c.l.b16 %v611
    %v761 = vunpack.c.l.b16 %v612
    %v762 = vunpack.c.h.b16 %v612
    %v763 = vunpack.c.l.b16 %v613
    %v764 = vunpack.c.l.b16 %v614
    %v765 = vunpack.c.h.b16 %v614
    %v766 = vunpack.c.l.b16 %v615
    %v767 = vunpack.c.l.b16 %v616
    %v768 = vunpack.c.h.b16 %v616
    %v769 = vunpack.c.l.b16 %v617
    %v770 = vunpack.c.l.b16 %v618
    %v771 = vunpack.c.h.b16 %v618
    %v772 = vunpack.c.l.b16 %v619
    %v773 = vunpack.c.l.b16 %v620
    %v774 = vunpack.c.h.b16 %v620
    %v775 = vunpack.c.l.b16 %v621
    %v776 = vunpack.c.l.b16 %v622
    %v777 = vunpack.c.h.b16 %v622
    %v778 = vunpack.c.l.b16 %v623
    %v779 = vunpack.c.l.b16 %v624
    %v780 = vunpack.c.h.b16 %v624
    %v781 = vunpack.c.l.b16 %v625
    %v782 = vunpack.c.l.b16 %v626
    %v783 = vunpack.c.h.b16 %v626
    %v784 = vunpack.c.l.b16 %v627
    %v785 = vunpack.c.l.b16 %v628
    %v786 = vunpack.c.h.b16 %v628
    %v787 = vunpack.c.l.b16 %v629
    %v788 = vunpack.c.l.b16 %v630
    %v789 = vunpack.c.h.b16 %v630
    %v790 = vunpack.c.l.b16 %v631
    %v791 = vunpack.c.l.b16 %v632
    %v792 = vunpack.c.h.b16 %v632
    %v793 = vunpack.c.l.b16 %v633
    %v794 = vunpack.c.l.b16 %v634
    %v795 = vunpack.c.h.b16 %v634
    %v796 = vunpack.c.l.b16 %v635
    %v797 = vunpack.c.l.b16 %v636
    %v798 = vunpack.c.h.b16 %v636
    %v799 = vunpack.c.l.b16 %v637
    %v800 = vpack.c.b16 %v707, %v704
    %v801 = vpack.c.b16 %v708, %v705
    %v802 = vpack.c.b16 %v709, %v706
    %v803 = vpack.c.b16 %v713, %v710
    %v804 = vpack.c.b16 %v714, %v711
    %v805 = vpack.c.b16 %v715, %v712
    %v806 = vpack.c.b16 %v719, %v716
    %v807 = vpack.c.b16 %v720, %v717
    %v808 = vpack.c.b16 %v721, %v718
    %v809 = vpack.c.b16 %v725, %v722
    %v810 = vpack.c.b16 %v726, %v723
    %v811 = vpack.c.b16 %v727, %v724
    %v812 = vpack.c.b16 %v731, %v728
    %v813 = vpack.c.b16 %v732, %v729
    %v814 = vpack.c.b16 %v733, %v730
    %v815 = vpack.c.b16 %v737, %v734
    %v816 = vpack.c.b16 %v738, %v735
    %v817 = vpack.c.b16 %v739, %v736
    %v818 = vpack.c.b16 %v743, %v740
    %v819 = vpack.c.b16 %v744, %v741
    %v820 = vpack.c.b16 %v745, %v742
    %v821 = vpack.c.b16 %v749, %v746
    %v822 = vpack.c.b16 %v750, %v747
    %v823 = vpack.c.b16 %v751, %v748
    %v824 = vpack.c.b16 %v755, %v752
    %v825 = vpack.c.b16 %v756, %v753
    %v826 = vpack.c.b16 %v757, %v754
    %v827 = vpack.c.b16 %v761, %v758
    %v828 = vpack.c.b16 %v762, %v759
    %v829 = vpack.c.b16 %v763, %v760
    %v830 = vpack.c.b16 %v767, %v764
    %v831 = vpack.c.b16 %v768, %v765
    %v832 = vpack.c.b16 %v769, %v766
    %v833 = vpack.c.b16 %v773, %v770
    %v834 = vpack.c.b16 %v774, %v771
    %v835 = vpack.c.b16 %v775, %v772
    %v836 = vpack.c.b16 %v779, %v776
    %v837 = vpack.c.b16 %v780, %v777
    %v838 = vpack.c.b16 %v781, %v778
    %v839 = vpack.c.b16 %v785, %v782
    %v840 = vpack.c.b16 %v786, %v783
    %v841 = vpack.c.b16 %v787, %v784
    %v842 = vpack.c.b16 %v791, %v788
    %v843 = vpack.c.b16 %v792, %v789
    %v844 = vpack.c.b16 %v793, %v790
    %v845 = vpack.c.b16 %v797, %v794
    %v846 = vpack.c.b16 %v798, %v795
    %v847 = vpack.c.b16 %v799, %v796
    %896 = vmatprep.subr.bf16.mxu0 %v822
    %897 = vmatpush1.bf16.msra.mxu0 %v821
    %898 = vmatprep.subr.bf16.mxu0 %v819
    %899 = vmatpush1.bf16.msra.mxu0 %v818
    %900 = vmatprep.subr.bf16.mxu0 %v816
    %901 = vmatpush1.bf16.msra.mxu0 %v815
    %902 = vmatprep.subr.bf16.mxu0 %v813
    %903 = vmatpush1.bf16.msra.mxu0 %v812
    %904 = vmatprep.subr.bf16.mxu0 %v810
    %905 = vmatpush1.bf16.msra.mxu0 %v809
    %906 = vmatprep.subr.bf16.mxu0 %v807
    %907 = vmatpush1.bf16.msra.mxu0 %v806
    %908 = vmatprep.subr.bf16.mxu0 %v804
    %909 = vmatpush1.bf16.msra.mxu0 %v803
    %910 = vmatprep.subr.bf16.mxu0 %v801
    %911 = vmatpush1.bf16.msra.mxu0 %v800
    %912 = vmatprep.subr.bf16.mxu0 %v846
    %913 = vmatpush2.bf16.msra.mxu0 %v845
    %914 = vmatprep.subr.bf16.mxu0 %v843
    %915 = vmatpush2.bf16.msra.mxu0 %v842
    %916 = vmatprep.subr.bf16.mxu0 %v840
    %917 = vmatpush2.bf16.msra.mxu0 %v839
    %918 = vmatprep.subr.bf16.mxu0 %v837
    %919 = vmatpush2.bf16.msra.mxu0 %v836
    %920 = vmatprep.subr.bf16.mxu0 %v834
    %921 = vmatpush2.bf16.msra.mxu0 %v833
    %922 = vmatprep.subr.bf16.mxu0 %v831
    %923 = vmatpush2.bf16.msra.mxu0 %v830
    %924 = vmatprep.subr.bf16.mxu0 %v828
    %925 = vmatpush2.bf16.msra.mxu0 %v827
    %926 = vmatprep.subr.bf16.mxu0 %v825
    %927 = vmatpush2.bf16.msra.mxu0 %v824
    %928 = vmatprep.mubr.bf16.mxu0 %v639
    %929 = vmatmul.mubr.bf16.gmra.mxu0 %v638
    %v930 = vpop.f32.mrf.mxu0
    %v931 = vadd.f32 0.0, %v930
    %v932 = vpop.f32.mrf.mxu0
    %v933 = vadd.f32 0.0, %v932
    %v934 = vpop.f32.mrf.mxu0
    %v935 = vadd.f32 0.0, %v934
    %v936 = vpop.f32.mrf.mxu0
    %v937 = vadd.f32 0.0, %v936
    %938 = vdwg.mxu0
    %939 = vmatprep.subr.bf16.mxu0 0
    %940 = vmatpush1.bf16.msra.mxu0 %v823
    %941 = vmatprep.subr.bf16.mxu0 0
    %942 = vmatpush1.bf16.msra.mxu0 %v820
    %943 = vmatprep.subr.bf16.mxu0 0
    %944 = vmatpush1.bf16.msra.mxu0 %v817
    %945 = vmatprep.subr.bf16.mxu0 0
    %946 = vmatpush1.bf16.msra.mxu0 %v814
    %947 = vmatprep.subr.bf16.mxu0 0
    %948 = vmatpush1.bf16.msra.mxu0 %v811
    %949 = vmatprep.subr.bf16.mxu0 0
    %950 = vmatpush1.bf16.msra.mxu0 %v808
    %951 = vmatprep.subr.bf16.mxu0 0
    %952 = vmatpush1.bf16.msra.mxu0 %v805
    %953 = vmatprep.subr.bf16.mxu0 0
    %954 = vmatpush1.bf16.msra.mxu0 %v802
    %955 = vmatprep.subr.bf16.mxu0 0
    %956 = vmatpush2.bf16.msra.mxu0 %v847
    %957 = vmatprep.subr.bf16.mxu0 0
    %958 = vmatpush2.bf16.msra.mxu0 %v844
    %959 = vmatprep.subr.bf16.mxu0 0
    %960 = vmatpush2.bf16.msra.mxu0 %v841
    %961 = vmatprep.subr.bf16.mxu0 0
    %962 = vmatpush2.bf16.msra.mxu0 %v838
    %963 = vmatprep.subr.bf16.mxu0 0
    %964 = vmatpush2.bf16.msra.mxu0 %v835
    %965 = vmatprep.subr.bf16.mxu0 0
    %966 = vmatpush2.bf16.msra.mxu0 %v832
    %967 = vmatprep.subr.bf16.mxu0 0
    %968 = vmatpush2.bf16.msra.mxu0 %v829
    %969 = vmatprep.subr.bf16.mxu0 0
    %970 = vmatpush2.bf16.msra.mxu0 %v826
    %971 = vmatprep.mubr.bf16.mxu0 %v639
    %972 = vmatmul.mubr.bf16.gmra.mxu0 %v638
    %v973 = vpop.f32.mrf.mxu0
    %v974 = vadd.f32 0.0, %v973
    %v975 = vpop.f32.mrf.mxu0
    %v976 = vpop.f32.mrf.mxu0
    %v977 = vadd.f32 0.0, %v976
    %v978 = vpop.f32.mrf.mxu0
    %979 = vdwg.mxu0
    %v980 = vld [vmem:[%s7] sm:$0x3]
    %v982 = vlaneseq
    %v983 = vshrl.u32 %v982, 7
    %v984 = vsub.s32 0, %v983
    %v985 = vrot.slane %v980, %v984
    %v986 = vlaneseq
    %v987 = vshrl.u32 %v986, 7
    %v988 = vsub.s32 1, %v987
    %v989 = vrot.slane %v980, %v988
    %v992 = vadd.f32 %v931, %v985
    %v993 = vadd.f32 %v933, %v989
    %v994 = vadd.f32 %v935, %v985
    %v995 = vadd.f32 %v937, %v989
    %v996 = vmax.f32 %v992, 0.0
    %v997 = vmax.f32 %v993, 0.0
    %v998 = vmax.f32 %v994, 0.0
    %v999 = vmax.f32 %v995, 0.0
    %vm1000 = vcmp.ne.f32.partialorder %v992, %v992
    %vm1001 = vcmp.ne.f32.partialorder %v993, %v993
    %vm1002 = vcmp.ne.f32.partialorder %v994, %v994
    %vm1003 = vcmp.ne.f32.partialorder %v995, %v995
    %v1004 = vadd.f32 %v992, 0.0
    %v1005 = vadd.f32 %v993, 0.0
    %v1006 = vadd.f32 %v994, 0.0
    %v1007 = vadd.f32 %v995, 0.0
    %v1008 = vand.u32 2147483647, %v992
    %v1009 = vand.u32 2147483647, %v993
    %v1010 = vand.u32 2147483647, %v994
    %v1011 = vand.u32 2147483647, %v995
    %v1012 = vsub.f32 0.0, %v1008
    %v1013 = vsub.f32 0.0, %v1009
    %v1014 = vsub.f32 0.0, %v1010
    %v1015 = vsub.f32 0.0, %v1011
    %v1016 = vmul.f32 %v1012, 1.442695
    %v1017 = vpow.pop %v1016
    %v1018 = vmul.f32 %v1013, 1.442695
    %v1019 = vpow.pop %v1018
    %v1020 = vmul.f32 %v1014, 1.442695
    %v1021 = vpow.pop %v1020
    %v1022 = vmul.f32 %v1015, 1.442695
    %v1023 = vpow.pop %v1022
    %v1024 = vadd.f32 %v1017, 1.0
    %v1025 = vlog2.pop %v1024
    %v1026 = vmul.f32 %v1025, 0.6931472
    %v1027 = vmul.f32 -0.5, %v1017
    %v1028 = vadd.f32 %v1027, 1.0
    %v1029 = vmul.f32 %v1028, %v1017
    %v1030 = vand.u32 2147483647, %v1017
    %vm1031 = vcmp.lt.f32.partialorder %v1030, 0.0004427343
    %v1032 = vsel %vm1031, %v1029, %v1026
    %v1033 = vadd.f32 %v1019, 1.0
    %v1034 = vlog2.pop %v1033
    %v1035 = vmul.f32 %v1034, 0.6931472
    %v1036 = vmul.f32 -0.5, %v1019
    %v1037 = vadd.f32 %v1036, 1.0
    %v1038 = vmul.f32 %v1037, %v1019
    %v1039 = vand.u32 2147483647, %v1019
    %vm1040 = vcmp.lt.f32.partialorder %v1039, 0.0004427343
    %v1041 = vsel %vm1040, %v1038, %v1035
    %v1042 = vadd.f32 %v1021, 1.0
    %v1043 = vlog2.pop %v1042
    %v1044 = vmul.f32 %v1043, 0.6931472
    %v1045 = vmul.f32 -0.5, %v1021
    %v1046 = vadd.f32 %v1045, 1.0
    %v1047 = vmul.f32 %v1046, %v1021
    %v1048 = vand.u32 2147483647, %v1021
    %vm1049 = vcmp.lt.f32.partialorder %v1048, 0.0004427343
    %v1050 = vsel %vm1049, %v1047, %v1044
    %v1051 = vadd.f32 %v1023, 1.0
    %v1052 = vlog2.pop %v1051
    %v1053 = vmul.f32 %v1052, 0.6931472
    %v1054 = vmul.f32 -0.5, %v1023
    %v1055 = vadd.f32 %v1054, 1.0
    %v1056 = vmul.f32 %v1055, %v1023
    %v1057 = vand.u32 2147483647, %v1023
    %vm1058 = vcmp.lt.f32.partialorder %v1057, 0.0004427343
    %v1059 = vsel %vm1058, %v1056, %v1053
    %v1060 = vadd.f32 %v996, %v1032
    %v1061 = vadd.f32 %v997, %v1041
    %v1062 = vadd.f32 %v998, %v1050
    %v1063 = vadd.f32 %v999, %v1059
    %v1064 = vsel %vm1000, %v1004, %v1060
    %v1065 = vsel %vm1001, %v1005, %v1061
    %v1066 = vsel %vm1002, %v1006, %v1062
    %v1067 = vsel %vm1003, %v1007, %v1063
    %1070 = vrot.lane.b32.xlu0 %v974, 112
    %v1071 = vpop.permute.xlu0 %1070
    %1072 = vrot.lane.b32.xlu0 %v977, 112
    %v1073 = vpop.permute.xlu0 %1072
    %vm1076 = vcmask 130048
    %1077 = vst.msk [vmem:[#allocation4] sm:$0xff] %vm1076, %v1071
    %1078 = vst.msk [vmem:[#allocation4 + $0x8] sm:$0xff] %vm1076, %v1073
    %v1079 = vld [vmem:[%s8] sm:$0xff]
    %v1080 = vld [vmem:[%s8 + $0x8] sm:$0xff]
    %v1081 = vld [vmem:[%s8 + $0x10] sm:$0xff]
    %v1082 = vld [vmem:[%s8 + $0x18] sm:$0xff]
    %v1083 = vmul.f32 %v1064, %v570
    %v1084 = vmul.f32 %v1065, %v571
    %v1085 = vmul.f32 %v1066, %v572
    %v1086 = vmul.f32 %v1067, %v573
    %v1087 = vlaneseq
    %v1088 = vshrl.u32 %v1087, 7
    %v1089 = vsub.s32 0, %v1088
    %v1090 = vrot.slane %v1079, %v1089
    %v1091 = vlaneseq
    %v1092 = vshrl.u32 %v1091, 7
    %v1093 = vsub.s32 0, %v1092
    %v1094 = vrot.slane %v1080, %v1093
    %v1095 = vmul.f32 %v1064, %v1090
    %v1096 = vmul.f32 %v1065, %v1094
    %v1097 = vmul.f32 %v1066, %v1090
    %v1098 = vmul.f32 %v1067, %v1094
    %v1099 = vmul.f32 %v1095, 1.442695
    %v1100 = vpow.pop %v1099
    %v1101 = vmul.f32 %v1096, 1.442695
    %v1102 = vpow.pop %v1101
    %v1103 = vmul.f32 %v1097, 1.442695
    %v1104 = vpow.pop %v1103
    %v1105 = vmul.f32 %v1098, 1.442695
    %v1106 = vpow.pop %v1105
    %1107 = vst [vmem:[#allocation2] sm:$0xff] %v1100
    %1108 = vst [vmem:[#allocation2 + $0x8] sm:$0xff] %v1102
    %1109 = vst [vmem:[#allocation2 + $0x10] sm:$0xff] %v1104
    %1110 = vst [vmem:[#allocation2 + $0x18] sm:$0xff] %v1106
    %1111 = vset.pattern.permute.xlu0 0
    %1112 = vperm.xlu0 %1111, %v974
    %v1113 = vpop.permute.xlu0 %1112
    %1115 = vset.pattern.permute.xlu0 0
    %1116 = vperm.xlu0 %1115, %v977
    %v1117 = vpop.permute.xlu0 %1116
    %v1119 = vmul.f32 %v1083, %v1113
    %v1120 = vmul.f32 %v1084, %v1113
    %v1121 = vmul.f32 %v1085, %v1117
    %v1122 = vmul.f32 %v1086, %v1117
    %1123 = vst [vmem:[#allocation3] sm:$0xff] %v1119
    %1124 = vst [vmem:[#allocation3 + $0x8] sm:$0xff] %v1120
    %1125 = vst [vmem:[#allocation3 + $0x10] sm:$0xff] %v1121
    %1126 = vst [vmem:[#allocation3 + $0x18] sm:$0xff] %v1122
    %v1127 = vlaneseq
    %v1128 = vshrl.u32 %v1127, 7
    %v1129 = vsub.s32 1, %v1128
    %v1130 = vrot.slane %v1079, %v1129
    %v1131 = vlaneseq
    %v1132 = vshrl.u32 %v1131, 7
    %v1133 = vsub.s32 1, %v1132
    %v1134 = vrot.slane %v1080, %v1133
    %v1135 = vmul.f32 %v1064, %v1130
    %v1136 = vmul.f32 %v1065, %v1134
    %v1137 = vmul.f32 %v1066, %v1130
    %v1138 = vmul.f32 %v1067, %v1134
    %v1139 = vmul.f32 %v1135, 1.442695
    %v1140 = vpow.pop %v1139
    %v1141 = vmul.f32 %v1136, 1.442695
    %v1142 = vpow.pop %v1141
    %v1143 = vmul.f32 %v1137, 1.442695
    %v1144 = vpow.pop %v1143
    %v1145 = vmul.f32 %v1138, 1.442695
    %v1146 = vpow.pop %v1145
    %s1147 = scalar_lea.vmem [#allocation2], 32
    %1148 = vst [vmem:[%s1147] sm:$0xff] %v1140
    %1149 = vst [vmem:[%s1147 + $0x8] sm:$0xff] %v1142
    %1150 = vst [vmem:[%s1147 + $0x10] sm:$0xff] %v1144
    %1151 = vst [vmem:[%s1147 + $0x18] sm:$0xff] %v1146
    %1152 = vset.pattern.permute.xlu0 1
    %1153 = vperm.xlu0 %1152, %v974
    %v1154 = vpop.permute.xlu0 %1153
    %1156 = vset.pattern.permute.xlu0 1
    %1157 = vperm.xlu0 %1156, %v977
    %v1158 = vpop.permute.xlu0 %1157
    %v1160 = vmul.f32 %v1083, %v1154
    %v1161 = vmul.f32 %v1084, %v1154
    %v1162 = vmul.f32 %v1085, %v1158
    %v1163 = vmul.f32 %v1086, %v1158
    %s1164 = scalar_lea.vmem [#allocation3], 32
    %1165 = vst [vmem:[%s1164] sm:$0xff] %v1160
    %1166 = vst [vmem:[%s1164 + $0x8] sm:$0xff] %v1161
    %1167 = vst [vmem:[%s1164 + $0x10] sm:$0xff] %v1162
    %1168 = vst [vmem:[%s1164 + $0x18] sm:$0xff] %v1163
    %v1169 = vlaneseq
    %v1170 = vshrl.u32 %v1169, 7
    %v1171 = vsub.s32 2, %v1170
    %v1172 = vrot.slane %v1079, %v1171
    %v1173 = vlaneseq
    %v1174 = vshrl.u32 %v1173, 7
    %v1175 = vsub.s32 2, %v1174
    %v1176 = vrot.slane %v1080, %v1175
    %v1177 = vmul.f32 %v1064, %v1172
    %v1178 = vmul.f32 %v1065, %v1176
    %v1179 = vmul.f32 %v1066, %v1172
    %v1180 = vmul.f32 %v1067, %v1176
    %v1181 = vmul.f32 %v1177, 1.442695
    %v1182 = vpow.pop %v1181
    %v1183 = vmul.f32 %v1178, 1.442695
    %v1184 = vpow.pop %v1183
    %v1185 = vmul.f32 %v1179, 1.442695
    %v1186 = vpow.pop %v1185
    %v1187 = vmul.f32 %v1180, 1.442695
    %v1188 = vpow.pop %v1187
    %s1189 = scalar_lea.vmem [#allocation2], 64
    %1190 = vst [vmem:[%s1189] sm:$0xff] %v1182
    %1191 = vst [vmem:[%s1189 + $0x8] sm:$0xff] %v1184
    %1192 = vst [vmem:[%s1189 + $0x10] sm:$0xff] %v1186
    %1193 = vst [vmem:[%s1189 + $0x18] sm:$0xff] %v1188
    %1194 = vset.pattern.permute.xlu0 2
    %1195 = vperm.xlu0 %1194, %v974
    %v1196 = vpop.permute.xlu0 %1195
    %1198 = vset.pattern.permute.xlu0 2
    %1199 = vperm.xlu0 %1198, %v977
    %v1200 = vpop.permute.xlu0 %1199
    %v1202 = vmul.f32 %v1083, %v1196
    %v1203 = vmul.f32 %v1084, %v1196
    %v1204 = vmul.f32 %v1085, %v1200
    %v1205 = vmul.f32 %v1086, %v1200
    %s1206 = scalar_lea.vmem [#allocation3], 64
    %1207 = vst [vmem:[%s1206] sm:$0xff] %v1202
    %1208 = vst [vmem:[%s1206 + $0x8] sm:$0xff] %v1203
    %1209 = vst [vmem:[%s1206 + $0x10] sm:$0xff] %v1204
    %1210 = vst [vmem:[%s1206 + $0x18] sm:$0xff] %v1205
    %v1211 = vlaneseq
    %v1212 = vshrl.u32 %v1211, 7
    %v1213 = vsub.s32 3, %v1212
    %v1214 = vrot.slane %v1079, %v1213
    %v1215 = vlaneseq
    %v1216 = vshrl.u32 %v1215, 7
    %v1217 = vsub.s32 3, %v1216
    %v1218 = vrot.slane %v1080, %v1217
    %v1219 = vmul.f32 %v1064, %v1214
    %v1220 = vmul.f32 %v1065, %v1218
    %v1221 = vmul.f32 %v1066, %v1214
    %v1222 = vmul.f32 %v1067, %v1218
    %v1223 = vmul.f32 %v1219, 1.442695
    %v1224 = vpow.pop %v1223
    %v1225 = vmul.f32 %v1220, 1.442695
    %v1226 = vpow.pop %v1225
    %v1227 = vmul.f32 %v1221, 1.442695
    %v1228 = vpow.pop %v1227
    %v1229 = vmul.f32 %v1222, 1.442695
    %v1230 = vpow.pop %v1229
    %s1231 = scalar_lea.vmem [#allocation2], 96
    %1232 = vst [vmem:[%s1231] sm:$0xff] %v1224
    %1233 = vst [vmem:[%s1231 + $0x8] sm:$0xff] %v1226
    %1234 = vst [vmem:[%s1231 + $0x10] sm:$0xff] %v1228
    %1235 = vst [vmem:[%s1231 + $0x18] sm:$0xff] %v1230
    %1236 = vset.pattern.permute.xlu0 3
    %1237 = vperm.xlu0 %1236, %v974
    %v1238 = vpop.permute.xlu0 %1237
    %1240 = vset.pattern.permute.xlu0 3
    %1241 = vperm.xlu0 %1240, %v977
    %v1242 = vpop.permute.xlu0 %1241
    %v1244 = vmul.f32 %v1083, %v1238
    %v1245 = vmul.f32 %v1084, %v1238
    %v1246 = vmul.f32 %v1085, %v1242
    %v1247 = vmul.f32 %v1086, %v1242
    %s1248 = scalar_lea.vmem [#allocation3], 96
    %1249 = vst [vmem:[%s1248] sm:$0xff] %v1244
    %1250 = vst [vmem:[%s1248 + $0x8] sm:$0xff] %v1245
    %1251 = vst [vmem:[%s1248 + $0x10] sm:$0xff] %v1246
    %1252 = vst [vmem:[%s1248 + $0x18] sm:$0xff] %v1247
    %v1253 = vlaneseq
    %v1254 = vshrl.u32 %v1253, 7
    %v1255 = vsub.s32 4, %v1254
    %v1256 = vrot.slane %v1079, %v1255
    %v1257 = vlaneseq
    %v1258 = vshrl.u32 %v1257, 7
    %v1259 = vsub.s32 4, %v1258
    %v1260 = vrot.slane %v1080, %v1259
    %v1261 = vmul.f32 %v1064, %v1256
    %v1262 = vmul.f32 %v1065, %v1260
    %v1263 = vmul.f32 %v1066, %v1256
    %v1264 = vmul.f32 %v1067, %v1260
    %v1265 = vmul.f32 %v1261, 1.442695
    %v1266 = vpow.pop %v1265
    %v1267 = vmul.f32 %v1262, 1.442695
    %v1268 = vpow.pop %v1267
    %v1269 = vmul.f32 %v1263, 1.442695
    %v1270 = vpow.pop %v1269
    %v1271 = vmul.f32 %v1264, 1.442695
    %v1272 = vpow.pop %v1271
    %s1273 = scalar_lea.vmem [#allocation2], 128
    %1274 = vst [vmem:[%s1273] sm:$0xff] %v1266
    %1275 = vst [vmem:[%s1273 + $0x8] sm:$0xff] %v1268
    %1276 = vst [vmem:[%s1273 + $0x10] sm:$0xff] %v1270
    %1277 = vst [vmem:[%s1273 + $0x18] sm:$0xff] %v1272
    %1278 = vset.pattern.permute.xlu0 4
    %1279 = vperm.xlu0 %1278, %v974
    %v1280 = vpop.permute.xlu0 %1279
    %1282 = vset.pattern.permute.xlu0 4
    %1283 = vperm.xlu0 %1282, %v977
    %v1284 = vpop.permute.xlu0 %1283
    %v1286 = vmul.f32 %v1083, %v1280
    %v1287 = vmul.f32 %v1084, %v1280
    %v1288 = vmul.f32 %v1085, %v1284
    %v1289 = vmul.f32 %v1086, %v1284
    %s1290 = scalar_lea.vmem [#allocation3], 128
    %1291 = vst [vmem:[%s1290] sm:$0xff] %v1286
    %1292 = vst [vmem:[%s1290 + $0x8] sm:$0xff] %v1287
    %1293 = vst [vmem:[%s1290 + $0x10] sm:$0xff] %v1288
    %1294 = vst [vmem:[%s1290 + $0x18] sm:$0xff] %v1289
    %v1295 = vlaneseq
    %v1296 = vshrl.u32 %v1295, 7
    %v1297 = vsub.s32 5, %v1296
    %v1298 = vrot.slane %v1079, %v1297
    %v1299 = vlaneseq
    %v1300 = vshrl.u32 %v1299, 7
    %v1301 = vsub.s32 5, %v1300
    %v1302 = vrot.slane %v1080, %v1301
    %v1303 = vmul.f32 %v1064, %v1298
    %v1304 = vmul.f32 %v1065, %v1302
    %v1305 = vmul.f32 %v1066, %v1298
    %v1306 = vmul.f32 %v1067, %v1302
    %v1307 = vmul.f32 %v1303, 1.442695
    %v1308 = vpow.pop %v1307
    %v1309 = vmul.f32 %v1304, 1.442695
    %v1310 = vpow.pop %v1309
    %v1311 = vmul.f32 %v1305, 1.442695
    %v1312 = vpow.pop %v1311
    %v1313 = vmul.f32 %v1306, 1.442695
    %v1314 = vpow.pop %v1313
    %s1315 = scalar_lea.vmem [#allocation2], 160
    %1316 = vst [vmem:[%s1315] sm:$0xff] %v1308
    %1317 = vst [vmem:[%s1315 + $0x8] sm:$0xff] %v1310
    %1318 = vst [vmem:[%s1315 + $0x10] sm:$0xff] %v1312
    %1319 = vst [vmem:[%s1315 + $0x18] sm:$0xff] %v1314
    %1320 = vset.pattern.permute.xlu0 5
    %1321 = vperm.xlu0 %1320, %v974
    %v1322 = vpop.permute.xlu0 %1321
    %1324 = vset.pattern.permute.xlu0 5
    %1325 = vperm.xlu0 %1324, %v977
    %v1326 = vpop.permute.xlu0 %1325
    %v1328 = vmul.f32 %v1083, %v1322
    %v1329 = vmul.f32 %v1084, %v1322
    %v1330 = vmul.f32 %v1085, %v1326
    %v1331 = vmul.f32 %v1086, %v1326
    %s1332 = scalar_lea.vmem [#allocation3], 160
    %1333 = vst [vmem:[%s1332] sm:$0xff] %v1328
    %1334 = vst [vmem:[%s1332 + $0x8] sm:$0xff] %v1329
    %1335 = vst [vmem:[%s1332 + $0x10] sm:$0xff] %v1330
    %1336 = vst [vmem:[%s1332 + $0x18] sm:$0xff] %v1331
    %v1337 = vlaneseq
    %v1338 = vshrl.u32 %v1337, 7
    %v1339 = vsub.s32 6, %v1338
    %v1340 = vrot.slane %v1079, %v1339
    %v1341 = vlaneseq
    %v1342 = vshrl.u32 %v1341, 7
    %v1343 = vsub.s32 6, %v1342
    %v1344 = vrot.slane %v1080, %v1343
    %v1345 = vmul.f32 %v1064, %v1340
    %v1346 = vmul.f32 %v1065, %v1344
    %v1347 = vmul.f32 %v1066, %v1340
    %v1348 = vmul.f32 %v1067, %v1344
    %v1349 = vmul.f32 %v1345, 1.442695
    %v1350 = vpow.pop %v1349
    %v1351 = vmul.f32 %v1346, 1.442695
    %v1352 = vpow.pop %v1351
    %v1353 = vmul.f32 %v1347, 1.442695
    %v1354 = vpow.pop %v1353
    %v1355 = vmul.f32 %v1348, 1.442695
    %v1356 = vpow.pop %v1355
    %s1357 = scalar_lea.vmem [#allocation2], 192
    %1358 = vst [vmem:[%s1357] sm:$0xff] %v1350
    %1359 = vst [vmem:[%s1357 + $0x8] sm:$0xff] %v1352
    %1360 = vst [vmem:[%s1357 + $0x10] sm:$0xff] %v1354
    %1361 = vst [vmem:[%s1357 + $0x18] sm:$0xff] %v1356
    %1362 = vset.pattern.permute.xlu0 6
    %1363 = vperm.xlu0 %1362, %v974
    %v1364 = vpop.permute.xlu0 %1363
    %1366 = vset.pattern.permute.xlu0 6
    %1367 = vperm.xlu0 %1366, %v977
    %v1368 = vpop.permute.xlu0 %1367
    %v1370 = vmul.f32 %v1083, %v1364
    %v1371 = vmul.f32 %v1084, %v1364
    %v1372 = vmul.f32 %v1085, %v1368
    %v1373 = vmul.f32 %v1086, %v1368
    %s1374 = scalar_lea.vmem [#allocation3], 192
    %1375 = vst [vmem:[%s1374] sm:$0xff] %v1370
    %1376 = vst [vmem:[%s1374 + $0x8] sm:$0xff] %v1371
    %1377 = vst [vmem:[%s1374 + $0x10] sm:$0xff] %v1372
    %1378 = vst [vmem:[%s1374 + $0x18] sm:$0xff] %v1373
    %v1379 = vlaneseq
    %v1380 = vshrl.u32 %v1379, 7
    %v1381 = vsub.s32 7, %v1380
    %v1382 = vrot.slane %v1079, %v1381
    %v1383 = vlaneseq
    %v1384 = vshrl.u32 %v1383, 7
    %v1385 = vsub.s32 7, %v1384
    %v1386 = vrot.slane %v1080, %v1385
    %v1387 = vmul.f32 %v1064, %v1382
    %v1388 = vmul.f32 %v1065, %v1386
    %v1389 = vmul.f32 %v1066, %v1382
    %v1390 = vmul.f32 %v1067, %v1386
    %v1391 = vmul.f32 %v1387, 1.442695
    %v1392 = vpow.pop %v1391
    %v1393 = vmul.f32 %v1388, 1.442695
    %v1394 = vpow.pop %v1393
    %v1395 = vmul.f32 %v1389, 1.442695
    %v1396 = vpow.pop %v1395
    %v1397 = vmul.f32 %v1390, 1.442695
    %v1398 = vpow.pop %v1397
    %s1399 = scalar_lea.vmem [#allocation2], 224
    %1400 = vst [vmem:[%s1399] sm:$0xff] %v1392
    %1401 = vst [vmem:[%s1399 + $0x8] sm:$0xff] %v1394
    %1402 = vst [vmem:[%s1399 + $0x10] sm:$0xff] %v1396
    %1403 = vst [vmem:[%s1399 + $0x18] sm:$0xff] %v1398
    %1404 = vset.pattern.permute.xlu0 7
    %1405 = vperm.xlu0 %1404, %v974
    %v1406 = vpop.permute.xlu0 %1405
    %1408 = vset.pattern.permute.xlu0 7
    %1409 = vperm.xlu0 %1408, %v977
    %v1410 = vpop.permute.xlu0 %1409
    %v1412 = vmul.f32 %v1083, %v1406
    %v1413 = vmul.f32 %v1084, %v1406
    %v1414 = vmul.f32 %v1085, %v1410
    %v1415 = vmul.f32 %v1086, %v1410
    %s1416 = scalar_lea.vmem [#allocation3], 224
    %1417 = vst [vmem:[%s1416] sm:$0xff] %v1412
    %1418 = vst [vmem:[%s1416 + $0x8] sm:$0xff] %v1413
    %1419 = vst [vmem:[%s1416 + $0x10] sm:$0xff] %v1414
    %1420 = vst [vmem:[%s1416 + $0x18] sm:$0xff] %v1415
    %v1421 = vlaneseq
    %v1422 = vshrl.u32 %v1421, 7
    %v1423 = vsub.s32 0, %v1422
    %v1424 = vrot.slane %v1081, %v1423
    %v1425 = vlaneseq
    %v1426 = vshrl.u32 %v1425, 7
    %v1427 = vsub.s32 0, %v1426
    %v1428 = vrot.slane %v1082, %v1427
    %v1429 = vmul.f32 %v1064, %v1424
    %v1430 = vmul.f32 %v1065, %v1428
    %v1431 = vmul.f32 %v1066, %v1424
    %v1432 = vmul.f32 %v1067, %v1428
    %v1433 = vmul.f32 %v1429, 1.442695
    %v1434 = vpow.pop %v1433
    %v1435 = vmul.f32 %v1430, 1.442695
    %v1436 = vpow.pop %v1435
    %v1437 = vmul.f32 %v1431, 1.442695
    %v1438 = vpow.pop %v1437
    %v1439 = vmul.f32 %v1432, 1.442695
    %v1440 = vpow.pop %v1439
    %s1441 = scalar_lea.vmem [#allocation2], 256
    %1442 = vst [vmem:[%s1441] sm:$0xff] %v1434
    %1443 = vst [vmem:[%s1441 + $0x8] sm:$0xff] %v1436
    %1444 = vst [vmem:[%s1441 + $0x10] sm:$0xff] %v1438
    %1445 = vst [vmem:[%s1441 + $0x18] sm:$0xff] %v1440
    %1446 = vset.pattern.permute.xlu0 8
    %1447 = vperm.xlu0 %1446, %v974
    %v1448 = vpop.permute.xlu0 %1447
    %1450 = vset.pattern.permute.xlu0 8
    %1451 = vperm.xlu0 %1450, %v977
    %v1452 = vpop.permute.xlu0 %1451
    %v1454 = vmul.f32 %v1083, %v1448
    %v1455 = vmul.f32 %v1084, %v1448
    %v1456 = vmul.f32 %v1085, %v1452
    %v1457 = vmul.f32 %v1086, %v1452
    %s1458 = scalar_lea.vmem [#allocation3], 256
    %1459 = vst [vmem:[%s1458] sm:$0xff] %v1454
    %1460 = vst [vmem:[%s1458 + $0x8] sm:$0xff] %v1455
    %1461 = vst [vmem:[%s1458 + $0x10] sm:$0xff] %v1456
    %1462 = vst [vmem:[%s1458 + $0x18] sm:$0xff] %v1457
    %v1463 = vlaneseq
    %v1464 = vshrl.u32 %v1463, 7
    %v1465 = vsub.s32 1, %v1464
    %v1466 = vrot.slane %v1081, %v1465
    %v1467 = vlaneseq
    %v1468 = vshrl.u32 %v1467, 7
    %v1469 = vsub.s32 1, %v1468
    %v1470 = vrot.slane %v1082, %v1469
    %v1471 = vmul.f32 %v1064, %v1466
    %v1472 = vmul.f32 %v1065, %v1470
    %v1473 = vmul.f32 %v1066, %v1466
    %v1474 = vmul.f32 %v1067, %v1470
    %v1475 = vmul.f32 %v1471, 1.442695
    %v1476 = vpow.pop %v1475
    %v1477 = vmul.f32 %v1472, 1.442695
    %v1478 = vpow.pop %v1477
    %v1479 = vmul.f32 %v1473, 1.442695
    %v1480 = vpow.pop %v1479
    %v1481 = vmul.f32 %v1474, 1.442695
    %v1482 = vpow.pop %v1481
    %s1483 = scalar_lea.vmem [#allocation2], 288
    %1484 = vst [vmem:[%s1483] sm:$0xff] %v1476
    %1485 = vst [vmem:[%s1483 + $0x8] sm:$0xff] %v1478
    %1486 = vst [vmem:[%s1483 + $0x10] sm:$0xff] %v1480
    %1487 = vst [vmem:[%s1483 + $0x18] sm:$0xff] %v1482
    %1488 = vset.pattern.permute.xlu0 9
    %1489 = vperm.xlu0 %1488, %v974
    %v1490 = vpop.permute.xlu0 %1489
    %1492 = vset.pattern.permute.xlu0 9
    %1493 = vperm.xlu0 %1492, %v977
    %v1494 = vpop.permute.xlu0 %1493
    %v1496 = vmul.f32 %v1083, %v1490
    %v1497 = vmul.f32 %v1084, %v1490
    %v1498 = vmul.f32 %v1085, %v1494
    %v1499 = vmul.f32 %v1086, %v1494
    %s1500 = scalar_lea.vmem [#allocation3], 288
    %1501 = vst [vmem:[%s1500] sm:$0xff] %v1496
    %1502 = vst [vmem:[%s1500 + $0x8] sm:$0xff] %v1497
    %1503 = vst [vmem:[%s1500 + $0x10] sm:$0xff] %v1498
    %1504 = vst [vmem:[%s1500 + $0x18] sm:$0xff] %v1499
    %v1505 = vlaneseq
    %v1506 = vshrl.u32 %v1505, 7
    %v1507 = vsub.s32 2, %v1506
    %v1508 = vrot.slane %v1081, %v1507
    %v1509 = vlaneseq
    %v1510 = vshrl.u32 %v1509, 7
    %v1511 = vsub.s32 2, %v1510
    %v1512 = vrot.slane %v1082, %v1511
    %v1513 = vmul.f32 %v1064, %v1508
    %v1514 = vmul.f32 %v1065, %v1512
    %v1515 = vmul.f32 %v1066, %v1508
    %v1516 = vmul.f32 %v1067, %v1512
    %v1517 = vmul.f32 %v1513, 1.442695
    %v1518 = vpow.pop %v1517
    %v1519 = vmul.f32 %v1514, 1.442695
    %v1520 = vpow.pop %v1519
    %v1521 = vmul.f32 %v1515, 1.442695
    %v1522 = vpow.pop %v1521
    %v1523 = vmul.f32 %v1516, 1.442695
    %v1524 = vpow.pop %v1523
    %s1525 = scalar_lea.vmem [#allocation2], 320
    %1526 = vst [vmem:[%s1525] sm:$0xff] %v1518
    %1527 = vst [vmem:[%s1525 + $0x8] sm:$0xff] %v1520
    %1528 = vst [vmem:[%s1525 + $0x10] sm:$0xff] %v1522
    %1529 = vst [vmem:[%s1525 + $0x18] sm:$0xff] %v1524
    %1530 = vset.pattern.permute.xlu0 10
    %1531 = vperm.xlu0 %1530, %v974
    %v1532 = vpop.permute.xlu0 %1531
    %1534 = vset.pattern.permute.xlu0 10
    %1535 = vperm.xlu0 %1534, %v977
    %v1536 = vpop.permute.xlu0 %1535
    %v1538 = vmul.f32 %v1083, %v1532
    %v1539 = vmul.f32 %v1084, %v1532
    %v1540 = vmul.f32 %v1085, %v1536
    %v1541 = vmul.f32 %v1086, %v1536
    %s1542 = scalar_lea.vmem [#allocation3], 320
    %1543 = vst [vmem:[%s1542] sm:$0xff] %v1538
    %1544 = vst [vmem:[%s1542 + $0x8] sm:$0xff] %v1539
    %1545 = vst [vmem:[%s1542 + $0x10] sm:$0xff] %v1540
    %1546 = vst [vmem:[%s1542 + $0x18] sm:$0xff] %v1541
    %v1547 = vlaneseq
    %v1548 = vshrl.u32 %v1547, 7
    %v1549 = vsub.s32 3, %v1548
    %v1550 = vrot.slane %v1081, %v1549
    %v1551 = vlaneseq
    %v1552 = vshrl.u32 %v1551, 7
    %v1553 = vsub.s32 3, %v1552
    %v1554 = vrot.slane %v1082, %v1553
    %v1555 = vmul.f32 %v1064, %v1550
    %v1556 = vmul.f32 %v1065, %v1554
    %v1557 = vmul.f32 %v1066, %v1550
    %v1558 = vmul.f32 %v1067, %v1554
    %v1559 = vmul.f32 %v1555, 1.442695
    %v1560 = vpow.pop %v1559
    %v1561 = vmul.f32 %v1556, 1.442695
    %v1562 = vpow.pop %v1561
    %v1563 = vmul.f32 %v1557, 1.442695
    %v1564 = vpow.pop %v1563
    %v1565 = vmul.f32 %v1558, 1.442695
    %v1566 = vpow.pop %v1565
    %s1567 = scalar_lea.vmem [#allocation2], 352
    %1568 = vst [vmem:[%s1567] sm:$0xff] %v1560
    %1569 = vst [vmem:[%s1567 + $0x8] sm:$0xff] %v1562
    %1570 = vst [vmem:[%s1567 + $0x10] sm:$0xff] %v1564
    %1571 = vst [vmem:[%s1567 + $0x18] sm:$0xff] %v1566
    %1572 = vset.pattern.permute.xlu0 11
    %1573 = vperm.xlu0 %1572, %v974
    %v1574 = vpop.permute.xlu0 %1573
    %1576 = vset.pattern.permute.xlu0 11
    %1577 = vperm.xlu0 %1576, %v977
    %v1578 = vpop.permute.xlu0 %1577
    %v1580 = vmul.f32 %v1083, %v1574
    %v1581 = vmul.f32 %v1084, %v1574
    %v1582 = vmul.f32 %v1085, %v1578
    %v1583 = vmul.f32 %v1086, %v1578
    %s1584 = scalar_lea.vmem [#allocation3], 352
    %1585 = vst [vmem:[%s1584] sm:$0xff] %v1580
    %1586 = vst [vmem:[%s1584 + $0x8] sm:$0xff] %v1581
    %1587 = vst [vmem:[%s1584 + $0x10] sm:$0xff] %v1582
    %1588 = vst [vmem:[%s1584 + $0x18] sm:$0xff] %v1583
    %v1589 = vlaneseq
    %v1590 = vshrl.u32 %v1589, 7
    %v1591 = vsub.s32 4, %v1590
    %v1592 = vrot.slane %v1081, %v1591
    %v1593 = vlaneseq
    %v1594 = vshrl.u32 %v1593, 7
    %v1595 = vsub.s32 4, %v1594
    %v1596 = vrot.slane %v1082, %v1595
    %v1597 = vmul.f32 %v1064, %v1592
    %v1598 = vmul.f32 %v1065, %v1596
    %v1599 = vmul.f32 %v1066, %v1592
    %v1600 = vmul.f32 %v1067, %v1596
    %v1601 = vmul.f32 %v1597, 1.442695
    %v1602 = vpow.pop %v1601
    %v1603 = vmul.f32 %v1598, 1.442695
    %v1604 = vpow.pop %v1603
    %v1605 = vmul.f32 %v1599, 1.442695
    %v1606 = vpow.pop %v1605
    %v1607 = vmul.f32 %v1600, 1.442695
    %v1608 = vpow.pop %v1607
    %s1609 = scalar_lea.vmem [#allocation2], 384
    %1610 = vst [vmem:[%s1609] sm:$0xff] %v1602
    %1611 = vst [vmem:[%s1609 + $0x8] sm:$0xff] %v1604
    %1612 = vst [vmem:[%s1609 + $0x10] sm:$0xff] %v1606
    %1613 = vst [vmem:[%s1609 + $0x18] sm:$0xff] %v1608
    %1614 = vset.pattern.permute.xlu0 12
    %1615 = vperm.xlu0 %1614, %v974
    %v1616 = vpop.permute.xlu0 %1615
    %1618 = vset.pattern.permute.xlu0 12
    %1619 = vperm.xlu0 %1618, %v977
    %v1620 = vpop.permute.xlu0 %1619
    %v1622 = vmul.f32 %v1083, %v1616
    %v1623 = vmul.f32 %v1084, %v1616
    %v1624 = vmul.f32 %v1085, %v1620
    %v1625 = vmul.f32 %v1086, %v1620
    %s1626 = scalar_lea.vmem [#allocation3], 384
    %1627 = vst [vmem:[%s1626] sm:$0xff] %v1622
    %1628 = vst [vmem:[%s1626 + $0x8] sm:$0xff] %v1623
    %1629 = vst [vmem:[%s1626 + $0x10] sm:$0xff] %v1624
    %1630 = vst [vmem:[%s1626 + $0x18] sm:$0xff] %v1625
    %v1631 = vlaneseq
    %v1632 = vshrl.u32 %v1631, 7
    %v1633 = vsub.s32 5, %v1632
    %v1634 = vrot.slane %v1081, %v1633
    %v1635 = vlaneseq
    %v1636 = vshrl.u32 %v1635, 7
    %v1637 = vsub.s32 5, %v1636
    %v1638 = vrot.slane %v1082, %v1637
    %v1639 = vmul.f32 %v1064, %v1634
    %v1640 = vmul.f32 %v1065, %v1638
    %v1641 = vmul.f32 %v1066, %v1634
    %v1642 = vmul.f32 %v1067, %v1638
    %v1643 = vmul.f32 %v1639, 1.442695
    %v1644 = vpow.pop %v1643
    %v1645 = vmul.f32 %v1640, 1.442695
    %v1646 = vpow.pop %v1645
    %v1647 = vmul.f32 %v1641, 1.442695
    %v1648 = vpow.pop %v1647
    %v1649 = vmul.f32 %v1642, 1.442695
    %v1650 = vpow.pop %v1649
    %s1651 = scalar_lea.vmem [#allocation2], 416
    %1652 = vst [vmem:[%s1651] sm:$0xff] %v1644
    %1653 = vst [vmem:[%s1651 + $0x8] sm:$0xff] %v1646
    %1654 = vst [vmem:[%s1651 + $0x10] sm:$0xff] %v1648
    %1655 = vst [vmem:[%s1651 + $0x18] sm:$0xff] %v1650
    %1656 = vset.pattern.permute.xlu0 13
    %1657 = vperm.xlu0 %1656, %v974
    %v1658 = vpop.permute.xlu0 %1657
    %1660 = vset.pattern.permute.xlu0 13
    %1661 = vperm.xlu0 %1660, %v977
    %v1662 = vpop.permute.xlu0 %1661
    %v1664 = vmul.f32 %v1083, %v1658
    %v1665 = vmul.f32 %v1084, %v1658
    %v1666 = vmul.f32 %v1085, %v1662
    %v1667 = vmul.f32 %v1086, %v1662
    %s1668 = scalar_lea.vmem [#allocation3], 416
    %1669 = vst [vmem:[%s1668] sm:$0xff] %v1664
    %1670 = vst [vmem:[%s1668 + $0x8] sm:$0xff] %v1665
    %1671 = vst [vmem:[%s1668 + $0x10] sm:$0xff] %v1666
    %1672 = vst [vmem:[%s1668 + $0x18] sm:$0xff] %v1667
    %v1673 = vlaneseq
    %v1674 = vshrl.u32 %v1673, 7
    %v1675 = vsub.s32 6, %v1674
    %v1676 = vrot.slane %v1081, %v1675
    %v1677 = vlaneseq
    %v1678 = vshrl.u32 %v1677, 7
    %v1679 = vsub.s32 6, %v1678
    %v1680 = vrot.slane %v1082, %v1679
    %v1681 = vmul.f32 %v1064, %v1676
    %v1682 = vmul.f32 %v1065, %v1680
    %v1683 = vmul.f32 %v1066, %v1676
    %v1684 = vmul.f32 %v1067, %v1680
    %v1685 = vmul.f32 %v1681, 1.442695
    %v1686 = vpow.pop %v1685
    %v1687 = vmul.f32 %v1682, 1.442695
    %v1688 = vpow.pop %v1687
    %v1689 = vmul.f32 %v1683, 1.442695
    %v1690 = vpow.pop %v1689
    %v1691 = vmul.f32 %v1684, 1.442695
    %v1692 = vpow.pop %v1691
    %s1693 = scalar_lea.vmem [#allocation2], 448
    %1694 = vst [vmem:[%s1693] sm:$0xff] %v1686
    %1695 = vst [vmem:[%s1693 + $0x8] sm:$0xff] %v1688
    %1696 = vst [vmem:[%s1693 + $0x10] sm:$0xff] %v1690
    %1697 = vst [vmem:[%s1693 + $0x18] sm:$0xff] %v1692
    %1698 = vset.pattern.permute.xlu0 14
    %1699 = vperm.xlu0 %1698, %v974
    %v1700 = vpop.permute.xlu0 %1699
    %1702 = vset.pattern.permute.xlu0 14
    %1703 = vperm.xlu0 %1702, %v977
    %v1704 = vpop.permute.xlu0 %1703
    %v1706 = vmul.f32 %v1083, %v1700
    %v1707 = vmul.f32 %v1084, %v1700
    %v1708 = vmul.f32 %v1085, %v1704
    %v1709 = vmul.f32 %v1086, %v1704
    %s1710 = scalar_lea.vmem [#allocation3], 448
    %1711 = vst [vmem:[%s1710] sm:$0xff] %v1706
    %1712 = vst [vmem:[%s1710 + $0x8] sm:$0xff] %v1707
    %1713 = vst [vmem:[%s1710 + $0x10] sm:$0xff] %v1708
    %1714 = vst [vmem:[%s1710 + $0x18] sm:$0xff] %v1709
    %v1715 = vlaneseq
    %v1716 = vshrl.u32 %v1715, 7
    %v1717 = vsub.s32 7, %v1716
    %v1718 = vrot.slane %v1081, %v1717
    %v1719 = vlaneseq
    %v1720 = vshrl.u32 %v1719, 7
    %v1721 = vsub.s32 7, %v1720
    %v1722 = vrot.slane %v1082, %v1721
    %v1723 = vmul.f32 %v1064, %v1718
    %v1724 = vmul.f32 %v1065, %v1722
    %v1725 = vmul.f32 %v1066, %v1718
    %v1726 = vmul.f32 %v1067, %v1722
    %v1727 = vmul.f32 %v1723, 1.442695
    %v1728 = vpow.pop %v1727
    %v1729 = vmul.f32 %v1724, 1.442695
    %v1730 = vpow.pop %v1729
    %v1731 = vmul.f32 %v1725, 1.442695
    %v1732 = vpow.pop %v1731
    %v1733 = vmul.f32 %v1726, 1.442695
    %v1734 = vpow.pop %v1733
    %s1735 = scalar_lea.vmem [#allocation2], 480
    %1736 = vst [vmem:[%s1735] sm:$0xff] %v1728
    %1737 = vst [vmem:[%s1735 + $0x8] sm:$0xff] %v1730
    %1738 = vst [vmem:[%s1735 + $0x10] sm:$0xff] %v1732
    %1739 = vst [vmem:[%s1735 + $0x18] sm:$0xff] %v1734
    %1740 = vset.pattern.permute.xlu0 15
    %1741 = vperm.xlu0 %1740, %v974
    %v1742 = vpop.permute.xlu0 %1741
    %1744 = vset.pattern.permute.xlu0 15
    %1745 = vperm.xlu0 %1744, %v977
    %v1746 = vpop.permute.xlu0 %1745
    %v1748 = vmul.f32 %v1083, %v1742
    %v1749 = vmul.f32 %v1084, %v1742
    %v1750 = vmul.f32 %v1085, %v1746
    %v1751 = vmul.f32 %v1086, %v1746
    %s1752 = scalar_lea.vmem [#allocation3], 480
    %1753 = vst [vmem:[%s1752] sm:$0xff] %v1748
    %1754 = vst [vmem:[%s1752 + $0x8] sm:$0xff] %v1749
    %1755 = vst [vmem:[%s1752 + $0x10] sm:$0xff] %v1750
    %1756 = vst [vmem:[%s1752 + $0x18] sm:$0xff] %v1751
    %v1757 = vld [vmem:[#allocation2] sm:$0x3]
    %v1758 = vld [vmem:[#allocation2 + $0x8] sm:$0x3]
    %v1759 = vld [vmem:[#allocation2 + $0x20] sm:$0x3]
    %v1760 = vld [vmem:[#allocation2 + $0x28] sm:$0x3]
    %v1761 = vld [vmem:[#allocation2 + $0x40] sm:$0x3]
    %v1762 = vld [vmem:[#allocation2 + $0x48] sm:$0x3]
    %v1763 = vld [vmem:[#allocation2 + $0x60] sm:$0x3]
    %v1764 = vld [vmem:[#allocation2 + $0x68] sm:$0x3]
    %v1765 = vld [vmem:[#allocation2 + $0x80] sm:$0x3]
    %v1766 = vld [vmem:[#allocation2 + $0x88] sm:$0x3]
    %v1767 = vld [vmem:[#allocation2 + $0xa0] sm:$0x3]
    %v1768 = vld [vmem:[#allocation2 + $0xa8] sm:$0x3]
    %v1769 = vld [vmem:[#allocation2 + $0xc0] sm:$0x3]
    %v1770 = vld [vmem:[#allocation2 + $0xc8] sm:$0x3]
    %v1771 = vld [vmem:[#allocation2 + $0xe0] sm:$0x3]
    %v1772 = vld [vmem:[#allocation2 + $0xe8] sm:$0x3]
    %v1773 = vld [vmem:[#allocation2 + $0x100] sm:$0x3]
    %v1774 = vld [vmem:[#allocation2 + $0x108] sm:$0x3]
    %v1775 = vld [vmem:[#allocation2 + $0x120] sm:$0x3]
    %v1776 = vld [vmem:[#allocation2 + $0x128] sm:$0x3]
    %v1777 = vld [vmem:[#allocation2 + $0x140] sm:$0x3]
    %v1778 = vld [vmem:[#allocation2 + $0x148] sm:$0x3]
    %v1779 = vld [vmem:[#allocation2 + $0x160] sm:$0x3]
    %v1780 = vld [vmem:[#allocation2 + $0x168] sm:$0x3]
    %v1781 = vld [vmem:[#allocation2 + $0x180] sm:$0x3]
    %v1782 = vld [vmem:[#allocation2 + $0x188] sm:$0x3]
    %v1783 = vld [vmem:[#allocation2 + $0x1a0] sm:$0x3]
    %v1784 = vld [vmem:[#allocation2 + $0x1a8] sm:$0x3]
    %v1785 = vld [vmem:[#allocation2 + $0x1c0] sm:$0x3]
    %v1786 = vld [vmem:[#allocation2 + $0x1c8] sm:$0x3]
    %v1787 = vld [vmem:[#allocation2 + $0x1e0] sm:$0x3]
    %v1788 = vld [vmem:[#allocation2 + $0x1e8] sm:$0x3]
    %v1789 = vmul.f32 %v1757, 0.0
    %v1790 = vmul.f32 %v1758, 0.0
    %v1791 = vmul.f32 %v1759, 0.0
    %v1792 = vmul.f32 %v1760, 0.0
    %v1793 = vmul.f32 %v1761, 0.0
    %v1794 = vmul.f32 %v1762, 0.0
    %v1795 = vmul.f32 %v1763, 0.0
    %v1796 = vmul.f32 %v1764, 0.0
    %v1797 = vmul.f32 %v1765, 0.0
    %v1798 = vmul.f32 %v1766, 0.0
    %v1799 = vmul.f32 %v1767, 0.0
    %v1800 = vmul.f32 %v1768, 0.0
    %v1801 = vmul.f32 %v1769, 0.0
    %v1802 = vmul.f32 %v1770, 0.0
    %v1803 = vmul.f32 %v1771, 0.0
    %v1804 = vmul.f32 %v1772, 0.0
    %v1805 = vmul.f32 %v1773, 0.0
    %v1806 = vmul.f32 %v1774, 0.0
    %v1807 = vmul.f32 %v1775, 0.0
    %v1808 = vmul.f32 %v1776, 0.0
    %v1809 = vmul.f32 %v1777, 0.0
    %v1810 = vmul.f32 %v1778, 0.0
    %v1811 = vmul.f32 %v1779, 0.0
    %v1812 = vmul.f32 %v1780, 0.0
    %v1813 = vmul.f32 %v1781, 0.0
    %v1814 = vmul.f32 %v1782, 0.0
    %v1815 = vmul.f32 %v1783, 0.0
    %v1816 = vmul.f32 %v1784, 0.0
    %v1817 = vmul.f32 %v1785, 0.0
    %v1818 = vmul.f32 %v1786, 0.0
    %v1819 = vmul.f32 %v1787, 0.0
    %v1820 = vmul.f32 %v1788, 0.0
    %v1821 = vld [vmem:[#allocation3] sm:$0x3]
    %v1822 = vld [vmem:[#allocation3 + $0x8] sm:$0x3]
    %v1823 = vld [vmem:[#allocation3 + $0x20] sm:$0x3]
    %v1824 = vld [vmem:[#allocation3 + $0x28] sm:$0x3]
    %v1825 = vld [vmem:[#allocation3 + $0x40] sm:$0x3]
    %v1826 = vld [vmem:[#allocation3 + $0x48] sm:$0x3]
    %v1827 = vld [vmem:[#allocation3 + $0x60] sm:$0x3]
    %v1828 = vld [vmem:[#allocation3 + $0x68] sm:$0x3]
    %v1829 = vld [vmem:[#allocation3 + $0x80] sm:$0x3]
    %v1830 = vld [vmem:[#allocation3 + $0x88] sm:$0x3]
    %v1831 = vld [vmem:[#allocation3 + $0xa0] sm:$0x3]
    %v1832 = vld [vmem:[#allocation3 + $0xa8] sm:$0x3]
    %v1833 = vld [vmem:[#allocation3 + $0xc0] sm:$0x3]
    %v1834 = vld [vmem:[#allocation3 + $0xc8] sm:$0x3]
    %v1835 = vld [vmem:[#allocation3 + $0xe0] sm:$0x3]
    %v1836 = vld [vmem:[#allocation3 + $0xe8] sm:$0x3]
    %v1837 = vld [vmem:[#allocation3 + $0x100] sm:$0x3]
    %v1838 = vld [vmem:[#allocation3 + $0x108] sm:$0x3]
    %v1839 = vld [vmem:[#allocation3 + $0x120] sm:$0x3]
    %v1840 = vld [vmem:[#allocation3 + $0x128] sm:$0x3]
    %v1841 = vld [vmem:[#allocation3 + $0x140] sm:$0x3]
    %v1842 = vld [vmem:[#allocation3 + $0x148] sm:$0x3]
    %v1843 = vld [vmem:[#allocation3 + $0x160] sm:$0x3]
    %v1844 = vld [vmem:[#allocation3 + $0x168] sm:$0x3]
    %v1845 = vld [vmem:[#allocation3 + $0x180] sm:$0x3]
    %v1846 = vld [vmem:[#allocation3 + $0x188] sm:$0x3]
    %v1847 = vld [vmem:[#allocation3 + $0x1a0] sm:$0x3]
    %v1848 = vld [vmem:[#allocation3 + $0x1a8] sm:$0x3]
    %v1849 = vld [vmem:[#allocation3 + $0x1c0] sm:$0x3]
    %v1850 = vld [vmem:[#allocation3 + $0x1c8] sm:$0x3]
    %v1851 = vld [vmem:[#allocation3 + $0x1e0] sm:$0x3]
    %v1852 = vld [vmem:[#allocation3 + $0x1e8] sm:$0x3]
    %v1853 = vadd.f32 %v1789, %v1821
    %v1854 = vadd.f32 %v1790, %v1822
    %v1855 = vadd.f32 %v1791, %v1823
    %v1856 = vadd.f32 %v1792, %v1824
    %v1857 = vadd.f32 %v1793, %v1825
    %v1858 = vadd.f32 %v1794, %v1826
    %v1859 = vadd.f32 %v1795, %v1827
    %v1860 = vadd.f32 %v1796, %v1828
    %v1861 = vadd.f32 %v1797, %v1829
    %v1862 = vadd.f32 %v1798, %v1830
    %v1863 = vadd.f32 %v1799, %v1831
    %v1864 = vadd.f32 %v1800, %v1832
    %v1865 = vadd.f32 %v1801, %v1833
    %v1866 = vadd.f32 %v1802, %v1834
    %v1867 = vadd.f32 %v1803, %v1835
    %v1868 = vadd.f32 %v1804, %v1836
    %v1869 = vadd.f32 %v1805, %v1837
    %v1870 = vadd.f32 %v1806, %v1838
    %v1871 = vadd.f32 %v1807, %v1839
    %v1872 = vadd.f32 %v1808, %v1840
    %v1873 = vadd.f32 %v1809, %v1841
    %v1874 = vadd.f32 %v1810, %v1842
    %v1875 = vadd.f32 %v1811, %v1843
    %v1876 = vadd.f32 %v1812, %v1844
    %v1877 = vadd.f32 %v1813, %v1845
    %v1878 = vadd.f32 %v1814, %v1846
    %v1879 = vadd.f32 %v1815, %v1847
    %v1880 = vadd.f32 %v1816, %v1848
    %v1881 = vadd.f32 %v1817, %v1849
    %v1882 = vadd.f32 %v1818, %v1850
    %v1883 = vadd.f32 %v1819, %v1851
    %v1884 = vadd.f32 %v1820, %v1852
    %v1885 = vld [vmem:[#allocation4] sm:$0x3]
    %1887 = vset.pattern.permute.xlu0 0
    %1888 = vperm.xlu0 %1887, %v1885
    %v1889 = vpop.permute.xlu0 %1888
    %v1891 = vmul.f32 %v1889, %v1853
    %v1892 = vmul.f32 %v1889, %v1854
    %1893 = vset.pattern.permute.xlu0 1
    %1894 = vperm.xlu0 %1893, %v1885
    %v1895 = vpop.permute.xlu0 %1894
    %v1897 = vmul.f32 %v1895, %v1855
    %v1898 = vmul.f32 %v1895, %v1856
    %v1899 = vadd.f32 %v1891, %v1897
    %v1900 = vadd.f32 %v1892, %v1898
    %1901 = vset.pattern.permute.xlu0 2
    %1902 = vperm.xlu0 %1901, %v1885
    %v1903 = vpop.permute.xlu0 %1902
    %v1905 = vmul.f32 %v1903, %v1857
    %v1906 = vmul.f32 %v1903, %v1858
    %v1907 = vadd.f32 %v1899, %v1905
    %v1908 = vadd.f32 %v1900, %v1906
    %1909 = vset.pattern.permute.xlu0 3
    %1910 = vperm.xlu0 %1909, %v1885
    %v1911 = vpop.permute.xlu0 %1910
    %v1913 = vmul.f32 %v1911, %v1859
    %v1914 = vmul.f32 %v1911, %v1860
    %v1915 = vadd.f32 %v1907, %v1913
    %v1916 = vadd.f32 %v1908, %v1914
    %1917 = vset.pattern.permute.xlu0 4
    %1918 = vperm.xlu0 %1917, %v1885
    %v1919 = vpop.permute.xlu0 %1918
    %v1921 = vmul.f32 %v1919, %v1861
    %v1922 = vmul.f32 %v1919, %v1862
    %v1923 = vadd.f32 %v1915, %v1921
    %v1924 = vadd.f32 %v1916, %v1922
    %1925 = vset.pattern.permute.xlu0 5
    %1926 = vperm.xlu0 %1925, %v1885
    %v1927 = vpop.permute.xlu0 %1926
    %v1929 = vmul.f32 %v1927, %v1863
    %v1930 = vmul.f32 %v1927, %v1864
    %v1931 = vadd.f32 %v1923, %v1929
    %v1932 = vadd.f32 %v1924, %v1930
    %1933 = vset.pattern.permute.xlu0 6
    %1934 = vperm.xlu0 %1933, %v1885
    %v1935 = vpop.permute.xlu0 %1934
    %v1937 = vmul.f32 %v1935, %v1865
    %v1938 = vmul.f32 %v1935, %v1866
    %v1939 = vadd.f32 %v1931, %v1937
    %v1940 = vadd.f32 %v1932, %v1938
    %1941 = vset.pattern.permute.xlu0 7
    %1942 = vperm.xlu0 %1941, %v1885
    %v1943 = vpop.permute.xlu0 %1942
    %v1945 = vmul.f32 %v1943, %v1867
    %v1946 = vmul.f32 %v1943, %v1868
    %v1947 = vadd.f32 %v1939, %v1945
    %v1948 = vadd.f32 %v1940, %v1946
    %1949 = vset.pattern.permute.xlu0 8
    %1950 = vperm.xlu0 %1949, %v1885
    %v1951 = vpop.permute.xlu0 %1950
    %v1953 = vmul.f32 %v1951, %v1869
    %v1954 = vmul.f32 %v1951, %v1870
    %v1955 = vadd.f32 %v1947, %v1953
    %v1956 = vadd.f32 %v1948, %v1954
    %1957 = vset.pattern.permute.xlu0 9
    %1958 = vperm.xlu0 %1957, %v1885
    %v1959 = vpop.permute.xlu0 %1958
    %v1961 = vmul.f32 %v1959, %v1871
    %v1962 = vmul.f32 %v1959, %v1872
    %v1963 = vadd.f32 %v1955, %v1961
    %v1964 = vadd.f32 %v1956, %v1962
    %1965 = vset.pattern.permute.xlu0 10
    %1966 = vperm.xlu0 %1965, %v1885
    %v1967 = vpop.permute.xlu0 %1966
    %v1969 = vmul.f32 %v1967, %v1873
    %v1970 = vmul.f32 %v1967, %v1874
    %v1971 = vadd.f32 %v1963, %v1969
    %v1972 = vadd.f32 %v1964, %v1970
    %1973 = vset.pattern.permute.xlu0 11
    %1974 = vperm.xlu0 %1973, %v1885
    %v1975 = vpop.permute.xlu0 %1974
    %v1977 = vmul.f32 %v1975, %v1875
    %v1978 = vmul.f32 %v1975, %v1876
    %v1979 = vadd.f32 %v1971, %v1977
    %v1980 = vadd.f32 %v1972, %v1978
    %1981 = vset.pattern.permute.xlu0 12
    %1982 = vperm.xlu0 %1981, %v1885
    %v1983 = vpop.permute.xlu0 %1982
    %v1985 = vmul.f32 %v1983, %v1877
    %v1986 = vmul.f32 %v1983, %v1878
    %v1987 = vadd.f32 %v1979, %v1985
    %v1988 = vadd.f32 %v1980, %v1986
    %1989 = vset.pattern.permute.xlu0 13
    %1990 = vperm.xlu0 %1989, %v1885
    %v1991 = vpop.permute.xlu0 %1990
    %v1993 = vmul.f32 %v1991, %v1879
    %v1994 = vmul.f32 %v1991, %v1880
    %v1995 = vadd.f32 %v1987, %v1993
    %v1996 = vadd.f32 %v1988, %v1994
    %1997 = vset.pattern.permute.xlu0 14
    %1998 = vperm.xlu0 %1997, %v1885
    %v1999 = vpop.permute.xlu0 %1998
    %v2001 = vmul.f32 %v1999, %v1881
    %v2002 = vmul.f32 %v1999, %v1882
    %v2003 = vadd.f32 %v1995, %v2001
    %v2004 = vadd.f32 %v1996, %v2002
    %2005 = vset.pattern.permute.xlu0 15
    %2006 = vperm.xlu0 %2005, %v1885
    %v2007 = vpop.permute.xlu0 %2006
    %v2009 = vmul.f32 %v2007, %v1883
    %v2010 = vmul.f32 %v2007, %v1884
    %v2011 = vadd.f32 %v2003, %v2009
    %v2012 = vadd.f32 %v2004, %v2010
    %2013 = vst [vmem:[#allocation5] sm:$0x3] %v2011
    %2014 = vst [vmem:[#allocation5 + $0x8] sm:$0x3] %v2012
    %v2015 = vld [vmem:[#allocation2] sm:$0xc]
    %v2016 = vld [vmem:[#allocation2 + $0x8] sm:$0xc]
    %v2017 = vld [vmem:[#allocation2 + $0x20] sm:$0xc]
    %v2018 = vld [vmem:[#allocation2 + $0x28] sm:$0xc]
    %v2019 = vld [vmem:[#allocation2 + $0x40] sm:$0xc]
    %v2020 = vld [vmem:[#allocation2 + $0x48] sm:$0xc]
    %v2021 = vld [vmem:[#allocation2 + $0x60] sm:$0xc]
    %v2022 = vld [vmem:[#allocation2 + $0x68] sm:$0xc]
    %v2023 = vld [vmem:[#allocation2 + $0x80] sm:$0xc]
    %v2024 = vld [vmem:[#allocation2 + $0x88] sm:$0xc]
    %v2025 = vld [vmem:[#allocation2 + $0xa0] sm:$0xc]
    %v2026 = vld [vmem:[#allocation2 + $0xa8] sm:$0xc]
    %v2027 = vld [vmem:[#allocation2 + $0xc0] sm:$0xc]
    %v2028 = vld [vmem:[#allocation2 + $0xc8] sm:$0xc]
    %v2029 = vld [vmem:[#allocation2 + $0xe0] sm:$0xc]
    %v2030 = vld [vmem:[#allocation2 + $0xe8] sm:$0xc]
    %v2031 = vld [vmem:[#allocation2 + $0x100] sm:$0xc]
    %v2032 = vld [vmem:[#allocation2 + $0x108] sm:$0xc]
    %v2033 = vld [vmem:[#allocation2 + $0x120] sm:$0xc]
    %v2034 = vld [vmem:[#allocation2 + $0x128] sm:$0xc]
    %v2035 = vld [vmem:[#allocation2 + $0x140] sm:$0xc]
    %v2036 = vld [vmem:[#allocation2 + $0x148] sm:$0xc]
    %v2037 = vld [vmem:[#allocation2 + $0x160] sm:$0xc]
    %v2038 = vld [vmem:[#allocation2 + $0x168] sm:$0xc]
    %v2039 = vld [vmem:[#allocation2 + $0x180] sm:$0xc]
    %v2040 = vld [vmem:[#allocation2 + $0x188] sm:$0xc]
    %v2041 = vld [vmem:[#allocation2 + $0x1a0] sm:$0xc]
    %v2042 = vld [vmem:[#allocation2 + $0x1a8] sm:$0xc]
    %v2043 = vld [vmem:[#allocation2 + $0x1c0] sm:$0xc]
    %v2044 = vld [vmem:[#allocation2 + $0x1c8] sm:$0xc]
    %v2045 = vld [vmem:[#allocation2 + $0x1e0] sm:$0xc]
    %v2046 = vld [vmem:[#allocation2 + $0x1e8] sm:$0xc]
    %v2079 = vrot.slane %v1853, 6
    %v2080 = vrot.slane %v1854, 6
    %v2081 = vrot.slane %v1855, 6
    %v2082 = vrot.slane %v1856, 6
    %v2083 = vrot.slane %v1857, 6
    %v2084 = vrot.slane %v1858, 6
    %v2085 = vrot.slane %v1859, 6
    %v2086 = vrot.slane %v1860, 6
    %v2087 = vrot.slane %v1861, 6
    %v2088 = vrot.slane %v1862, 6
    %v2089 = vrot.slane %v1863, 6
    %v2090 = vrot.slane %v1864, 6
    %v2091 = vrot.slane %v1865, 6
    %v2092 = vrot.slane %v1866, 6
    %v2093 = vrot.slane %v1867, 6
    %v2094 = vrot.slane %v1868, 6
    %v2095 = vrot.slane %v1869, 6
    %v2096 = vrot.slane %v1870, 6
    %v2097 = vrot.slane %v1871, 6
    %v2098 = vrot.slane %v1872, 6
    %v2099 = vrot.slane %v1873, 6
    %v2100 = vrot.slane %v1874, 6
    %v2101 = vrot.slane %v1875, 6
    %v2102 = vrot.slane %v1876, 6
    %v2103 = vrot.slane %v1877, 6
    %v2104 = vrot.slane %v1878, 6
    %v2105 = vrot.slane %v1879, 6
    %v2106 = vrot.slane %v1880, 6
    %v2107 = vrot.slane %v1881, 6
    %v2108 = vrot.slane %v1882, 6
    %v2109 = vrot.slane %v1883, 6
    %v2110 = vrot.slane %v1884, 6
    %v2143 = vmul.f32 %v2015, %v2079
    %v2144 = vmul.f32 %v2016, %v2080
    %v2145 = vmul.f32 %v2017, %v2081
    %v2146 = vmul.f32 %v2018, %v2082
    %v2147 = vmul.f32 %v2019, %v2083
    %v2148 = vmul.f32 %v2020, %v2084
    %v2149 = vmul.f32 %v2021, %v2085
    %v2150 = vmul.f32 %v2022, %v2086
    %v2151 = vmul.f32 %v2023, %v2087
    %v2152 = vmul.f32 %v2024, %v2088
    %v2153 = vmul.f32 %v2025, %v2089
    %v2154 = vmul.f32 %v2026, %v2090
    %v2155 = vmul.f32 %v2027, %v2091
    %v2156 = vmul.f32 %v2028, %v2092
    %v2157 = vmul.f32 %v2029, %v2093
    %v2158 = vmul.f32 %v2030, %v2094
    %v2159 = vmul.f32 %v2031, %v2095
    %v2160 = vmul.f32 %v2032, %v2096
    %v2161 = vmul.f32 %v2033, %v2097
    %v2162 = vmul.f32 %v2034, %v2098
    %v2163 = vmul.f32 %v2035, %v2099
    %v2164 = vmul.f32 %v2036, %v2100
    %v2165 = vmul.f32 %v2037, %v2101
    %v2166 = vmul.f32 %v2038, %v2102
    %v2167 = vmul.f32 %v2039, %v2103
    %v2168 = vmul.f32 %v2040, %v2104
    %v2169 = vmul.f32 %v2041, %v2105
    %v2170 = vmul.f32 %v2042, %v2106
    %v2171 = vmul.f32 %v2043, %v2107
    %v2172 = vmul.f32 %v2044, %v2108
    %v2173 = vmul.f32 %v2045, %v2109
    %v2174 = vmul.f32 %v2046, %v2110
    %v2175 = vld [vmem:[#allocation3] sm:$0xc]
    %v2176 = vld [vmem:[#allocation3 + $0x8] sm:$0xc]
    %v2177 = vld [vmem:[#allocation3 + $0x20] sm:$0xc]
    %v2178 = vld [vmem:[#allocation3 + $0x28] sm:$0xc]
    %v2179 = vld [vmem:[#allocation3 + $0x40] sm:$0xc]
    %v2180 = vld [vmem:[#allocation3 + $0x48] sm:$0xc]
    %v2181 = vld [vmem:[#allocation3 + $0x60] sm:$0xc]
    %v2182 = vld [vmem:[#allocation3 + $0x68] sm:$0xc]
    %v2183 = vld [vmem:[#allocation3 + $0x80] sm:$0xc]
    %v2184 = vld [vmem:[#allocation3 + $0x88] sm:$0xc]
    %v2185 = vld [vmem:[#allocation3 + $0xa0] sm:$0xc]
    %v2186 = vld [vmem:[#allocation3 + $0xa8] sm:$0xc]
    %v2187 = vld [vmem:[#allocation3 + $0xc0] sm:$0xc]
    %v2188 = vld [vmem:[#allocation3 + $0xc8] sm:$0xc]
    %v2189 = vld [vmem:[#allocation3 + $0xe0] sm:$0xc]
    %v2190 = vld [vmem:[#allocation3 + $0xe8] sm:$0xc]
    %v2191 = vld [vmem:[#allocation3 + $0x100] sm:$0xc]
    %v2192 = vld [vmem:[#allocation3 + $0x108] sm:$0xc]
    %v2193 = vld [vmem:[#allocation3 + $0x120] sm:$0xc]
    %v2194 = vld [vmem:[#allocation3 + $0x128] sm:$0xc]
    %v2195 = vld [vmem:[#allocation3 + $0x140] sm:$0xc]
    %v2196 = vld [vmem:[#allocation3 + $0x148] sm:$0xc]
    %v2197 = vld [vmem:[#allocation3 + $0x160] sm:$0xc]
    %v2198 = vld [vmem:[#allocation3 + $0x168] sm:$0xc]
    %v2199 = vld [vmem:[#allocation3 + $0x180] sm:$0xc]
    %v2200 = vld [vmem:[#allocation3 + $0x188] sm:$0xc]
    %v2201 = vld [vmem:[#allocation3 + $0x1a0] sm:$0xc]
    %v2202 = vld [vmem:[#allocation3 + $0x1a8] sm:$0xc]
    %v2203 = vld [vmem:[#allocation3 + $0x1c0] sm:$0xc]
    %v2204 = vld [vmem:[#allocation3 + $0x1c8] sm:$0xc]
    %v2205 = vld [vmem:[#allocation3 + $0x1e0] sm:$0xc]
    %v2206 = vld [vmem:[#allocation3 + $0x1e8] sm:$0xc]
    %v2207 = vadd.f32 %v2143, %v2175
    %v2208 = vadd.f32 %v2144, %v2176
    %v2209 = vadd.f32 %v2145, %v2177
    %v2210 = vadd.f32 %v2146, %v2178
    %v2211 = vadd.f32 %v2147, %v2179
    %v2212 = vadd.f32 %v2148, %v2180
    %v2213 = vadd.f32 %v2149, %v2181
    %v2214 = vadd.f32 %v2150, %v2182
    %v2215 = vadd.f32 %v2151, %v2183
    %v2216 = vadd.f32 %v2152, %v2184
    %v2217 = vadd.f32 %v2153, %v2185
    %v2218 = vadd.f32 %v2154, %v2186
    %v2219 = vadd.f32 %v2155, %v2187
    %v2220 = vadd.f32 %v2156, %v2188
    %v2221 = vadd.f32 %v2157, %v2189
    %v2222 = vadd.f32 %v2158, %v2190
    %v2223 = vadd.f32 %v2159, %v2191
    %v2224 = vadd.f32 %v2160, %v2192
    %v2225 = vadd.f32 %v2161, %v2193
    %v2226 = vadd.f32 %v2162, %v2194
    %v2227 = vadd.f32 %v2163, %v2195
    %v2228 = vadd.f32 %v2164, %v2196
    %v2229 = vadd.f32 %v2165, %v2197
    %v2230 = vadd.f32 %v2166, %v2198
    %v2231 = vadd.f32 %v2167, %v2199
    %v2232 = vadd.f32 %v2168, %v2200
    %v2233 = vadd.f32 %v2169, %v2201
    %v2234 = vadd.f32 %v2170, %v2202
    %v2235 = vadd.f32 %v2171, %v2203
    %v2236 = vadd.f32 %v2172, %v2204
    %v2237 = vadd.f32 %v2173, %v2205
    %v2238 = vadd.f32 %v2174, %v2206
    %v2239 = vld [vmem:[#allocation4 + $0x2] sm:$0x3]
    %2241 = vset.pattern.permute.xlu0 0
    %2242 = vperm.xlu0 %2241, %v2239
    %v2243 = vpop.permute.xlu0 %2242
    %v2247 = vrot.slane %v2207, 2
    %v2248 = vrot.slane %v2208, 2
    %v2251 = vmul.f32 %v2243, %v2247
    %v2252 = vmul.f32 %v2243, %v2248
    %2253 = vset.pattern.permute.xlu0 1
    %2254 = vperm.xlu0 %2253, %v2239
    %v2255 = vpop.permute.xlu0 %2254
    %v2259 = vrot.slane %v2209, 2
    %v2260 = vrot.slane %v2210, 2
    %v2263 = vmul.f32 %v2255, %v2259
    %v2264 = vmul.f32 %v2255, %v2260
    %v2265 = vadd.f32 %v2251, %v2263
    %v2266 = vadd.f32 %v2252, %v2264
    %2267 = vset.pattern.permute.xlu0 2
    %2268 = vperm.xlu0 %2267, %v2239
    %v2269 = vpop.permute.xlu0 %2268
    %v2273 = vrot.slane %v2211, 2
    %v2274 = vrot.slane %v2212, 2
    %v2277 = vmul.f32 %v2269, %v2273
    %v2278 = vmul.f32 %v2269, %v2274
    %v2279 = vadd.f32 %v2265, %v2277
    %v2280 = vadd.f32 %v2266, %v2278
    %2281 = vset.pattern.permute.xlu0 3
    %2282 = vperm.xlu0 %2281, %v2239
    %v2283 = vpop.permute.xlu0 %2282
    %v2287 = vrot.slane %v2213, 2
    %v2288 = vrot.slane %v2214, 2
    %v2291 = vmul.f32 %v2283, %v2287
    %v2292 = vmul.f32 %v2283, %v2288
    %v2293 = vadd.f32 %v2279, %v2291
    %v2294 = vadd.f32 %v2280, %v2292
    %2295 = vset.pattern.permute.xlu0 4
    %2296 = vperm.xlu0 %2295, %v2239
    %v2297 = vpop.permute.xlu0 %2296
    %v2301 = vrot.slane %v2215, 2
    %v2302 = vrot.slane %v2216, 2
    %v2305 = vmul.f32 %v2297, %v2301
    %v2306 = vmul.f32 %v2297, %v2302
    %v2307 = vadd.f32 %v2293, %v2305
    %v2308 = vadd.f32 %v2294, %v2306
    %2309 = vset.pattern.permute.xlu0 5
    %2310 = vperm.xlu0 %2309, %v2239
    %v2311 = vpop.permute.xlu0 %2310
    %v2315 = vrot.slane %v2217, 2
    %v2316 = vrot.slane %v2218, 2
    %v2319 = vmul.f32 %v2311, %v2315
    %v2320 = vmul.f32 %v2311, %v2316
    %v2321 = vadd.f32 %v2307, %v2319
    %v2322 = vadd.f32 %v2308, %v2320
    %2323 = vset.pattern.permute.xlu0 6
    %2324 = vperm.xlu0 %2323, %v2239
    %v2325 = vpop.permute.xlu0 %2324
    %v2329 = vrot.slane %v2219, 2
    %v2330 = vrot.slane %v2220, 2
    %v2333 = vmul.f32 %v2325, %v2329
    %v2334 = vmul.f32 %v2325, %v2330
    %v2335 = vadd.f32 %v2321, %v2333
    %v2336 = vadd.f32 %v2322, %v2334
    %2337 = vset.pattern.permute.xlu0 7
    %2338 = vperm.xlu0 %2337, %v2239
    %v2339 = vpop.permute.xlu0 %2338
    %v2343 = vrot.slane %v2221, 2
    %v2344 = vrot.slane %v2222, 2
    %v2347 = vmul.f32 %v2339, %v2343
    %v2348 = vmul.f32 %v2339, %v2344
    %v2349 = vadd.f32 %v2335, %v2347
    %v2350 = vadd.f32 %v2336, %v2348
    %2351 = vset.pattern.permute.xlu0 8
    %2352 = vperm.xlu0 %2351, %v2239
    %v2353 = vpop.permute.xlu0 %2352
    %v2357 = vrot.slane %v2223, 2
    %v2358 = vrot.slane %v2224, 2
    %v2361 = vmul.f32 %v2353, %v2357
    %v2362 = vmul.f32 %v2353, %v2358
    %v2363 = vadd.f32 %v2349, %v2361
    %v2364 = vadd.f32 %v2350, %v2362
    %2365 = vset.pattern.permute.xlu0 9
    %2366 = vperm.xlu0 %2365, %v2239
    %v2367 = vpop.permute.xlu0 %2366
    %v2371 = vrot.slane %v2225, 2
    %v2372 = vrot.slane %v2226, 2
    %v2375 = vmul.f32 %v2367, %v2371
    %v2376 = vmul.f32 %v2367, %v2372
    %v2377 = vadd.f32 %v2363, %v2375
    %v2378 = vadd.f32 %v2364, %v2376
    %2379 = vset.pattern.permute.xlu0 10
    %2380 = vperm.xlu0 %2379, %v2239
    %v2381 = vpop.permute.xlu0 %2380
    %v2385 = vrot.slane %v2227, 2
    %v2386 = vrot.slane %v2228, 2
    %v2389 = vmul.f32 %v2381, %v2385
    %v2390 = vmul.f32 %v2381, %v2386
    %v2391 = vadd.f32 %v2377, %v2389
    %v2392 = vadd.f32 %v2378, %v2390
    %2393 = vset.pattern.permute.xlu0 11
    %2394 = vperm.xlu0 %2393, %v2239
    %v2395 = vpop.permute.xlu0 %2394
    %v2399 = vrot.slane %v2229, 2
    %v2400 = vrot.slane %v2230, 2
    %v2403 = vmul.f32 %v2395, %v2399
    %v2404 = vmul.f32 %v2395, %v2400
    %v2405 = vadd.f32 %v2391, %v2403
    %v2406 = vadd.f32 %v2392, %v2404
    %2407 = vset.pattern.permute.xlu0 12
    %2408 = vperm.xlu0 %2407, %v2239
    %v2409 = vpop.permute.xlu0 %2408
    %v2413 = vrot.slane %v2231, 2
    %v2414 = vrot.slane %v2232, 2
    %v2417 = vmul.f32 %v2409, %v2413
    %v2418 = vmul.f32 %v2409, %v2414
    %v2419 = vadd.f32 %v2405, %v2417
    %v2420 = vadd.f32 %v2406, %v2418
    %2421 = vset.pattern.permute.xlu0 13
    %2422 = vperm.xlu0 %2421, %v2239
    %v2423 = vpop.permute.xlu0 %2422
    %v2427 = vrot.slane %v2233, 2
    %v2428 = vrot.slane %v2234, 2
    %v2431 = vmul.f32 %v2423, %v2427
    %v2432 = vmul.f32 %v2423, %v2428
    %v2433 = vadd.f32 %v2419, %v2431
    %v2434 = vadd.f32 %v2420, %v2432
    %2435 = vset.pattern.permute.xlu0 14
    %2436 = vperm.xlu0 %2435, %v2239
    %v2437 = vpop.permute.xlu0 %2436
    %v2441 = vrot.slane %v2235, 2
    %v2442 = vrot.slane %v2236, 2
    %v2445 = vmul.f32 %v2437, %v2441
    %v2446 = vmul.f32 %v2437, %v2442
    %v2447 = vadd.f32 %v2433, %v2445
    %v2448 = vadd.f32 %v2434, %v2446
    %2449 = vset.pattern.permute.xlu0 15
    %2450 = vperm.xlu0 %2449, %v2239
    %v2451 = vpop.permute.xlu0 %2450
    %v2455 = vrot.slane %v2237, 2
    %v2456 = vrot.slane %v2238, 2
    %v2459 = vmul.f32 %v2451, %v2455
    %v2460 = vmul.f32 %v2451, %v2456
    %v2461 = vadd.f32 %v2447, %v2459
    %v2462 = vadd.f32 %v2448, %v2460
    %v2465 = vrot.slane %v2461, 6
    %v2466 = vrot.slane %v2462, 6
    %2469 = vst [vmem:[#allocation5] sm:$0xc] %v2465
    %2470 = vst [vmem:[#allocation5 + $0x8] sm:$0xc] %v2466
    %v2471 = vld [vmem:[#allocation2] sm:$0x30]
    %v2472 = vld [vmem:[#allocation2 + $0x8] sm:$0x30]
    %v2473 = vld [vmem:[#allocation2 + $0x20] sm:$0x30]
    %v2474 = vld [vmem:[#allocation2 + $0x28] sm:$0x30]
    %v2475 = vld [vmem:[#allocation2 + $0x40] sm:$0x30]
    %v2476 = vld [vmem:[#allocation2 + $0x48] sm:$0x30]
    %v2477 = vld [vmem:[#allocation2 + $0x60] sm:$0x30]
    %v2478 = vld [vmem:[#allocation2 + $0x68] sm:$0x30]
    %v2479 = vld [vmem:[#allocation2 + $0x80] sm:$0x30]
    %v2480 = vld [vmem:[#allocation2 + $0x88] sm:$0x30]
    %v2481 = vld [vmem:[#allocation2 + $0xa0] sm:$0x30]
    %v2482 = vld [vmem:[#allocation2 + $0xa8] sm:$0x30]
    %v2483 = vld [vmem:[#allocation2 + $0xc0] sm:$0x30]
    %v2484 = vld [vmem:[#allocation2 + $0xc8] sm:$0x30]
    %v2485 = vld [vmem:[#allocation2 + $0xe0] sm:$0x30]
    %v2486 = vld [vmem:[#allocation2 + $0xe8] sm:$0x30]
    %v2487 = vld [vmem:[#allocation2 + $0x100] sm:$0x30]
    %v2488 = vld [vmem:[#allocation2 + $0x108] sm:$0x30]
    %v2489 = vld [vmem:[#allocation2 + $0x120] sm:$0x30]
    %v2490 = vld [vmem:[#allocation2 + $0x128] sm:$0x30]
    %v2491 = vld [vmem:[#allocation2 + $0x140] sm:$0x30]
    %v2492 = vld [vmem:[#allocation2 + $0x148] sm:$0x30]
    %v2493 = vld [vmem:[#allocation2 + $0x160] sm:$0x30]
    %v2494 = vld [vmem:[#allocation2 + $0x168] sm:$0x30]
    %v2495 = vld [vmem:[#allocation2 + $0x180] sm:$0x30]
    %v2496 = vld [vmem:[#allocation2 + $0x188] sm:$0x30]
    %v2497 = vld [vmem:[#allocation2 + $0x1a0] sm:$0x30]
    %v2498 = vld [vmem:[#allocation2 + $0x1a8] sm:$0x30]
    %v2499 = vld [vmem:[#allocation2 + $0x1c0] sm:$0x30]
    %v2500 = vld [vmem:[#allocation2 + $0x1c8] sm:$0x30]
    %v2501 = vld [vmem:[#allocation2 + $0x1e0] sm:$0x30]
    %v2502 = vld [vmem:[#allocation2 + $0x1e8] sm:$0x30]
    %v2503 = vrot.slane %v2207, 6
    %v2504 = vrot.slane %v2208, 6
    %v2505 = vrot.slane %v2209, 6
    %v2506 = vrot.slane %v2210, 6
    %v2507 = vrot.slane %v2211, 6
    %v2508 = vrot.slane %v2212, 6
    %v2509 = vrot.slane %v2213, 6
    %v2510 = vrot.slane %v2214, 6
    %v2511 = vrot.slane %v2215, 6
    %v2512 = vrot.slane %v2216, 6
    %v2513 = vrot.slane %v2217, 6
    %v2514 = vrot.slane %v2218, 6
    %v2515 = vrot.slane %v2219, 6
    %v2516 = vrot.slane %v2220, 6
    %v2517 = vrot.slane %v2221, 6
    %v2518 = vrot.slane %v2222, 6
    %v2519 = vrot.slane %v2223, 6
    %v2520 = vrot.slane %v2224, 6
    %v2521 = vrot.slane %v2225, 6
    %v2522 = vrot.slane %v2226, 6
    %v2523 = vrot.slane %v2227, 6
    %v2524 = vrot.slane %v2228, 6
    %v2525 = vrot.slane %v2229, 6
    %v2526 = vrot.slane %v2230, 6
    %v2527 = vrot.slane %v2231, 6
    %v2528 = vrot.slane %v2232, 6
    %v2529 = vrot.slane %v2233, 6
    %v2530 = vrot.slane %v2234, 6
    %v2531 = vrot.slane %v2235, 6
    %v2532 = vrot.slane %v2236, 6
    %v2533 = vrot.slane %v2237, 6
    %v2534 = vrot.slane %v2238, 6
    %v2567 = vmul.f32 %v2471, %v2503
    %v2568 = vmul.f32 %v2472, %v2504
    %v2569 = vmul.f32 %v2473, %v2505
    %v2570 = vmul.f32 %v2474, %v2506
    %v2571 = vmul.f32 %v2475, %v2507
    %v2572 = vmul.f32 %v2476, %v2508
    %v2573 = vmul.f32 %v2477, %v2509
    %v2574 = vmul.f32 %v2478, %v2510
    %v2575 = vmul.f32 %v2479, %v2511
    %v2576 = vmul.f32 %v2480, %v2512
    %v2577 = vmul.f32 %v2481, %v2513
    %v2578 = vmul.f32 %v2482, %v2514
    %v2579 = vmul.f32 %v2483, %v2515
    %v2580 = vmul.f32 %v2484, %v2516
    %v2581 = vmul.f32 %v2485, %v2517
    %v2582 = vmul.f32 %v2486, %v2518
    %v2583 = vmul.f32 %v2487, %v2519
    %v2584 = vmul.f32 %v2488, %v2520
    %v2585 = vmul.f32 %v2489, %v2521
    %v2586 = vmul.f32 %v2490, %v2522
    %v2587 = vmul.f32 %v2491, %v2523
    %v2588 = vmul.f32 %v2492, %v2524
    %v2589 = vmul.f32 %v2493, %v2525
    %v2590 = vmul.f32 %v2494, %v2526
    %v2591 = vmul.f32 %v2495, %v2527
    %v2592 = vmul.f32 %v2496, %v2528
    %v2593 = vmul.f32 %v2497, %v2529
    %v2594 = vmul.f32 %v2498, %v2530
    %v2595 = vmul.f32 %v2499, %v2531
    %v2596 = vmul.f32 %v2500, %v2532
    %v2597 = vmul.f32 %v2501, %v2533
    %v2598 = vmul.f32 %v2502, %v2534
    %v2599 = vld [vmem:[#allocation3] sm:$0x30]
    %v2600 = vld [vmem:[#allocation3 + $0x8] sm:$0x30]
    %v2601 = vld [vmem:[#allocation3 + $0x20] sm:$0x30]
    %v2602 = vld [vmem:[#allocation3 + $0x28] sm:$0x30]
    %v2603 = vld [vmem:[#allocation3 + $0x40] sm:$0x30]
    %v2604 = vld [vmem:[#allocation3 + $0x48] sm:$0x30]
    %v2605 = vld [vmem:[#allocation3 + $0x60] sm:$0x30]
    %v2606 = vld [vmem:[#allocation3 + $0x68] sm:$0x30]
    %v2607 = vld [vmem:[#allocation3 + $0x80] sm:$0x30]
    %v2608 = vld [vmem:[#allocation3 + $0x88] sm:$0x30]
    %v2609 = vld [vmem:[#allocation3 + $0xa0] sm:$0x30]
    %v2610 = vld [vmem:[#allocation3 + $0xa8] sm:$0x30]
    %v2611 = vld [vmem:[#allocation3 + $0xc0] sm:$0x30]
    %v2612 = vld [vmem:[#allocation3 + $0xc8] sm:$0x30]
    %v2613 = vld [vmem:[#allocation3 + $0xe0] sm:$0x30]
    %v2614 = vld [vmem:[#allocation3 + $0xe8] sm:$0x30]
    %v2615 = vld [vmem:[#allocation3 + $0x100] sm:$0x30]
    %v2616 = vld [vmem:[#allocation3 + $0x108] sm:$0x30]
    %v2617 = vld [vmem:[#allocation3 + $0x120] sm:$0x30]
    %v2618 = vld [vmem:[#allocation3 + $0x128] sm:$0x30]
    %v2619 = vld [vmem:[#allocation3 + $0x140] sm:$0x30]
    %v2620 = vld [vmem:[#allocation3 + $0x148] sm:$0x30]
    %v2621 = vld [vmem:[#allocation3 + $0x160] sm:$0x30]
    %v2622 = vld [vmem:[#allocation3 + $0x168] sm:$0x30]
    %v2623 = vld [vmem:[#allocation3 + $0x180] sm:$0x30]
    %v2624 = vld [vmem:[#allocation3 + $0x188] sm:$0x30]
    %v2625 = vld [vmem:[#allocation3 + $0x1a0] sm:$0x30]
    %v2626 = vld [vmem:[#allocation3 + $0x1a8] sm:$0x30]
    %v2627 = vld [vmem:[#allocation3 + $0x1c0] sm:$0x30]
    %v2628 = vld [vmem:[#allocation3 + $0x1c8] sm:$0x30]
    %v2629 = vld [vmem:[#allocation3 + $0x1e0] sm:$0x30]
    %v2630 = vld [vmem:[#allocation3 + $0x1e8] sm:$0x30]
    %v2631 = vadd.f32 %v2567, %v2599
    %v2632 = vadd.f32 %v2568, %v2600
    %v2633 = vadd.f32 %v2569, %v2601
    %v2634 = vadd.f32 %v2570, %v2602
    %v2635 = vadd.f32 %v2571, %v2603
    %v2636 = vadd.f32 %v2572, %v2604
    %v2637 = vadd.f32 %v2573, %v2605
    %v2638 = vadd.f32 %v2574, %v2606
    %v2639 = vadd.f32 %v2575, %v2607
    %v2640 = vadd.f32 %v2576, %v2608
    %v2641 = vadd.f32 %v2577, %v2609
    %v2642 = vadd.f32 %v2578, %v2610
    %v2643 = vadd.f32 %v2579, %v2611
    %v2644 = vadd.f32 %v2580, %v2612
    %v2645 = vadd.f32 %v2581, %v2613
    %v2646 = vadd.f32 %v2582, %v2614
    %v2647 = vadd.f32 %v2583, %v2615
    %v2648 = vadd.f32 %v2584, %v2616
    %v2649 = vadd.f32 %v2585, %v2617
    %v2650 = vadd.f32 %v2586, %v2618
    %v2651 = vadd.f32 %v2587, %v2619
    %v2652 = vadd.f32 %v2588, %v2620
    %v2653 = vadd.f32 %v2589, %v2621
    %v2654 = vadd.f32 %v2590, %v2622
    %v2655 = vadd.f32 %v2591, %v2623
    %v2656 = vadd.f32 %v2592, %v2624
    %v2657 = vadd.f32 %v2593, %v2625
    %v2658 = vadd.f32 %v2594, %v2626
    %v2659 = vadd.f32 %v2595, %v2627
    %v2660 = vadd.f32 %v2596, %v2628
    %v2661 = vadd.f32 %v2597, %v2629
    %v2662 = vadd.f32 %v2598, %v2630
    %v2663 = vld [vmem:[#allocation4 + $0x4] sm:$0x3]
    %2665 = vset.pattern.permute.xlu0 0
    %2666 = vperm.xlu0 %2665, %v2663
    %v2667 = vpop.permute.xlu0 %2666
    %v2671 = vrot.slane %v2631, 4
    %v2672 = vrot.slane %v2632, 4
    %v2675 = vmul.f32 %v2667, %v2671
    %v2676 = vmul.f32 %v2667, %v2672
    %2677 = vset.pattern.permute.xlu0 1
    %2678 = vperm.xlu0 %2677, %v2663
    %v2679 = vpop.permute.xlu0 %2678
    %v2683 = vrot.slane %v2633, 4
    %v2684 = vrot.slane %v2634, 4
    %v2687 = vmul.f32 %v2679, %v2683
    %v2688 = vmul.f32 %v2679, %v2684
    %v2689 = vadd.f32 %v2675, %v2687
    %v2690 = vadd.f32 %v2676, %v2688
    %2691 = vset.pattern.permute.xlu0 2
    %2692 = vperm.xlu0 %2691, %v2663
    %v2693 = vpop.permute.xlu0 %2692
    %v2697 = vrot.slane %v2635, 4
    %v2698 = vrot.slane %v2636, 4
    %v2701 = vmul.f32 %v2693, %v2697
    %v2702 = vmul.f32 %v2693, %v2698
    %v2703 = vadd.f32 %v2689, %v2701
    %v2704 = vadd.f32 %v2690, %v2702
    %2705 = vset.pattern.permute.xlu0 3
    %2706 = vperm.xlu0 %2705, %v2663
    %v2707 = vpop.permute.xlu0 %2706
    %v2711 = vrot.slane %v2637, 4
    %v2712 = vrot.slane %v2638, 4
    %v2715 = vmul.f32 %v2707, %v2711
    %v2716 = vmul.f32 %v2707, %v2712
    %v2717 = vadd.f32 %v2703, %v2715
    %v2718 = vadd.f32 %v2704, %v2716
    %2719 = vset.pattern.permute.xlu0 4
    %2720 = vperm.xlu0 %2719, %v2663
    %v2721 = vpop.permute.xlu0 %2720
    %v2725 = vrot.slane %v2639, 4
    %v2726 = vrot.slane %v2640, 4
    %v2729 = vmul.f32 %v2721, %v2725
    %v2730 = vmul.f32 %v2721, %v2726
    %v2731 = vadd.f32 %v2717, %v2729
    %v2732 = vadd.f32 %v2718, %v2730
    %2733 = vset.pattern.permute.xlu0 5
    %2734 = vperm.xlu0 %2733, %v2663
    %v2735 = vpop.permute.xlu0 %2734
    %v2739 = vrot.slane %v2641, 4
    %v2740 = vrot.slane %v2642, 4
    %v2743 = vmul.f32 %v2735, %v2739
    %v2744 = vmul.f32 %v2735, %v2740
    %v2745 = vadd.f32 %v2731, %v2743
    %v2746 = vadd.f32 %v2732, %v2744
    %2747 = vset.pattern.permute.xlu0 6
    %2748 = vperm.xlu0 %2747, %v2663
    %v2749 = vpop.permute.xlu0 %2748
    %v2753 = vrot.slane %v2643, 4
    %v2754 = vrot.slane %v2644, 4
    %v2757 = vmul.f32 %v2749, %v2753
    %v2758 = vmul.f32 %v2749, %v2754
    %v2759 = vadd.f32 %v2745, %v2757
    %v2760 = vadd.f32 %v2746, %v2758
    %2761 = vset.pattern.permute.xlu0 7
    %2762 = vperm.xlu0 %2761, %v2663
    %v2763 = vpop.permute.xlu0 %2762
    %v2767 = vrot.slane %v2645, 4
    %v2768 = vrot.slane %v2646, 4
    %v2771 = vmul.f32 %v2763, %v2767
    %v2772 = vmul.f32 %v2763, %v2768
    %v2773 = vadd.f32 %v2759, %v2771
    %v2774 = vadd.f32 %v2760, %v2772
    %2775 = vset.pattern.permute.xlu0 8
    %2776 = vperm.xlu0 %2775, %v2663
    %v2777 = vpop.permute.xlu0 %2776
    %v2781 = vrot.slane %v2647, 4
    %v2782 = vrot.slane %v2648, 4
    %v2785 = vmul.f32 %v2777, %v2781
    %v2786 = vmul.f32 %v2777, %v2782
    %v2787 = vadd.f32 %v2773, %v2785
    %v2788 = vadd.f32 %v2774, %v2786
    %2789 = vset.pattern.permute.xlu0 9
    %2790 = vperm.xlu0 %2789, %v2663
    %v2791 = vpop.permute.xlu0 %2790
    %v2795 = vrot.slane %v2649, 4
    %v2796 = vrot.slane %v2650, 4
    %v2799 = vmul.f32 %v2791, %v2795
    %v2800 = vmul.f32 %v2791, %v2796
    %v2801 = vadd.f32 %v2787, %v2799
    %v2802 = vadd.f32 %v2788, %v2800
    %2803 = vset.pattern.permute.xlu0 10
    %2804 = vperm.xlu0 %2803, %v2663
    %v2805 = vpop.permute.xlu0 %2804
    %v2809 = vrot.slane %v2651, 4
    %v2810 = vrot.slane %v2652, 4
    %v2813 = vmul.f32 %v2805, %v2809
    %v2814 = vmul.f32 %v2805, %v2810
    %v2815 = vadd.f32 %v2801, %v2813
    %v2816 = vadd.f32 %v2802, %v2814
    %2817 = vset.pattern.permute.xlu0 11
    %2818 = vperm.xlu0 %2817, %v2663
    %v2819 = vpop.permute.xlu0 %2818
    %v2823 = vrot.slane %v2653, 4
    %v2824 = vrot.slane %v2654, 4
    %v2827 = vmul.f32 %v2819, %v2823
    %v2828 = vmul.f32 %v2819, %v2824
    %v2829 = vadd.f32 %v2815, %v2827
    %v2830 = vadd.f32 %v2816, %v2828
    %2831 = vset.pattern.permute.xlu0 12
    %2832 = vperm.xlu0 %2831, %v2663
    %v2833 = vpop.permute.xlu0 %2832
    %v2837 = vrot.slane %v2655, 4
    %v2838 = vrot.slane %v2656, 4
    %v2841 = vmul.f32 %v2833, %v2837
    %v2842 = vmul.f32 %v2833, %v2838
    %v2843 = vadd.f32 %v2829, %v2841
    %v2844 = vadd.f32 %v2830, %v2842
    %2845 = vset.pattern.permute.xlu0 13
    %2846 = vperm.xlu0 %2845, %v2663
    %v2847 = vpop.permute.xlu0 %2846
    %v2851 = vrot.slane %v2657, 4
    %v2852 = vrot.slane %v2658, 4
    %v2855 = vmul.f32 %v2847, %v2851
    %v2856 = vmul.f32 %v2847, %v2852
    %v2857 = vadd.f32 %v2843, %v2855
    %v2858 = vadd.f32 %v2844, %v2856
    %2859 = vset.pattern.permute.xlu0 14
    %2860 = vperm.xlu0 %2859, %v2663
    %v2861 = vpop.permute.xlu0 %2860
    %v2865 = vrot.slane %v2659, 4
    %v2866 = vrot.slane %v2660, 4
    %v2869 = vmul.f32 %v2861, %v2865
    %v2870 = vmul.f32 %v2861, %v2866
    %v2871 = vadd.f32 %v2857, %v2869
    %v2872 = vadd.f32 %v2858, %v2870
    %2873 = vset.pattern.permute.xlu0 15
    %2874 = vperm.xlu0 %2873, %v2663
    %v2875 = vpop.permute.xlu0 %2874
    %v2879 = vrot.slane %v2661, 4
    %v2880 = vrot.slane %v2662, 4
    %v2883 = vmul.f32 %v2875, %v2879
    %v2884 = vmul.f32 %v2875, %v2880
    %v2885 = vadd.f32 %v2871, %v2883
    %v2886 = vadd.f32 %v2872, %v2884
    %v2889 = vrot.slane %v2885, 4
    %v2890 = vrot.slane %v2886, 4
    %2893 = vst [vmem:[#allocation5] sm:$0x30] %v2889
    %2894 = vst [vmem:[#allocation5 + $0x8] sm:$0x30] %v2890
    %v2895 = vld [vmem:[#allocation2] sm:$0xc0]
    %v2896 = vld [vmem:[#allocation2 + $0x8] sm:$0xc0]
    %v2897 = vld [vmem:[#allocation2 + $0x20] sm:$0xc0]
    %v2898 = vld [vmem:[#allocation2 + $0x28] sm:$0xc0]
    %v2899 = vld [vmem:[#allocation2 + $0x40] sm:$0xc0]
    %v2900 = vld [vmem:[#allocation2 + $0x48] sm:$0xc0]
    %v2901 = vld [vmem:[#allocation2 + $0x60] sm:$0xc0]
    %v2902 = vld [vmem:[#allocation2 + $0x68] sm:$0xc0]
    %v2903 = vld [vmem:[#allocation2 + $0x80] sm:$0xc0]
    %v2904 = vld [vmem:[#allocation2 + $0x88] sm:$0xc0]
    %v2905 = vld [vmem:[#allocation2 + $0xa0] sm:$0xc0]
    %v2906 = vld [vmem:[#allocation2 + $0xa8] sm:$0xc0]
    %v2907 = vld [vmem:[#allocation2 + $0xc0] sm:$0xc0]
    %v2908 = vld [vmem:[#allocation2 + $0xc8] sm:$0xc0]
    %v2909 = vld [vmem:[#allocation2 + $0xe0] sm:$0xc0]
    %v2910 = vld [vmem:[#allocation2 + $0xe8] sm:$0xc0]
    %v2911 = vld [vmem:[#allocation2 + $0x100] sm:$0xc0]
    %v2912 = vld [vmem:[#allocation2 + $0x108] sm:$0xc0]
    %v2913 = vld [vmem:[#allocation2 + $0x120] sm:$0xc0]
    %v2914 = vld [vmem:[#allocation2 + $0x128] sm:$0xc0]
    %v2915 = vld [vmem:[#allocation2 + $0x140] sm:$0xc0]
    %v2916 = vld [vmem:[#allocation2 + $0x148] sm:$0xc0]
    %v2917 = vld [vmem:[#allocation2 + $0x160] sm:$0xc0]
    %v2918 = vld [vmem:[#allocation2 + $0x168] sm:$0xc0]
    %v2919 = vld [vmem:[#allocation2 + $0x180] sm:$0xc0]
    %v2920 = vld [vmem:[#allocation2 + $0x188] sm:$0xc0]
    %v2921 = vld [vmem:[#allocation2 + $0x1a0] sm:$0xc0]
    %v2922 = vld [vmem:[#allocation2 + $0x1a8] sm:$0xc0]
    %v2923 = vld [vmem:[#allocation2 + $0x1c0] sm:$0xc0]
    %v2924 = vld [vmem:[#allocation2 + $0x1c8] sm:$0xc0]
    %v2925 = vld [vmem:[#allocation2 + $0x1e0] sm:$0xc0]
    %v2926 = vld [vmem:[#allocation2 + $0x1e8] sm:$0xc0]
    %v2927 = vrot.slane %v2631, 6
    %v2928 = vrot.slane %v2632, 6
    %v2929 = vrot.slane %v2633, 6
    %v2930 = vrot.slane %v2634, 6
    %v2931 = vrot.slane %v2635, 6
    %v2932 = vrot.slane %v2636, 6
    %v2933 = vrot.slane %v2637, 6
    %v2934 = vrot.slane %v2638, 6
    %v2935 = vrot.slane %v2639, 6
    %v2936 = vrot.slane %v2640, 6
    %v2937 = vrot.slane %v2641, 6
    %v2938 = vrot.slane %v2642, 6
    %v2939 = vrot.slane %v2643, 6
    %v2940 = vrot.slane %v2644, 6
    %v2941 = vrot.slane %v2645, 6
    %v2942 = vrot.slane %v2646, 6
    %v2943 = vrot.slane %v2647, 6
    %v2944 = vrot.slane %v2648, 6
    %v2945 = vrot.slane %v2649, 6
    %v2946 = vrot.slane %v2650, 6
    %v2947 = vrot.slane %v2651, 6
    %v2948 = vrot.slane %v2652, 6
    %v2949 = vrot.slane %v2653, 6
    %v2950 = vrot.slane %v2654, 6
    %v2951 = vrot.slane %v2655, 6
    %v2952 = vrot.slane %v2656, 6
    %v2953 = vrot.slane %v2657, 6
    %v2954 = vrot.slane %v2658, 6
    %v2955 = vrot.slane %v2659, 6
    %v2956 = vrot.slane %v2660, 6
    %v2957 = vrot.slane %v2661, 6
    %v2958 = vrot.slane %v2662, 6
    %v2991 = vmul.f32 %v2895, %v2927
    %v2992 = vmul.f32 %v2896, %v2928
    %v2993 = vmul.f32 %v2897, %v2929
    %v2994 = vmul.f32 %v2898, %v2930
    %v2995 = vmul.f32 %v2899, %v2931
    %v2996 = vmul.f32 %v2900, %v2932
    %v2997 = vmul.f32 %v2901, %v2933
    %v2998 = vmul.f32 %v2902, %v2934
    %v2999 = vmul.f32 %v2903, %v2935
    %v3000 = vmul.f32 %v2904, %v2936
    %v3001 = vmul.f32 %v2905, %v2937
    %v3002 = vmul.f32 %v2906, %v2938
    %v3003 = vmul.f32 %v2907, %v2939
    %v3004 = vmul.f32 %v2908, %v2940
    %v3005 = vmul.f32 %v2909, %v2941
    %v3006 = vmul.f32 %v2910, %v2942
    %v3007 = vmul.f32 %v2911, %v2943
    %v3008 = vmul.f32 %v2912, %v2944
    %v3009 = vmul.f32 %v2913, %v2945
    %v3010 = vmul.f32 %v2914, %v2946
    %v3011 = vmul.f32 %v2915, %v2947
    %v3012 = vmul.f32 %v2916, %v2948
    %v3013 = vmul.f32 %v2917, %v2949
    %v3014 = vmul.f32 %v2918, %v2950
    %v3015 = vmul.f32 %v2919, %v2951
    %v3016 = vmul.f32 %v2920, %v2952
    %v3017 = vmul.f32 %v2921, %v2953
    %v3018 = vmul.f32 %v2922, %v2954
    %v3019 = vmul.f32 %v2923, %v2955
    %v3020 = vmul.f32 %v2924, %v2956
    %v3021 = vmul.f32 %v2925, %v2957
    %v3022 = vmul.f32 %v2926, %v2958
    %v3023 = vld [vmem:[#allocation3] sm:$0xc0]
    %v3024 = vld [vmem:[#allocation3 + $0x8] sm:$0xc0]
    %v3025 = vld [vmem:[#allocation3 + $0x20] sm:$0xc0]
    %v3026 = vld [vmem:[#allocation3 + $0x28] sm:$0xc0]
    %v3027 = vld [vmem:[#allocation3 + $0x40] sm:$0xc0]
    %v3028 = vld [vmem:[#allocation3 + $0x48] sm:$0xc0]
    %v3029 = vld [vmem:[#allocation3 + $0x60] sm:$0xc0]
    %v3030 = vld [vmem:[#allocation3 + $0x68] sm:$0xc0]
    %v3031 = vld [vmem:[#allocation3 + $0x80] sm:$0xc0]
    %v3032 = vld [vmem:[#allocation3 + $0x88] sm:$0xc0]
    %v3033 = vld [vmem:[#allocation3 + $0xa0] sm:$0xc0]
    %v3034 = vld [vmem:[#allocation3 + $0xa8] sm:$0xc0]
    %v3035 = vld [vmem:[#allocation3 + $0xc0] sm:$0xc0]
    %v3036 = vld [vmem:[#allocation3 + $0xc8] sm:$0xc0]
    %v3037 = vld [vmem:[#allocation3 + $0xe0] sm:$0xc0]
    %v3038 = vld [vmem:[#allocation3 + $0xe8] sm:$0xc0]
    %v3039 = vld [vmem:[#allocation3 + $0x100] sm:$0xc0]
    %v3040 = vld [vmem:[#allocation3 + $0x108] sm:$0xc0]
    %v3041 = vld [vmem:[#allocation3 + $0x120] sm:$0xc0]
    %v3042 = vld [vmem:[#allocation3 + $0x128] sm:$0xc0]
    %v3043 = vld [vmem:[#allocation3 + $0x140] sm:$0xc0]
    %v3044 = vld [vmem:[#allocation3 + $0x148] sm:$0xc0]
    %v3045 = vld [vmem:[#allocation3 + $0x160] sm:$0xc0]
    %v3046 = vld [vmem:[#allocation3 + $0x168] sm:$0xc0]
    %v3047 = vld [vmem:[#allocation3 + $0x180] sm:$0xc0]
    %v3048 = vld [vmem:[#allocation3 + $0x188] sm:$0xc0]
    %v3049 = vld [vmem:[#allocation3 + $0x1a0] sm:$0xc0]
    %v3050 = vld [vmem:[#allocation3 + $0x1a8] sm:$0xc0]
    %v3051 = vld [vmem:[#allocation3 + $0x1c0] sm:$0xc0]
    %v3052 = vld [vmem:[#allocation3 + $0x1c8] sm:$0xc0]
    %v3053 = vld [vmem:[#allocation3 + $0x1e0] sm:$0xc0]
    %v3054 = vld [vmem:[#allocation3 + $0x1e8] sm:$0xc0]
    %v3055 = vadd.f32 %v2991, %v3023
    %v3056 = vadd.f32 %v2992, %v3024
    %v3057 = vadd.f32 %v2993, %v3025
    %v3058 = vadd.f32 %v2994, %v3026
    %v3059 = vadd.f32 %v2995, %v3027
    %v3060 = vadd.f32 %v2996, %v3028
    %v3061 = vadd.f32 %v2997, %v3029
    %v3062 = vadd.f32 %v2998, %v3030
    %v3063 = vadd.f32 %v2999, %v3031
    %v3064 = vadd.f32 %v3000, %v3032
    %v3065 = vadd.f32 %v3001, %v3033
    %v3066 = vadd.f32 %v3002, %v3034
    %v3067 = vadd.f32 %v3003, %v3035
    %v3068 = vadd.f32 %v3004, %v3036
    %v3069 = vadd.f32 %v3005, %v3037
    %v3070 = vadd.f32 %v3006, %v3038
    %v3071 = vadd.f32 %v3007, %v3039
    %v3072 = vadd.f32 %v3008, %v3040
    %v3073 = vadd.f32 %v3009, %v3041
    %v3074 = vadd.f32 %v3010, %v3042
    %v3075 = vadd.f32 %v3011, %v3043
    %v3076 = vadd.f32 %v3012, %v3044
    %v3077 = vadd.f32 %v3013, %v3045
    %v3078 = vadd.f32 %v3014, %v3046
    %v3079 = vadd.f32 %v3015, %v3047
    %v3080 = vadd.f32 %v3016, %v3048
    %v3081 = vadd.f32 %v3017, %v3049
    %v3082 = vadd.f32 %v3018, %v3050
    %v3083 = vadd.f32 %v3019, %v3051
    %v3084 = vadd.f32 %v3020, %v3052
    %v3085 = vadd.f32 %v3021, %v3053
    %v3086 = vadd.f32 %v3022, %v3054
    %v3087 = vld [vmem:[#allocation4 + $0x6] sm:$0x3]
    %3089 = vset.pattern.permute.xlu0 0
    %3090 = vperm.xlu0 %3089, %v3087
    %v3091 = vpop.permute.xlu0 %3090
    %v3095 = vrot.slane %v3055, 6
    %v3096 = vrot.slane %v3056, 6
    %v3099 = vmul.f32 %v3091, %v3095
    %v3100 = vmul.f32 %v3091, %v3096
    %3101 = vset.pattern.permute.xlu0 1
    %3102 = vperm.xlu0 %3101, %v3087
    %v3103 = vpop.permute.xlu0 %3102
    %v3107 = vrot.slane %v3057, 6
    %v3108 = vrot.slane %v3058, 6
    %v3111 = vmul.f32 %v3103, %v3107
    %v3112 = vmul.f32 %v3103, %v3108
    %v3113 = vadd.f32 %v3099, %v3111
    %v3114 = vadd.f32 %v3100, %v3112
    %3115 = vset.pattern.permute.xlu0 2
    %3116 = vperm.xlu0 %3115, %v3087
    %v3117 = vpop.permute.xlu0 %3116
    %v3121 = vrot.slane %v3059, 6
    %v3122 = vrot.slane %v3060, 6
    %v3125 = vmul.f32 %v3117, %v3121
    %v3126 = vmul.f32 %v3117, %v3122
    %v3127 = vadd.f32 %v3113, %v3125
    %v3128 = vadd.f32 %v3114, %v3126
    %3129 = vset.pattern.permute.xlu0 3
    %3130 = vperm.xlu0 %3129, %v3087
    %v3131 = vpop.permute.xlu0 %3130
    %v3135 = vrot.slane %v3061, 6
    %v3136 = vrot.slane %v3062, 6
    %v3139 = vmul.f32 %v3131, %v3135
    %v3140 = vmul.f32 %v3131, %v3136
    %v3141 = vadd.f32 %v3127, %v3139
    %v3142 = vadd.f32 %v3128, %v3140
    %3143 = vset.pattern.permute.xlu0 4
    %3144 = vperm.xlu0 %3143, %v3087
    %v3145 = vpop.permute.xlu0 %3144
    %v3149 = vrot.slane %v3063, 6
    %v3150 = vrot.slane %v3064, 6
    %v3153 = vmul.f32 %v3145, %v3149
    %v3154 = vmul.f32 %v3145, %v3150
    %v3155 = vadd.f32 %v3141, %v3153
    %v3156 = vadd.f32 %v3142, %v3154
    %3157 = vset.pattern.permute.xlu0 5
    %3158 = vperm.xlu0 %3157, %v3087
    %v3159 = vpop.permute.xlu0 %3158
    %v3163 = vrot.slane %v3065, 6
    %v3164 = vrot.slane %v3066, 6
    %v3167 = vmul.f32 %v3159, %v3163
    %v3168 = vmul.f32 %v3159, %v3164
    %v3169 = vadd.f32 %v3155, %v3167
    %v3170 = vadd.f32 %v3156, %v3168
    %3171 = vset.pattern.permute.xlu0 6
    %3172 = vperm.xlu0 %3171, %v3087
    %v3173 = vpop.permute.xlu0 %3172
    %v3177 = vrot.slane %v3067, 6
    %v3178 = vrot.slane %v3068, 6
    %v3181 = vmul.f32 %v3173, %v3177
    %v3182 = vmul.f32 %v3173, %v3178
    %v3183 = vadd.f32 %v3169, %v3181
    %v3184 = vadd.f32 %v3170, %v3182
    %3185 = vset.pattern.permute.xlu0 7
    %3186 = vperm.xlu0 %3185, %v3087
    %v3187 = vpop.permute.xlu0 %3186
    %v3191 = vrot.slane %v3069, 6
    %v3192 = vrot.slane %v3070, 6
    %v3195 = vmul.f32 %v3187, %v3191
    %v3196 = vmul.f32 %v3187, %v3192
    %v3197 = vadd.f32 %v3183, %v3195
    %v3198 = vadd.f32 %v3184, %v3196
    %3199 = vset.pattern.permute.xlu0 8
    %3200 = vperm.xlu0 %3199, %v3087
    %v3201 = vpop.permute.xlu0 %3200
    %v3205 = vrot.slane %v3071, 6
    %v3206 = vrot.slane %v3072, 6
    %v3209 = vmul.f32 %v3201, %v3205
    %v3210 = vmul.f32 %v3201, %v3206
    %v3211 = vadd.f32 %v3197, %v3209
    %v3212 = vadd.f32 %v3198, %v3210
    %3213 = vset.pattern.permute.xlu0 9
    %3214 = vperm.xlu0 %3213, %v3087
    %v3215 = vpop.permute.xlu0 %3214
    %v3219 = vrot.slane %v3073, 6
    %v3220 = vrot.slane %v3074, 6
    %v3223 = vmul.f32 %v3215, %v3219
    %v3224 = vmul.f32 %v3215, %v3220
    %v3225 = vadd.f32 %v3211, %v3223
    %v3226 = vadd.f32 %v3212, %v3224
    %3227 = vset.pattern.permute.xlu0 10
    %3228 = vperm.xlu0 %3227, %v3087
    %v3229 = vpop.permute.xlu0 %3228
    %v3233 = vrot.slane %v3075, 6
    %v3234 = vrot.slane %v3076, 6
    %v3237 = vmul.f32 %v3229, %v3233
    %v3238 = vmul.f32 %v3229, %v3234
    %v3239 = vadd.f32 %v3225, %v3237
    %v3240 = vadd.f32 %v3226, %v3238
    %3241 = vset.pattern.permute.xlu0 11
    %3242 = vperm.xlu0 %3241, %v3087
    %v3243 = vpop.permute.xlu0 %3242
    %v3247 = vrot.slane %v3077, 6
    %v3248 = vrot.slane %v3078, 6
    %v3251 = vmul.f32 %v3243, %v3247
    %v3252 = vmul.f32 %v3243, %v3248
    %v3253 = vadd.f32 %v3239, %v3251
    %v3254 = vadd.f32 %v3240, %v3252
    %3255 = vset.pattern.permute.xlu0 12
    %3256 = vperm.xlu0 %3255, %v3087
    %v3257 = vpop.permute.xlu0 %3256
    %v3261 = vrot.slane %v3079, 6
    %v3262 = vrot.slane %v3080, 6
    %v3265 = vmul.f32 %v3257, %v3261
    %v3266 = vmul.f32 %v3257, %v3262
    %v3267 = vadd.f32 %v3253, %v3265
    %v3268 = vadd.f32 %v3254, %v3266
    %3269 = vset.pattern.permute.xlu0 13
    %3270 = vperm.xlu0 %3269, %v3087
    %v3271 = vpop.permute.xlu0 %3270
    %v3275 = vrot.slane %v3081, 6
    %v3276 = vrot.slane %v3082, 6
    %v3279 = vmul.f32 %v3271, %v3275
    %v3280 = vmul.f32 %v3271, %v3276
    %v3281 = vadd.f32 %v3267, %v3279
    %v3282 = vadd.f32 %v3268, %v3280
    %3283 = vset.pattern.permute.xlu0 14
    %3284 = vperm.xlu0 %3283, %v3087
    %v3285 = vpop.permute.xlu0 %3284
    %v3289 = vrot.slane %v3083, 6
    %v3290 = vrot.slane %v3084, 6
    %v3293 = vmul.f32 %v3285, %v3289
    %v3294 = vmul.f32 %v3285, %v3290
    %v3295 = vadd.f32 %v3281, %v3293
    %v3296 = vadd.f32 %v3282, %v3294
    %3297 = vset.pattern.permute.xlu0 15
    %3298 = vperm.xlu0 %3297, %v3087
    %v3299 = vpop.permute.xlu0 %3298
    %v3303 = vrot.slane %v3085, 6
    %v3304 = vrot.slane %v3086, 6
    %v3307 = vmul.f32 %v3299, %v3303
    %v3308 = vmul.f32 %v3299, %v3304
    %v3309 = vadd.f32 %v3295, %v3307
    %v3310 = vadd.f32 %v3296, %v3308
    %v3313 = vrot.slane %v3309, 2
    %v3314 = vrot.slane %v3310, 2
    %3317 = vst [vmem:[#allocation5] sm:$0xc0] %v3313
    %3318 = vst [vmem:[#allocation5 + $0x8] sm:$0xc0] %v3314
    %v3319 = vld [vmem:[#allocation2 + $0x10] sm:$0x3]
    %v3320 = vld [vmem:[#allocation2 + $0x18] sm:$0x3]
    %v3321 = vld [vmem:[#allocation2 + $0x30] sm:$0x3]
    %v3322 = vld [vmem:[#allocation2 + $0x38] sm:$0x3]
    %v3323 = vld [vmem:[#allocation2 + $0x50] sm:$0x3]
    %v3324 = vld [vmem:[#allocation2 + $0x58] sm:$0x3]
    %v3325 = vld [vmem:[#allocation2 + $0x70] sm:$0x3]
    %v3326 = vld [vmem:[#allocation2 + $0x78] sm:$0x3]
    %v3327 = vld [vmem:[#allocation2 + $0x90] sm:$0x3]
    %v3328 = vld [vmem:[#allocation2 + $0x98] sm:$0x3]
    %v3329 = vld [vmem:[#allocation2 + $0xb0] sm:$0x3]
    %v3330 = vld [vmem:[#allocation2 + $0xb8] sm:$0x3]
    %v3331 = vld [vmem:[#allocation2 + $0xd0] sm:$0x3]
    %v3332 = vld [vmem:[#allocation2 + $0xd8] sm:$0x3]
    %v3333 = vld [vmem:[#allocation2 + $0xf0] sm:$0x3]
    %v3334 = vld [vmem:[#allocation2 + $0xf8] sm:$0x3]
    %v3335 = vld [vmem:[#allocation2 + $0x110] sm:$0x3]
    %v3336 = vld [vmem:[#allocation2 + $0x118] sm:$0x3]
    %v3337 = vld [vmem:[#allocation2 + $0x130] sm:$0x3]
    %v3338 = vld [vmem:[#allocation2 + $0x138] sm:$0x3]
    %v3339 = vld [vmem:[#allocation2 + $0x150] sm:$0x3]
    %v3340 = vld [vmem:[#allocation2 + $0x158] sm:$0x3]
    %v3341 = vld [vmem:[#allocation2 + $0x170] sm:$0x3]
    %v3342 = vld [vmem:[#allocation2 + $0x178] sm:$0x3]
    %v3343 = vld [vmem:[#allocation2 + $0x190] sm:$0x3]
    %v3344 = vld [vmem:[#allocation2 + $0x198] sm:$0x3]
    %v3345 = vld [vmem:[#allocation2 + $0x1b0] sm:$0x3]
    %v3346 = vld [vmem:[#allocation2 + $0x1b8] sm:$0x3]
    %v3347 = vld [vmem:[#allocation2 + $0x1d0] sm:$0x3]
    %v3348 = vld [vmem:[#allocation2 + $0x1d8] sm:$0x3]
    %v3349 = vld [vmem:[#allocation2 + $0x1f0] sm:$0x3]
    %v3350 = vld [vmem:[#allocation2 + $0x1f8] sm:$0x3]
    %v3351 = vmul.f32 %v3319, %v3095
    %v3352 = vmul.f32 %v3320, %v3096
    %v3353 = vmul.f32 %v3321, %v3107
    %v3354 = vmul.f32 %v3322, %v3108
    %v3355 = vmul.f32 %v3323, %v3121
    %v3356 = vmul.f32 %v3324, %v3122
    %v3357 = vmul.f32 %v3325, %v3135
    %v3358 = vmul.f32 %v3326, %v3136
    %v3359 = vmul.f32 %v3327, %v3149
    %v3360 = vmul.f32 %v3328, %v3150
    %v3361 = vmul.f32 %v3329, %v3163
    %v3362 = vmul.f32 %v3330, %v3164
    %v3363 = vmul.f32 %v3331, %v3177
    %v3364 = vmul.f32 %v3332, %v3178
    %v3365 = vmul.f32 %v3333, %v3191
    %v3366 = vmul.f32 %v3334, %v3192
    %v3367 = vmul.f32 %v3335, %v3205
    %v3368 = vmul.f32 %v3336, %v3206
    %v3369 = vmul.f32 %v3337, %v3219
    %v3370 = vmul.f32 %v3338, %v3220
    %v3371 = vmul.f32 %v3339, %v3233
    %v3372 = vmul.f32 %v3340, %v3234
    %v3373 = vmul.f32 %v3341, %v3247
    %v3374 = vmul.f32 %v3342, %v3248
    %v3375 = vmul.f32 %v3343, %v3261
    %v3376 = vmul.f32 %v3344, %v3262
    %v3377 = vmul.f32 %v3345, %v3275
    %v3378 = vmul.f32 %v3346, %v3276
    %v3379 = vmul.f32 %v3347, %v3289
    %v3380 = vmul.f32 %v3348, %v3290
    %v3381 = vmul.f32 %v3349, %v3303
    %v3382 = vmul.f32 %v3350, %v3304
    %v3383 = vld [vmem:[#allocation3 + $0x10] sm:$0x3]
    %v3384 = vld [vmem:[#allocation3 + $0x18] sm:$0x3]
    %v3385 = vld [vmem:[#allocation3 + $0x30] sm:$0x3]
    %v3386 = vld [vmem:[#allocation3 + $0x38] sm:$0x3]
    %v3387 = vld [vmem:[#allocation3 + $0x50] sm:$0x3]
    %v3388 = vld [vmem:[#allocation3 + $0x58] sm:$0x3]
    %v3389 = vld [vmem:[#allocation3 + $0x70] sm:$0x3]
    %v3390 = vld [vmem:[#allocation3 + $0x78] sm:$0x3]
    %v3391 = vld [vmem:[#allocation3 + $0x90] sm:$0x3]
    %v3392 = vld [vmem:[#allocation3 + $0x98] sm:$0x3]
    %v3393 = vld [vmem:[#allocation3 + $0xb0] sm:$0x3]
    %v3394 = vld [vmem:[#allocation3 + $0xb8] sm:$0x3]
    %v3395 = vld [vmem:[#allocation3 + $0xd0] sm:$0x3]
    %v3396 = vld [vmem:[#allocation3 + $0xd8] sm:$0x3]
    %v3397 = vld [vmem:[#allocation3 + $0xf0] sm:$0x3]
    %v3398 = vld [vmem:[#allocation3 + $0xf8] sm:$0x3]
    %v3399 = vld [vmem:[#allocation3 + $0x110] sm:$0x3]
    %v3400 = vld [vmem:[#allocation3 + $0x118] sm:$0x3]
    %v3401 = vld [vmem:[#allocation3 + $0x130] sm:$0x3]
    %v3402 = vld [vmem:[#allocation3 + $0x138] sm:$0x3]
    %v3403 = vld [vmem:[#allocation3 + $0x150] sm:$0x3]
    %v3404 = vld [vmem:[#allocation3 + $0x158] sm:$0x3]
    %v3405 = vld [vmem:[#allocation3 + $0x170] sm:$0x3]
    %v3406 = vld [vmem:[#allocation3 + $0x178] sm:$0x3]
    %v3407 = vld [vmem:[#allocation3 + $0x190] sm:$0x3]
    %v3408 = vld [vmem:[#allocation3 + $0x198] sm:$0x3]
    %v3409 = vld [vmem:[#allocation3 + $0x1b0] sm:$0x3]
    %v3410 = vld [vmem:[#allocation3 + $0x1b8] sm:$0x3]
    %v3411 = vld [vmem:[#allocation3 + $0x1d0] sm:$0x3]
    %v3412 = vld [vmem:[#allocation3 + $0x1d8] sm:$0x3]
    %v3413 = vld [vmem:[#allocation3 + $0x1f0] sm:$0x3]
    %v3414 = vld [vmem:[#allocation3 + $0x1f8] sm:$0x3]
    %v3415 = vadd.f32 %v3351, %v3383
    %v3416 = vadd.f32 %v3352, %v3384
    %v3417 = vadd.f32 %v3353, %v3385
    %v3418 = vadd.f32 %v3354, %v3386
    %v3419 = vadd.f32 %v3355, %v3387
    %v3420 = vadd.f32 %v3356, %v3388
    %v3421 = vadd.f32 %v3357, %v3389
    %v3422 = vadd.f32 %v3358, %v3390
    %v3423 = vadd.f32 %v3359, %v3391
    %v3424 = vadd.f32 %v3360, %v3392
    %v3425 = vadd.f32 %v3361, %v3393
    %v3426 = vadd.f32 %v3362, %v3394
    %v3427 = vadd.f32 %v3363, %v3395
    %v3428 = vadd.f32 %v3364, %v3396
    %v3429 = vadd.f32 %v3365, %v3397
    %v3430 = vadd.f32 %v3366, %v3398
    %v3431 = vadd.f32 %v3367, %v3399
    %v3432 = vadd.f32 %v3368, %v3400
    %v3433 = vadd.f32 %v3369, %v3401
    %v3434 = vadd.f32 %v3370, %v3402
    %v3435 = vadd.f32 %v3371, %v3403
    %v3436 = vadd.f32 %v3372, %v3404
    %v3437 = vadd.f32 %v3373, %v3405
    %v3438 = vadd.f32 %v3374, %v3406
    %v3439 = vadd.f32 %v3375, %v3407
    %v3440 = vadd.f32 %v3376, %v3408
    %v3441 = vadd.f32 %v3377, %v3409
    %v3442 = vadd.f32 %v3378, %v3410
    %v3443 = vadd.f32 %v3379, %v3411
    %v3444 = vadd.f32 %v3380, %v3412
    %v3445 = vadd.f32 %v3381, %v3413
    %v3446 = vadd.f32 %v3382, %v3414
    %v3447 = vld [vmem:[#allocation4 + $0x8] sm:$0x3]
    %3449 = vset.pattern.permute.xlu0 0
    %3450 = vperm.xlu0 %3449, %v3447
    %v3451 = vpop.permute.xlu0 %3450
    %v3453 = vmul.f32 %v3451, %v3415
    %v3454 = vmul.f32 %v3451, %v3416
    %3455 = vset.pattern.permute.xlu0 1
    %3456 = vperm.xlu0 %3455, %v3447
    %v3457 = vpop.permute.xlu0 %3456
    %v3459 = vmul.f32 %v3457, %v3417
    %v3460 = vmul.f32 %v3457, %v3418
    %v3461 = vadd.f32 %v3453, %v3459
    %v3462 = vadd.f32 %v3454, %v3460
    %3463 = vset.pattern.permute.xlu0 2
    %3464 = vperm.xlu0 %3463, %v3447
    %v3465 = vpop.permute.xlu0 %3464
    %v3467 = vmul.f32 %v3465, %v3419
    %v3468 = vmul.f32 %v3465, %v3420
    %v3469 = vadd.f32 %v3461, %v3467
    %v3470 = vadd.f32 %v3462, %v3468
    %3471 = vset.pattern.permute.xlu0 3
    %3472 = vperm.xlu0 %3471, %v3447
    %v3473 = vpop.permute.xlu0 %3472
    %v3475 = vmul.f32 %v3473, %v3421
    %v3476 = vmul.f32 %v3473, %v3422
    %v3477 = vadd.f32 %v3469, %v3475
    %v3478 = vadd.f32 %v3470, %v3476
    %3479 = vset.pattern.permute.xlu0 4
    %3480 = vperm.xlu0 %3479, %v3447
    %v3481 = vpop.permute.xlu0 %3480
    %v3483 = vmul.f32 %v3481, %v3423
    %v3484 = vmul.f32 %v3481, %v3424
    %v3485 = vadd.f32 %v3477, %v3483
    %v3486 = vadd.f32 %v3478, %v3484
    %3487 = vset.pattern.permute.xlu0 5
    %3488 = vperm.xlu0 %3487, %v3447
    %v3489 = vpop.permute.xlu0 %3488
    %v3491 = vmul.f32 %v3489, %v3425
    %v3492 = vmul.f32 %v3489, %v3426
    %v3493 = vadd.f32 %v3485, %v3491
    %v3494 = vadd.f32 %v3486, %v3492
    %3495 = vset.pattern.permute.xlu0 6
    %3496 = vperm.xlu0 %3495, %v3447
    %v3497 = vpop.permute.xlu0 %3496
    %v3499 = vmul.f32 %v3497, %v3427
    %v3500 = vmul.f32 %v3497, %v3428
    %v3501 = vadd.f32 %v3493, %v3499
    %v3502 = vadd.f32 %v3494, %v3500
    %3503 = vset.pattern.permute.xlu0 7
    %3504 = vperm.xlu0 %3503, %v3447
    %v3505 = vpop.permute.xlu0 %3504
    %v3507 = vmul.f32 %v3505, %v3429
    %v3508 = vmul.f32 %v3505, %v3430
    %v3509 = vadd.f32 %v3501, %v3507
    %v3510 = vadd.f32 %v3502, %v3508
    %3511 = vset.pattern.permute.xlu0 8
    %3512 = vperm.xlu0 %3511, %v3447
    %v3513 = vpop.permute.xlu0 %3512
    %v3515 = vmul.f32 %v3513, %v3431
    %v3516 = vmul.f32 %v3513, %v3432
    %v3517 = vadd.f32 %v3509, %v3515
    %v3518 = vadd.f32 %v3510, %v3516
    %3519 = vset.pattern.permute.xlu0 9
    %3520 = vperm.xlu0 %3519, %v3447
    %v3521 = vpop.permute.xlu0 %3520
    %v3523 = vmul.f32 %v3521, %v3433
    %v3524 = vmul.f32 %v3521, %v3434
    %v3525 = vadd.f32 %v3517, %v3523
    %v3526 = vadd.f32 %v3518, %v3524
    %3527 = vset.pattern.permute.xlu0 10
    %3528 = vperm.xlu0 %3527, %v3447
    %v3529 = vpop.permute.xlu0 %3528
    %v3531 = vmul.f32 %v3529, %v3435
    %v3532 = vmul.f32 %v3529, %v3436
    %v3533 = vadd.f32 %v3525, %v3531
    %v3534 = vadd.f32 %v3526, %v3532
    %3535 = vset.pattern.permute.xlu0 11
    %3536 = vperm.xlu0 %3535, %v3447
    %v3537 = vpop.permute.xlu0 %3536
    %v3539 = vmul.f32 %v3537, %v3437
    %v3540 = vmul.f32 %v3537, %v3438
    %v3541 = vadd.f32 %v3533, %v3539
    %v3542 = vadd.f32 %v3534, %v3540
    %3543 = vset.pattern.permute.xlu0 12
    %3544 = vperm.xlu0 %3543, %v3447
    %v3545 = vpop.permute.xlu0 %3544
    %v3547 = vmul.f32 %v3545, %v3439
    %v3548 = vmul.f32 %v3545, %v3440
    %v3549 = vadd.f32 %v3541, %v3547
    %v3550 = vadd.f32 %v3542, %v3548
    %3551 = vset.pattern.permute.xlu0 13
    %3552 = vperm.xlu0 %3551, %v3447
    %v3553 = vpop.permute.xlu0 %3552
    %v3555 = vmul.f32 %v3553, %v3441
    %v3556 = vmul.f32 %v3553, %v3442
    %v3557 = vadd.f32 %v3549, %v3555
    %v3558 = vadd.f32 %v3550, %v3556
    %3559 = vset.pattern.permute.xlu0 14
    %3560 = vperm.xlu0 %3559, %v3447
    %v3561 = vpop.permute.xlu0 %3560
    %v3563 = vmul.f32 %v3561, %v3443
    %v3564 = vmul.f32 %v3561, %v3444
    %v3565 = vadd.f32 %v3557, %v3563
    %v3566 = vadd.f32 %v3558, %v3564
    %3567 = vset.pattern.permute.xlu0 15
    %3568 = vperm.xlu0 %3567, %v3447
    %v3569 = vpop.permute.xlu0 %3568
    %v3571 = vmul.f32 %v3569, %v3445
    %v3572 = vmul.f32 %v3569, %v3446
    %v3573 = vadd.f32 %v3565, %v3571
    %v3574 = vadd.f32 %v3566, %v3572
    %3575 = vst [vmem:[#allocation5 + $0x10] sm:$0x3] %v3573
    %3576 = vst [vmem:[#allocation5 + $0x18] sm:$0x3] %v3574
    %v3577 = vld [vmem:[#allocation2 + $0x10] sm:$0xc]
    %v3578 = vld [vmem:[#allocation2 + $0x18] sm:$0xc]
    %v3579 = vld [vmem:[#allocation2 + $0x30] sm:$0xc]
    %v3580 = vld [vmem:[#allocation2 + $0x38] sm:$0xc]
    %v3581 = vld [vmem:[#allocation2 + $0x50] sm:$0xc]
    %v3582 = vld [vmem:[#allocation2 + $0x58] sm:$0xc]
    %v3583 = vld [vmem:[#allocation2 + $0x70] sm:$0xc]
    %v3584 = vld [vmem:[#allocation2 + $0x78] sm:$0xc]
    %v3585 = vld [vmem:[#allocation2 + $0x90] sm:$0xc]
    %v3586 = vld [vmem:[#allocation2 + $0x98] sm:$0xc]
    %v3587 = vld [vmem:[#allocation2 + $0xb0] sm:$0xc]
    %v3588 = vld [vmem:[#allocation2 + $0xb8] sm:$0xc]
    %v3589 = vld [vmem:[#allocation2 + $0xd0] sm:$0xc]
    %v3590 = vld [vmem:[#allocation2 + $0xd8] sm:$0xc]
    %v3591 = vld [vmem:[#allocation2 + $0xf0] sm:$0xc]
    %v3592 = vld [vmem:[#allocation2 + $0xf8] sm:$0xc]
    %v3593 = vld [vmem:[#allocation2 + $0x110] sm:$0xc]
    %v3594 = vld [vmem:[#allocation2 + $0x118] sm:$0xc]
    %v3595 = vld [vmem:[#allocation2 + $0x130] sm:$0xc]
    %v3596 = vld [vmem:[#allocation2 + $0x138] sm:$0xc]
    %v3597 = vld [vmem:[#allocation2 + $0x150] sm:$0xc]
    %v3598 = vld [vmem:[#allocation2 + $0x158] sm:$0xc]
    %v3599 = vld [vmem:[#allocation2 + $0x170] sm:$0xc]
    %v3600 = vld [vmem:[#allocation2 + $0x178] sm:$0xc]
    %v3601 = vld [vmem:[#allocation2 + $0x190] sm:$0xc]
    %v3602 = vld [vmem:[#allocation2 + $0x198] sm:$0xc]
    %v3603 = vld [vmem:[#allocation2 + $0x1b0] sm:$0xc]
    %v3604 = vld [vmem:[#allocation2 + $0x1b8] sm:$0xc]
    %v3605 = vld [vmem:[#allocation2 + $0x1d0] sm:$0xc]
    %v3606 = vld [vmem:[#allocation2 + $0x1d8] sm:$0xc]
    %v3607 = vld [vmem:[#allocation2 + $0x1f0] sm:$0xc]
    %v3608 = vld [vmem:[#allocation2 + $0x1f8] sm:$0xc]
    %v3641 = vrot.slane %v3415, 6
    %v3642 = vrot.slane %v3416, 6
    %v3643 = vrot.slane %v3417, 6
    %v3644 = vrot.slane %v3418, 6
    %v3645 = vrot.slane %v3419, 6
    %v3646 = vrot.slane %v3420, 6
    %v3647 = vrot.slane %v3421, 6
    %v3648 = vrot.slane %v3422, 6
    %v3649 = vrot.slane %v3423, 6
    %v3650 = vrot.slane %v3424, 6
    %v3651 = vrot.slane %v3425, 6
    %v3652 = vrot.slane %v3426, 6
    %v3653 = vrot.slane %v3427, 6
    %v3654 = vrot.slane %v3428, 6
    %v3655 = vrot.slane %v3429, 6
    %v3656 = vrot.slane %v3430, 6
    %v3657 = vrot.slane %v3431, 6
    %v3658 = vrot.slane %v3432, 6
    %v3659 = vrot.slane %v3433, 6
    %v3660 = vrot.slane %v3434, 6
    %v3661 = vrot.slane %v3435, 6
    %v3662 = vrot.slane %v3436, 6
    %v3663 = vrot.slane %v3437, 6
    %v3664 = vrot.slane %v3438, 6
    %v3665 = vrot.slane %v3439, 6
    %v3666 = vrot.slane %v3440, 6
    %v3667 = vrot.slane %v3441, 6
    %v3668 = vrot.slane %v3442, 6
    %v3669 = vrot.slane %v3443, 6
    %v3670 = vrot.slane %v3444, 6
    %v3671 = vrot.slane %v3445, 6
    %v3672 = vrot.slane %v3446, 6
    %v3705 = vmul.f32 %v3577, %v3641
    %v3706 = vmul.f32 %v3578, %v3642
    %v3707 = vmul.f32 %v3579, %v3643
    %v3708 = vmul.f32 %v3580, %v3644
    %v3709 = vmul.f32 %v3581, %v3645
    %v3710 = vmul.f32 %v3582, %v3646
    %v3711 = vmul.f32 %v3583, %v3647
    %v3712 = vmul.f32 %v3584, %v3648
    %v3713 = vmul.f32 %v3585, %v3649
    %v3714 = vmul.f32 %v3586, %v3650
    %v3715 = vmul.f32 %v3587, %v3651
    %v3716 = vmul.f32 %v3588, %v3652
    %v3717 = vmul.f32 %v3589, %v3653
    %v3718 = vmul.f32 %v3590, %v3654
    %v3719 = vmul.f32 %v3591, %v3655
    %v3720 = vmul.f32 %v3592, %v3656
    %v3721 = vmul.f32 %v3593, %v3657
    %v3722 = vmul.f32 %v3594, %v3658
    %v3723 = vmul.f32 %v3595, %v3659
    %v3724 = vmul.f32 %v3596, %v3660
    %v3725 = vmul.f32 %v3597, %v3661
    %v3726 = vmul.f32 %v3598, %v3662
    %v3727 = vmul.f32 %v3599, %v3663
    %v3728 = vmul.f32 %v3600, %v3664
    %v3729 = vmul.f32 %v3601, %v3665
    %v3730 = vmul.f32 %v3602, %v3666
    %v3731 = vmul.f32 %v3603, %v3667
    %v3732 = vmul.f32 %v3604, %v3668
    %v3733 = vmul.f32 %v3605, %v3669
    %v3734 = vmul.f32 %v3606, %v3670
    %v3735 = vmul.f32 %v3607, %v3671
    %v3736 = vmul.f32 %v3608, %v3672
    %v3737 = vld [vmem:[#allocation3 + $0x10] sm:$0xc]
    %v3738 = vld [vmem:[#allocation3 + $0x18] sm:$0xc]
    %v3739 = vld [vmem:[#allocation3 + $0x30] sm:$0xc]
    %v3740 = vld [vmem:[#allocation3 + $0x38] sm:$0xc]
    %v3741 = vld [vmem:[#allocation3 + $0x50] sm:$0xc]
    %v3742 = vld [vmem:[#allocation3 + $0x58] sm:$0xc]
    %v3743 = vld [vmem:[#allocation3 + $0x70] sm:$0xc]
    %v3744 = vld [vmem:[#allocation3 + $0x78] sm:$0xc]
    %v3745 = vld [vmem:[#allocation3 + $0x90] sm:$0xc]
    %v3746 = vld [vmem:[#allocation3 + $0x98] sm:$0xc]
    %v3747 = vld [vmem:[#allocation3 + $0xb0] sm:$0xc]
    %v3748 = vld [vmem:[#allocation3 + $0xb8] sm:$0xc]
    %v3749 = vld [vmem:[#allocation3 + $0xd0] sm:$0xc]
    %v3750 = vld [vmem:[#allocation3 + $0xd8] sm:$0xc]
    %v3751 = vld [vmem:[#allocation3 + $0xf0] sm:$0xc]
    %v3752 = vld [vmem:[#allocation3 + $0xf8] sm:$0xc]
    %v3753 = vld [vmem:[#allocation3 + $0x110] sm:$0xc]
    %v3754 = vld [vmem:[#allocation3 + $0x118] sm:$0xc]
    %v3755 = vld [vmem:[#allocation3 + $0x130] sm:$0xc]
    %v3756 = vld [vmem:[#allocation3 + $0x138] sm:$0xc]
    %v3757 = vld [vmem:[#allocation3 + $0x150] sm:$0xc]
    %v3758 = vld [vmem:[#allocation3 + $0x158] sm:$0xc]
    %v3759 = vld [vmem:[#allocation3 + $0x170] sm:$0xc]
    %v3760 = vld [vmem:[#allocation3 + $0x178] sm:$0xc]
    %v3761 = vld [vmem:[#allocation3 + $0x190] sm:$0xc]
    %v3762 = vld [vmem:[#allocation3 + $0x198] sm:$0xc]
    %v3763 = vld [vmem:[#allocation3 + $0x1b0] sm:$0xc]
    %v3764 = vld [vmem:[#allocation3 + $0x1b8] sm:$0xc]
    %v3765 = vld [vmem:[#allocation3 + $0x1d0] sm:$0xc]
    %v3766 = vld [vmem:[#allocation3 + $0x1d8] sm:$0xc]
    %v3767 = vld [vmem:[#allocation3 + $0x1f0] sm:$0xc]
    %v3768 = vld [vmem:[#allocation3 + $0x1f8] sm:$0xc]
    %v3769 = vadd.f32 %v3705, %v3737
    %v3770 = vadd.f32 %v3706, %v3738
    %v3771 = vadd.f32 %v3707, %v3739
    %v3772 = vadd.f32 %v3708, %v3740
    %v3773 = vadd.f32 %v3709, %v3741
    %v3774 = vadd.f32 %v3710, %v3742
    %v3775 = vadd.f32 %v3711, %v3743
    %v3776 = vadd.f32 %v3712, %v3744
    %v3777 = vadd.f32 %v3713, %v3745
    %v3778 = vadd.f32 %v3714, %v3746
    %v3779 = vadd.f32 %v3715, %v3747
    %v3780 = vadd.f32 %v3716, %v3748
    %v3781 = vadd.f32 %v3717, %v3749
    %v3782 = vadd.f32 %v3718, %v3750
    %v3783 = vadd.f32 %v3719, %v3751
    %v3784 = vadd.f32 %v3720, %v3752
    %v3785 = vadd.f32 %v3721, %v3753
    %v3786 = vadd.f32 %v3722, %v3754
    %v3787 = vadd.f32 %v3723, %v3755
    %v3788 = vadd.f32 %v3724, %v3756
    %v3789 = vadd.f32 %v3725, %v3757
    %v3790 = vadd.f32 %v3726, %v3758
    %v3791 = vadd.f32 %v3727, %v3759
    %v3792 = vadd.f32 %v3728, %v3760
    %v3793 = vadd.f32 %v3729, %v3761
    %v3794 = vadd.f32 %v3730, %v3762
    %v3795 = vadd.f32 %v3731, %v3763
    %v3796 = vadd.f32 %v3732, %v3764
    %v3797 = vadd.f32 %v3733, %v3765
    %v3798 = vadd.f32 %v3734, %v3766
    %v3799 = vadd.f32 %v3735, %v3767
    %v3800 = vadd.f32 %v3736, %v3768
    %v3801 = vld [vmem:[#allocation4 + $0xa] sm:$0x3]
    %3803 = vset.pattern.permute.xlu0 0
    %3804 = vperm.xlu0 %3803, %v3801
    %v3805 = vpop.permute.xlu0 %3804
    %v3809 = vrot.slane %v3769, 2
    %v3810 = vrot.slane %v3770, 2
    %v3813 = vmul.f32 %v3805, %v3809
    %v3814 = vmul.f32 %v3805, %v3810
    %3815 = vset.pattern.permute.xlu0 1
    %3816 = vperm.xlu0 %3815, %v3801
    %v3817 = vpop.permute.xlu0 %3816
    %v3821 = vrot.slane %v3771, 2
    %v3822 = vrot.slane %v3772, 2
    %v3825 = vmul.f32 %v3817, %v3821
    %v3826 = vmul.f32 %v3817, %v3822
    %v3827 = vadd.f32 %v3813, %v3825
    %v3828 = vadd.f32 %v3814, %v3826
    %3829 = vset.pattern.permute.xlu0 2
    %3830 = vperm.xlu0 %3829, %v3801
    %v3831 = vpop.permute.xlu0 %3830
    %v3835 = vrot.slane %v3773, 2
    %v3836 = vrot.slane %v3774, 2
    %v3839 = vmul.f32 %v3831, %v3835
    %v3840 = vmul.f32 %v3831, %v3836
    %v3841 = vadd.f32 %v3827, %v3839
    %v3842 = vadd.f32 %v3828, %v3840
    %3843 = vset.pattern.permute.xlu0 3
    %3844 = vperm.xlu0 %3843, %v3801
    %v3845 = vpop.permute.xlu0 %3844
    %v3849 = vrot.slane %v3775, 2
    %v3850 = vrot.slane %v3776, 2
    %v3853 = vmul.f32 %v3845, %v3849
    %v3854 = vmul.f32 %v3845, %v3850
    %v3855 = vadd.f32 %v3841, %v3853
    %v3856 = vadd.f32 %v3842, %v3854
    %3857 = vset.pattern.permute.xlu0 4
    %3858 = vperm.xlu0 %3857, %v3801
    %v3859 = vpop.permute.xlu0 %3858
    %v3863 = vrot.slane %v3777, 2
    %v3864 = vrot.slane %v3778, 2
    %v3867 = vmul.f32 %v3859, %v3863
    %v3868 = vmul.f32 %v3859, %v3864
    %v3869 = vadd.f32 %v3855, %v3867
    %v3870 = vadd.f32 %v3856, %v3868
    %3871 = vset.pattern.permute.xlu0 5
    %3872 = vperm.xlu0 %3871, %v3801
    %v3873 = vpop.permute.xlu0 %3872
    %v3877 = vrot.slane %v3779, 2
    %v3878 = vrot.slane %v3780, 2
    %v3881 = vmul.f32 %v3873, %v3877
    %v3882 = vmul.f32 %v3873, %v3878
    %v3883 = vadd.f32 %v3869, %v3881
    %v3884 = vadd.f32 %v3870, %v3882
    %3885 = vset.pattern.permute.xlu0 6
    %3886 = vperm.xlu0 %3885, %v3801
    %v3887 = vpop.permute.xlu0 %3886
    %v3891 = vrot.slane %v3781, 2
    %v3892 = vrot.slane %v3782, 2
    %v3895 = vmul.f32 %v3887, %v3891
    %v3896 = vmul.f32 %v3887, %v3892
    %v3897 = vadd.f32 %v3883, %v3895
    %v3898 = vadd.f32 %v3884, %v3896
    %3899 = vset.pattern.permute.xlu0 7
    %3900 = vperm.xlu0 %3899, %v3801
    %v3901 = vpop.permute.xlu0 %3900
    %v3905 = vrot.slane %v3783, 2
    %v3906 = vrot.slane %v3784, 2
    %v3909 = vmul.f32 %v3901, %v3905
    %v3910 = vmul.f32 %v3901, %v3906
    %v3911 = vadd.f32 %v3897, %v3909
    %v3912 = vadd.f32 %v3898, %v3910
    %3913 = vset.pattern.permute.xlu0 8
    %3914 = vperm.xlu0 %3913, %v3801
    %v3915 = vpop.permute.xlu0 %3914
    %v3919 = vrot.slane %v3785, 2
    %v3920 = vrot.slane %v3786, 2
    %v3923 = vmul.f32 %v3915, %v3919
    %v3924 = vmul.f32 %v3915, %v3920
    %v3925 = vadd.f32 %v3911, %v3923
    %v3926 = vadd.f32 %v3912, %v3924
    %3927 = vset.pattern.permute.xlu0 9
    %3928 = vperm.xlu0 %3927, %v3801
    %v3929 = vpop.permute.xlu0 %3928
    %v3933 = vrot.slane %v3787, 2
    %v3934 = vrot.slane %v3788, 2
    %v3937 = vmul.f32 %v3929, %v3933
    %v3938 = vmul.f32 %v3929, %v3934
    %v3939 = vadd.f32 %v3925, %v3937
    %v3940 = vadd.f32 %v3926, %v3938
    %3941 = vset.pattern.permute.xlu0 10
    %3942 = vperm.xlu0 %3941, %v3801
    %v3943 = vpop.permute.xlu0 %3942
    %v3947 = vrot.slane %v3789, 2
    %v3948 = vrot.slane %v3790, 2
    %v3951 = vmul.f32 %v3943, %v3947
    %v3952 = vmul.f32 %v3943, %v3948
    %v3953 = vadd.f32 %v3939, %v3951
    %v3954 = vadd.f32 %v3940, %v3952
    %3955 = vset.pattern.permute.xlu0 11
    %3956 = vperm.xlu0 %3955, %v3801
    %v3957 = vpop.permute.xlu0 %3956
    %v3961 = vrot.slane %v3791, 2
    %v3962 = vrot.slane %v3792, 2
    %v3965 = vmul.f32 %v3957, %v3961
    %v3966 = vmul.f32 %v3957, %v3962
    %v3967 = vadd.f32 %v3953, %v3965
    %v3968 = vadd.f32 %v3954, %v3966
    %3969 = vset.pattern.permute.xlu0 12
    %3970 = vperm.xlu0 %3969, %v3801
    %v3971 = vpop.permute.xlu0 %3970
    %v3975 = vrot.slane %v3793, 2
    %v3976 = vrot.slane %v3794, 2
    %v3979 = vmul.f32 %v3971, %v3975
    %v3980 = vmul.f32 %v3971, %v3976
    %v3981 = vadd.f32 %v3967, %v3979
    %v3982 = vadd.f32 %v3968, %v3980
    %3983 = vset.pattern.permute.xlu0 13
    %3984 = vperm.xlu0 %3983, %v3801
    %v3985 = vpop.permute.xlu0 %3984
    %v3989 = vrot.slane %v3795, 2
    %v3990 = vrot.slane %v3796, 2
    %v3993 = vmul.f32 %v3985, %v3989
    %v3994 = vmul.f32 %v3985, %v3990
    %v3995 = vadd.f32 %v3981, %v3993
    %v3996 = vadd.f32 %v3982, %v3994
    %3997 = vset.pattern.permute.xlu0 14
    %3998 = vperm.xlu0 %3997, %v3801
    %v3999 = vpop.permute.xlu0 %3998
    %v4003 = vrot.slane %v3797, 2
    %v4004 = vrot.slane %v3798, 2
    %v4007 = vmul.f32 %v3999, %v4003
    %v4008 = vmul.f32 %v3999, %v4004
    %v4009 = vadd.f32 %v3995, %v4007
    %v4010 = vadd.f32 %v3996, %v4008
    %4011 = vset.pattern.permute.xlu0 15
    %4012 = vperm.xlu0 %4011, %v3801
    %v4013 = vpop.permute.xlu0 %4012
    %v4017 = vrot.slane %v3799, 2
    %v4018 = vrot.slane %v3800, 2
    %v4021 = vmul.f32 %v4013, %v4017
    %v4022 = vmul.f32 %v4013, %v4018
    %v4023 = vadd.f32 %v4009, %v4021
    %v4024 = vadd.f32 %v4010, %v4022
    %v4027 = vrot.slane %v4023, 6
    %v4028 = vrot.slane %v4024, 6
    %4031 = vst [vmem:[#allocation5 + $0x10] sm:$0xc] %v4027
    %4032 = vst [vmem:[#allocation5 + $0x18] sm:$0xc] %v4028
    %v4033 = vld [vmem:[#allocation2 + $0x10] sm:$0x30]
    %v4034 = vld [vmem:[#allocation2 + $0x18] sm:$0x30]
    %v4035 = vld [vmem:[#allocation2 + $0x30] sm:$0x30]
    %v4036 = vld [vmem:[#allocation2 + $0x38] sm:$0x30]
    %v4037 = vld [vmem:[#allocation2 + $0x50] sm:$0x30]
    %v4038 = vld [vmem:[#allocation2 + $0x58] sm:$0x30]
    %v4039 = vld [vmem:[#allocation2 + $0x70] sm:$0x30]
    %v4040 = vld [vmem:[#allocation2 + $0x78] sm:$0x30]
    %v4041 = vld [vmem:[#allocation2 + $0x90] sm:$0x30]
    %v4042 = vld [vmem:[#allocation2 + $0x98] sm:$0x30]
    %v4043 = vld [vmem:[#allocation2 + $0xb0] sm:$0x30]
    %v4044 = vld [vmem:[#allocation2 + $0xb8] sm:$0x30]
    %v4045 = vld [vmem:[#allocation2 + $0xd0] sm:$0x30]
    %v4046 = vld [vmem:[#allocation2 + $0xd8] sm:$0x30]
    %v4047 = vld [vmem:[#allocation2 + $0xf0] sm:$0x30]
    %v4048 = vld [vmem:[#allocation2 + $0xf8] sm:$0x30]
    %v4049 = vld [vmem:[#allocation2 + $0x110] sm:$0x30]
    %v4050 = vld [vmem:[#allocation2 + $0x118] sm:$0x30]
    %v4051 = vld [vmem:[#allocation2 + $0x130] sm:$0x30]
    %v4052 = vld [vmem:[#allocation2 + $0x138] sm:$0x30]
    %v4053 = vld [vmem:[#allocation2 + $0x150] sm:$0x30]
    %v4054 = vld [vmem:[#allocation2 + $0x158] sm:$0x30]
    %v4055 = vld [vmem:[#allocation2 + $0x170] sm:$0x30]
    %v4056 = vld [vmem:[#allocation2 + $0x178] sm:$0x30]
    %v4057 = vld [vmem:[#allocation2 + $0x190] sm:$0x30]
    %v4058 = vld [vmem:[#allocation2 + $0x198] sm:$0x30]
    %v4059 = vld [vmem:[#allocation2 + $0x1b0] sm:$0x30]
    %v4060 = vld [vmem:[#allocation2 + $0x1b8] sm:$0x30]
    %v4061 = vld [vmem:[#allocation2 + $0x1d0] sm:$0x30]
    %v4062 = vld [vmem:[#allocation2 + $0x1d8] sm:$0x30]
    %v4063 = vld [vmem:[#allocation2 + $0x1f0] sm:$0x30]
    %v4064 = vld [vmem:[#allocation2 + $0x1f8] sm:$0x30]
    %v4065 = vrot.slane %v3769, 6
    %v4066 = vrot.slane %v3770, 6
    %v4067 = vrot.slane %v3771, 6
    %v4068 = vrot.slane %v3772, 6
    %v4069 = vrot.slane %v3773, 6
    %v4070 = vrot.slane %v3774, 6
    %v4071 = vrot.slane %v3775, 6
    %v4072 = vrot.slane %v3776, 6
    %v4073 = vrot.slane %v3777, 6
    %v4074 = vrot.slane %v3778, 6
    %v4075 = vrot.slane %v3779, 6
    %v4076 = vrot.slane %v3780, 6
    %v4077 = vrot.slane %v3781, 6
    %v4078 = vrot.slane %v3782, 6
    %v4079 = vrot.slane %v3783, 6
    %v4080 = vrot.slane %v3784, 6
    %v4081 = vrot.slane %v3785, 6
    %v4082 = vrot.slane %v3786, 6
    %v4083 = vrot.slane %v3787, 6
    %v4084 = vrot.slane %v3788, 6
    %v4085 = vrot.slane %v3789, 6
    %v4086 = vrot.slane %v3790, 6
    %v4087 = vrot.slane %v3791, 6
    %v4088 = vrot.slane %v3792, 6
    %v4089 = vrot.slane %v3793, 6
    %v4090 = vrot.slane %v3794, 6
    %v4091 = vrot.slane %v3795, 6
    %v4092 = vrot.slane %v3796, 6
    %v4093 = vrot.slane %v3797, 6
    %v4094 = vrot.slane %v3798, 6
    %v4095 = vrot.slane %v3799, 6
    %v4096 = vrot.slane %v3800, 6
    %v4129 = vmul.f32 %v4033, %v4065
    %v4130 = vmul.f32 %v4034, %v4066
    %v4131 = vmul.f32 %v4035, %v4067
    %v4132 = vmul.f32 %v4036, %v4068
    %v4133 = vmul.f32 %v4037, %v4069
    %v4134 = vmul.f32 %v4038, %v4070
    %v4135 = vmul.f32 %v4039, %v4071
    %v4136 = vmul.f32 %v4040, %v4072
    %v4137 = vmul.f32 %v4041, %v4073
    %v4138 = vmul.f32 %v4042, %v4074
    %v4139 = vmul.f32 %v4043, %v4075
    %v4140 = vmul.f32 %v4044, %v4076
    %v4141 = vmul.f32 %v4045, %v4077
    %v4142 = vmul.f32 %v4046, %v4078
    %v4143 = vmul.f32 %v4047, %v4079
    %v4144 = vmul.f32 %v4048, %v4080
    %v4145 = vmul.f32 %v4049, %v4081
    %v4146 = vmul.f32 %v4050, %v4082
    %v4147 = vmul.f32 %v4051, %v4083
    %v4148 = vmul.f32 %v4052, %v4084
    %v4149 = vmul.f32 %v4053, %v4085
    %v4150 = vmul.f32 %v4054, %v4086
    %v4151 = vmul.f32 %v4055, %v4087
    %v4152 = vmul.f32 %v4056, %v4088
    %v4153 = vmul.f32 %v4057, %v4089
    %v4154 = vmul.f32 %v4058, %v4090
    %v4155 = vmul.f32 %v4059, %v4091
    %v4156 = vmul.f32 %v4060, %v4092
    %v4157 = vmul.f32 %v4061, %v4093
    %v4158 = vmul.f32 %v4062, %v4094
    %v4159 = vmul.f32 %v4063, %v4095
    %v4160 = vmul.f32 %v4064, %v4096
    %v4161 = vld [vmem:[#allocation3 + $0x10] sm:$0x30]
    %v4162 = vld [vmem:[#allocation3 + $0x18] sm:$0x30]
    %v4163 = vld [vmem:[#allocation3 + $0x30] sm:$0x30]
    %v4164 = vld [vmem:[#allocation3 + $0x38] sm:$0x30]
    %v4165 = vld [vmem:[#allocation3 + $0x50] sm:$0x30]
    %v4166 = vld [vmem:[#allocation3 + $0x58] sm:$0x30]
    %v4167 = vld [vmem:[#allocation3 + $0x70] sm:$0x30]
    %v4168 = vld [vmem:[#allocation3 + $0x78] sm:$0x30]
    %v4169 = vld [vmem:[#allocation3 + $0x90] sm:$0x30]
    %v4170 = vld [vmem:[#allocation3 + $0x98] sm:$0x30]
    %v4171 = vld [vmem:[#allocation3 + $0xb0] sm:$0x30]
    %v4172 = vld [vmem:[#allocation3 + $0xb8] sm:$0x30]
    %v4173 = vld [vmem:[#allocation3 + $0xd0] sm:$0x30]
    %v4174 = vld [vmem:[#allocation3 + $0xd8] sm:$0x30]
    %v4175 = vld [vmem:[#allocation3 + $0xf0] sm:$0x30]
    %v4176 = vld [vmem:[#allocation3 + $0xf8] sm:$0x30]
    %v4177 = vld [vmem:[#allocation3 + $0x110] sm:$0x30]
    %v4178 = vld [vmem:[#allocation3 + $0x118] sm:$0x30]
    %v4179 = vld [vmem:[#allocation3 + $0x130] sm:$0x30]
    %v4180 = vld [vmem:[#allocation3 + $0x138] sm:$0x30]
    %v4181 = vld [vmem:[#allocation3 + $0x150] sm:$0x30]
    %v4182 = vld [vmem:[#allocation3 + $0x158] sm:$0x30]
    %v4183 = vld [vmem:[#allocation3 + $0x170] sm:$0x30]
    %v4184 = vld [vmem:[#allocation3 + $0x178] sm:$0x30]
    %v4185 = vld [vmem:[#allocation3 + $0x190] sm:$0x30]
    %v4186 = vld [vmem:[#allocation3 + $0x198] sm:$0x30]
    %v4187 = vld [vmem:[#allocation3 + $0x1b0] sm:$0x30]
    %v4188 = vld [vmem:[#allocation3 + $0x1b8] sm:$0x30]
    %v4189 = vld [vmem:[#allocation3 + $0x1d0] sm:$0x30]
    %v4190 = vld [vmem:[#allocation3 + $0x1d8] sm:$0x30]
    %v4191 = vld [vmem:[#allocation3 + $0x1f0] sm:$0x30]
    %v4192 = vld [vmem:[#allocation3 + $0x1f8] sm:$0x30]
    %v4193 = vadd.f32 %v4129, %v4161
    %v4194 = vadd.f32 %v4130, %v4162
    %v4195 = vadd.f32 %v4131, %v4163
    %v4196 = vadd.f32 %v4132, %v4164
    %v4197 = vadd.f32 %v4133, %v4165
    %v4198 = vadd.f32 %v4134, %v4166
    %v4199 = vadd.f32 %v4135, %v4167
    %v4200 = vadd.f32 %v4136, %v4168
    %v4201 = vadd.f32 %v4137, %v4169
    %v4202 = vadd.f32 %v4138, %v4170
    %v4203 = vadd.f32 %v4139, %v4171
    %v4204 = vadd.f32 %v4140, %v4172
    %v4205 = vadd.f32 %v4141, %v4173
    %v4206 = vadd.f32 %v4142, %v4174
    %v4207 = vadd.f32 %v4143, %v4175
    %v4208 = vadd.f32 %v4144, %v4176
    %v4209 = vadd.f32 %v4145, %v4177
    %v4210 = vadd.f32 %v4146, %v4178
    %v4211 = vadd.f32 %v4147, %v4179
    %v4212 = vadd.f32 %v4148, %v4180
    %v4213 = vadd.f32 %v4149, %v4181
    %v4214 = vadd.f32 %v4150, %v4182
    %v4215 = vadd.f32 %v4151, %v4183
    %v4216 = vadd.f32 %v4152, %v4184
    %v4217 = vadd.f32 %v4153, %v4185
    %v4218 = vadd.f32 %v4154, %v4186
    %v4219 = vadd.f32 %v4155, %v4187
    %v4220 = vadd.f32 %v4156, %v4188
    %v4221 = vadd.f32 %v4157, %v4189
    %v4222 = vadd.f32 %v4158, %v4190
    %v4223 = vadd.f32 %v4159, %v4191
    %v4224 = vadd.f32 %v4160, %v4192
    %v4225 = vld [vmem:[#allocation4 + $0xc] sm:$0x3]
    %4227 = vset.pattern.permute.xlu0 0
    %4228 = vperm.xlu0 %4227, %v4225
    %v4229 = vpop.permute.xlu0 %4228
    %v4233 = vrot.slane %v4193, 4
    %v4234 = vrot.slane %v4194, 4
    %v4237 = vmul.f32 %v4229, %v4233
    %v4238 = vmul.f32 %v4229, %v4234
    %4239 = vset.pattern.permute.xlu0 1
    %4240 = vperm.xlu0 %4239, %v4225
    %v4241 = vpop.permute.xlu0 %4240
    %v4245 = vrot.slane %v4195, 4
    %v4246 = vrot.slane %v4196, 4
    %v4249 = vmul.f32 %v4241, %v4245
    %v4250 = vmul.f32 %v4241, %v4246
    %v4251 = vadd.f32 %v4237, %v4249
    %v4252 = vadd.f32 %v4238, %v4250
    %4253 = vset.pattern.permute.xlu0 2
    %4254 = vperm.xlu0 %4253, %v4225
    %v4255 = vpop.permute.xlu0 %4254
    %v4259 = vrot.slane %v4197, 4
    %v4260 = vrot.slane %v4198, 4
    %v4263 = vmul.f32 %v4255, %v4259
    %v4264 = vmul.f32 %v4255, %v4260
    %v4265 = vadd.f32 %v4251, %v4263
    %v4266 = vadd.f32 %v4252, %v4264
    %4267 = vset.pattern.permute.xlu0 3
    %4268 = vperm.xlu0 %4267, %v4225
    %v4269 = vpop.permute.xlu0 %4268
    %v4273 = vrot.slane %v4199, 4
    %v4274 = vrot.slane %v4200, 4
    %v4277 = vmul.f32 %v4269, %v4273
    %v4278 = vmul.f32 %v4269, %v4274
    %v4279 = vadd.f32 %v4265, %v4277
    %v4280 = vadd.f32 %v4266, %v4278
    %4281 = vset.pattern.permute.xlu0 4
    %4282 = vperm.xlu0 %4281, %v4225
    %v4283 = vpop.permute.xlu0 %4282
    %v4287 = vrot.slane %v4201, 4
    %v4288 = vrot.slane %v4202, 4
    %v4291 = vmul.f32 %v4283, %v4287
    %v4292 = vmul.f32 %v4283, %v4288
    %v4293 = vadd.f32 %v4279, %v4291
    %v4294 = vadd.f32 %v4280, %v4292
    %4295 = vset.pattern.permute.xlu0 5
    %4296 = vperm.xlu0 %4295, %v4225
    %v4297 = vpop.permute.xlu0 %4296
    %v4301 = vrot.slane %v4203, 4
    %v4302 = vrot.slane %v4204, 4
    %v4305 = vmul.f32 %v4297, %v4301
    %v4306 = vmul.f32 %v4297, %v4302
    %v4307 = vadd.f32 %v4293, %v4305
    %v4308 = vadd.f32 %v4294, %v4306
    %4309 = vset.pattern.permute.xlu0 6
    %4310 = vperm.xlu0 %4309, %v4225
    %v4311 = vpop.permute.xlu0 %4310
    %v4315 = vrot.slane %v4205, 4
    %v4316 = vrot.slane %v4206, 4
    %v4319 = vmul.f32 %v4311, %v4315
    %v4320 = vmul.f32 %v4311, %v4316
    %v4321 = vadd.f32 %v4307, %v4319
    %v4322 = vadd.f32 %v4308, %v4320
    %4323 = vset.pattern.permute.xlu0 7
    %4324 = vperm.xlu0 %4323, %v4225
    %v4325 = vpop.permute.xlu0 %4324
    %v4329 = vrot.slane %v4207, 4
    %v4330 = vrot.slane %v4208, 4
    %v4333 = vmul.f32 %v4325, %v4329
    %v4334 = vmul.f32 %v4325, %v4330
    %v4335 = vadd.f32 %v4321, %v4333
    %v4336 = vadd.f32 %v4322, %v4334
    %4337 = vset.pattern.permute.xlu0 8
    %4338 = vperm.xlu0 %4337, %v4225
    %v4339 = vpop.permute.xlu0 %4338
    %v4343 = vrot.slane %v4209, 4
    %v4344 = vrot.slane %v4210, 4
    %v4347 = vmul.f32 %v4339, %v4343
    %v4348 = vmul.f32 %v4339, %v4344
    %v4349 = vadd.f32 %v4335, %v4347
    %v4350 = vadd.f32 %v4336, %v4348
    %4351 = vset.pattern.permute.xlu0 9
    %4352 = vperm.xlu0 %4351, %v4225
    %v4353 = vpop.permute.xlu0 %4352
    %v4357 = vrot.slane %v4211, 4
    %v4358 = vrot.slane %v4212, 4
    %v4361 = vmul.f32 %v4353, %v4357
    %v4362 = vmul.f32 %v4353, %v4358
    %v4363 = vadd.f32 %v4349, %v4361
    %v4364 = vadd.f32 %v4350, %v4362
    %4365 = vset.pattern.permute.xlu0 10
    %4366 = vperm.xlu0 %4365, %v4225
    %v4367 = vpop.permute.xlu0 %4366
    %v4371 = vrot.slane %v4213, 4
    %v4372 = vrot.slane %v4214, 4
    %v4375 = vmul.f32 %v4367, %v4371
    %v4376 = vmul.f32 %v4367, %v4372
    %v4377 = vadd.f32 %v4363, %v4375
    %v4378 = vadd.f32 %v4364, %v4376
    %4379 = vset.pattern.permute.xlu0 11
    %4380 = vperm.xlu0 %4379, %v4225
    %v4381 = vpop.permute.xlu0 %4380
    %v4385 = vrot.slane %v4215, 4
    %v4386 = vrot.slane %v4216, 4
    %v4389 = vmul.f32 %v4381, %v4385
    %v4390 = vmul.f32 %v4381, %v4386
    %v4391 = vadd.f32 %v4377, %v4389
    %v4392 = vadd.f32 %v4378, %v4390
    %4393 = vset.pattern.permute.xlu0 12
    %4394 = vperm.xlu0 %4393, %v4225
    %v4395 = vpop.permute.xlu0 %4394
    %v4399 = vrot.slane %v4217, 4
    %v4400 = vrot.slane %v4218, 4
    %v4403 = vmul.f32 %v4395, %v4399
    %v4404 = vmul.f32 %v4395, %v4400
    %v4405 = vadd.f32 %v4391, %v4403
    %v4406 = vadd.f32 %v4392, %v4404
    %4407 = vset.pattern.permute.xlu0 13
    %4408 = vperm.xlu0 %4407, %v4225
    %v4409 = vpop.permute.xlu0 %4408
    %v4413 = vrot.slane %v4219, 4
    %v4414 = vrot.slane %v4220, 4
    %v4417 = vmul.f32 %v4409, %v4413
    %v4418 = vmul.f32 %v4409, %v4414
    %v4419 = vadd.f32 %v4405, %v4417
    %v4420 = vadd.f32 %v4406, %v4418
    %4421 = vset.pattern.permute.xlu0 14
    %4422 = vperm.xlu0 %4421, %v4225
    %v4423 = vpop.permute.xlu0 %4422
    %v4427 = vrot.slane %v4221, 4
    %v4428 = vrot.slane %v4222, 4
    %v4431 = vmul.f32 %v4423, %v4427
    %v4432 = vmul.f32 %v4423, %v4428
    %v4433 = vadd.f32 %v4419, %v4431
    %v4434 = vadd.f32 %v4420, %v4432
    %4435 = vset.pattern.permute.xlu0 15
    %4436 = vperm.xlu0 %4435, %v4225
    %v4437 = vpop.permute.xlu0 %4436
    %v4441 = vrot.slane %v4223, 4
    %v4442 = vrot.slane %v4224, 4
    %v4445 = vmul.f32 %v4437, %v4441
    %v4446 = vmul.f32 %v4437, %v4442
    %v4447 = vadd.f32 %v4433, %v4445
    %v4448 = vadd.f32 %v4434, %v4446
    %v4451 = vrot.slane %v4447, 4
    %v4452 = vrot.slane %v4448, 4
    %4455 = vst [vmem:[#allocation5 + $0x10] sm:$0x30] %v4451
    %4456 = vst [vmem:[#allocation5 + $0x18] sm:$0x30] %v4452
    %v4457 = vld [vmem:[#allocation2 + $0x10] sm:$0xc0]
    %v4458 = vld [vmem:[#allocation2 + $0x18] sm:$0xc0]
    %v4459 = vld [vmem:[#allocation2 + $0x30] sm:$0xc0]
    %v4460 = vld [vmem:[#allocation2 + $0x38] sm:$0xc0]
    %v4461 = vld [vmem:[#allocation2 + $0x50] sm:$0xc0]
    %v4462 = vld [vmem:[#allocation2 + $0x58] sm:$0xc0]
    %v4463 = vld [vmem:[#allocation2 + $0x70] sm:$0xc0]
    %v4464 = vld [vmem:[#allocation2 + $0x78] sm:$0xc0]
    %v4465 = vld [vmem:[#allocation2 + $0x90] sm:$0xc0]
    %v4466 = vld [vmem:[#allocation2 + $0x98] sm:$0xc0]
    %v4467 = vld [vmem:[#allocation2 + $0xb0] sm:$0xc0]
    %v4468 = vld [vmem:[#allocation2 + $0xb8] sm:$0xc0]
    %v4469 = vld [vmem:[#allocation2 + $0xd0] sm:$0xc0]
    %v4470 = vld [vmem:[#allocation2 + $0xd8] sm:$0xc0]
    %v4471 = vld [vmem:[#allocation2 + $0xf0] sm:$0xc0]
    %v4472 = vld [vmem:[#allocation2 + $0xf8] sm:$0xc0]
    %v4473 = vld [vmem:[#allocation2 + $0x110] sm:$0xc0]
    %v4474 = vld [vmem:[#allocation2 + $0x118] sm:$0xc0]
    %v4475 = vld [vmem:[#allocation2 + $0x130] sm:$0xc0]
    %v4476 = vld [vmem:[#allocation2 + $0x138] sm:$0xc0]
    %v4477 = vld [vmem:[#allocation2 + $0x150] sm:$0xc0]
    %v4478 = vld [vmem:[#allocation2 + $0x158] sm:$0xc0]
    %v4479 = vld [vmem:[#allocation2 + $0x170] sm:$0xc0]
    %v4480 = vld [vmem:[#allocation2 + $0x178] sm:$0xc0]
    %v4481 = vld [vmem:[#allocation2 + $0x190] sm:$0xc0]
    %v4482 = vld [vmem:[#allocation2 + $0x198] sm:$0xc0]
    %v4483 = vld [vmem:[#allocation2 + $0x1b0] sm:$0xc0]
    %v4484 = vld [vmem:[#allocation2 + $0x1b8] sm:$0xc0]
    %v4485 = vld [vmem:[#allocation2 + $0x1d0] sm:$0xc0]
    %v4486 = vld [vmem:[#allocation2 + $0x1d8] sm:$0xc0]
    %v4487 = vld [vmem:[#allocation2 + $0x1f0] sm:$0xc0]
    %v4488 = vld [vmem:[#allocation2 + $0x1f8] sm:$0xc0]
    %v4489 = vrot.slane %v4193, 6
    %v4490 = vrot.slane %v4194, 6
    %v4491 = vrot.slane %v4195, 6
    %v4492 = vrot.slane %v4196, 6
    %v4493 = vrot.slane %v4197, 6
    %v4494 = vrot.slane %v4198, 6
    %v4495 = vrot.slane %v4199, 6
    %v4496 = vrot.slane %v4200, 6
    %v4497 = vrot.slane %v4201, 6
    %v4498 = vrot.slane %v4202, 6
    %v4499 = vrot.slane %v4203, 6
    %v4500 = vrot.slane %v4204, 6
    %v4501 = vrot.slane %v4205, 6
    %v4502 = vrot.slane %v4206, 6
    %v4503 = vrot.slane %v4207, 6
    %v4504 = vrot.slane %v4208, 6
    %v4505 = vrot.slane %v4209, 6
    %v4506 = vrot.slane %v4210, 6
    %v4507 = vrot.slane %v4211, 6
    %v4508 = vrot.slane %v4212, 6
    %v4509 = vrot.slane %v4213, 6
    %v4510 = vrot.slane %v4214, 6
    %v4511 = vrot.slane %v4215, 6
    %v4512 = vrot.slane %v4216, 6
    %v4513 = vrot.slane %v4217, 6
    %v4514 = vrot.slane %v4218, 6
    %v4515 = vrot.slane %v4219, 6
    %v4516 = vrot.slane %v4220, 6
    %v4517 = vrot.slane %v4221, 6
    %v4518 = vrot.slane %v4222, 6
    %v4519 = vrot.slane %v4223, 6
    %v4520 = vrot.slane %v4224, 6
    %v4553 = vmul.f32 %v4457, %v4489
    %v4554 = vmul.f32 %v4458, %v4490
    %v4555 = vmul.f32 %v4459, %v4491
    %v4556 = vmul.f32 %v4460, %v4492
    %v4557 = vmul.f32 %v4461, %v4493
    %v4558 = vmul.f32 %v4462, %v4494
    %v4559 = vmul.f32 %v4463, %v4495
    %v4560 = vmul.f32 %v4464, %v4496
    %v4561 = vmul.f32 %v4465, %v4497
    %v4562 = vmul.f32 %v4466, %v4498
    %v4563 = vmul.f32 %v4467, %v4499
    %v4564 = vmul.f32 %v4468, %v4500
    %v4565 = vmul.f32 %v4469, %v4501
    %v4566 = vmul.f32 %v4470, %v4502
    %v4567 = vmul.f32 %v4471, %v4503
    %v4568 = vmul.f32 %v4472, %v4504
    %v4569 = vmul.f32 %v4473, %v4505
    %v4570 = vmul.f32 %v4474, %v4506
    %v4571 = vmul.f32 %v4475, %v4507
    %v4572 = vmul.f32 %v4476, %v4508
    %v4573 = vmul.f32 %v4477, %v4509
    %v4574 = vmul.f32 %v4478, %v4510
    %v4575 = vmul.f32 %v4479, %v4511
    %v4576 = vmul.f32 %v4480, %v4512
    %v4577 = vmul.f32 %v4481, %v4513
    %v4578 = vmul.f32 %v4482, %v4514
    %v4579 = vmul.f32 %v4483, %v4515
    %v4580 = vmul.f32 %v4484, %v4516
    %v4581 = vmul.f32 %v4485, %v4517
    %v4582 = vmul.f32 %v4486, %v4518
    %v4583 = vmul.f32 %v4487, %v4519
    %v4584 = vmul.f32 %v4488, %v4520
    %v4585 = vld [vmem:[#allocation3 + $0x10] sm:$0xc0]
    %v4586 = vld [vmem:[#allocation3 + $0x18] sm:$0xc0]
    %v4587 = vld [vmem:[#allocation3 + $0x30] sm:$0xc0]
    %v4588 = vld [vmem:[#allocation3 + $0x38] sm:$0xc0]
    %v4589 = vld [vmem:[#allocation3 + $0x50] sm:$0xc0]
    %v4590 = vld [vmem:[#allocation3 + $0x58] sm:$0xc0]
    %v4591 = vld [vmem:[#allocation3 + $0x70] sm:$0xc0]
    %v4592 = vld [vmem:[#allocation3 + $0x78] sm:$0xc0]
    %v4593 = vld [vmem:[#allocation3 + $0x90] sm:$0xc0]
    %v4594 = vld [vmem:[#allocation3 + $0x98] sm:$0xc0]
    %v4595 = vld [vmem:[#allocation3 + $0xb0] sm:$0xc0]
    %v4596 = vld [vmem:[#allocation3 + $0xb8] sm:$0xc0]
    %v4597 = vld [vmem:[#allocation3 + $0xd0] sm:$0xc0]
    %v4598 = vld [vmem:[#allocation3 + $0xd8] sm:$0xc0]
    %v4599 = vld [vmem:[#allocation3 + $0xf0] sm:$0xc0]
    %v4600 = vld [vmem:[#allocation3 + $0xf8] sm:$0xc0]
    %v4601 = vld [vmem:[#allocation3 + $0x110] sm:$0xc0]
    %v4602 = vld [vmem:[#allocation3 + $0x118] sm:$0xc0]
    %v4603 = vld [vmem:[#allocation3 + $0x130] sm:$0xc0]
    %v4604 = vld [vmem:[#allocation3 + $0x138] sm:$0xc0]
    %v4605 = vld [vmem:[#allocation3 + $0x150] sm:$0xc0]
    %v4606 = vld [vmem:[#allocation3 + $0x158] sm:$0xc0]
    %v4607 = vld [vmem:[#allocation3 + $0x170] sm:$0xc0]
    %v4608 = vld [vmem:[#allocation3 + $0x178] sm:$0xc0]
    %v4609 = vld [vmem:[#allocation3 + $0x190] sm:$0xc0]
    %v4610 = vld [vmem:[#allocation3 + $0x198] sm:$0xc0]
    %v4611 = vld [vmem:[#allocation3 + $0x1b0] sm:$0xc0]
    %v4612 = vld [vmem:[#allocation3 + $0x1b8] sm:$0xc0]
    %v4613 = vld [vmem:[#allocation3 + $0x1d0] sm:$0xc0]
    %v4614 = vld [vmem:[#allocation3 + $0x1d8] sm:$0xc0]
    %v4615 = vld [vmem:[#allocation3 + $0x1f0] sm:$0xc0]
    %v4616 = vld [vmem:[#allocation3 + $0x1f8] sm:$0xc0]
    %v4617 = vadd.f32 %v4553, %v4585
    %v4618 = vadd.f32 %v4554, %v4586
    %v4619 = vadd.f32 %v4555, %v4587
    %v4620 = vadd.f32 %v4556, %v4588
    %v4621 = vadd.f32 %v4557, %v4589
    %v4622 = vadd.f32 %v4558, %v4590
    %v4623 = vadd.f32 %v4559, %v4591
    %v4624 = vadd.f32 %v4560, %v4592
    %v4625 = vadd.f32 %v4561, %v4593
    %v4626 = vadd.f32 %v4562, %v4594
    %v4627 = vadd.f32 %v4563, %v4595
    %v4628 = vadd.f32 %v4564, %v4596
    %v4629 = vadd.f32 %v4565, %v4597
    %v4630 = vadd.f32 %v4566, %v4598
    %v4631 = vadd.f32 %v4567, %v4599
    %v4632 = vadd.f32 %v4568, %v4600
    %v4633 = vadd.f32 %v4569, %v4601
    %v4634 = vadd.f32 %v4570, %v4602
    %v4635 = vadd.f32 %v4571, %v4603
    %v4636 = vadd.f32 %v4572, %v4604
    %v4637 = vadd.f32 %v4573, %v4605
    %v4638 = vadd.f32 %v4574, %v4606
    %v4639 = vadd.f32 %v4575, %v4607
    %v4640 = vadd.f32 %v4576, %v4608
    %v4641 = vadd.f32 %v4577, %v4609
    %v4642 = vadd.f32 %v4578, %v4610
    %v4643 = vadd.f32 %v4579, %v4611
    %v4644 = vadd.f32 %v4580, %v4612
    %v4645 = vadd.f32 %v4581, %v4613
    %v4646 = vadd.f32 %v4582, %v4614
    %v4647 = vadd.f32 %v4583, %v4615
    %v4648 = vadd.f32 %v4584, %v4616
    %v4649 = vld [vmem:[#allocation4 + $0xe] sm:$0x3]
    %4651 = vset.pattern.permute.xlu0 0
    %4652 = vperm.xlu0 %4651, %v4649
    %v4653 = vpop.permute.xlu0 %4652
    %v4657 = vrot.slane %v4617, 6
    %v4658 = vrot.slane %v4618, 6
    %v4661 = vmul.f32 %v4653, %v4657
    %v4662 = vmul.f32 %v4653, %v4658
    %4663 = vset.pattern.permute.xlu0 1
    %4664 = vperm.xlu0 %4663, %v4649
    %v4665 = vpop.permute.xlu0 %4664
    %v4669 = vrot.slane %v4619, 6
    %v4670 = vrot.slane %v4620, 6
    %v4673 = vmul.f32 %v4665, %v4669
    %v4674 = vmul.f32 %v4665, %v4670
    %v4675 = vadd.f32 %v4661, %v4673
    %v4676 = vadd.f32 %v4662, %v4674
    %4677 = vset.pattern.permute.xlu0 2
    %4678 = vperm.xlu0 %4677, %v4649
    %v4679 = vpop.permute.xlu0 %4678
    %v4683 = vrot.slane %v4621, 6
    %v4684 = vrot.slane %v4622, 6
    %v4687 = vmul.f32 %v4679, %v4683
    %v4688 = vmul.f32 %v4679, %v4684
    %v4689 = vadd.f32 %v4675, %v4687
    %v4690 = vadd.f32 %v4676, %v4688
    %4691 = vset.pattern.permute.xlu0 3
    %4692 = vperm.xlu0 %4691, %v4649
    %v4693 = vpop.permute.xlu0 %4692
    %v4697 = vrot.slane %v4623, 6
    %v4698 = vrot.slane %v4624, 6
    %v4701 = vmul.f32 %v4693, %v4697
    %v4702 = vmul.f32 %v4693, %v4698
    %v4703 = vadd.f32 %v4689, %v4701
    %v4704 = vadd.f32 %v4690, %v4702
    %4705 = vset.pattern.permute.xlu0 4
    %4706 = vperm.xlu0 %4705, %v4649
    %v4707 = vpop.permute.xlu0 %4706
    %v4711 = vrot.slane %v4625, 6
    %v4712 = vrot.slane %v4626, 6
    %v4715 = vmul.f32 %v4707, %v4711
    %v4716 = vmul.f32 %v4707, %v4712
    %v4717 = vadd.f32 %v4703, %v4715
    %v4718 = vadd.f32 %v4704, %v4716
    %4719 = vset.pattern.permute.xlu0 5
    %4720 = vperm.xlu0 %4719, %v4649
    %v4721 = vpop.permute.xlu0 %4720
    %v4725 = vrot.slane %v4627, 6
    %v4726 = vrot.slane %v4628, 6
    %v4729 = vmul.f32 %v4721, %v4725
    %v4730 = vmul.f32 %v4721, %v4726
    %v4731 = vadd.f32 %v4717, %v4729
    %v4732 = vadd.f32 %v4718, %v4730
    %4733 = vset.pattern.permute.xlu0 6
    %4734 = vperm.xlu0 %4733, %v4649
    %v4735 = vpop.permute.xlu0 %4734
    %v4739 = vrot.slane %v4629, 6
    %v4740 = vrot.slane %v4630, 6
    %v4743 = vmul.f32 %v4735, %v4739
    %v4744 = vmul.f32 %v4735, %v4740
    %v4745 = vadd.f32 %v4731, %v4743
    %v4746 = vadd.f32 %v4732, %v4744
    %4747 = vset.pattern.permute.xlu0 7
    %4748 = vperm.xlu0 %4747, %v4649
    %v4749 = vpop.permute.xlu0 %4748
    %v4753 = vrot.slane %v4631, 6
    %v4754 = vrot.slane %v4632, 6
    %v4757 = vmul.f32 %v4749, %v4753
    %v4758 = vmul.f32 %v4749, %v4754
    %v4759 = vadd.f32 %v4745, %v4757
    %v4760 = vadd.f32 %v4746, %v4758
    %4761 = vset.pattern.permute.xlu0 8
    %4762 = vperm.xlu0 %4761, %v4649
    %v4763 = vpop.permute.xlu0 %4762
    %v4767 = vrot.slane %v4633, 6
    %v4768 = vrot.slane %v4634, 6
    %v4771 = vmul.f32 %v4763, %v4767
    %v4772 = vmul.f32 %v4763, %v4768
    %v4773 = vadd.f32 %v4759, %v4771
    %v4774 = vadd.f32 %v4760, %v4772
    %4775 = vset.pattern.permute.xlu0 9
    %4776 = vperm.xlu0 %4775, %v4649
    %v4777 = vpop.permute.xlu0 %4776
    %v4781 = vrot.slane %v4635, 6
    %v4782 = vrot.slane %v4636, 6
    %v4785 = vmul.f32 %v4777, %v4781
    %v4786 = vmul.f32 %v4777, %v4782
    %v4787 = vadd.f32 %v4773, %v4785
    %v4788 = vadd.f32 %v4774, %v4786
    %4789 = vset.pattern.permute.xlu0 10
    %4790 = vperm.xlu0 %4789, %v4649
    %v4791 = vpop.permute.xlu0 %4790
    %v4795 = vrot.slane %v4637, 6
    %v4796 = vrot.slane %v4638, 6
    %v4799 = vmul.f32 %v4791, %v4795
    %v4800 = vmul.f32 %v4791, %v4796
    %v4801 = vadd.f32 %v4787, %v4799
    %v4802 = vadd.f32 %v4788, %v4800
    %4803 = vset.pattern.permute.xlu0 11
    %4804 = vperm.xlu0 %4803, %v4649
    %v4805 = vpop.permute.xlu0 %4804
    %v4809 = vrot.slane %v4639, 6
    %v4810 = vrot.slane %v4640, 6
    %v4813 = vmul.f32 %v4805, %v4809
    %v4814 = vmul.f32 %v4805, %v4810
    %v4815 = vadd.f32 %v4801, %v4813
    %v4816 = vadd.f32 %v4802, %v4814
    %4817 = vset.pattern.permute.xlu0 12
    %4818 = vperm.xlu0 %4817, %v4649
    %v4819 = vpop.permute.xlu0 %4818
    %v4823 = vrot.slane %v4641, 6
    %v4824 = vrot.slane %v4642, 6
    %v4827 = vmul.f32 %v4819, %v4823
    %v4828 = vmul.f32 %v4819, %v4824
    %v4829 = vadd.f32 %v4815, %v4827
    %v4830 = vadd.f32 %v4816, %v4828
    %4831 = vset.pattern.permute.xlu0 13
    %4832 = vperm.xlu0 %4831, %v4649
    %v4833 = vpop.permute.xlu0 %4832
    %v4837 = vrot.slane %v4643, 6
    %v4838 = vrot.slane %v4644, 6
    %v4841 = vmul.f32 %v4833, %v4837
    %v4842 = vmul.f32 %v4833, %v4838
    %v4843 = vadd.f32 %v4829, %v4841
    %v4844 = vadd.f32 %v4830, %v4842
    %4845 = vset.pattern.permute.xlu0 14
    %4846 = vperm.xlu0 %4845, %v4649
    %v4847 = vpop.permute.xlu0 %4846
    %v4851 = vrot.slane %v4645, 6
    %v4852 = vrot.slane %v4646, 6
    %v4855 = vmul.f32 %v4847, %v4851
    %v4856 = vmul.f32 %v4847, %v4852
    %v4857 = vadd.f32 %v4843, %v4855
    %v4858 = vadd.f32 %v4844, %v4856
    %4859 = vset.pattern.permute.xlu0 15
    %4860 = vperm.xlu0 %4859, %v4649
    %v4861 = vpop.permute.xlu0 %4860
    %v4865 = vrot.slane %v4647, 6
    %v4866 = vrot.slane %v4648, 6
    %v4869 = vmul.f32 %v4861, %v4865
    %v4870 = vmul.f32 %v4861, %v4866
    %v4871 = vadd.f32 %v4857, %v4869
    %v4872 = vadd.f32 %v4858, %v4870
    %v4875 = vrot.slane %v4871, 2
    %v4876 = vrot.slane %v4872, 2
    %4879 = vst [vmem:[#allocation5 + $0x10] sm:$0xc0] %v4875
    %4880 = vst [vmem:[#allocation5 + $0x18] sm:$0xc0] %v4876
    %v4881 = vld [vmem:[#allocation5] sm:$0xff]
    %v4882 = vld [vmem:[#allocation5 + $0x8] sm:$0xff]
    %v4883 = vld [vmem:[#allocation5 + $0x10] sm:$0xff]
    %v4884 = vld [vmem:[#allocation5 + $0x18] sm:$0xff]
    %v4885 = vld [vmem:[%s9] sm:$0x3]
    %v4887 = vlaneseq
    %v4888 = vshrl.u32 %v4887, 7
    %v4889 = vsub.s32 0, %v4888
    %v4890 = vrot.slane %v4885, %v4889
    %v4891 = vlaneseq
    %v4892 = vshrl.u32 %v4891, 7
    %v4893 = vsub.s32 1, %v4892
    %v4894 = vrot.slane %v4885, %v4893
    %v4897 = vmul.f32 %v570, %v4890
    %v4898 = vmul.f32 %v571, %v4894
    %v4899 = vmul.f32 %v572, %v4890
    %v4900 = vmul.f32 %v573, %v4894
    %v4901 = vadd.f32 %v4881, %v4897
    %v4902 = vadd.f32 %v4882, %v4898
    %v4903 = vadd.f32 %v4883, %v4899
    %v4904 = vadd.f32 %v4884, %v4900
    %v4905 = vxor.u32 %v354, 2147483648
    %v4906 = vxor.u32 %v356, 2147483648
    %v4907 = vxor.u32 %v358, 2147483648
    %v4908 = vxor.u32 %v360, 2147483648
    %v4909 = vmul.f32 %v4905, 1.442695
    %v4910 = vpow.pop %v4909
    %v4911 = vmul.f32 %v4906, 1.442695
    %v4912 = vpow.pop %v4911
    %v4913 = vmul.f32 %v4907, 1.442695
    %v4914 = vpow.pop %v4913
    %v4915 = vmul.f32 %v4908, 1.442695
    %v4916 = vpow.pop %v4915
    %v4917 = vadd.f32 %v4910, 1.0
    %v4918 = vadd.f32 %v4912, 1.0
    %v4919 = vadd.f32 %v4914, 1.0
    %v4920 = vadd.f32 %v4916, 1.0
    %v4921 = vrcp.pop %v4917
    %v4922 = vmul.f32 1.0, %v4921
    %v4923 = vrcp.pop %v4918
    %v4924 = vmul.f32 1.0, %v4923
    %v4925 = vrcp.pop %v4919
    %v4926 = vmul.f32 1.0, %v4925
    %v4927 = vrcp.pop %v4920
    %v4928 = vmul.f32 1.0, %v4927
    %v4929 = vmul.f32 %v354, %v4922
    %v4930 = vmul.f32 %v356, %v4924
    %v4931 = vmul.f32 %v358, %v4926
    %v4932 = vmul.f32 %v360, %v4928
    %v4933 = vmul.f32 %v4901, %v4929
    %v4934 = vmul.f32 %v4902, %v4930
    %v4935 = vmul.f32 %v4903, %v4931
    %v4936 = vmul.f32 %v4904, %v4932
    %v4937 = vld [vmem:[%s10] sm:$0xf]
    %v4938 = vld [vmem:[%s10 + $0x4] sm:$0xf]
    %v4939 = vld [vmem:[%s10 + $0x8] sm:$0xf]
    %v4940 = vld [vmem:[%s10 + $0xc] sm:$0xf]
    %v4941 = vld [vmem:[%s10 + $0x10] sm:$0xf]
    %v4942 = vld [vmem:[%s10 + $0x14] sm:$0xf]
    %v4943 = vld [vmem:[%s10 + $0x18] sm:$0xf]
    %v4944 = vld [vmem:[%s10 + $0x1c] sm:$0xf]
    %v4945 = vld [vmem:[%s10 + $0x20] sm:$0xf]
    %v4946 = vld [vmem:[%s10 + $0x24] sm:$0xf]
    %v4947 = vld [vmem:[%s10 + $0x28] sm:$0xf]
    %v4948 = vld [vmem:[%s10 + $0x2c] sm:$0xf]
    %v4949 = vld [vmem:[%s10 + $0x30] sm:$0xf]
    %v4950 = vld [vmem:[%s10 + $0x34] sm:$0xf]
    %v4951 = vld [vmem:[%s10 + $0x38] sm:$0xf]
    %v4952 = vld [vmem:[%s10 + $0x3c] sm:$0xf]
    %v4953 = vld [vmem:[%s10 + $0x40] sm:$0xf]
    %v4954 = vld [vmem:[%s10 + $0x44] sm:$0xf]
    %v4955 = vld [vmem:[%s10 + $0x48] sm:$0xf]
    %v4956 = vld [vmem:[%s10 + $0x4c] sm:$0xf]
    %v4957 = vld [vmem:[%s10 + $0x50] sm:$0xf]
    %v4958 = vld [vmem:[%s10 + $0x54] sm:$0xf]
    %v4959 = vld [vmem:[%s10 + $0x58] sm:$0xf]
    %v4960 = vld [vmem:[%s10 + $0x5c] sm:$0xf]
    %v4961 = vld [vmem:[%s10 + $0x60] sm:$0xf]
    %v4962 = vld [vmem:[%s10 + $0x64] sm:$0xf]
    %v4963 = vld [vmem:[%s10 + $0x68] sm:$0xf]
    %v4964 = vld [vmem:[%s10 + $0x6c] sm:$0xf]
    %v4965 = vld [vmem:[%s10 + $0x70] sm:$0xf]
    %v4966 = vld [vmem:[%s10 + $0x74] sm:$0xf]
    %v4967 = vld [vmem:[%s10 + $0x78] sm:$0xf]
    %v4968 = vld [vmem:[%s10 + $0x7c] sm:$0xf]
    %v4969 = vpack.c.bf16 %v4935, %v4933
    %v4970 = vpack.c.bf16 %v4936, %v4934
    %v5003 = vunpack.c.l.b16 %v4937
    %v5004 = vunpack.c.l.b16 %v4938
    %v5005 = vunpack.c.l.b16 %v4939
    %v5006 = vunpack.c.l.b16 %v4940
    %v5007 = vunpack.c.l.b16 %v4941
    %v5008 = vunpack.c.l.b16 %v4942
    %v5009 = vunpack.c.l.b16 %v4943
    %v5010 = vunpack.c.l.b16 %v4944
    %v5011 = vunpack.c.l.b16 %v4945
    %v5012 = vunpack.c.l.b16 %v4946
    %v5013 = vunpack.c.l.b16 %v4947
    %v5014 = vunpack.c.l.b16 %v4948
    %v5015 = vunpack.c.l.b16 %v4949
    %v5016 = vunpack.c.l.b16 %v4950
    %v5017 = vunpack.c.l.b16 %v4951
    %v5018 = vunpack.c.l.b16 %v4952
    %v5019 = vunpack.c.l.b16 %v4953
    %v5020 = vunpack.c.l.b16 %v4954
    %v5021 = vunpack.c.l.b16 %v4955
    %v5022 = vunpack.c.l.b16 %v4956
    %v5023 = vunpack.c.l.b16 %v4957
    %v5024 = vunpack.c.l.b16 %v4958
    %v5025 = vunpack.c.l.b16 %v4959
    %v5026 = vunpack.c.l.b16 %v4960
    %v5027 = vunpack.c.l.b16 %v4961
    %v5028 = vunpack.c.l.b16 %v4962
    %v5029 = vunpack.c.l.b16 %v4963
    %v5030 = vunpack.c.l.b16 %v4964
    %v5031 = vunpack.c.l.b16 %v4965
    %v5032 = vunpack.c.l.b16 %v4966
    %v5033 = vunpack.c.l.b16 %v4967
    %v5034 = vunpack.c.l.b16 %v4968
    %v5035 = vpack.c.b16 %v5004, %v5003
    %v5036 = vpack.c.b16 %v5006, %v5005
    %v5037 = vpack.c.b16 %v5008, %v5007
    %v5038 = vpack.c.b16 %v5010, %v5009
    %v5039 = vpack.c.b16 %v5012, %v5011
    %v5040 = vpack.c.b16 %v5014, %v5013
    %v5041 = vpack.c.b16 %v5016, %v5015
    %v5042 = vpack.c.b16 %v5018, %v5017
    %v5043 = vpack.c.b16 %v5020, %v5019
    %v5044 = vpack.c.b16 %v5022, %v5021
    %v5045 = vpack.c.b16 %v5024, %v5023
    %v5046 = vpack.c.b16 %v5026, %v5025
    %v5047 = vpack.c.b16 %v5028, %v5027
    %v5048 = vpack.c.b16 %v5030, %v5029
    %v5049 = vpack.c.b16 %v5032, %v5031
    %v5050 = vpack.c.b16 %v5034, %v5033
    %5067 = vmatprep.subr.bf16.mxu0 0
    %5068 = vmatpush1.bf16.msra.mxu0 %v5042
    %5069 = vmatprep.subr.bf16.mxu0 0
    %5070 = vmatpush1.bf16.msra.mxu0 %v5041
    %5071 = vmatprep.subr.bf16.mxu0 0
    %5072 = vmatpush1.bf16.msra.mxu0 %v5040
    %5073 = vmatprep.subr.bf16.mxu0 0
    %5074 = vmatpush1.bf16.msra.mxu0 %v5039
    %5075 = vmatprep.subr.bf16.mxu0 0
    %5076 = vmatpush1.bf16.msra.mxu0 %v5038
    %5077 = vmatprep.subr.bf16.mxu0 0
    %5078 = vmatpush1.bf16.msra.mxu0 %v5037
    %5079 = vmatprep.subr.bf16.mxu0 0
    %5080 = vmatpush1.bf16.msra.mxu0 %v5036
    %5081 = vmatprep.subr.bf16.mxu0 0
    %5082 = vmatpush1.bf16.msra.mxu0 %v5035
    %5083 = vmatprep.subr.bf16.mxu0 0
    %5084 = vmatpush2.bf16.msra.mxu0 %v5050
    %5085 = vmatprep.subr.bf16.mxu0 0
    %5086 = vmatpush2.bf16.msra.mxu0 %v5049
    %5087 = vmatprep.subr.bf16.mxu0 0
    %5088 = vmatpush2.bf16.msra.mxu0 %v5048
    %5089 = vmatprep.subr.bf16.mxu0 0
    %5090 = vmatpush2.bf16.msra.mxu0 %v5047
    %5091 = vmatprep.subr.bf16.mxu0 0
    %5092 = vmatpush2.bf16.msra.mxu0 %v5046
    %5093 = vmatprep.subr.bf16.mxu0 0
    %5094 = vmatpush2.bf16.msra.mxu0 %v5045
    %5095 = vmatprep.subr.bf16.mxu0 0
    %5096 = vmatpush2.bf16.msra.mxu0 %v5044
    %5097 = vmatprep.subr.bf16.mxu0 0
    %5098 = vmatpush2.bf16.msra.mxu0 %v5043
    %5099 = vmatprep.mubr.bf16.mxu0 %v4970
    %5100 = vmatmul.mubr.bf16.gmra.mxu0 %v4969
    %v5101 = vpop.f32.mrf.mxu0
    %v5102 = vadd.f32 0.0, %v5101
    %v5103 = vpop.f32.mrf.mxu0
    %v5104 = vpop.f32.mrf.mxu0
    %v5105 = vadd.f32 0.0, %v5104
    %v5106 = vpop.f32.mrf.mxu0
    %5107 = vdwg.mxu0
    %5108 = vst [vmem:[#allocation6] sm:$0xff] %v5102
    %5109 = vst [vmem:[#allocation6 + $0x8] sm:$0xff] %v5105
    // Predicated region
    $region46: #{tpu_custom_call.1} parent=1 // pred_check
      _
    $region47: #{tpu_custom_call.1} parent=1 // pred_check_branch
      %5111 = sbr.rel (0) target = $region49
    $region48: #{tpu_custom_call.1} parent=1 // pred_region
      %s5113 = ssub.s32 256, 256
      %5114 = vsyncadd [#allocation7], %s5113
      %s5115 = sshll.u32 [#allocation6], 4
      %s5116 = int_to_ptr.vmem [resolvable:$true] %s5115
      %5121 = dma.vmem_to_hbm [thread:$0]  %s5116, 256, %s11, [#allocation7], 128, 128, 8
    $region49: #{tpu_custom_call.1} parent=1 // pred_fallthru
      _
    // Predicated region
    $region50: #{tpu_custom_call.1} parent=1 // pred_check
      _
    $region51: #{tpu_custom_call.1} parent=1 // pred_check_branch
      %5123 = sbr.rel (0) target = $region53
    $region52: #{tpu_custom_call.1} parent=1 // pred_region
      %5124 = dma.done [#allocation7], 256
    $region53: #{tpu_custom_call.1} parent=1 // pred_fallthru
      _
    %5125 = vsyncpa [#allocation7], 1

</llo_original>
